<compile_context>
chip_gen: v6e
topology: v6e:2x2x1
jax: 0.10.0
libtpu: 0.0.40
codegen_flags: <defaults>
</compile_context>

<pallas_src>
import functools

import numpy as np
import jax
import jax.numpy as jnp
from jax.experimental import pallas as pl
from jax.experimental.pallas import tpu as pltpu


# ----------------------------------------------------------------------------
# Fused multi-stage Pallas kernel (one batch element per grid step)
# ----------------------------------------------------------------------------
def _multi_stage_kernel(x_ref, m_ref,
                        fw1, fb1, fw2, fb2, gw1, gb1, gw2, gb2,
                        xn_ref, il_ref, r_ref,
                        sbuf_ref, xcol_ref, *, img_w):
    """All stages for one batch element, lane-dense (C, H*W) activations.

    x_ref        : (C, HW)            stage-0 input (NCHW-flat, batch squeezed)
    m_ref        : (9, HW)            per-tap validity masks (conv zero padding)
    f*/g* w      : (Cout, 9*Cin)      im2col-folded 3x3 weights
    f*/g* b      : (Cout, 1)
    xn/il/r refs : (stage, C, HW)     per-stage outputs (next x, illum, reflect.)
    sbuf_ref     : (Cmax, PAD+HW+PAD) shift staging buffer, PAD = img_w + 1
    xcol_ref     : (9*Cmax, HW)       im2col matrix scratch
    """
    n_stage = il_ref.shape[0]
    hw = x_ref.shape[1]
    pad = img_w + 1
    cmax = sbuf_ref.shape[0]

    # Zero only the border strips of the shift buffer (once per grid step);
    # the interior is fully overwritten by every conv before being read.
    zstrip = jnp.zeros((cmax, pad), jnp.float32)
    sbuf_ref[:, :pad] = zstrip
    sbuf_ref[:, pad + hw:] = zstrip

    masks = m_ref[...]                                   # (9, HW) f32

    def conv3x3(v, w_ref, b_ref, act):
        """3x3 conv, stride 1, zero pad 1: one matmul (Cout,HW) = W @ Xcol."""
        cin = v.shape[0]
        sbuf_ref[:cin, pad:pad + hw] = v                 # embed in the zero ring
        for t in range(9):                               # build im2col (9*Cin, HW)
            dy, dx = t // 3 - 1, t % 3 - 1
            off = dy * img_w + dx
            shifted = sbuf_ref[:cin, pad + off:pad + off + hw]
            xcol_ref[t * cin:(t + 1) * cin, :] = shifted * masks[t:t + 1, :]
        y = jnp.dot(w_ref[...], xcol_ref[:9 * cin, :],
                    preferred_element_type=jnp.float32) + b_ref[...]
        if act == "relu":
            return jnp.maximum(y, 0.0)
        return jax.nn.sigmoid(y)                         # exp/recip on the EUP

    x = x_ref[...].astype(jnp.float32)
    for s in range(n_stage):                             # stages fully fused
        h_f = conv3x3(x, fw1, fb1, "relu")
        illum = conv3x3(h_f, fw2, fb2, "sigmoid")
        # torch: r = clamp(x / i, 0, 1).  sigmoid keeps i > 0 in f32 here, so the
        # exact division is NaN-safe and matches the reference.
        r = jnp.clip(x / illum, 0.0, 1.0)
        h_g = conv3x3(r, gw1, gb1, "relu")
        x_next = conv3x3(h_g, gw2, gb2, "sigmoid")
        il_ref[s] = illum.astype(il_ref.dtype)
        r_ref[s] = r.astype(r_ref.dtype)
        xn_ref[s] = x_next.astype(xn_ref.dtype)
        x = x_next


# ----------------------------------------------------------------------------
# Host-side prep + pallas_call wrapper
# ----------------------------------------------------------------------------
def _prep_conv_params(w_hwio, b):
    """(3,3,Cin,Cout) HWIO -> (Cout, 9*Cin) im2col weight; (Cout,) -> (Cout,1)."""
    kh, kw, cin, cout = w_hwio.shape
    w9 = jnp.transpose(w_hwio, (3, 0, 1, 2)).reshape(cout, kh * kw * cin)
    return w9, b.reshape(cout, 1)


def _tap_masks(h, w):
    """(9, H*W) f32: 1 where the shifted source pixel is in-bounds, else 0."""
    rr = np.arange(h)[:, None]
    cc = np.arange(w)[None, :]
    m = np.zeros((9, h * w), np.float32)
    for t in range(9):
        dy, dx = t // 3 - 1, t % 3 - 1
        valid = ((rr + dy >= 0) & (rr + dy < h) &
                 (cc + dx >= 0) & (cc + dx < w))
        m[t] = valid.reshape(-1).astype(np.float32)
    return jnp.asarray(m)


def fused_multi_stage(x_flat, params, stage, img_h, img_w):
    """Run all `stage` Retinex stages in a single fused pallas_call.

    x_flat: (B, C, H*W) f32.  Returns (xn_all, il_all, r_all), each
    (B, stage, C, H*W) f32.
    """
    B, C, HW = x_flat.shape
    masks = _tap_masks(img_h, img_w)
    fw1, fb1 = _prep_conv_params(params["f"]["w1"], params["f"]["b1"])
    fw2, fb2 = _prep_conv_params(params["f"]["w2"], params["f"]["b2"])
    gw1, gb1 = _prep_conv_params(params["g"]["w1"], params["g"]["b1"])
    gw2, gb2 = _prep_conv_params(params["g"]["w2"], params["g"]["b2"])
    cmax = max(C, fw1.shape[0], gw1.shape[0])
    pad = img_w + 1

    def const_spec(a):
        return pl.BlockSpec(a.shape, lambda b, nd=a.ndim: (0,) * nd)

    in_spec = pl.BlockSpec((None, C, HW), lambda b: (b, 0, 0))
    out_spec = pl.BlockSpec((None, stage, C, HW), lambda b: (b, 0, 0, 0))
    out_sds = jax.ShapeDtypeStruct((B, stage, C, HW), jnp.float32)

    kernel = functools.partial(_multi_stage_kernel, img_w=img_w)
    xn_all, il_all, r_all = pl.pallas_call(
        kernel,
        out_shape=(out_sds, out_sds, out_sds),
        grid=(B,),
        in_specs=[in_spec, const_spec(masks),
                  const_spec(fw1), const_spec(fb1),
                  const_spec(fw2), const_spec(fb2),
                  const_spec(gw1), const_spec(gb1),
                  const_spec(gw2), const_spec(gb2)],
        out_specs=(out_spec, out_spec, out_spec),
        scratch_shapes=[
            pltpu.VMEM((cmax, pad + HW + pad), jnp.float32),   # shift buffer
            pltpu.VMEM((9 * cmax, HW), jnp.float32),           # im2col matrix
        ],
        compiler_params=pltpu.CompilerParams(dimension_semantics=("parallel",)),
    )(x_flat, masks, fw1, fb1, fw2, fb2, gw1, gb1, gw2, gb2)
    return xn_all, il_all, r_all


# ----------------------------------------------------------------------------
# Model (forward pass of ModuleChangableMultiStageModelWithoutDenoise)
# ----------------------------------------------------------------------------
def init_params(key, channels=3, hidden=16):
    def conv_init(k, cin, cout):
        # Mirrors weights_init: weight ~ N(0, 0.02), bias = 0 (HWIO layout).
        return (0.02 * jax.random.normal(k, (3, 3, cin, cout), jnp.float32),
                jnp.zeros((cout,), jnp.float32))

    k = jax.random.split(key, 4)
    f_w1, f_b1 = conv_init(k[0], channels, hidden)
    f_w2, f_b2 = conv_init(k[1], hidden, channels)
    g_w1, g_b1 = conv_init(k[2], channels, hidden)
    g_w2, g_b2 = conv_init(k[3], hidden, channels)
    return {
        "f": {"w1": f_w1, "b1": f_b1, "w2": f_w2, "b2": f_b2},
        "g": {"w1": g_w1, "b1": g_b1, "w2": g_w2, "b2": g_b2},
    }


@functools.partial(jax.jit, static_argnames=("stage",))
def forward(x_nchw, params, stage=3):
    """Replicates ModuleChangableMultiStageModelWithoutDenoise.forward (NCHW I/O)."""
    B, C, H, W = x_nchw.shape
    x_flat = x_nchw.reshape(B, C, H * W)                 # free reshape, no transpose
    xn_all, il_all, r_all = fused_multi_stage(x_flat, params, stage, H, W)

    to_img = lambda t: t.reshape(B, C, H, W)             # free reshape, no transpose
    inlist = [x_nchw] + [to_img(xn_all[:, s]) for s in range(stage - 1)]
    ilist = [to_img(il_all[:, s]) for s in range(stage)]
    rlist = [to_img(r_all[:, s]) for s in range(stage)]
    return dict(inp=inlist, res=rlist, ill=ilist, nx=list(inlist), dnx=[])


def test_forward(x_nchw, params, stage=3, out_idx=0):
    out_dict = forward(x_nchw, params, stage=stage)
    return out_dict["res"][out_idx]


# ----------------------------------------------------------------------------
# Pure-JAX reference (for in-script correctness verification)
# ----------------------------------------------------------------------------
def _conv_ref(x, w, b):
    y = jax.lax.conv_general_dilated(
        x, w, (1, 1), "SAME", dimension_numbers=("NHWC", "HWIO", "NHWC"),
        precision=jax.lax.Precision.HIGHEST)
    return y + b


def _forward_ref(x_nchw, params, stage=3):
    x = jnp.transpose(x_nchw, (0, 2, 3, 1))
    inlist, ilist, rlist = [], [], []
    for _ in range(stage):
        inlist.append(x)
        h = jnp.maximum(_conv_ref(x, params["f"]["w1"], params["f"]["b1"]), 0.0)
        i = jax.nn.sigmoid(_conv_ref(h, params["f"]["w2"], params["f"]["b2"]))
        r = jnp.clip(x / i, 0.0, 1.0)
        ilist.append(i)
        rlist.append(r)
        hg = jnp.maximum(_conv_ref(r, params["g"]["w1"], params["g"]["b1"]), 0.0)
        x = jax.nn.sigmoid(_conv_ref(hg, params["g"]["w2"], params["g"]["b2"]))
    to_nchw = lambda t: jnp.transpose(t, (0, 3, 1, 2))
    return dict(inp=[to_nchw(t) for t in inlist],
                res=[to_nchw(t) for t in rlist],
                ill=[to_nchw(t) for t in ilist])


# ----------------------------------------------------------------------------
if __name__ == "__main__":
    key = jax.random.PRNGKey(0)
    k_param, k_x = jax.random.split(key)

    B, C, H, W = 2, 3, 16, 16
    params = init_params(k_param, channels=C, hidden=16)
    x = jax.random.uniform(k_x, (B, C, H, W), jnp.float32, minval=0.0, maxval=1.0)

    out_dict = forward(x, params, stage=3)
    result = test_forward(x, params, stage=3, out_idx=0)

    jax.block_until_ready(result)
    jax.tree_util.tree_map(jax.block_until_ready, out_dict)

    # Correctness check against the pure-JAX reference.
    ref = _forward_ref(x, params, stage=3)
    for name in ("res", "ill", "inp"):
        for got, want in zip(out_dict[name], ref[name]):
            err = float(jnp.max(jnp.abs(got - want)))
            assert err < 5e-3, (name, err)

    assert result.shape == (B, C, H, W)
    assert len(out_dict["res"]) == 3 and len(out_dict["ill"]) == 3
    assert len(out_dict["inp"]) == 3 and len(out_dict["nx"]) == 3
    assert len(out_dict["dnx"]) == 0

    print("KERNEL_OK")
</pallas_src>

<mosaic_0001>
module attributes {stable_mosaic.version = 11 : i64} {
  func.func @_multi_stage_kernel(%arg0: i32, %arg1: memref<1x3x256xf32, #tpu.memory_space<vmem>>, %arg2: memref<9x256xf32, #tpu.memory_space<vmem>>, %arg3: memref<16x27xf32, #tpu.memory_space<vmem>>, %arg4: memref<16x1xf32, #tpu.memory_space<vmem>>, %arg5: memref<3x144xf32, #tpu.memory_space<vmem>>, %arg6: memref<3x1xf32, #tpu.memory_space<vmem>>, %arg7: memref<16x27xf32, #tpu.memory_space<vmem>>, %arg8: memref<16x1xf32, #tpu.memory_space<vmem>>, %arg9: memref<3x144xf32, #tpu.memory_space<vmem>>, %arg10: memref<3x1xf32, #tpu.memory_space<vmem>>, %arg11: memref<1x3x3x256xf32, #tpu.memory_space<vmem>>, %arg12: memref<1x3x3x256xf32, #tpu.memory_space<vmem>>, %arg13: memref<1x3x3x256xf32, #tpu.memory_space<vmem>>, %arg14: memref<16x290xf32, #tpu.memory_space<vmem>>, %arg15: memref<144x256xf32, #tpu.memory_space<vmem>>) attributes {dimension_semantics = [#tpu.dimension_semantics<parallel>], iteration_bounds = array<i64: 2>, scalar_prefetch = 0 : i64, scratch_operands = 2 : i64, tpu.core_type = #tpu.core_type<tc>, window_params = [{transform_indices = @transform_0, window_bounds = array<i64: 1, 3, 256>}, {pipeline_mode = #tpu.pipeline_mode<synchronous>, transform_indices = @transform_1, window_bounds = array<i64: 9, 256>}, {pipeline_mode = #tpu.pipeline_mode<synchronous>, transform_indices = @transform_2, window_bounds = array<i64: 16, 27>}, {pipeline_mode = #tpu.pipeline_mode<synchronous>, transform_indices = @transform_3, window_bounds = array<i64: 16, 1>}, {pipeline_mode = #tpu.pipeline_mode<synchronous>, transform_indices = @transform_4, window_bounds = array<i64: 3, 144>}, {pipeline_mode = #tpu.pipeline_mode<synchronous>, transform_indices = @transform_5, window_bounds = array<i64: 3, 1>}, {pipeline_mode = #tpu.pipeline_mode<synchronous>, transform_indices = @transform_6, window_bounds = array<i64: 16, 27>}, {pipeline_mode = #tpu.pipeline_mode<synchronous>, transform_indices = @transform_7, window_bounds = array<i64: 16, 1>}, {pipeline_mode = #tpu.pipeline_mode<synchronous>, transform_indices = @transform_8, window_bounds = array<i64: 3, 144>}, {pipeline_mode = #tpu.pipeline_mode<synchronous>, transform_indices = @transform_9, window_bounds = array<i64: 3, 1>}, {transform_indices = @transform_10, window_bounds = array<i64: 1, 3, 3, 256>}, {transform_indices = @transform_11, window_bounds = array<i64: 1, 3, 3, 256>}, {transform_indices = @transform_12, window_bounds = array<i64: 1, 3, 3, 256>}]} {
    %cst = arith.constant 0.000000e+00 : f32
    %0 = vector.broadcast %cst : f32 to vector<16x17xf32>
    %c0 = arith.constant 0 : index
    %c0_0 = arith.constant 0 : index
    %1 = vector.load %arg14[%c0, %c0_0] : memref<16x290xf32, #tpu.memory_space<vmem>>, vector<16x17xf32>
    tpu.vector_store %arg14[%c0, %c0_0], %0 {strides = array<i32>} : memref<16x290xf32, #tpu.memory_space<vmem>>, vector<16x17xf32>,
    %c0_1 = arith.constant 0 : index
    %c273 = arith.constant 273 : index
    %2 = vector.load %arg14[%c0_1, %c273] : memref<16x290xf32, #tpu.memory_space<vmem>>, vector<16x17xf32>
    tpu.vector_store %arg14[%c0_1, %c273], %0 {strides = array<i32>} : memref<16x290xf32, #tpu.memory_space<vmem>>, vector<16x17xf32>,
    %c0_2 = arith.constant 0 : index
    %c0_3 = arith.constant 0 : index
    %3 = vector.load %arg2[%c0_2, %c0_3] : memref<9x256xf32, #tpu.memory_space<vmem>>, vector<9x256xf32>
    %c0_4 = arith.constant 0 : index
    %c0_5 = arith.constant 0 : index
    %c0_6 = arith.constant 0 : index
    %4 = vector.load %arg1[%c0_4, %c0_5, %c0_6] : memref<1x3x256xf32, #tpu.memory_space<vmem>>, vector<1x3x256xf32>
    %5 = vector.shape_cast %4 : vector<1x3x256xf32> to vector<3x256xf32>
    %c0_7 = arith.constant 0 : index
    %c17 = arith.constant 17 : index
    %6 = vector.load %arg14[%c0_7, %c17] : memref<16x290xf32, #tpu.memory_space<vmem>>, vector<3x256xf32>
    tpu.vector_store %arg14[%c0_7, %c17], %5 {strides = array<i32>} : memref<16x290xf32, #tpu.memory_space<vmem>>, vector<3x256xf32>,
    %c0_8 = arith.constant 0 : index
    %c0_9 = arith.constant 0 : index
    %7 = vector.load %arg14[%c0_8, %c0_9] : memref<16x290xf32, #tpu.memory_space<vmem>>, vector<3x256xf32>
    %8 = vector.extract_strided_slice %3 {offsets = [0, 0], sizes = [1, 256], strides = [1, 1]} : vector<9x256xf32> to vector<1x256xf32>
    %9 = vector.broadcast %8 : vector<1x256xf32> to vector<3x256xf32>
    %10 = arith.mulf %7, %9 : vector<3x256xf32>
    %c0_10 = arith.constant 0 : index
    %c0_11 = arith.constant 0 : index
    %11 = vector.load %arg15[%c0_10, %c0_11] : memref<144x256xf32, #tpu.memory_space<vmem>>, vector<3x256xf32>
    tpu.vector_store %arg15[%c0_10, %c0_11], %10 {strides = array<i32>} : memref<144x256xf32, #tpu.memory_space<vmem>>, vector<3x256xf32>,
    %c0_12 = arith.constant 0 : index
    %c1 = arith.constant 1 : index
    %12 = vector.load %arg14[%c0_12, %c1] : memref<16x290xf32, #tpu.memory_space<vmem>>, vector<3x256xf32>
    %13 = vector.extract_strided_slice %3 {offsets = [1, 0], sizes = [1, 256], strides = [1, 1]} : vector<9x256xf32> to vector<1x256xf32>
    %14 = vector.broadcast %13 : vector<1x256xf32> to vector<3x256xf32>
    %15 = arith.mulf %12, %14 : vector<3x256xf32>
    %c3 = arith.constant 3 : index
    %c0_13 = arith.constant 0 : index
    %16 = vector.load %arg15[%c3, %c0_13] : memref<144x256xf32, #tpu.memory_space<vmem>>, vector<3x256xf32>
    tpu.vector_store %arg15[%c3, %c0_13], %15 {strides = array<i32>} : memref<144x256xf32, #tpu.memory_space<vmem>>, vector<3x256xf32>,
    %c0_14 = arith.constant 0 : index
    %c2 = arith.constant 2 : index
    %17 = vector.load %arg14[%c0_14, %c2] : memref<16x290xf32, #tpu.memory_space<vmem>>, vector<3x256xf32>
    %18 = vector.extract_strided_slice %3 {offsets = [2, 0], sizes = [1, 256], strides = [1, 1]} : vector<9x256xf32> to vector<1x256xf32>
    %19 = vector.broadcast %18 : vector<1x256xf32> to vector<3x256xf32>
    %20 = arith.mulf %17, %19 : vector<3x256xf32>
    %c6 = arith.constant 6 : index
    %c0_15 = arith.constant 0 : index
    %21 = vector.load %arg15[%c6, %c0_15] : memref<144x256xf32, #tpu.memory_space<vmem>>, vector<3x256xf32>
    tpu.vector_store %arg15[%c6, %c0_15], %20 {strides = array<i32>} : memref<144x256xf32, #tpu.memory_space<vmem>>, vector<3x256xf32>,
    %c0_16 = arith.constant 0 : index
    %c16 = arith.constant 16 : index
    %22 = vector.load %arg14[%c0_16, %c16] : memref<16x290xf32, #tpu.memory_space<vmem>>, vector<3x256xf32>
    %23 = vector.extract_strided_slice %3 {offsets = [3, 0], sizes = [1, 256], strides = [1, 1]} : vector<9x256xf32> to vector<1x256xf32>
    %24 = vector.broadcast %23 : vector<1x256xf32> to vector<3x256xf32>
    %25 = arith.mulf %22, %24 : vector<3x256xf32>
    %c9 = arith.constant 9 : index
    %c0_17 = arith.constant 0 : index
    %26 = vector.load %arg15[%c9, %c0_17] : memref<144x256xf32, #tpu.memory_space<vmem>>, vector<3x256xf32>
    tpu.vector_store %arg15[%c9, %c0_17], %25 {strides = array<i32>} : memref<144x256xf32, #tpu.memory_space<vmem>>, vector<3x256xf32>,
    %c0_18 = arith.constant 0 : index
    %c17_19 = arith.constant 17 : index
    %27 = vector.load %arg14[%c0_18, %c17_19] : memref<16x290xf32, #tpu.memory_space<vmem>>, vector<3x256xf32>
    %28 = vector.extract_strided_slice %3 {offsets = [4, 0], sizes = [1, 256], strides = [1, 1]} : vector<9x256xf32> to vector<1x256xf32>
    %29 = vector.broadcast %28 : vector<1x256xf32> to vector<3x256xf32>
    %30 = arith.mulf %27, %29 : vector<3x256xf32>
    %c12 = arith.constant 12 : index
    %c0_20 = arith.constant 0 : index
    %31 = vector.load %arg15[%c12, %c0_20] : memref<144x256xf32, #tpu.memory_space<vmem>>, vector<3x256xf32>
    tpu.vector_store %arg15[%c12, %c0_20], %30 {strides = array<i32>} : memref<144x256xf32, #tpu.memory_space<vmem>>, vector<3x256xf32>,
    %c0_21 = arith.constant 0 : index
    %c18 = arith.constant 18 : index
    %32 = vector.load %arg14[%c0_21, %c18] : memref<16x290xf32, #tpu.memory_space<vmem>>, vector<3x256xf32>
    %33 = vector.extract_strided_slice %3 {offsets = [5, 0], sizes = [1, 256], strides = [1, 1]} : vector<9x256xf32> to vector<1x256xf32>
    %34 = vector.broadcast %33 : vector<1x256xf32> to vector<3x256xf32>
    %35 = arith.mulf %32, %34 : vector<3x256xf32>
    %c15 = arith.constant 15 : index
    %c0_22 = arith.constant 0 : index
    %36 = vector.load %arg15[%c15, %c0_22] : memref<144x256xf32, #tpu.memory_space<vmem>>, vector<3x256xf32>
    tpu.vector_store %arg15[%c15, %c0_22], %35 {strides = array<i32>} : memref<144x256xf32, #tpu.memory_space<vmem>>, vector<3x256xf32>,
    %c0_23 = arith.constant 0 : index
    %c32 = arith.constant 32 : index
    %37 = vector.load %arg14[%c0_23, %c32] : memref<16x290xf32, #tpu.memory_space<vmem>>, vector<3x256xf32>
    %38 = vector.extract_strided_slice %3 {offsets = [6, 0], sizes = [1, 256], strides = [1, 1]} : vector<9x256xf32> to vector<1x256xf32>
    %39 = vector.broadcast %38 : vector<1x256xf32> to vector<3x256xf32>
    %40 = arith.mulf %37, %39 : vector<3x256xf32>
    %c18_24 = arith.constant 18 : index
    %c0_25 = arith.constant 0 : index
    %41 = vector.load %arg15[%c18_24, %c0_25] : memref<144x256xf32, #tpu.memory_space<vmem>>, vector<3x256xf32>
    tpu.vector_store %arg15[%c18_24, %c0_25], %40 {strides = array<i32>} : memref<144x256xf32, #tpu.memory_space<vmem>>, vector<3x256xf32>,
    %c0_26 = arith.constant 0 : index
    %c33 = arith.constant 33 : index
    %42 = vector.load %arg14[%c0_26, %c33] : memref<16x290xf32, #tpu.memory_space<vmem>>, vector<3x256xf32>
    %43 = vector.extract_strided_slice %3 {offsets = [7, 0], sizes = [1, 256], strides = [1, 1]} : vector<9x256xf32> to vector<1x256xf32>
    %44 = vector.broadcast %43 : vector<1x256xf32> to vector<3x256xf32>
    %45 = arith.mulf %42, %44 : vector<3x256xf32>
    %c21 = arith.constant 21 : index
    %c0_27 = arith.constant 0 : index
    %46 = vector.load %arg15[%c21, %c0_27] : memref<144x256xf32, #tpu.memory_space<vmem>>, vector<3x256xf32>
    tpu.vector_store %arg15[%c21, %c0_27], %45 {strides = array<i32>} : memref<144x256xf32, #tpu.memory_space<vmem>>, vector<3x256xf32>,
    %c0_28 = arith.constant 0 : index
    %c34 = arith.constant 34 : index
    %47 = vector.load %arg14[%c0_28, %c34] : memref<16x290xf32, #tpu.memory_space<vmem>>, vector<3x256xf32>
    %48 = vector.extract_strided_slice %3 {offsets = [8, 0], sizes = [1, 256], strides = [1, 1]} : vector<9x256xf32> to vector<1x256xf32>
    %49 = vector.broadcast %48 : vector<1x256xf32> to vector<3x256xf32>
    %50 = arith.mulf %47, %49 : vector<3x256xf32>
    %c24 = arith.constant 24 : index
    %c0_29 = arith.constant 0 : index
    %51 = vector.load %arg15[%c24, %c0_29] : memref<144x256xf32, #tpu.memory_space<vmem>>, vector<3x256xf32>
    tpu.vector_store %arg15[%c24, %c0_29], %50 {strides = array<i32>} : memref<144x256xf32, #tpu.memory_space<vmem>>, vector<3x256xf32>,
    %c0_30 = arith.constant 0 : index
    %c0_31 = arith.constant 0 : index
    %52 = vector.load %arg3[%c0_30, %c0_31] : memref<16x27xf32, #tpu.memory_space<vmem>>, vector<16x27xf32>
    %c0_32 = arith.constant 0 : index
    %c0_33 = arith.constant 0 : index
    %53 = vector.load %arg15[%c0_32, %c0_33] : memref<144x256xf32, #tpu.memory_space<vmem>>, vector<27x256xf32>
    %cst_34 = arith.constant dense<0.000000e+00> : vector<16x256xf32>
    %54 = tpu.matmul %52, %53, %cst_34 {dimension_numbers = #tpu.dot_dimension_numbers<[1], [0], [0], [1], [0, 0, 1, 1], [], []>} : vector<16x27xf32>, vector<27x256xf32>, vector<16x256xf32> -> vector<16x256xf32>
    %c0_35 = arith.constant 0 : index
    %c0_36 = arith.constant 0 : index
    %55 = vector.load %arg4[%c0_35, %c0_36] : memref<16x1xf32, #tpu.memory_space<vmem>>, vector<16x1xf32>
    %56 = vector.broadcast %55 : vector<16x1xf32> to vector<16x256xf32>
    %57 = arith.addf %54, %56 : vector<16x256xf32>
    %cst_37 = arith.constant 0.000000e+00 : f32
    %58 = vector.broadcast %cst_37 : f32 to vector<16x256xf32>
    %59 = arith.maximumf %57, %58 : vector<16x256xf32>
    %c0_38 = arith.constant 0 : index
    %c17_39 = arith.constant 17 : index
    %60 = vector.load %arg14[%c0_38, %c17_39] : memref<16x290xf32, #tpu.memory_space<vmem>>, vector<16x256xf32>
    tpu.vector_store %arg14[%c0_38, %c17_39], %59 {strides = array<i32>} : memref<16x290xf32, #tpu.memory_space<vmem>>, vector<16x256xf32>,
    %c0_40 = arith.constant 0 : index
    %c0_41 = arith.constant 0 : index
    %61 = vector.load %arg14[%c0_40, %c0_41] : memref<16x290xf32, #tpu.memory_space<vmem>>, vector<16x256xf32>
    %62 = vector.extract_strided_slice %3 {offsets = [0, 0], sizes = [1, 256], strides = [1, 1]} : vector<9x256xf32> to vector<1x256xf32>
    %63 = vector.broadcast %62 : vector<1x256xf32> to vector<16x256xf32>
    %64 = arith.mulf %61, %63 : vector<16x256xf32>
    %c0_42 = arith.constant 0 : index
    %c0_43 = arith.constant 0 : index
    %65 = vector.load %arg15[%c0_42, %c0_43] : memref<144x256xf32, #tpu.memory_space<vmem>>, vector<16x256xf32>
    tpu.vector_store %arg15[%c0_42, %c0_43], %64 {strides = array<i32>} : memref<144x256xf32, #tpu.memory_space<vmem>>, vector<16x256xf32>,
    %c0_44 = arith.constant 0 : index
    %c1_45 = arith.constant 1 : index
    %66 = vector.load %arg14[%c0_44, %c1_45] : memref<16x290xf32, #tpu.memory_space<vmem>>, vector<16x256xf32>
    %67 = vector.extract_strided_slice %3 {offsets = [1, 0], sizes = [1, 256], strides = [1, 1]} : vector<9x256xf32> to vector<1x256xf32>
    %68 = vector.broadcast %67 : vector<1x256xf32> to vector<16x256xf32>
    %69 = arith.mulf %66, %68 : vector<16x256xf32>
    %c16_46 = arith.constant 16 : index
    %c0_47 = arith.constant 0 : index
    %70 = vector.load %arg15[%c16_46, %c0_47] : memref<144x256xf32, #tpu.memory_space<vmem>>, vector<16x256xf32>
    tpu.vector_store %arg15[%c16_46, %c0_47], %69 {strides = array<i32>} : memref<144x256xf32, #tpu.memory_space<vmem>>, vector<16x256xf32>,
    %c0_48 = arith.constant 0 : index
    %c2_49 = arith.constant 2 : index
    %71 = vector.load %arg14[%c0_48, %c2_49] : memref<16x290xf32, #tpu.memory_space<vmem>>, vector<16x256xf32>
    %72 = vector.extract_strided_slice %3 {offsets = [2, 0], sizes = [1, 256], strides = [1, 1]} : vector<9x256xf32> to vector<1x256xf32>
    %73 = vector.broadcast %72 : vector<1x256xf32> to vector<16x256xf32>
    %74 = arith.mulf %71, %73 : vector<16x256xf32>
    %c32_50 = arith.constant 32 : index
    %c0_51 = arith.constant 0 : index
    %75 = vector.load %arg15[%c32_50, %c0_51] : memref<144x256xf32, #tpu.memory_space<vmem>>, vector<16x256xf32>
    tpu.vector_store %arg15[%c32_50, %c0_51], %74 {strides = array<i32>} : memref<144x256xf32, #tpu.memory_space<vmem>>, vector<16x256xf32>,
    %c0_52 = arith.constant 0 : index
    %c16_53 = arith.constant 16 : index
    %76 = vector.load %arg14[%c0_52, %c16_53] : memref<16x290xf32, #tpu.memory_space<vmem>>, vector<16x256xf32>
    %77 = vector.extract_strided_slice %3 {offsets = [3, 0], sizes = [1, 256], strides = [1, 1]} : vector<9x256xf32> to vector<1x256xf32>
    %78 = vector.broadcast %77 : vector<1x256xf32> to vector<16x256xf32>
    %79 = arith.mulf %76, %78 : vector<16x256xf32>
    %c48 = arith.constant 48 : index
    %c0_54 = arith.constant 0 : index
    %80 = vector.load %arg15[%c48, %c0_54] : memref<144x256xf32, #tpu.memory_space<vmem>>, vector<16x256xf32>
    tpu.vector_store %arg15[%c48, %c0_54], %79 {strides = array<i32>} : memref<144x256xf32, #tpu.memory_space<vmem>>, vector<16x256xf32>,
    %c0_55 = arith.constant 0 : index
    %c17_56 = arith.constant 17 : index
    %81 = vector.load %arg14[%c0_55, %c17_56] : memref<16x290xf32, #tpu.memory_space<vmem>>, vector<16x256xf32>
    %82 = vector.extract_strided_slice %3 {offsets = [4, 0], sizes = [1, 256], strides = [1, 1]} : vector<9x256xf32> to vector<1x256xf32>
    %83 = vector.broadcast %82 : vector<1x256xf32> to vector<16x256xf32>
    %84 = arith.mulf %81, %83 : vector<16x256xf32>
    %c64 = arith.constant 64 : index
    %c0_57 = arith.constant 0 : index
    %85 = vector.load %arg15[%c64, %c0_57] : memref<144x256xf32, #tpu.memory_space<vmem>>, vector<16x256xf32>
    tpu.vector_store %arg15[%c64, %c0_57], %84 {strides = array<i32>} : memref<144x256xf32, #tpu.memory_space<vmem>>, vector<16x256xf32>,
    %c0_58 = arith.constant 0 : index
    %c18_59 = arith.constant 18 : index
    %86 = vector.load %arg14[%c0_58, %c18_59] : memref<16x290xf32, #tpu.memory_space<vmem>>, vector<16x256xf32>
    %87 = vector.extract_strided_slice %3 {offsets = [5, 0], sizes = [1, 256], strides = [1, 1]} : vector<9x256xf32> to vector<1x256xf32>
    %88 = vector.broadcast %87 : vector<1x256xf32> to vector<16x256xf32>
    %89 = arith.mulf %86, %88 : vector<16x256xf32>
    %c80 = arith.constant 80 : index
    %c0_60 = arith.constant 0 : index
    %90 = vector.load %arg15[%c80, %c0_60] : memref<144x256xf32, #tpu.memory_space<vmem>>, vector<16x256xf32>
    tpu.vector_store %arg15[%c80, %c0_60], %89 {strides = array<i32>} : memref<144x256xf32, #tpu.memory_space<vmem>>, vector<16x256xf32>,
    %c0_61 = arith.constant 0 : index
    %c32_62 = arith.constant 32 : index
    %91 = vector.load %arg14[%c0_61, %c32_62] : memref<16x290xf32, #tpu.memory_space<vmem>>, vector<16x256xf32>
    %92 = vector.extract_strided_slice %3 {offsets = [6, 0], sizes = [1, 256], strides = [1, 1]} : vector<9x256xf32> to vector<1x256xf32>
    %93 = vector.broadcast %92 : vector<1x256xf32> to vector<16x256xf32>
    %94 = arith.mulf %91, %93 : vector<16x256xf32>
    %c96 = arith.constant 96 : index
    %c0_63 = arith.constant 0 : index
    %95 = vector.load %arg15[%c96, %c0_63] : memref<144x256xf32, #tpu.memory_space<vmem>>, vector<16x256xf32>
    tpu.vector_store %arg15[%c96, %c0_63], %94 {strides = array<i32>} : memref<144x256xf32, #tpu.memory_space<vmem>>, vector<16x256xf32>,
    %c0_64 = arith.constant 0 : index
    %c33_65 = arith.constant 33 : index
    %96 = vector.load %arg14[%c0_64, %c33_65] : memref<16x290xf32, #tpu.memory_space<vmem>>, vector<16x256xf32>
    %97 = vector.extract_strided_slice %3 {offsets = [7, 0], sizes = [1, 256], strides = [1, 1]} : vector<9x256xf32> to vector<1x256xf32>
    %98 = vector.broadcast %97 : vector<1x256xf32> to vector<16x256xf32>
    %99 = arith.mulf %96, %98 : vector<16x256xf32>
    %c112 = arith.constant 112 : index
    %c0_66 = arith.constant 0 : index
    %100 = vector.load %arg15[%c112, %c0_66] : memref<144x256xf32, #tpu.memory_space<vmem>>, vector<16x256xf32>
    tpu.vector_store %arg15[%c112, %c0_66], %99 {strides = array<i32>} : memref<144x256xf32, #tpu.memory_space<vmem>>, vector<16x256xf32>,
    %c0_67 = arith.constant 0 : index
    %c34_68 = arith.constant 34 : index
    %101 = vector.load %arg14[%c0_67, %c34_68] : memref<16x290xf32, #tpu.memory_space<vmem>>, vector<16x256xf32>
    %102 = vector.extract_strided_slice %3 {offsets = [8, 0], sizes = [1, 256], strides = [1, 1]} : vector<9x256xf32> to vector<1x256xf32>
    %103 = vector.broadcast %102 : vector<1x256xf32> to vector<16x256xf32>
    %104 = arith.mulf %101, %103 : vector<16x256xf32>
    %c128 = arith.constant 128 : index
    %c0_69 = arith.constant 0 : index
    %105 = vector.load %arg15[%c128, %c0_69] : memref<144x256xf32, #tpu.memory_space<vmem>>, vector<16x256xf32>
    tpu.vector_store %arg15[%c128, %c0_69], %104 {strides = array<i32>} : memref<144x256xf32, #tpu.memory_space<vmem>>, vector<16x256xf32>,
    %c0_70 = arith.constant 0 : index
    %c0_71 = arith.constant 0 : index
    %106 = vector.load %arg5[%c0_70, %c0_71] : memref<3x144xf32, #tpu.memory_space<vmem>>, vector<3x144xf32>
    %c0_72 = arith.constant 0 : index
    %c0_73 = arith.constant 0 : index
    %107 = vector.load %arg15[%c0_72, %c0_73] : memref<144x256xf32, #tpu.memory_space<vmem>>, vector<144x256xf32>
    %cst_74 = arith.constant dense<0.000000e+00> : vector<3x256xf32>
    %108 = tpu.matmul %106, %107, %cst_74 {dimension_numbers = #tpu.dot_dimension_numbers<[1], [0], [0], [1], [0, 0, 1, 1], [], []>} : vector<3x144xf32>, vector<144x256xf32>, vector<3x256xf32> -> vector<3x256xf32>
    %c0_75 = arith.constant 0 : index
    %c0_76 = arith.constant 0 : index
    %109 = vector.load %arg6[%c0_75, %c0_76] : memref<3x1xf32, #tpu.memory_space<vmem>>, vector<3x1xf32>
    %110 = vector.broadcast %109 : vector<3x1xf32> to vector<3x256xf32>
    %111 = arith.addf %108, %110 : vector<3x256xf32>
    %112 = arith.negf %111 : vector<3x256xf32>
    %113 = math.exp %112 : vector<3x256xf32>
    %cst_77 = arith.constant 1.000000e+00 : f32
    %114 = vector.broadcast %cst_77 : f32 to vector<3x256xf32>
    %115 = arith.addf %114, %113 : vector<3x256xf32>
    %116 = arith.divf %114, %115 : vector<3x256xf32>
    %117 = arith.divf %5, %116 : vector<3x256xf32>
    %cst_78 = arith.constant 0.000000e+00 : f32
    %cst_79 = arith.constant 1.000000e+00 : f32
    %118 = vector.broadcast %cst_78 : f32 to vector<3x256xf32>
    %119 = arith.maximumf %118, %117 : vector<3x256xf32>
    %120 = vector.broadcast %cst_79 : f32 to vector<3x256xf32>
    %121 = arith.minimumf %120, %119 : vector<3x256xf32>
    %c0_80 = arith.constant 0 : index
    %c17_81 = arith.constant 17 : index
    %122 = vector.load %arg14[%c0_80, %c17_81] : memref<16x290xf32, #tpu.memory_space<vmem>>, vector<3x256xf32>
    tpu.vector_store %arg14[%c0_80, %c17_81], %121 {strides = array<i32>} : memref<16x290xf32, #tpu.memory_space<vmem>>, vector<3x256xf32>,
    %c0_82 = arith.constant 0 : index
    %c0_83 = arith.constant 0 : index
    %123 = vector.load %arg14[%c0_82, %c0_83] : memref<16x290xf32, #tpu.memory_space<vmem>>, vector<3x256xf32>
    %124 = vector.extract_strided_slice %3 {offsets = [0, 0], sizes = [1, 256], strides = [1, 1]} : vector<9x256xf32> to vector<1x256xf32>
    %125 = vector.broadcast %124 : vector<1x256xf32> to vector<3x256xf32>
    %126 = arith.mulf %123, %125 : vector<3x256xf32>
    %c0_84 = arith.constant 0 : index
    %c0_85 = arith.constant 0 : index
    %127 = vector.load %arg15[%c0_84, %c0_85] : memref<144x256xf32, #tpu.memory_space<vmem>>, vector<3x256xf32>
    tpu.vector_store %arg15[%c0_84, %c0_85], %126 {strides = array<i32>} : memref<144x256xf32, #tpu.memory_space<vmem>>, vector<3x256xf32>,
    %c0_86 = arith.constant 0 : index
    %c1_87 = arith.constant 1 : index
    %128 = vector.load %arg14[%c0_86, %c1_87] : memref<16x290xf32, #tpu.memory_space<vmem>>, vector<3x256xf32>
    %129 = vector.extract_strided_slice %3 {offsets = [1, 0], sizes = [1, 256], strides = [1, 1]} : vector<9x256xf32> to vector<1x256xf32>
    %130 = vector.broadcast %129 : vector<1x256xf32> to vector<3x256xf32>
    %131 = arith.mulf %128, %130 : vector<3x256xf32>
    %c3_88 = arith.constant 3 : index
    %c0_89 = arith.constant 0 : index
    %132 = vector.load %arg15[%c3_88, %c0_89] : memref<144x256xf32, #tpu.memory_space<vmem>>, vector<3x256xf32>
    tpu.vector_store %arg15[%c3_88, %c0_89], %131 {strides = array<i32>} : memref<144x256xf32, #tpu.memory_space<vmem>>, vector<3x256xf32>,
    %c0_90 = arith.constant 0 : index
    %c2_91 = arith.constant 2 : index
    %133 = vector.load %arg14[%c0_90, %c2_91] : memref<16x290xf32, #tpu.memory_space<vmem>>, vector<3x256xf32>
    %134 = vector.extract_strided_slice %3 {offsets = [2, 0], sizes = [1, 256], strides = [1, 1]} : vector<9x256xf32> to vector<1x256xf32>
    %135 = vector.broadcast %134 : vector<1x256xf32> to vector<3x256xf32>
    %136 = arith.mulf %133, %135 : vector<3x256xf32>
    %c6_92 = arith.constant 6 : index
    %c0_93 = arith.constant 0 : index
    %137 = vector.load %arg15[%c6_92, %c0_93] : memref<144x256xf32, #tpu.memory_space<vmem>>, vector<3x256xf32>
    tpu.vector_store %arg15[%c6_92, %c0_93], %136 {strides = array<i32>} : memref<144x256xf32, #tpu.memory_space<vmem>>, vector<3x256xf32>,
    %c0_94 = arith.constant 0 : index
    %c16_95 = arith.constant 16 : index
    %138 = vector.load %arg14[%c0_94, %c16_95] : memref<16x290xf32, #tpu.memory_space<vmem>>, vector<3x256xf32>
    %139 = vector.extract_strided_slice %3 {offsets = [3, 0], sizes = [1, 256], strides = [1, 1]} : vector<9x256xf32> to vector<1x256xf32>
    %140 = vector.broadcast %139 : vector<1x256xf32> to vector<3x256xf32>
    %141 = arith.mulf %138, %140 : vector<3x256xf32>
    %c9_96 = arith.constant 9 : index
    %c0_97 = arith.constant 0 : index
    %142 = vector.load %arg15[%c9_96, %c0_97] : memref<144x256xf32, #tpu.memory_space<vmem>>, vector<3x256xf32>
    tpu.vector_store %arg15[%c9_96, %c0_97], %141 {strides = array<i32>} : memref<144x256xf32, #tpu.memory_space<vmem>>, vector<3x256xf32>,
    %c0_98 = arith.constant 0 : index
    %c17_99 = arith.constant 17 : index
    %143 = vector.load %arg14[%c0_98, %c17_99] : memref<16x290xf32, #tpu.memory_space<vmem>>, vector<3x256xf32>
    %144 = vector.extract_strided_slice %3 {offsets = [4, 0], sizes = [1, 256], strides = [1, 1]} : vector<9x256xf32> to vector<1x256xf32>
    %145 = vector.broadcast %144 : vector<1x256xf32> to vector<3x256xf32>
    %146 = arith.mulf %143, %145 : vector<3x256xf32>
    %c12_100 = arith.constant 12 : index
    %c0_101 = arith.constant 0 : index
    %147 = vector.load %arg15[%c12_100, %c0_101] : memref<144x256xf32, #tpu.memory_space<vmem>>, vector<3x256xf32>
    tpu.vector_store %arg15[%c12_100, %c0_101], %146 {strides = array<i32>} : memref<144x256xf32, #tpu.memory_space<vmem>>, vector<3x256xf32>,
    %c0_102 = arith.constant 0 : index
    %c18_103 = arith.constant 18 : index
    %148 = vector.load %arg14[%c0_102, %c18_103] : memref<16x290xf32, #tpu.memory_space<vmem>>, vector<3x256xf32>
    %149 = vector.extract_strided_slice %3 {offsets = [5, 0], sizes = [1, 256], strides = [1, 1]} : vector<9x256xf32> to vector<1x256xf32>
    %150 = vector.broadcast %149 : vector<1x256xf32> to vector<3x256xf32>
    %151 = arith.mulf %148, %150 : vector<3x256xf32>
    %c15_104 = arith.constant 15 : index
    %c0_105 = arith.constant 0 : index
    %152 = vector.load %arg15[%c15_104, %c0_105] : memref<144x256xf32, #tpu.memory_space<vmem>>, vector<3x256xf32>
    tpu.vector_store %arg15[%c15_104, %c0_105], %151 {strides = array<i32>} : memref<144x256xf32, #tpu.memory_space<vmem>>, vector<3x256xf32>,
    %c0_106 = arith.constant 0 : index
    %c32_107 = arith.constant 32 : index
    %153 = vector.load %arg14[%c0_106, %c32_107] : memref<16x290xf32, #tpu.memory_space<vmem>>, vector<3x256xf32>
    %154 = vector.extract_strided_slice %3 {offsets = [6, 0], sizes = [1, 256], strides = [1, 1]} : vector<9x256xf32> to vector<1x256xf32>
    %155 = vector.broadcast %154 : vector<1x256xf32> to vector<3x256xf32>
    %156 = arith.mulf %153, %155 : vector<3x256xf32>
    %c18_108 = arith.constant 18 : index
    %c0_109 = arith.constant 0 : index
    %157 = vector.load %arg15[%c18_108, %c0_109] : memref<144x256xf32, #tpu.memory_space<vmem>>, vector<3x256xf32>
    tpu.vector_store %arg15[%c18_108, %c0_109], %156 {strides = array<i32>} : memref<144x256xf32, #tpu.memory_space<vmem>>, vector<3x256xf32>,
    %c0_110 = arith.constant 0 : index
    %c33_111 = arith.constant 33 : index
    %158 = vector.load %arg14[%c0_110, %c33_111] : memref<16x290xf32, #tpu.memory_space<vmem>>, vector<3x256xf32>
    %159 = vector.extract_strided_slice %3 {offsets = [7, 0], sizes = [1, 256], strides = [1, 1]} : vector<9x256xf32> to vector<1x256xf32>
    %160 = vector.broadcast %159 : vector<1x256xf32> to vector<3x256xf32>
    %161 = arith.mulf %158, %160 : vector<3x256xf32>
    %c21_112 = arith.constant 21 : index
    %c0_113 = arith.constant 0 : index
    %162 = vector.load %arg15[%c21_112, %c0_113] : memref<144x256xf32, #tpu.memory_space<vmem>>, vector<3x256xf32>
    tpu.vector_store %arg15[%c21_112, %c0_113], %161 {strides = array<i32>} : memref<144x256xf32, #tpu.memory_space<vmem>>, vector<3x256xf32>,
    %c0_114 = arith.constant 0 : index
    %c34_115 = arith.constant 34 : index
    %163 = vector.load %arg14[%c0_114, %c34_115] : memref<16x290xf32, #tpu.memory_space<vmem>>, vector<3x256xf32>
    %164 = vector.extract_strided_slice %3 {offsets = [8, 0], sizes = [1, 256], strides = [1, 1]} : vector<9x256xf32> to vector<1x256xf32>
    %165 = vector.broadcast %164 : vector<1x256xf32> to vector<3x256xf32>
    %166 = arith.mulf %163, %165 : vector<3x256xf32>
    %c24_116 = arith.constant 24 : index
    %c0_117 = arith.constant 0 : index
    %167 = vector.load %arg15[%c24_116, %c0_117] : memref<144x256xf32, #tpu.memory_space<vmem>>, vector<3x256xf32>
    tpu.vector_store %arg15[%c24_116, %c0_117], %166 {strides = array<i32>} : memref<144x256xf32, #tpu.memory_space<vmem>>, vector<3x256xf32>,
    %c0_118 = arith.constant 0 : index
    %c0_119 = arith.constant 0 : index
    %168 = vector.load %arg7[%c0_118, %c0_119] : memref<16x27xf32, #tpu.memory_space<vmem>>, vector<16x27xf32>
    %c0_120 = arith.constant 0 : index
    %c0_121 = arith.constant 0 : index
    %169 = vector.load %arg15[%c0_120, %c0_121] : memref<144x256xf32, #tpu.memory_space<vmem>>, vector<27x256xf32>
    %cst_122 = arith.constant dense<0.000000e+00> : vector<16x256xf32>
    %170 = tpu.matmul %168, %169, %cst_122 {dimension_numbers = #tpu.dot_dimension_numbers<[1], [0], [0], [1], [0, 0, 1, 1], [], []>} : vector<16x27xf32>, vector<27x256xf32>, vector<16x256xf32> -> vector<16x256xf32>
    %c0_123 = arith.constant 0 : index
    %c0_124 = arith.constant 0 : index
    %171 = vector.load %arg8[%c0_123, %c0_124] : memref<16x1xf32, #tpu.memory_space<vmem>>, vector<16x1xf32>
    %172 = vector.broadcast %171 : vector<16x1xf32> to vector<16x256xf32>
    %173 = arith.addf %170, %172 : vector<16x256xf32>
    %cst_125 = arith.constant 0.000000e+00 : f32
    %174 = vector.broadcast %cst_125 : f32 to vector<16x256xf32>
    %175 = arith.maximumf %173, %174 : vector<16x256xf32>
    %c0_126 = arith.constant 0 : index
    %c17_127 = arith.constant 17 : index
    %176 = vector.load %arg14[%c0_126, %c17_127] : memref<16x290xf32, #tpu.memory_space<vmem>>, vector<16x256xf32>
    tpu.vector_store %arg14[%c0_126, %c17_127], %175 {strides = array<i32>} : memref<16x290xf32, #tpu.memory_space<vmem>>, vector<16x256xf32>,
    %c0_128 = arith.constant 0 : index
    %c0_129 = arith.constant 0 : index
    %177 = vector.load %arg14[%c0_128, %c0_129] : memref<16x290xf32, #tpu.memory_space<vmem>>, vector<16x256xf32>
    %178 = vector.extract_strided_slice %3 {offsets = [0, 0], sizes = [1, 256], strides = [1, 1]} : vector<9x256xf32> to vector<1x256xf32>
    %179 = vector.broadcast %178 : vector<1x256xf32> to vector<16x256xf32>
    %180 = arith.mulf %177, %179 : vector<16x256xf32>
    %c0_130 = arith.constant 0 : index
    %c0_131 = arith.constant 0 : index
    %181 = vector.load %arg15[%c0_130, %c0_131] : memref<144x256xf32, #tpu.memory_space<vmem>>, vector<16x256xf32>
    tpu.vector_store %arg15[%c0_130, %c0_131], %180 {strides = array<i32>} : memref<144x256xf32, #tpu.memory_space<vmem>>, vector<16x256xf32>,
    %c0_132 = arith.constant 0 : index
    %c1_133 = arith.constant 1 : index
    %182 = vector.load %arg14[%c0_132, %c1_133] : memref<16x290xf32, #tpu.memory_space<vmem>>, vector<16x256xf32>
    %183 = vector.extract_strided_slice %3 {offsets = [1, 0], sizes = [1, 256], strides = [1, 1]} : vector<9x256xf32> to vector<1x256xf32>
    %184 = vector.broadcast %183 : vector<1x256xf32> to vector<16x256xf32>
    %185 = arith.mulf %182, %184 : vector<16x256xf32>
    %c16_134 = arith.constant 16 : index
    %c0_135 = arith.constant 0 : index
    %186 = vector.load %arg15[%c16_134, %c0_135] : memref<144x256xf32, #tpu.memory_space<vmem>>, vector<16x256xf32>
    tpu.vector_store %arg15[%c16_134, %c0_135], %185 {strides = array<i32>} : memref<144x256xf32, #tpu.memory_space<vmem>>, vector<16x256xf32>,
    %c0_136 = arith.constant 0 : index
    %c2_137 = arith.constant 2 : index
    %187 = vector.load %arg14[%c0_136, %c2_137] : memref<16x290xf32, #tpu.memory_space<vmem>>, vector<16x256xf32>
    %188 = vector.extract_strided_slice %3 {offsets = [2, 0], sizes = [1, 256], strides = [1, 1]} : vector<9x256xf32> to vector<1x256xf32>
    %189 = vector.broadcast %188 : vector<1x256xf32> to vector<16x256xf32>
    %190 = arith.mulf %187, %189 : vector<16x256xf32>
    %c32_138 = arith.constant 32 : index
    %c0_139 = arith.constant 0 : index
    %191 = vector.load %arg15[%c32_138, %c0_139] : memref<144x256xf32, #tpu.memory_space<vmem>>, vector<16x256xf32>
    tpu.vector_store %arg15[%c32_138, %c0_139], %190 {strides = array<i32>} : memref<144x256xf32, #tpu.memory_space<vmem>>, vector<16x256xf32>,
    %c0_140 = arith.constant 0 : index
    %c16_141 = arith.constant 16 : index
    %192 = vector.load %arg14[%c0_140, %c16_141] : memref<16x290xf32, #tpu.memory_space<vmem>>, vector<16x256xf32>
    %193 = vector.extract_strided_slice %3 {offsets = [3, 0], sizes = [1, 256], strides = [1, 1]} : vector<9x256xf32> to vector<1x256xf32>
    %194 = vector.broadcast %193 : vector<1x256xf32> to vector<16x256xf32>
    %195 = arith.mulf %192, %194 : vector<16x256xf32>
    %c48_142 = arith.constant 48 : index
    %c0_143 = arith.constant 0 : index
    %196 = vector.load %arg15[%c48_142, %c0_143] : memref<144x256xf32, #tpu.memory_space<vmem>>, vector<16x256xf32>
    tpu.vector_store %arg15[%c48_142, %c0_143], %195 {strides = array<i32>} : memref<144x256xf32, #tpu.memory_space<vmem>>, vector<16x256xf32>,
    %c0_144 = arith.constant 0 : index
    %c17_145 = arith.constant 17 : index
    %197 = vector.load %arg14[%c0_144, %c17_145] : memref<16x290xf32, #tpu.memory_space<vmem>>, vector<16x256xf32>
    %198 = vector.extract_strided_slice %3 {offsets = [4, 0], sizes = [1, 256], strides = [1, 1]} : vector<9x256xf32> to vector<1x256xf32>
    %199 = vector.broadcast %198 : vector<1x256xf32> to vector<16x256xf32>
    %200 = arith.mulf %197, %199 : vector<16x256xf32>
    %c64_146 = arith.constant 64 : index
    %c0_147 = arith.constant 0 : index
    %201 = vector.load %arg15[%c64_146, %c0_147] : memref<144x256xf32, #tpu.memory_space<vmem>>, vector<16x256xf32>
    tpu.vector_store %arg15[%c64_146, %c0_147], %200 {strides = array<i32>} : memref<144x256xf32, #tpu.memory_space<vmem>>, vector<16x256xf32>,
    %c0_148 = arith.constant 0 : index
    %c18_149 = arith.constant 18 : index
    %202 = vector.load %arg14[%c0_148, %c18_149] : memref<16x290xf32, #tpu.memory_space<vmem>>, vector<16x256xf32>
    %203 = vector.extract_strided_slice %3 {offsets = [5, 0], sizes = [1, 256], strides = [1, 1]} : vector<9x256xf32> to vector<1x256xf32>
    %204 = vector.broadcast %203 : vector<1x256xf32> to vector<16x256xf32>
    %205 = arith.mulf %202, %204 : vector<16x256xf32>
    %c80_150 = arith.constant 80 : index
    %c0_151 = arith.constant 0 : index
    %206 = vector.load %arg15[%c80_150, %c0_151] : memref<144x256xf32, #tpu.memory_space<vmem>>, vector<16x256xf32>
    tpu.vector_store %arg15[%c80_150, %c0_151], %205 {strides = array<i32>} : memref<144x256xf32, #tpu.memory_space<vmem>>, vector<16x256xf32>,
    %c0_152 = arith.constant 0 : index
    %c32_153 = arith.constant 32 : index
    %207 = vector.load %arg14[%c0_152, %c32_153] : memref<16x290xf32, #tpu.memory_space<vmem>>, vector<16x256xf32>
    %208 = vector.extract_strided_slice %3 {offsets = [6, 0], sizes = [1, 256], strides = [1, 1]} : vector<9x256xf32> to vector<1x256xf32>
    %209 = vector.broadcast %208 : vector<1x256xf32> to vector<16x256xf32>
    %210 = arith.mulf %207, %209 : vector<16x256xf32>
    %c96_154 = arith.constant 96 : index
    %c0_155 = arith.constant 0 : index
    %211 = vector.load %arg15[%c96_154, %c0_155] : memref<144x256xf32, #tpu.memory_space<vmem>>, vector<16x256xf32>
    tpu.vector_store %arg15[%c96_154, %c0_155], %210 {strides = array<i32>} : memref<144x256xf32, #tpu.memory_space<vmem>>, vector<16x256xf32>,
    %c0_156 = arith.constant 0 : index
    %c33_157 = arith.constant 33 : index
    %212 = vector.load %arg14[%c0_156, %c33_157] : memref<16x290xf32, #tpu.memory_space<vmem>>, vector<16x256xf32>
    %213 = vector.extract_strided_slice %3 {offsets = [7, 0], sizes = [1, 256], strides = [1, 1]} : vector<9x256xf32> to vector<1x256xf32>
    %214 = vector.broadcast %213 : vector<1x256xf32> to vector<16x256xf32>
    %215 = arith.mulf %212, %214 : vector<16x256xf32>
    %c112_158 = arith.constant 112 : index
    %c0_159 = arith.constant 0 : index
    %216 = vector.load %arg15[%c112_158, %c0_159] : memref<144x256xf32, #tpu.memory_space<vmem>>, vector<16x256xf32>
    tpu.vector_store %arg15[%c112_158, %c0_159], %215 {strides = array<i32>} : memref<144x256xf32, #tpu.memory_space<vmem>>, vector<16x256xf32>,
    %c0_160 = arith.constant 0 : index
    %c34_161 = arith.constant 34 : index
    %217 = vector.load %arg14[%c0_160, %c34_161] : memref<16x290xf32, #tpu.memory_space<vmem>>, vector<16x256xf32>
    %218 = vector.extract_strided_slice %3 {offsets = [8, 0], sizes = [1, 256], strides = [1, 1]} : vector<9x256xf32> to vector<1x256xf32>
    %219 = vector.broadcast %218 : vector<1x256xf32> to vector<16x256xf32>
    %220 = arith.mulf %217, %219 : vector<16x256xf32>
    %c128_162 = arith.constant 128 : index
    %c0_163 = arith.constant 0 : index
    %221 = vector.load %arg15[%c128_162, %c0_163] : memref<144x256xf32, #tpu.memory_space<vmem>>, vector<16x256xf32>
    tpu.vector_store %arg15[%c128_162, %c0_163], %220 {strides = array<i32>} : memref<144x256xf32, #tpu.memory_space<vmem>>, vector<16x256xf32>,
    %c0_164 = arith.constant 0 : index
    %c0_165 = arith.constant 0 : index
    %222 = vector.load %arg9[%c0_164, %c0_165] : memref<3x144xf32, #tpu.memory_space<vmem>>, vector<3x144xf32>
    %c0_166 = arith.constant 0 : index
    %c0_167 = arith.constant 0 : index
    %223 = vector.load %arg15[%c0_166, %c0_167] : memref<144x256xf32, #tpu.memory_space<vmem>>, vector<144x256xf32>
    %cst_168 = arith.constant dense<0.000000e+00> : vector<3x256xf32>
    %224 = tpu.matmul %222, %223, %cst_168 {dimension_numbers = #tpu.dot_dimension_numbers<[1], [0], [0], [1], [0, 0, 1, 1], [], []>} : vector<3x144xf32>, vector<144x256xf32>, vector<3x256xf32> -> vector<3x256xf32>
    %c0_169 = arith.constant 0 : index
    %c0_170 = arith.constant 0 : index
    %225 = vector.load %arg10[%c0_169, %c0_170] : memref<3x1xf32, #tpu.memory_space<vmem>>, vector<3x1xf32>
    %226 = vector.broadcast %225 : vector<3x1xf32> to vector<3x256xf32>
    %227 = arith.addf %224, %226 : vector<3x256xf32>
    %228 = arith.negf %227 : vector<3x256xf32>
    %229 = math.exp %228 : vector<3x256xf32>
    %cst_171 = arith.constant 1.000000e+00 : f32
    %230 = vector.broadcast %cst_171 : f32 to vector<3x256xf32>
    %231 = arith.addf %230, %229 : vector<3x256xf32>
    %232 = arith.divf %230, %231 : vector<3x256xf32>
    %c0_172 = arith.constant 0 : index
    %c0_173 = arith.constant 0 : index
    %c0_174 = arith.constant 0 : index
    %c0_175 = arith.constant 0 : index
    %233 = vector.load %arg12[%c0_172, %c0_173, %c0_174, %c0_175] : memref<1x3x3x256xf32, #tpu.memory_space<vmem>>, vector<1x1x3x256xf32>
    %234 = vector.shape_cast %233 : vector<1x1x3x256xf32> to vector<3x256xf32>
    %235 = vector.shape_cast %116 : vector<3x256xf32> to vector<1x1x3x256xf32>
    tpu.vector_store %arg12[%c0_172, %c0_173, %c0_174, %c0_175], %235 {strides = array<i32>} : memref<1x3x3x256xf32, #tpu.memory_space<vmem>>, vector<1x1x3x256xf32>,
    %c0_176 = arith.constant 0 : index
    %c0_177 = arith.constant 0 : index
    %c0_178 = arith.constant 0 : index
    %c0_179 = arith.constant 0 : index
    %236 = vector.load %arg13[%c0_176, %c0_177, %c0_178, %c0_179] : memref<1x3x3x256xf32, #tpu.memory_space<vmem>>, vector<1x1x3x256xf32>
    %237 = vector.shape_cast %236 : vector<1x1x3x256xf32> to vector<3x256xf32>
    %238 = vector.shape_cast %121 : vector<3x256xf32> to vector<1x1x3x256xf32>
    tpu.vector_store %arg13[%c0_176, %c0_177, %c0_178, %c0_179], %238 {strides = array<i32>} : memref<1x3x3x256xf32, #tpu.memory_space<vmem>>, vector<1x1x3x256xf32>,
    %c0_180 = arith.constant 0 : index
    %c0_181 = arith.constant 0 : index
    %c0_182 = arith.constant 0 : index
    %c0_183 = arith.constant 0 : index
    %239 = vector.load %arg11[%c0_180, %c0_181, %c0_182, %c0_183] : memref<1x3x3x256xf32, #tpu.memory_space<vmem>>, vector<1x1x3x256xf32>
    %240 = vector.shape_cast %239 : vector<1x1x3x256xf32> to vector<3x256xf32>
    %241 = vector.shape_cast %232 : vector<3x256xf32> to vector<1x1x3x256xf32>
    tpu.vector_store %arg11[%c0_180, %c0_181, %c0_182, %c0_183], %241 {strides = array<i32>} : memref<1x3x3x256xf32, #tpu.memory_space<vmem>>, vector<1x1x3x256xf32>,
    %c0_184 = arith.constant 0 : index
    %c17_185 = arith.constant 17 : index
    %242 = vector.load %arg14[%c0_184, %c17_185] : memref<16x290xf32, #tpu.memory_space<vmem>>, vector<3x256xf32>
    tpu.vector_store %arg14[%c0_184, %c17_185], %232 {strides = array<i32>} : memref<16x290xf32, #tpu.memory_space<vmem>>, vector<3x256xf32>,
    %c0_186 = arith.constant 0 : index
    %c0_187 = arith.constant 0 : index
    %243 = vector.load %arg14[%c0_186, %c0_187] : memref<16x290xf32, #tpu.memory_space<vmem>>, vector<3x256xf32>
    %244 = vector.extract_strided_slice %3 {offsets = [0, 0], sizes = [1, 256], strides = [1, 1]} : vector<9x256xf32> to vector<1x256xf32>
    %245 = vector.broadcast %244 : vector<1x256xf32> to vector<3x256xf32>
    %246 = arith.mulf %243, %245 : vector<3x256xf32>
    %c0_188 = arith.constant 0 : index
    %c0_189 = arith.constant 0 : index
    %247 = vector.load %arg15[%c0_188, %c0_189] : memref<144x256xf32, #tpu.memory_space<vmem>>, vector<3x256xf32>
    tpu.vector_store %arg15[%c0_188, %c0_189], %246 {strides = array<i32>} : memref<144x256xf32, #tpu.memory_space<vmem>>, vector<3x256xf32>,
    %c0_190 = arith.constant 0 : index
    %c1_191 = arith.constant 1 : index
    %248 = vector.load %arg14[%c0_190, %c1_191] : memref<16x290xf32, #tpu.memory_space<vmem>>, vector<3x256xf32>
    %249 = vector.extract_strided_slice %3 {offsets = [1, 0], sizes = [1, 256], strides = [1, 1]} : vector<9x256xf32> to vector<1x256xf32>
    %250 = vector.broadcast %249 : vector<1x256xf32> to vector<3x256xf32>
    %251 = arith.mulf %248, %250 : vector<3x256xf32>
    %c3_192 = arith.constant 3 : index
    %c0_193 = arith.constant 0 : index
    %252 = vector.load %arg15[%c3_192, %c0_193] : memref<144x256xf32, #tpu.memory_space<vmem>>, vector<3x256xf32>
    tpu.vector_store %arg15[%c3_192, %c0_193], %251 {strides = array<i32>} : memref<144x256xf32, #tpu.memory_space<vmem>>, vector<3x256xf32>,
    %c0_194 = arith.constant 0 : index
    %c2_195 = arith.constant 2 : index
    %253 = vector.load %arg14[%c0_194, %c2_195] : memref<16x290xf32, #tpu.memory_space<vmem>>, vector<3x256xf32>
    %254 = vector.extract_strided_slice %3 {offsets = [2, 0], sizes = [1, 256], strides = [1, 1]} : vector<9x256xf32> to vector<1x256xf32>
    %255 = vector.broadcast %254 : vector<1x256xf32> to vector<3x256xf32>
    %256 = arith.mulf %253, %255 : vector<3x256xf32>
    %c6_196 = arith.constant 6 : index
    %c0_197 = arith.constant 0 : index
    %257 = vector.load %arg15[%c6_196, %c0_197] : memref<144x256xf32, #tpu.memory_space<vmem>>, vector<3x256xf32>
    tpu.vector_store %arg15[%c6_196, %c0_197], %256 {strides = array<i32>} : memref<144x256xf32, #tpu.memory_space<vmem>>, vector<3x256xf32>,
    %c0_198 = arith.constant 0 : index
    %c16_199 = arith.constant 16 : index
    %258 = vector.load %arg14[%c0_198, %c16_199] : memref<16x290xf32, #tpu.memory_space<vmem>>, vector<3x256xf32>
    %259 = vector.extract_strided_slice %3 {offsets = [3, 0], sizes = [1, 256], strides = [1, 1]} : vector<9x256xf32> to vector<1x256xf32>
    %260 = vector.broadcast %259 : vector<1x256xf32> to vector<3x256xf32>
    %261 = arith.mulf %258, %260 : vector<3x256xf32>
    %c9_200 = arith.constant 9 : index
    %c0_201 = arith.constant 0 : index
    %262 = vector.load %arg15[%c9_200, %c0_201] : memref<144x256xf32, #tpu.memory_space<vmem>>, vector<3x256xf32>
    tpu.vector_store %arg15[%c9_200, %c0_201], %261 {strides = array<i32>} : memref<144x256xf32, #tpu.memory_space<vmem>>, vector<3x256xf32>,
    %c0_202 = arith.constant 0 : index
    %c17_203 = arith.constant 17 : index
    %263 = vector.load %arg14[%c0_202, %c17_203] : memref<16x290xf32, #tpu.memory_space<vmem>>, vector<3x256xf32>
    %264 = vector.extract_strided_slice %3 {offsets = [4, 0], sizes = [1, 256], strides = [1, 1]} : vector<9x256xf32> to vector<1x256xf32>
    %265 = vector.broadcast %264 : vector<1x256xf32> to vector<3x256xf32>
    %266 = arith.mulf %263, %265 : vector<3x256xf32>
    %c12_204 = arith.constant 12 : index
    %c0_205 = arith.constant 0 : index
    %267 = vector.load %arg15[%c12_204, %c0_205] : memref<144x256xf32, #tpu.memory_space<vmem>>, vector<3x256xf32>
    tpu.vector_store %arg15[%c12_204, %c0_205], %266 {strides = array<i32>} : memref<144x256xf32, #tpu.memory_space<vmem>>, vector<3x256xf32>,
    %c0_206 = arith.constant 0 : index
    %c18_207 = arith.constant 18 : index
    %268 = vector.load %arg14[%c0_206, %c18_207] : memref<16x290xf32, #tpu.memory_space<vmem>>, vector<3x256xf32>
    %269 = vector.extract_strided_slice %3 {offsets = [5, 0], sizes = [1, 256], strides = [1, 1]} : vector<9x256xf32> to vector<1x256xf32>
    %270 = vector.broadcast %269 : vector<1x256xf32> to vector<3x256xf32>
    %271 = arith.mulf %268, %270 : vector<3x256xf32>
    %c15_208 = arith.constant 15 : index
    %c0_209 = arith.constant 0 : index
    %272 = vector.load %arg15[%c15_208, %c0_209] : memref<144x256xf32, #tpu.memory_space<vmem>>, vector<3x256xf32>
    tpu.vector_store %arg15[%c15_208, %c0_209], %271 {strides = array<i32>} : memref<144x256xf32, #tpu.memory_space<vmem>>, vector<3x256xf32>,
    %c0_210 = arith.constant 0 : index
    %c32_211 = arith.constant 32 : index
    %273 = vector.load %arg14[%c0_210, %c32_211] : memref<16x290xf32, #tpu.memory_space<vmem>>, vector<3x256xf32>
    %274 = vector.extract_strided_slice %3 {offsets = [6, 0], sizes = [1, 256], strides = [1, 1]} : vector<9x256xf32> to vector<1x256xf32>
    %275 = vector.broadcast %274 : vector<1x256xf32> to vector<3x256xf32>
    %276 = arith.mulf %273, %275 : vector<3x256xf32>
    %c18_212 = arith.constant 18 : index
    %c0_213 = arith.constant 0 : index
    %277 = vector.load %arg15[%c18_212, %c0_213] : memref<144x256xf32, #tpu.memory_space<vmem>>, vector<3x256xf32>
    tpu.vector_store %arg15[%c18_212, %c0_213], %276 {strides = array<i32>} : memref<144x256xf32, #tpu.memory_space<vmem>>, vector<3x256xf32>,
    %c0_214 = arith.constant 0 : index
    %c33_215 = arith.constant 33 : index
    %278 = vector.load %arg14[%c0_214, %c33_215] : memref<16x290xf32, #tpu.memory_space<vmem>>, vector<3x256xf32>
    %279 = vector.extract_strided_slice %3 {offsets = [7, 0], sizes = [1, 256], strides = [1, 1]} : vector<9x256xf32> to vector<1x256xf32>
    %280 = vector.broadcast %279 : vector<1x256xf32> to vector<3x256xf32>
    %281 = arith.mulf %278, %280 : vector<3x256xf32>
    %c21_216 = arith.constant 21 : index
    %c0_217 = arith.constant 0 : index
    %282 = vector.load %arg15[%c21_216, %c0_217] : memref<144x256xf32, #tpu.memory_space<vmem>>, vector<3x256xf32>
    tpu.vector_store %arg15[%c21_216, %c0_217], %281 {strides = array<i32>} : memref<144x256xf32, #tpu.memory_space<vmem>>, vector<3x256xf32>,
    %c0_218 = arith.constant 0 : index
    %c34_219 = arith.constant 34 : index
    %283 = vector.load %arg14[%c0_218, %c34_219] : memref<16x290xf32, #tpu.memory_space<vmem>>, vector<3x256xf32>
    %284 = vector.extract_strided_slice %3 {offsets = [8, 0], sizes = [1, 256], strides = [1, 1]} : vector<9x256xf32> to vector<1x256xf32>
    %285 = vector.broadcast %284 : vector<1x256xf32> to vector<3x256xf32>
    %286 = arith.mulf %283, %285 : vector<3x256xf32>
    %c24_220 = arith.constant 24 : index
    %c0_221 = arith.constant 0 : index
    %287 = vector.load %arg15[%c24_220, %c0_221] : memref<144x256xf32, #tpu.memory_space<vmem>>, vector<3x256xf32>
    tpu.vector_store %arg15[%c24_220, %c0_221], %286 {strides = array<i32>} : memref<144x256xf32, #tpu.memory_space<vmem>>, vector<3x256xf32>,
    %c0_222 = arith.constant 0 : index
    %c0_223 = arith.constant 0 : index
    %288 = vector.load %arg3[%c0_222, %c0_223] : memref<16x27xf32, #tpu.memory_space<vmem>>, vector<16x27xf32>
    %c0_224 = arith.constant 0 : index
    %c0_225 = arith.constant 0 : index
    %289 = vector.load %arg15[%c0_224, %c0_225] : memref<144x256xf32, #tpu.memory_space<vmem>>, vector<27x256xf32>
    %cst_226 = arith.constant dense<0.000000e+00> : vector<16x256xf32>
    %290 = tpu.matmul %288, %289, %cst_226 {dimension_numbers = #tpu.dot_dimension_numbers<[1], [0], [0], [1], [0, 0, 1, 1], [], []>} : vector<16x27xf32>, vector<27x256xf32>, vector<16x256xf32> -> vector<16x256xf32>
    %c0_227 = arith.constant 0 : index
    %c0_228 = arith.constant 0 : index
    %291 = vector.load %arg4[%c0_227, %c0_228] : memref<16x1xf32, #tpu.memory_space<vmem>>, vector<16x1xf32>
    %292 = vector.broadcast %291 : vector<16x1xf32> to vector<16x256xf32>
    %293 = arith.addf %290, %292 : vector<16x256xf32>
    %cst_229 = arith.constant 0.000000e+00 : f32
    %294 = vector.broadcast %cst_229 : f32 to vector<16x256xf32>
    %295 = arith.maximumf %293, %294 : vector<16x256xf32>
    %c0_230 = arith.constant 0 : index
    %c17_231 = arith.constant 17 : index
    %296 = vector.load %arg14[%c0_230, %c17_231] : memref<16x290xf32, #tpu.memory_space<vmem>>, vector<16x256xf32>
    tpu.vector_store %arg14[%c0_230, %c17_231], %295 {strides = array<i32>} : memref<16x290xf32, #tpu.memory_space<vmem>>, vector<16x256xf32>,
    %c0_232 = arith.constant 0 : index
    %c0_233 = arith.constant 0 : index
    %297 = vector.load %arg14[%c0_232, %c0_233] : memref<16x290xf32, #tpu.memory_space<vmem>>, vector<16x256xf32>
    %298 = vector.extract_strided_slice %3 {offsets = [0, 0], sizes = [1, 256], strides = [1, 1]} : vector<9x256xf32> to vector<1x256xf32>
    %299 = vector.broadcast %298 : vector<1x256xf32> to vector<16x256xf32>
    %300 = arith.mulf %297, %299 : vector<16x256xf32>
    %c0_234 = arith.constant 0 : index
    %c0_235 = arith.constant 0 : index
    %301 = vector.load %arg15[%c0_234, %c0_235] : memref<144x256xf32, #tpu.memory_space<vmem>>, vector<16x256xf32>
    tpu.vector_store %arg15[%c0_234, %c0_235], %300 {strides = array<i32>} : memref<144x256xf32, #tpu.memory_space<vmem>>, vector<16x256xf32>,
    %c0_236 = arith.constant 0 : index
    %c1_237 = arith.constant 1 : index
    %302 = vector.load %arg14[%c0_236, %c1_237] : memref<16x290xf32, #tpu.memory_space<vmem>>, vector<16x256xf32>
    %303 = vector.extract_strided_slice %3 {offsets = [1, 0], sizes = [1, 256], strides = [1, 1]} : vector<9x256xf32> to vector<1x256xf32>
    %304 = vector.broadcast %303 : vector<1x256xf32> to vector<16x256xf32>
    %305 = arith.mulf %302, %304 : vector<16x256xf32>
    %c16_238 = arith.constant 16 : index
    %c0_239 = arith.constant 0 : index
    %306 = vector.load %arg15[%c16_238, %c0_239] : memref<144x256xf32, #tpu.memory_space<vmem>>, vector<16x256xf32>
    tpu.vector_store %arg15[%c16_238, %c0_239], %305 {strides = array<i32>} : memref<144x256xf32, #tpu.memory_space<vmem>>, vector<16x256xf32>,
    %c0_240 = arith.constant 0 : index
    %c2_241 = arith.constant 2 : index
    %307 = vector.load %arg14[%c0_240, %c2_241] : memref<16x290xf32, #tpu.memory_space<vmem>>, vector<16x256xf32>
    %308 = vector.extract_strided_slice %3 {offsets = [2, 0], sizes = [1, 256], strides = [1, 1]} : vector<9x256xf32> to vector<1x256xf32>
    %309 = vector.broadcast %308 : vector<1x256xf32> to vector<16x256xf32>
    %310 = arith.mulf %307, %309 : vector<16x256xf32>
    %c32_242 = arith.constant 32 : index
    %c0_243 = arith.constant 0 : index
    %311 = vector.load %arg15[%c32_242, %c0_243] : memref<144x256xf32, #tpu.memory_space<vmem>>, vector<16x256xf32>
    tpu.vector_store %arg15[%c32_242, %c0_243], %310 {strides = array<i32>} : memref<144x256xf32, #tpu.memory_space<vmem>>, vector<16x256xf32>,
    %c0_244 = arith.constant 0 : index
    %c16_245 = arith.constant 16 : index
    %312 = vector.load %arg14[%c0_244, %c16_245] : memref<16x290xf32, #tpu.memory_space<vmem>>, vector<16x256xf32>
    %313 = vector.extract_strided_slice %3 {offsets = [3, 0], sizes = [1, 256], strides = [1, 1]} : vector<9x256xf32> to vector<1x256xf32>
    %314 = vector.broadcast %313 : vector<1x256xf32> to vector<16x256xf32>
    %315 = arith.mulf %312, %314 : vector<16x256xf32>
    %c48_246 = arith.constant 48 : index
    %c0_247 = arith.constant 0 : index
    %316 = vector.load %arg15[%c48_246, %c0_247] : memref<144x256xf32, #tpu.memory_space<vmem>>, vector<16x256xf32>
    tpu.vector_store %arg15[%c48_246, %c0_247], %315 {strides = array<i32>} : memref<144x256xf32, #tpu.memory_space<vmem>>, vector<16x256xf32>,
    %c0_248 = arith.constant 0 : index
    %c17_249 = arith.constant 17 : index
    %317 = vector.load %arg14[%c0_248, %c17_249] : memref<16x290xf32, #tpu.memory_space<vmem>>, vector<16x256xf32>
    %318 = vector.extract_strided_slice %3 {offsets = [4, 0], sizes = [1, 256], strides = [1, 1]} : vector<9x256xf32> to vector<1x256xf32>
    %319 = vector.broadcast %318 : vector<1x256xf32> to vector<16x256xf32>
    %320 = arith.mulf %317, %319 : vector<16x256xf32>
    %c64_250 = arith.constant 64 : index
    %c0_251 = arith.constant 0 : index
    %321 = vector.load %arg15[%c64_250, %c0_251] : memref<144x256xf32, #tpu.memory_space<vmem>>, vector<16x256xf32>
    tpu.vector_store %arg15[%c64_250, %c0_251], %320 {strides = array<i32>} : memref<144x256xf32, #tpu.memory_space<vmem>>, vector<16x256xf32>,
    %c0_252 = arith.constant 0 : index
    %c18_253 = arith.constant 18 : index
    %322 = vector.load %arg14[%c0_252, %c18_253] : memref<16x290xf32, #tpu.memory_space<vmem>>, vector<16x256xf32>
    %323 = vector.extract_strided_slice %3 {offsets = [5, 0], sizes = [1, 256], strides = [1, 1]} : vector<9x256xf32> to vector<1x256xf32>
    %324 = vector.broadcast %323 : vector<1x256xf32> to vector<16x256xf32>
    %325 = arith.mulf %322, %324 : vector<16x256xf32>
    %c80_254 = arith.constant 80 : index
    %c0_255 = arith.constant 0 : index
    %326 = vector.load %arg15[%c80_254, %c0_255] : memref<144x256xf32, #tpu.memory_space<vmem>>, vector<16x256xf32>
    tpu.vector_store %arg15[%c80_254, %c0_255], %325 {strides = array<i32>} : memref<144x256xf32, #tpu.memory_space<vmem>>, vector<16x256xf32>,
    %c0_256 = arith.constant 0 : index
    %c32_257 = arith.constant 32 : index
    %327 = vector.load %arg14[%c0_256, %c32_257] : memref<16x290xf32, #tpu.memory_space<vmem>>, vector<16x256xf32>
    %328 = vector.extract_strided_slice %3 {offsets = [6, 0], sizes = [1, 256], strides = [1, 1]} : vector<9x256xf32> to vector<1x256xf32>
    %329 = vector.broadcast %328 : vector<1x256xf32> to vector<16x256xf32>
    %330 = arith.mulf %327, %329 : vector<16x256xf32>
    %c96_258 = arith.constant 96 : index
    %c0_259 = arith.constant 0 : index
    %331 = vector.load %arg15[%c96_258, %c0_259] : memref<144x256xf32, #tpu.memory_space<vmem>>, vector<16x256xf32>
    tpu.vector_store %arg15[%c96_258, %c0_259], %330 {strides = array<i32>} : memref<144x256xf32, #tpu.memory_space<vmem>>, vector<16x256xf32>,
    %c0_260 = arith.constant 0 : index
    %c33_261 = arith.constant 33 : index
    %332 = vector.load %arg14[%c0_260, %c33_261] : memref<16x290xf32, #tpu.memory_space<vmem>>, vector<16x256xf32>
    %333 = vector.extract_strided_slice %3 {offsets = [7, 0], sizes = [1, 256], strides = [1, 1]} : vector<9x256xf32> to vector<1x256xf32>
    %334 = vector.broadcast %333 : vector<1x256xf32> to vector<16x256xf32>
    %335 = arith.mulf %332, %334 : vector<16x256xf32>
    %c112_262 = arith.constant 112 : index
    %c0_263 = arith.constant 0 : index
    %336 = vector.load %arg15[%c112_262, %c0_263] : memref<144x256xf32, #tpu.memory_space<vmem>>, vector<16x256xf32>
    tpu.vector_store %arg15[%c112_262, %c0_263], %335 {strides = array<i32>} : memref<144x256xf32, #tpu.memory_space<vmem>>, vector<16x256xf32>,
    %c0_264 = arith.constant 0 : index
    %c34_265 = arith.constant 34 : index
    %337 = vector.load %arg14[%c0_264, %c34_265] : memref<16x290xf32, #tpu.memory_space<vmem>>, vector<16x256xf32>
    %338 = vector.extract_strided_slice %3 {offsets = [8, 0], sizes = [1, 256], strides = [1, 1]} : vector<9x256xf32> to vector<1x256xf32>
    %339 = vector.broadcast %338 : vector<1x256xf32> to vector<16x256xf32>
    %340 = arith.mulf %337, %339 : vector<16x256xf32>
    %c128_266 = arith.constant 128 : index
    %c0_267 = arith.constant 0 : index
    %341 = vector.load %arg15[%c128_266, %c0_267] : memref<144x256xf32, #tpu.memory_space<vmem>>, vector<16x256xf32>
    tpu.vector_store %arg15[%c128_266, %c0_267], %340 {strides = array<i32>} : memref<144x256xf32, #tpu.memory_space<vmem>>, vector<16x256xf32>,
    %c0_268 = arith.constant 0 : index
    %c0_269 = arith.constant 0 : index
    %342 = vector.load %arg5[%c0_268, %c0_269] : memref<3x144xf32, #tpu.memory_space<vmem>>, vector<3x144xf32>
    %c0_270 = arith.constant 0 : index
    %c0_271 = arith.constant 0 : index
    %343 = vector.load %arg15[%c0_270, %c0_271] : memref<144x256xf32, #tpu.memory_space<vmem>>, vector<144x256xf32>
    %cst_272 = arith.constant dense<0.000000e+00> : vector<3x256xf32>
    %344 = tpu.matmul %342, %343, %cst_272 {dimension_numbers = #tpu.dot_dimension_numbers<[1], [0], [0], [1], [0, 0, 1, 1], [], []>} : vector<3x144xf32>, vector<144x256xf32>, vector<3x256xf32> -> vector<3x256xf32>
    %c0_273 = arith.constant 0 : index
    %c0_274 = arith.constant 0 : index
    %345 = vector.load %arg6[%c0_273, %c0_274] : memref<3x1xf32, #tpu.memory_space<vmem>>, vector<3x1xf32>
    %346 = vector.broadcast %345 : vector<3x1xf32> to vector<3x256xf32>
    %347 = arith.addf %344, %346 : vector<3x256xf32>
    %348 = arith.negf %347 : vector<3x256xf32>
    %349 = math.exp %348 : vector<3x256xf32>
    %cst_275 = arith.constant 1.000000e+00 : f32
    %350 = vector.broadcast %cst_275 : f32 to vector<3x256xf32>
    %351 = arith.addf %350, %349 : vector<3x256xf32>
    %352 = arith.divf %350, %351 : vector<3x256xf32>
    %353 = arith.divf %232, %352 : vector<3x256xf32>
    %cst_276 = arith.constant 0.000000e+00 : f32
    %cst_277 = arith.constant 1.000000e+00 : f32
    %354 = vector.broadcast %cst_276 : f32 to vector<3x256xf32>
    %355 = arith.maximumf %354, %353 : vector<3x256xf32>
    %356 = vector.broadcast %cst_277 : f32 to vector<3x256xf32>
    %357 = arith.minimumf %356, %355 : vector<3x256xf32>
    %c0_278 = arith.constant 0 : index
    %c17_279 = arith.constant 17 : index
    %358 = vector.load %arg14[%c0_278, %c17_279] : memref<16x290xf32, #tpu.memory_space<vmem>>, vector<3x256xf32>
    tpu.vector_store %arg14[%c0_278, %c17_279], %357 {strides = array<i32>} : memref<16x290xf32, #tpu.memory_space<vmem>>, vector<3x256xf32>,
    %c0_280 = arith.constant 0 : index
    %c0_281 = arith.constant 0 : index
    %359 = vector.load %arg14[%c0_280, %c0_281] : memref<16x290xf32, #tpu.memory_space<vmem>>, vector<3x256xf32>
    %360 = vector.extract_strided_slice %3 {offsets = [0, 0], sizes = [1, 256], strides = [1, 1]} : vector<9x256xf32> to vector<1x256xf32>
    %361 = vector.broadcast %360 : vector<1x256xf32> to vector<3x256xf32>
    %362 = arith.mulf %359, %361 : vector<3x256xf32>
    %c0_282 = arith.constant 0 : index
    %c0_283 = arith.constant 0 : index
    %363 = vector.load %arg15[%c0_282, %c0_283] : memref<144x256xf32, #tpu.memory_space<vmem>>, vector<3x256xf32>
    tpu.vector_store %arg15[%c0_282, %c0_283], %362 {strides = array<i32>} : memref<144x256xf32, #tpu.memory_space<vmem>>, vector<3x256xf32>,
    %c0_284 = arith.constant 0 : index
    %c1_285 = arith.constant 1 : index
    %364 = vector.load %arg14[%c0_284, %c1_285] : memref<16x290xf32, #tpu.memory_space<vmem>>, vector<3x256xf32>
    %365 = vector.extract_strided_slice %3 {offsets = [1, 0], sizes = [1, 256], strides = [1, 1]} : vector<9x256xf32> to vector<1x256xf32>
    %366 = vector.broadcast %365 : vector<1x256xf32> to vector<3x256xf32>
    %367 = arith.mulf %364, %366 : vector<3x256xf32>
    %c3_286 = arith.constant 3 : index
    %c0_287 = arith.constant 0 : index
    %368 = vector.load %arg15[%c3_286, %c0_287] : memref<144x256xf32, #tpu.memory_space<vmem>>, vector<3x256xf32>
    tpu.vector_store %arg15[%c3_286, %c0_287], %367 {strides = array<i32>} : memref<144x256xf32, #tpu.memory_space<vmem>>, vector<3x256xf32>,
    %c0_288 = arith.constant 0 : index
    %c2_289 = arith.constant 2 : index
    %369 = vector.load %arg14[%c0_288, %c2_289] : memref<16x290xf32, #tpu.memory_space<vmem>>, vector<3x256xf32>
    %370 = vector.extract_strided_slice %3 {offsets = [2, 0], sizes = [1, 256], strides = [1, 1]} : vector<9x256xf32> to vector<1x256xf32>
    %371 = vector.broadcast %370 : vector<1x256xf32> to vector<3x256xf32>
    %372 = arith.mulf %369, %371 : vector<3x256xf32>
    %c6_290 = arith.constant 6 : index
    %c0_291 = arith.constant 0 : index
    %373 = vector.load %arg15[%c6_290, %c0_291] : memref<144x256xf32, #tpu.memory_space<vmem>>, vector<3x256xf32>
    tpu.vector_store %arg15[%c6_290, %c0_291], %372 {strides = array<i32>} : memref<144x256xf32, #tpu.memory_space<vmem>>, vector<3x256xf32>,
    %c0_292 = arith.constant 0 : index
    %c16_293 = arith.constant 16 : index
    %374 = vector.load %arg14[%c0_292, %c16_293] : memref<16x290xf32, #tpu.memory_space<vmem>>, vector<3x256xf32>
    %375 = vector.extract_strided_slice %3 {offsets = [3, 0], sizes = [1, 256], strides = [1, 1]} : vector<9x256xf32> to vector<1x256xf32>
    %376 = vector.broadcast %375 : vector<1x256xf32> to vector<3x256xf32>
    %377 = arith.mulf %374, %376 : vector<3x256xf32>
    %c9_294 = arith.constant 9 : index
    %c0_295 = arith.constant 0 : index
    %378 = vector.load %arg15[%c9_294, %c0_295] : memref<144x256xf32, #tpu.memory_space<vmem>>, vector<3x256xf32>
    tpu.vector_store %arg15[%c9_294, %c0_295], %377 {strides = array<i32>} : memref<144x256xf32, #tpu.memory_space<vmem>>, vector<3x256xf32>,
    %c0_296 = arith.constant 0 : index
    %c17_297 = arith.constant 17 : index
    %379 = vector.load %arg14[%c0_296, %c17_297] : memref<16x290xf32, #tpu.memory_space<vmem>>, vector<3x256xf32>
    %380 = vector.extract_strided_slice %3 {offsets = [4, 0], sizes = [1, 256], strides = [1, 1]} : vector<9x256xf32> to vector<1x256xf32>
    %381 = vector.broadcast %380 : vector<1x256xf32> to vector<3x256xf32>
    %382 = arith.mulf %379, %381 : vector<3x256xf32>
    %c12_298 = arith.constant 12 : index
    %c0_299 = arith.constant 0 : index
    %383 = vector.load %arg15[%c12_298, %c0_299] : memref<144x256xf32, #tpu.memory_space<vmem>>, vector<3x256xf32>
    tpu.vector_store %arg15[%c12_298, %c0_299], %382 {strides = array<i32>} : memref<144x256xf32, #tpu.memory_space<vmem>>, vector<3x256xf32>,
    %c0_300 = arith.constant 0 : index
    %c18_301 = arith.constant 18 : index
    %384 = vector.load %arg14[%c0_300, %c18_301] : memref<16x290xf32, #tpu.memory_space<vmem>>, vector<3x256xf32>
    %385 = vector.extract_strided_slice %3 {offsets = [5, 0], sizes = [1, 256], strides = [1, 1]} : vector<9x256xf32> to vector<1x256xf32>
    %386 = vector.broadcast %385 : vector<1x256xf32> to vector<3x256xf32>
    %387 = arith.mulf %384, %386 : vector<3x256xf32>
    %c15_302 = arith.constant 15 : index
    %c0_303 = arith.constant 0 : index
    %388 = vector.load %arg15[%c15_302, %c0_303] : memref<144x256xf32, #tpu.memory_space<vmem>>, vector<3x256xf32>
    tpu.vector_store %arg15[%c15_302, %c0_303], %387 {strides = array<i32>} : memref<144x256xf32, #tpu.memory_space<vmem>>, vector<3x256xf32>,
    %c0_304 = arith.constant 0 : index
    %c32_305 = arith.constant 32 : index
    %389 = vector.load %arg14[%c0_304, %c32_305] : memref<16x290xf32, #tpu.memory_space<vmem>>, vector<3x256xf32>
    %390 = vector.extract_strided_slice %3 {offsets = [6, 0], sizes = [1, 256], strides = [1, 1]} : vector<9x256xf32> to vector<1x256xf32>
    %391 = vector.broadcast %390 : vector<1x256xf32> to vector<3x256xf32>
    %392 = arith.mulf %389, %391 : vector<3x256xf32>
    %c18_306 = arith.constant 18 : index
    %c0_307 = arith.constant 0 : index
    %393 = vector.load %arg15[%c18_306, %c0_307] : memref<144x256xf32, #tpu.memory_space<vmem>>, vector<3x256xf32>
    tpu.vector_store %arg15[%c18_306, %c0_307], %392 {strides = array<i32>} : memref<144x256xf32, #tpu.memory_space<vmem>>, vector<3x256xf32>,
    %c0_308 = arith.constant 0 : index
    %c33_309 = arith.constant 33 : index
    %394 = vector.load %arg14[%c0_308, %c33_309] : memref<16x290xf32, #tpu.memory_space<vmem>>, vector<3x256xf32>
    %395 = vector.extract_strided_slice %3 {offsets = [7, 0], sizes = [1, 256], strides = [1, 1]} : vector<9x256xf32> to vector<1x256xf32>
    %396 = vector.broadcast %395 : vector<1x256xf32> to vector<3x256xf32>
    %397 = arith.mulf %394, %396 : vector<3x256xf32>
    %c21_310 = arith.constant 21 : index
    %c0_311 = arith.constant 0 : index
    %398 = vector.load %arg15[%c21_310, %c0_311] : memref<144x256xf32, #tpu.memory_space<vmem>>, vector<3x256xf32>
    tpu.vector_store %arg15[%c21_310, %c0_311], %397 {strides = array<i32>} : memref<144x256xf32, #tpu.memory_space<vmem>>, vector<3x256xf32>,
    %c0_312 = arith.constant 0 : index
    %c34_313 = arith.constant 34 : index
    %399 = vector.load %arg14[%c0_312, %c34_313] : memref<16x290xf32, #tpu.memory_space<vmem>>, vector<3x256xf32>
    %400 = vector.extract_strided_slice %3 {offsets = [8, 0], sizes = [1, 256], strides = [1, 1]} : vector<9x256xf32> to vector<1x256xf32>
    %401 = vector.broadcast %400 : vector<1x256xf32> to vector<3x256xf32>
    %402 = arith.mulf %399, %401 : vector<3x256xf32>
    %c24_314 = arith.constant 24 : index
    %c0_315 = arith.constant 0 : index
    %403 = vector.load %arg15[%c24_314, %c0_315] : memref<144x256xf32, #tpu.memory_space<vmem>>, vector<3x256xf32>
    tpu.vector_store %arg15[%c24_314, %c0_315], %402 {strides = array<i32>} : memref<144x256xf32, #tpu.memory_space<vmem>>, vector<3x256xf32>,
    %c0_316 = arith.constant 0 : index
    %c0_317 = arith.constant 0 : index
    %404 = vector.load %arg7[%c0_316, %c0_317] : memref<16x27xf32, #tpu.memory_space<vmem>>, vector<16x27xf32>
    %c0_318 = arith.constant 0 : index
    %c0_319 = arith.constant 0 : index
    %405 = vector.load %arg15[%c0_318, %c0_319] : memref<144x256xf32, #tpu.memory_space<vmem>>, vector<27x256xf32>
    %cst_320 = arith.constant dense<0.000000e+00> : vector<16x256xf32>
    %406 = tpu.matmul %404, %405, %cst_320 {dimension_numbers = #tpu.dot_dimension_numbers<[1], [0], [0], [1], [0, 0, 1, 1], [], []>} : vector<16x27xf32>, vector<27x256xf32>, vector<16x256xf32> -> vector<16x256xf32>
    %c0_321 = arith.constant 0 : index
    %c0_322 = arith.constant 0 : index
    %407 = vector.load %arg8[%c0_321, %c0_322] : memref<16x1xf32, #tpu.memory_space<vmem>>, vector<16x1xf32>
    %408 = vector.broadcast %407 : vector<16x1xf32> to vector<16x256xf32>
    %409 = arith.addf %406, %408 : vector<16x256xf32>
    %cst_323 = arith.constant 0.000000e+00 : f32
    %410 = vector.broadcast %cst_323 : f32 to vector<16x256xf32>
    %411 = arith.maximumf %409, %410 : vector<16x256xf32>
    %c0_324 = arith.constant 0 : index
    %c17_325 = arith.constant 17 : index
    %412 = vector.load %arg14[%c0_324, %c17_325] : memref<16x290xf32, #tpu.memory_space<vmem>>, vector<16x256xf32>
    tpu.vector_store %arg14[%c0_324, %c17_325], %411 {strides = array<i32>} : memref<16x290xf32, #tpu.memory_space<vmem>>, vector<16x256xf32>,
    %c0_326 = arith.constant 0 : index
    %c0_327 = arith.constant 0 : index
    %413 = vector.load %arg14[%c0_326, %c0_327] : memref<16x290xf32, #tpu.memory_space<vmem>>, vector<16x256xf32>
    %414 = vector.extract_strided_slice %3 {offsets = [0, 0], sizes = [1, 256], strides = [1, 1]} : vector<9x256xf32> to vector<1x256xf32>
    %415 = vector.broadcast %414 : vector<1x256xf32> to vector<16x256xf32>
    %416 = arith.mulf %413, %415 : vector<16x256xf32>
    %c0_328 = arith.constant 0 : index
    %c0_329 = arith.constant 0 : index
    %417 = vector.load %arg15[%c0_328, %c0_329] : memref<144x256xf32, #tpu.memory_space<vmem>>, vector<16x256xf32>
    tpu.vector_store %arg15[%c0_328, %c0_329], %416 {strides = array<i32>} : memref<144x256xf32, #tpu.memory_space<vmem>>, vector<16x256xf32>,
    %c0_330 = arith.constant 0 : index
    %c1_331 = arith.constant 1 : index
    %418 = vector.load %arg14[%c0_330, %c1_331] : memref<16x290xf32, #tpu.memory_space<vmem>>, vector<16x256xf32>
    %419 = vector.extract_strided_slice %3 {offsets = [1, 0], sizes = [1, 256], strides = [1, 1]} : vector<9x256xf32> to vector<1x256xf32>
    %420 = vector.broadcast %419 : vector<1x256xf32> to vector<16x256xf32>
    %421 = arith.mulf %418, %420 : vector<16x256xf32>
    %c16_332 = arith.constant 16 : index
    %c0_333 = arith.constant 0 : index
    %422 = vector.load %arg15[%c16_332, %c0_333] : memref<144x256xf32, #tpu.memory_space<vmem>>, vector<16x256xf32>
    tpu.vector_store %arg15[%c16_332, %c0_333], %421 {strides = array<i32>} : memref<144x256xf32, #tpu.memory_space<vmem>>, vector<16x256xf32>,
    %c0_334 = arith.constant 0 : index
    %c2_335 = arith.constant 2 : index
    %423 = vector.load %arg14[%c0_334, %c2_335] : memref<16x290xf32, #tpu.memory_space<vmem>>, vector<16x256xf32>
    %424 = vector.extract_strided_slice %3 {offsets = [2, 0], sizes = [1, 256], strides = [1, 1]} : vector<9x256xf32> to vector<1x256xf32>
    %425 = vector.broadcast %424 : vector<1x256xf32> to vector<16x256xf32>
    %426 = arith.mulf %423, %425 : vector<16x256xf32>
    %c32_336 = arith.constant 32 : index
    %c0_337 = arith.constant 0 : index
    %427 = vector.load %arg15[%c32_336, %c0_337] : memref<144x256xf32, #tpu.memory_space<vmem>>, vector<16x256xf32>
    tpu.vector_store %arg15[%c32_336, %c0_337], %426 {strides = array<i32>} : memref<144x256xf32, #tpu.memory_space<vmem>>, vector<16x256xf32>,
    %c0_338 = arith.constant 0 : index
    %c16_339 = arith.constant 16 : index
    %428 = vector.load %arg14[%c0_338, %c16_339] : memref<16x290xf32, #tpu.memory_space<vmem>>, vector<16x256xf32>
    %429 = vector.extract_strided_slice %3 {offsets = [3, 0], sizes = [1, 256], strides = [1, 1]} : vector<9x256xf32> to vector<1x256xf32>
    %430 = vector.broadcast %429 : vector<1x256xf32> to vector<16x256xf32>
    %431 = arith.mulf %428, %430 : vector<16x256xf32>
    %c48_340 = arith.constant 48 : index
    %c0_341 = arith.constant 0 : index
    %432 = vector.load %arg15[%c48_340, %c0_341] : memref<144x256xf32, #tpu.memory_space<vmem>>, vector<16x256xf32>
    tpu.vector_store %arg15[%c48_340, %c0_341], %431 {strides = array<i32>} : memref<144x256xf32, #tpu.memory_space<vmem>>, vector<16x256xf32>,
    %c0_342 = arith.constant 0 : index
    %c17_343 = arith.constant 17 : index
    %433 = vector.load %arg14[%c0_342, %c17_343] : memref<16x290xf32, #tpu.memory_space<vmem>>, vector<16x256xf32>
    %434 = vector.extract_strided_slice %3 {offsets = [4, 0], sizes = [1, 256], strides = [1, 1]} : vector<9x256xf32> to vector<1x256xf32>
    %435 = vector.broadcast %434 : vector<1x256xf32> to vector<16x256xf32>
    %436 = arith.mulf %433, %435 : vector<16x256xf32>
    %c64_344 = arith.constant 64 : index
    %c0_345 = arith.constant 0 : index
    %437 = vector.load %arg15[%c64_344, %c0_345] : memref<144x256xf32, #tpu.memory_space<vmem>>, vector<16x256xf32>
    tpu.vector_store %arg15[%c64_344, %c0_345], %436 {strides = array<i32>} : memref<144x256xf32, #tpu.memory_space<vmem>>, vector<16x256xf32>,
    %c0_346 = arith.constant 0 : index
    %c18_347 = arith.constant 18 : index
    %438 = vector.load %arg14[%c0_346, %c18_347] : memref<16x290xf32, #tpu.memory_space<vmem>>, vector<16x256xf32>
    %439 = vector.extract_strided_slice %3 {offsets = [5, 0], sizes = [1, 256], strides = [1, 1]} : vector<9x256xf32> to vector<1x256xf32>
    %440 = vector.broadcast %439 : vector<1x256xf32> to vector<16x256xf32>
    %441 = arith.mulf %438, %440 : vector<16x256xf32>
    %c80_348 = arith.constant 80 : index
    %c0_349 = arith.constant 0 : index
    %442 = vector.load %arg15[%c80_348, %c0_349] : memref<144x256xf32, #tpu.memory_space<vmem>>, vector<16x256xf32>
    tpu.vector_store %arg15[%c80_348, %c0_349], %441 {strides = array<i32>} : memref<144x256xf32, #tpu.memory_space<vmem>>, vector<16x256xf32>,
    %c0_350 = arith.constant 0 : index
    %c32_351 = arith.constant 32 : index
    %443 = vector.load %arg14[%c0_350, %c32_351] : memref<16x290xf32, #tpu.memory_space<vmem>>, vector<16x256xf32>
    %444 = vector.extract_strided_slice %3 {offsets = [6, 0], sizes = [1, 256], strides = [1, 1]} : vector<9x256xf32> to vector<1x256xf32>
    %445 = vector.broadcast %444 : vector<1x256xf32> to vector<16x256xf32>
    %446 = arith.mulf %443, %445 : vector<16x256xf32>
    %c96_352 = arith.constant 96 : index
    %c0_353 = arith.constant 0 : index
    %447 = vector.load %arg15[%c96_352, %c0_353] : memref<144x256xf32, #tpu.memory_space<vmem>>, vector<16x256xf32>
    tpu.vector_store %arg15[%c96_352, %c0_353], %446 {strides = array<i32>} : memref<144x256xf32, #tpu.memory_space<vmem>>, vector<16x256xf32>,
    %c0_354 = arith.constant 0 : index
    %c33_355 = arith.constant 33 : index
    %448 = vector.load %arg14[%c0_354, %c33_355] : memref<16x290xf32, #tpu.memory_space<vmem>>, vector<16x256xf32>
    %449 = vector.extract_strided_slice %3 {offsets = [7, 0], sizes = [1, 256], strides = [1, 1]} : vector<9x256xf32> to vector<1x256xf32>
    %450 = vector.broadcast %449 : vector<1x256xf32> to vector<16x256xf32>
    %451 = arith.mulf %448, %450 : vector<16x256xf32>
    %c112_356 = arith.constant 112 : index
    %c0_357 = arith.constant 0 : index
    %452 = vector.load %arg15[%c112_356, %c0_357] : memref<144x256xf32, #tpu.memory_space<vmem>>, vector<16x256xf32>
    tpu.vector_store %arg15[%c112_356, %c0_357], %451 {strides = array<i32>} : memref<144x256xf32, #tpu.memory_space<vmem>>, vector<16x256xf32>,
    %c0_358 = arith.constant 0 : index
    %c34_359 = arith.constant 34 : index
    %453 = vector.load %arg14[%c0_358, %c34_359] : memref<16x290xf32, #tpu.memory_space<vmem>>, vector<16x256xf32>
    %454 = vector.extract_strided_slice %3 {offsets = [8, 0], sizes = [1, 256], strides = [1, 1]} : vector<9x256xf32> to vector<1x256xf32>
    %455 = vector.broadcast %454 : vector<1x256xf32> to vector<16x256xf32>
    %456 = arith.mulf %453, %455 : vector<16x256xf32>
    %c128_360 = arith.constant 128 : index
    %c0_361 = arith.constant 0 : index
    %457 = vector.load %arg15[%c128_360, %c0_361] : memref<144x256xf32, #tpu.memory_space<vmem>>, vector<16x256xf32>
    tpu.vector_store %arg15[%c128_360, %c0_361], %456 {strides = array<i32>} : memref<144x256xf32, #tpu.memory_space<vmem>>, vector<16x256xf32>,
    %c0_362 = arith.constant 0 : index
    %c0_363 = arith.constant 0 : index
    %458 = vector.load %arg9[%c0_362, %c0_363] : memref<3x144xf32, #tpu.memory_space<vmem>>, vector<3x144xf32>
    %c0_364 = arith.constant 0 : index
    %c0_365 = arith.constant 0 : index
    %459 = vector.load %arg15[%c0_364, %c0_365] : memref<144x256xf32, #tpu.memory_space<vmem>>, vector<144x256xf32>
    %cst_366 = arith.constant dense<0.000000e+00> : vector<3x256xf32>
    %460 = tpu.matmul %458, %459, %cst_366 {dimension_numbers = #tpu.dot_dimension_numbers<[1], [0], [0], [1], [0, 0, 1, 1], [], []>} : vector<3x144xf32>, vector<144x256xf32>, vector<3x256xf32> -> vector<3x256xf32>
    %c0_367 = arith.constant 0 : index
    %c0_368 = arith.constant 0 : index
    %461 = vector.load %arg10[%c0_367, %c0_368] : memref<3x1xf32, #tpu.memory_space<vmem>>, vector<3x1xf32>
    %462 = vector.broadcast %461 : vector<3x1xf32> to vector<3x256xf32>
    %463 = arith.addf %460, %462 : vector<3x256xf32>
    %464 = arith.negf %463 : vector<3x256xf32>
    %465 = math.exp %464 : vector<3x256xf32>
    %cst_369 = arith.constant 1.000000e+00 : f32
    %466 = vector.broadcast %cst_369 : f32 to vector<3x256xf32>
    %467 = arith.addf %466, %465 : vector<3x256xf32>
    %468 = arith.divf %466, %467 : vector<3x256xf32>
    %c0_370 = arith.constant 0 : index
    %c1_371 = arith.constant 1 : index
    %c0_372 = arith.constant 0 : index
    %c0_373 = arith.constant 0 : index
    %469 = vector.load %arg12[%c0_370, %c1_371, %c0_372, %c0_373] : memref<1x3x3x256xf32, #tpu.memory_space<vmem>>, vector<1x1x3x256xf32>
    %470 = vector.shape_cast %469 : vector<1x1x3x256xf32> to vector<3x256xf32>
    %471 = vector.shape_cast %352 : vector<3x256xf32> to vector<1x1x3x256xf32>
    tpu.vector_store %arg12[%c0_370, %c1_371, %c0_372, %c0_373], %471 {strides = array<i32>} : memref<1x3x3x256xf32, #tpu.memory_space<vmem>>, vector<1x1x3x256xf32>,
    %c0_374 = arith.constant 0 : index
    %c1_375 = arith.constant 1 : index
    %c0_376 = arith.constant 0 : index
    %c0_377 = arith.constant 0 : index
    %472 = vector.load %arg13[%c0_374, %c1_375, %c0_376, %c0_377] : memref<1x3x3x256xf32, #tpu.memory_space<vmem>>, vector<1x1x3x256xf32>
    %473 = vector.shape_cast %472 : vector<1x1x3x256xf32> to vector<3x256xf32>
    %474 = vector.shape_cast %357 : vector<3x256xf32> to vector<1x1x3x256xf32>
    tpu.vector_store %arg13[%c0_374, %c1_375, %c0_376, %c0_377], %474 {strides = array<i32>} : memref<1x3x3x256xf32, #tpu.memory_space<vmem>>, vector<1x1x3x256xf32>,
    %c0_378 = arith.constant 0 : index
    %c1_379 = arith.constant 1 : index
    %c0_380 = arith.constant 0 : index
    %c0_381 = arith.constant 0 : index
    %475 = vector.load %arg11[%c0_378, %c1_379, %c0_380, %c0_381] : memref<1x3x3x256xf32, #tpu.memory_space<vmem>>, vector<1x1x3x256xf32>
    %476 = vector.shape_cast %475 : vector<1x1x3x256xf32> to vector<3x256xf32>
    %477 = vector.shape_cast %468 : vector<3x256xf32> to vector<1x1x3x256xf32>
    tpu.vector_store %arg11[%c0_378, %c1_379, %c0_380, %c0_381], %477 {strides = array<i32>} : memref<1x3x3x256xf32, #tpu.memory_space<vmem>>, vector<1x1x3x256xf32>,
    %c0_382 = arith.constant 0 : index
    %c17_383 = arith.constant 17 : index
    %478 = vector.load %arg14[%c0_382, %c17_383] : memref<16x290xf32, #tpu.memory_space<vmem>>, vector<3x256xf32>
    tpu.vector_store %arg14[%c0_382, %c17_383], %468 {strides = array<i32>} : memref<16x290xf32, #tpu.memory_space<vmem>>, vector<3x256xf32>,
    %c0_384 = arith.constant 0 : index
    %c0_385 = arith.constant 0 : index
    %479 = vector.load %arg14[%c0_384, %c0_385] : memref<16x290xf32, #tpu.memory_space<vmem>>, vector<3x256xf32>
    %480 = vector.extract_strided_slice %3 {offsets = [0, 0], sizes = [1, 256], strides = [1, 1]} : vector<9x256xf32> to vector<1x256xf32>
    %481 = vector.broadcast %480 : vector<1x256xf32> to vector<3x256xf32>
    %482 = arith.mulf %479, %481 : vector<3x256xf32>
    %c0_386 = arith.constant 0 : index
    %c0_387 = arith.constant 0 : index
    %483 = vector.load %arg15[%c0_386, %c0_387] : memref<144x256xf32, #tpu.memory_space<vmem>>, vector<3x256xf32>
    tpu.vector_store %arg15[%c0_386, %c0_387], %482 {strides = array<i32>} : memref<144x256xf32, #tpu.memory_space<vmem>>, vector<3x256xf32>,
    %c0_388 = arith.constant 0 : index
    %c1_389 = arith.constant 1 : index
    %484 = vector.load %arg14[%c0_388, %c1_389] : memref<16x290xf32, #tpu.memory_space<vmem>>, vector<3x256xf32>
    %485 = vector.extract_strided_slice %3 {offsets = [1, 0], sizes = [1, 256], strides = [1, 1]} : vector<9x256xf32> to vector<1x256xf32>
    %486 = vector.broadcast %485 : vector<1x256xf32> to vector<3x256xf32>
    %487 = arith.mulf %484, %486 : vector<3x256xf32>
    %c3_390 = arith.constant 3 : index
    %c0_391 = arith.constant 0 : index
    %488 = vector.load %arg15[%c3_390, %c0_391] : memref<144x256xf32, #tpu.memory_space<vmem>>, vector<3x256xf32>
    tpu.vector_store %arg15[%c3_390, %c0_391], %487 {strides = array<i32>} : memref<144x256xf32, #tpu.memory_space<vmem>>, vector<3x256xf32>,
    %c0_392 = arith.constant 0 : index
    %c2_393 = arith.constant 2 : index
    %489 = vector.load %arg14[%c0_392, %c2_393] : memref<16x290xf32, #tpu.memory_space<vmem>>, vector<3x256xf32>
    %490 = vector.extract_strided_slice %3 {offsets = [2, 0], sizes = [1, 256], strides = [1, 1]} : vector<9x256xf32> to vector<1x256xf32>
    %491 = vector.broadcast %490 : vector<1x256xf32> to vector<3x256xf32>
    %492 = arith.mulf %489, %491 : vector<3x256xf32>
    %c6_394 = arith.constant 6 : index
    %c0_395 = arith.constant 0 : index
    %493 = vector.load %arg15[%c6_394, %c0_395] : memref<144x256xf32, #tpu.memory_space<vmem>>, vector<3x256xf32>
    tpu.vector_store %arg15[%c6_394, %c0_395], %492 {strides = array<i32>} : memref<144x256xf32, #tpu.memory_space<vmem>>, vector<3x256xf32>,
    %c0_396 = arith.constant 0 : index
    %c16_397 = arith.constant 16 : index
    %494 = vector.load %arg14[%c0_396, %c16_397] : memref<16x290xf32, #tpu.memory_space<vmem>>, vector<3x256xf32>
    %495 = vector.extract_strided_slice %3 {offsets = [3, 0], sizes = [1, 256], strides = [1, 1]} : vector<9x256xf32> to vector<1x256xf32>
    %496 = vector.broadcast %495 : vector<1x256xf32> to vector<3x256xf32>
    %497 = arith.mulf %494, %496 : vector<3x256xf32>
    %c9_398 = arith.constant 9 : index
    %c0_399 = arith.constant 0 : index
    %498 = vector.load %arg15[%c9_398, %c0_399] : memref<144x256xf32, #tpu.memory_space<vmem>>, vector<3x256xf32>
    tpu.vector_store %arg15[%c9_398, %c0_399], %497 {strides = array<i32>} : memref<144x256xf32, #tpu.memory_space<vmem>>, vector<3x256xf32>,
    %c0_400 = arith.constant 0 : index
    %c17_401 = arith.constant 17 : index
    %499 = vector.load %arg14[%c0_400, %c17_401] : memref<16x290xf32, #tpu.memory_space<vmem>>, vector<3x256xf32>
    %500 = vector.extract_strided_slice %3 {offsets = [4, 0], sizes = [1, 256], strides = [1, 1]} : vector<9x256xf32> to vector<1x256xf32>
    %501 = vector.broadcast %500 : vector<1x256xf32> to vector<3x256xf32>
    %502 = arith.mulf %499, %501 : vector<3x256xf32>
    %c12_402 = arith.constant 12 : index
    %c0_403 = arith.constant 0 : index
    %503 = vector.load %arg15[%c12_402, %c0_403] : memref<144x256xf32, #tpu.memory_space<vmem>>, vector<3x256xf32>
    tpu.vector_store %arg15[%c12_402, %c0_403], %502 {strides = array<i32>} : memref<144x256xf32, #tpu.memory_space<vmem>>, vector<3x256xf32>,
    %c0_404 = arith.constant 0 : index
    %c18_405 = arith.constant 18 : index
    %504 = vector.load %arg14[%c0_404, %c18_405] : memref<16x290xf32, #tpu.memory_space<vmem>>, vector<3x256xf32>
    %505 = vector.extract_strided_slice %3 {offsets = [5, 0], sizes = [1, 256], strides = [1, 1]} : vector<9x256xf32> to vector<1x256xf32>
    %506 = vector.broadcast %505 : vector<1x256xf32> to vector<3x256xf32>
    %507 = arith.mulf %504, %506 : vector<3x256xf32>
    %c15_406 = arith.constant 15 : index
    %c0_407 = arith.constant 0 : index
    %508 = vector.load %arg15[%c15_406, %c0_407] : memref<144x256xf32, #tpu.memory_space<vmem>>, vector<3x256xf32>
    tpu.vector_store %arg15[%c15_406, %c0_407], %507 {strides = array<i32>} : memref<144x256xf32, #tpu.memory_space<vmem>>, vector<3x256xf32>,
    %c0_408 = arith.constant 0 : index
    %c32_409 = arith.constant 32 : index
    %509 = vector.load %arg14[%c0_408, %c32_409] : memref<16x290xf32, #tpu.memory_space<vmem>>, vector<3x256xf32>
    %510 = vector.extract_strided_slice %3 {offsets = [6, 0], sizes = [1, 256], strides = [1, 1]} : vector<9x256xf32> to vector<1x256xf32>
    %511 = vector.broadcast %510 : vector<1x256xf32> to vector<3x256xf32>
    %512 = arith.mulf %509, %511 : vector<3x256xf32>
    %c18_410 = arith.constant 18 : index
    %c0_411 = arith.constant 0 : index
    %513 = vector.load %arg15[%c18_410, %c0_411] : memref<144x256xf32, #tpu.memory_space<vmem>>, vector<3x256xf32>
    tpu.vector_store %arg15[%c18_410, %c0_411], %512 {strides = array<i32>} : memref<144x256xf32, #tpu.memory_space<vmem>>, vector<3x256xf32>,
    %c0_412 = arith.constant 0 : index
    %c33_413 = arith.constant 33 : index
    %514 = vector.load %arg14[%c0_412, %c33_413] : memref<16x290xf32, #tpu.memory_space<vmem>>, vector<3x256xf32>
    %515 = vector.extract_strided_slice %3 {offsets = [7, 0], sizes = [1, 256], strides = [1, 1]} : vector<9x256xf32> to vector<1x256xf32>
    %516 = vector.broadcast %515 : vector<1x256xf32> to vector<3x256xf32>
    %517 = arith.mulf %514, %516 : vector<3x256xf32>
    %c21_414 = arith.constant 21 : index
    %c0_415 = arith.constant 0 : index
    %518 = vector.load %arg15[%c21_414, %c0_415] : memref<144x256xf32, #tpu.memory_space<vmem>>, vector<3x256xf32>
    tpu.vector_store %arg15[%c21_414, %c0_415], %517 {strides = array<i32>} : memref<144x256xf32, #tpu.memory_space<vmem>>, vector<3x256xf32>,
    %c0_416 = arith.constant 0 : index
    %c34_417 = arith.constant 34 : index
    %519 = vector.load %arg14[%c0_416, %c34_417] : memref<16x290xf32, #tpu.memory_space<vmem>>, vector<3x256xf32>
    %520 = vector.extract_strided_slice %3 {offsets = [8, 0], sizes = [1, 256], strides = [1, 1]} : vector<9x256xf32> to vector<1x256xf32>
    %521 = vector.broadcast %520 : vector<1x256xf32> to vector<3x256xf32>
    %522 = arith.mulf %519, %521 : vector<3x256xf32>
    %c24_418 = arith.constant 24 : index
    %c0_419 = arith.constant 0 : index
    %523 = vector.load %arg15[%c24_418, %c0_419] : memref<144x256xf32, #tpu.memory_space<vmem>>, vector<3x256xf32>
    tpu.vector_store %arg15[%c24_418, %c0_419], %522 {strides = array<i32>} : memref<144x256xf32, #tpu.memory_space<vmem>>, vector<3x256xf32>,
    %c0_420 = arith.constant 0 : index
    %c0_421 = arith.constant 0 : index
    %524 = vector.load %arg3[%c0_420, %c0_421] : memref<16x27xf32, #tpu.memory_space<vmem>>, vector<16x27xf32>
    %c0_422 = arith.constant 0 : index
    %c0_423 = arith.constant 0 : index
    %525 = vector.load %arg15[%c0_422, %c0_423] : memref<144x256xf32, #tpu.memory_space<vmem>>, vector<27x256xf32>
    %cst_424 = arith.constant dense<0.000000e+00> : vector<16x256xf32>
    %526 = tpu.matmul %524, %525, %cst_424 {dimension_numbers = #tpu.dot_dimension_numbers<[1], [0], [0], [1], [0, 0, 1, 1], [], []>} : vector<16x27xf32>, vector<27x256xf32>, vector<16x256xf32> -> vector<16x256xf32>
    %c0_425 = arith.constant 0 : index
    %c0_426 = arith.constant 0 : index
    %527 = vector.load %arg4[%c0_425, %c0_426] : memref<16x1xf32, #tpu.memory_space<vmem>>, vector<16x1xf32>
    %528 = vector.broadcast %527 : vector<16x1xf32> to vector<16x256xf32>
    %529 = arith.addf %526, %528 : vector<16x256xf32>
    %cst_427 = arith.constant 0.000000e+00 : f32
    %530 = vector.broadcast %cst_427 : f32 to vector<16x256xf32>
    %531 = arith.maximumf %529, %530 : vector<16x256xf32>
    %c0_428 = arith.constant 0 : index
    %c17_429 = arith.constant 17 : index
    %532 = vector.load %arg14[%c0_428, %c17_429] : memref<16x290xf32, #tpu.memory_space<vmem>>, vector<16x256xf32>
    tpu.vector_store %arg14[%c0_428, %c17_429], %531 {strides = array<i32>} : memref<16x290xf32, #tpu.memory_space<vmem>>, vector<16x256xf32>,
    %c0_430 = arith.constant 0 : index
    %c0_431 = arith.constant 0 : index
    %533 = vector.load %arg14[%c0_430, %c0_431] : memref<16x290xf32, #tpu.memory_space<vmem>>, vector<16x256xf32>
    %534 = vector.extract_strided_slice %3 {offsets = [0, 0], sizes = [1, 256], strides = [1, 1]} : vector<9x256xf32> to vector<1x256xf32>
    %535 = vector.broadcast %534 : vector<1x256xf32> to vector<16x256xf32>
    %536 = arith.mulf %533, %535 : vector<16x256xf32>
    %c0_432 = arith.constant 0 : index
    %c0_433 = arith.constant 0 : index
    %537 = vector.load %arg15[%c0_432, %c0_433] : memref<144x256xf32, #tpu.memory_space<vmem>>, vector<16x256xf32>
    tpu.vector_store %arg15[%c0_432, %c0_433], %536 {strides = array<i32>} : memref<144x256xf32, #tpu.memory_space<vmem>>, vector<16x256xf32>,
    %c0_434 = arith.constant 0 : index
    %c1_435 = arith.constant 1 : index
    %538 = vector.load %arg14[%c0_434, %c1_435] : memref<16x290xf32, #tpu.memory_space<vmem>>, vector<16x256xf32>
    %539 = vector.extract_strided_slice %3 {offsets = [1, 0], sizes = [1, 256], strides = [1, 1]} : vector<9x256xf32> to vector<1x256xf32>
    %540 = vector.broadcast %539 : vector<1x256xf32> to vector<16x256xf32>
    %541 = arith.mulf %538, %540 : vector<16x256xf32>
    %c16_436 = arith.constant 16 : index
    %c0_437 = arith.constant 0 : index
    %542 = vector.load %arg15[%c16_436, %c0_437] : memref<144x256xf32, #tpu.memory_space<vmem>>, vector<16x256xf32>
    tpu.vector_store %arg15[%c16_436, %c0_437], %541 {strides = array<i32>} : memref<144x256xf32, #tpu.memory_space<vmem>>, vector<16x256xf32>,
    %c0_438 = arith.constant 0 : index
    %c2_439 = arith.constant 2 : index
    %543 = vector.load %arg14[%c0_438, %c2_439] : memref<16x290xf32, #tpu.memory_space<vmem>>, vector<16x256xf32>
    %544 = vector.extract_strided_slice %3 {offsets = [2, 0], sizes = [1, 256], strides = [1, 1]} : vector<9x256xf32> to vector<1x256xf32>
    %545 = vector.broadcast %544 : vector<1x256xf32> to vector<16x256xf32>
    %546 = arith.mulf %543, %545 : vector<16x256xf32>
    %c32_440 = arith.constant 32 : index
    %c0_441 = arith.constant 0 : index
    %547 = vector.load %arg15[%c32_440, %c0_441] : memref<144x256xf32, #tpu.memory_space<vmem>>, vector<16x256xf32>
    tpu.vector_store %arg15[%c32_440, %c0_441], %546 {strides = array<i32>} : memref<144x256xf32, #tpu.memory_space<vmem>>, vector<16x256xf32>,
    %c0_442 = arith.constant 0 : index
    %c16_443 = arith.constant 16 : index
    %548 = vector.load %arg14[%c0_442, %c16_443] : memref<16x290xf32, #tpu.memory_space<vmem>>, vector<16x256xf32>
    %549 = vector.extract_strided_slice %3 {offsets = [3, 0], sizes = [1, 256], strides = [1, 1]} : vector<9x256xf32> to vector<1x256xf32>
    %550 = vector.broadcast %549 : vector<1x256xf32> to vector<16x256xf32>
    %551 = arith.mulf %548, %550 : vector<16x256xf32>
    %c48_444 = arith.constant 48 : index
    %c0_445 = arith.constant 0 : index
    %552 = vector.load %arg15[%c48_444, %c0_445] : memref<144x256xf32, #tpu.memory_space<vmem>>, vector<16x256xf32>
    tpu.vector_store %arg15[%c48_444, %c0_445], %551 {strides = array<i32>} : memref<144x256xf32, #tpu.memory_space<vmem>>, vector<16x256xf32>,
    %c0_446 = arith.constant 0 : index
    %c17_447 = arith.constant 17 : index
    %553 = vector.load %arg14[%c0_446, %c17_447] : memref<16x290xf32, #tpu.memory_space<vmem>>, vector<16x256xf32>
    %554 = vector.extract_strided_slice %3 {offsets = [4, 0], sizes = [1, 256], strides = [1, 1]} : vector<9x256xf32> to vector<1x256xf32>
    %555 = vector.broadcast %554 : vector<1x256xf32> to vector<16x256xf32>
    %556 = arith.mulf %553, %555 : vector<16x256xf32>
    %c64_448 = arith.constant 64 : index
    %c0_449 = arith.constant 0 : index
    %557 = vector.load %arg15[%c64_448, %c0_449] : memref<144x256xf32, #tpu.memory_space<vmem>>, vector<16x256xf32>
    tpu.vector_store %arg15[%c64_448, %c0_449], %556 {strides = array<i32>} : memref<144x256xf32, #tpu.memory_space<vmem>>, vector<16x256xf32>,
    %c0_450 = arith.constant 0 : index
    %c18_451 = arith.constant 18 : index
    %558 = vector.load %arg14[%c0_450, %c18_451] : memref<16x290xf32, #tpu.memory_space<vmem>>, vector<16x256xf32>
    %559 = vector.extract_strided_slice %3 {offsets = [5, 0], sizes = [1, 256], strides = [1, 1]} : vector<9x256xf32> to vector<1x256xf32>
    %560 = vector.broadcast %559 : vector<1x256xf32> to vector<16x256xf32>
    %561 = arith.mulf %558, %560 : vector<16x256xf32>
    %c80_452 = arith.constant 80 : index
    %c0_453 = arith.constant 0 : index
    %562 = vector.load %arg15[%c80_452, %c0_453] : memref<144x256xf32, #tpu.memory_space<vmem>>, vector<16x256xf32>
    tpu.vector_store %arg15[%c80_452, %c0_453], %561 {strides = array<i32>} : memref<144x256xf32, #tpu.memory_space<vmem>>, vector<16x256xf32>,
    %c0_454 = arith.constant 0 : index
    %c32_455 = arith.constant 32 : index
    %563 = vector.load %arg14[%c0_454, %c32_455] : memref<16x290xf32, #tpu.memory_space<vmem>>, vector<16x256xf32>
    %564 = vector.extract_strided_slice %3 {offsets = [6, 0], sizes = [1, 256], strides = [1, 1]} : vector<9x256xf32> to vector<1x256xf32>
    %565 = vector.broadcast %564 : vector<1x256xf32> to vector<16x256xf32>
    %566 = arith.mulf %563, %565 : vector<16x256xf32>
    %c96_456 = arith.constant 96 : index
    %c0_457 = arith.constant 0 : index
    %567 = vector.load %arg15[%c96_456, %c0_457] : memref<144x256xf32, #tpu.memory_space<vmem>>, vector<16x256xf32>
    tpu.vector_store %arg15[%c96_456, %c0_457], %566 {strides = array<i32>} : memref<144x256xf32, #tpu.memory_space<vmem>>, vector<16x256xf32>,
    %c0_458 = arith.constant 0 : index
    %c33_459 = arith.constant 33 : index
    %568 = vector.load %arg14[%c0_458, %c33_459] : memref<16x290xf32, #tpu.memory_space<vmem>>, vector<16x256xf32>
    %569 = vector.extract_strided_slice %3 {offsets = [7, 0], sizes = [1, 256], strides = [1, 1]} : vector<9x256xf32> to vector<1x256xf32>
    %570 = vector.broadcast %569 : vector<1x256xf32> to vector<16x256xf32>
    %571 = arith.mulf %568, %570 : vector<16x256xf32>
    %c112_460 = arith.constant 112 : index
    %c0_461 = arith.constant 0 : index
    %572 = vector.load %arg15[%c112_460, %c0_461] : memref<144x256xf32, #tpu.memory_space<vmem>>, vector<16x256xf32>
    tpu.vector_store %arg15[%c112_460, %c0_461], %571 {strides = array<i32>} : memref<144x256xf32, #tpu.memory_space<vmem>>, vector<16x256xf32>,
    %c0_462 = arith.constant 0 : index
    %c34_463 = arith.constant 34 : index
    %573 = vector.load %arg14[%c0_462, %c34_463] : memref<16x290xf32, #tpu.memory_space<vmem>>, vector<16x256xf32>
    %574 = vector.extract_strided_slice %3 {offsets = [8, 0], sizes = [1, 256], strides = [1, 1]} : vector<9x256xf32> to vector<1x256xf32>
    %575 = vector.broadcast %574 : vector<1x256xf32> to vector<16x256xf32>
    %576 = arith.mulf %573, %575 : vector<16x256xf32>
    %c128_464 = arith.constant 128 : index
    %c0_465 = arith.constant 0 : index
    %577 = vector.load %arg15[%c128_464, %c0_465] : memref<144x256xf32, #tpu.memory_space<vmem>>, vector<16x256xf32>
    tpu.vector_store %arg15[%c128_464, %c0_465], %576 {strides = array<i32>} : memref<144x256xf32, #tpu.memory_space<vmem>>, vector<16x256xf32>,
    %c0_466 = arith.constant 0 : index
    %c0_467 = arith.constant 0 : index
    %578 = vector.load %arg5[%c0_466, %c0_467] : memref<3x144xf32, #tpu.memory_space<vmem>>, vector<3x144xf32>
    %c0_468 = arith.constant 0 : index
    %c0_469 = arith.constant 0 : index
    %579 = vector.load %arg15[%c0_468, %c0_469] : memref<144x256xf32, #tpu.memory_space<vmem>>, vector<144x256xf32>
    %cst_470 = arith.constant dense<0.000000e+00> : vector<3x256xf32>
    %580 = tpu.matmul %578, %579, %cst_470 {dimension_numbers = #tpu.dot_dimension_numbers<[1], [0], [0], [1], [0, 0, 1, 1], [], []>} : vector<3x144xf32>, vector<144x256xf32>, vector<3x256xf32> -> vector<3x256xf32>
    %c0_471 = arith.constant 0 : index
    %c0_472 = arith.constant 0 : index
    %581 = vector.load %arg6[%c0_471, %c0_472] : memref<3x1xf32, #tpu.memory_space<vmem>>, vector<3x1xf32>
    %582 = vector.broadcast %581 : vector<3x1xf32> to vector<3x256xf32>
    %583 = arith.addf %580, %582 : vector<3x256xf32>
    %584 = arith.negf %583 : vector<3x256xf32>
    %585 = math.exp %584 : vector<3x256xf32>
    %cst_473 = arith.constant 1.000000e+00 : f32
    %586 = vector.broadcast %cst_473 : f32 to vector<3x256xf32>
    %587 = arith.addf %586, %585 : vector<3x256xf32>
    %588 = arith.divf %586, %587 : vector<3x256xf32>
    %589 = arith.divf %468, %588 : vector<3x256xf32>
    %cst_474 = arith.constant 0.000000e+00 : f32
    %cst_475 = arith.constant 1.000000e+00 : f32
    %590 = vector.broadcast %cst_474 : f32 to vector<3x256xf32>
    %591 = arith.maximumf %590, %589 : vector<3x256xf32>
    %592 = vector.broadcast %cst_475 : f32 to vector<3x256xf32>
    %593 = arith.minimumf %592, %591 : vector<3x256xf32>
    %c0_476 = arith.constant 0 : index
    %c17_477 = arith.constant 17 : index
    %594 = vector.load %arg14[%c0_476, %c17_477] : memref<16x290xf32, #tpu.memory_space<vmem>>, vector<3x256xf32>
    tpu.vector_store %arg14[%c0_476, %c17_477], %593 {strides = array<i32>} : memref<16x290xf32, #tpu.memory_space<vmem>>, vector<3x256xf32>,
    %c0_478 = arith.constant 0 : index
    %c0_479 = arith.constant 0 : index
    %595 = vector.load %arg14[%c0_478, %c0_479] : memref<16x290xf32, #tpu.memory_space<vmem>>, vector<3x256xf32>
    %596 = vector.extract_strided_slice %3 {offsets = [0, 0], sizes = [1, 256], strides = [1, 1]} : vector<9x256xf32> to vector<1x256xf32>
    %597 = vector.broadcast %596 : vector<1x256xf32> to vector<3x256xf32>
    %598 = arith.mulf %595, %597 : vector<3x256xf32>
    %c0_480 = arith.constant 0 : index
    %c0_481 = arith.constant 0 : index
    %599 = vector.load %arg15[%c0_480, %c0_481] : memref<144x256xf32, #tpu.memory_space<vmem>>, vector<3x256xf32>
    tpu.vector_store %arg15[%c0_480, %c0_481], %598 {strides = array<i32>} : memref<144x256xf32, #tpu.memory_space<vmem>>, vector<3x256xf32>,
    %c0_482 = arith.constant 0 : index
    %c1_483 = arith.constant 1 : index
    %600 = vector.load %arg14[%c0_482, %c1_483] : memref<16x290xf32, #tpu.memory_space<vmem>>, vector<3x256xf32>
    %601 = vector.extract_strided_slice %3 {offsets = [1, 0], sizes = [1, 256], strides = [1, 1]} : vector<9x256xf32> to vector<1x256xf32>
    %602 = vector.broadcast %601 : vector<1x256xf32> to vector<3x256xf32>
    %603 = arith.mulf %600, %602 : vector<3x256xf32>
    %c3_484 = arith.constant 3 : index
    %c0_485 = arith.constant 0 : index
    %604 = vector.load %arg15[%c3_484, %c0_485] : memref<144x256xf32, #tpu.memory_space<vmem>>, vector<3x256xf32>
    tpu.vector_store %arg15[%c3_484, %c0_485], %603 {strides = array<i32>} : memref<144x256xf32, #tpu.memory_space<vmem>>, vector<3x256xf32>,
    %c0_486 = arith.constant 0 : index
    %c2_487 = arith.constant 2 : index
    %605 = vector.load %arg14[%c0_486, %c2_487] : memref<16x290xf32, #tpu.memory_space<vmem>>, vector<3x256xf32>
    %606 = vector.extract_strided_slice %3 {offsets = [2, 0], sizes = [1, 256], strides = [1, 1]} : vector<9x256xf32> to vector<1x256xf32>
    %607 = vector.broadcast %606 : vector<1x256xf32> to vector<3x256xf32>
    %608 = arith.mulf %605, %607 : vector<3x256xf32>
    %c6_488 = arith.constant 6 : index
    %c0_489 = arith.constant 0 : index
    %609 = vector.load %arg15[%c6_488, %c0_489] : memref<144x256xf32, #tpu.memory_space<vmem>>, vector<3x256xf32>
    tpu.vector_store %arg15[%c6_488, %c0_489], %608 {strides = array<i32>} : memref<144x256xf32, #tpu.memory_space<vmem>>, vector<3x256xf32>,
    %c0_490 = arith.constant 0 : index
    %c16_491 = arith.constant 16 : index
    %610 = vector.load %arg14[%c0_490, %c16_491] : memref<16x290xf32, #tpu.memory_space<vmem>>, vector<3x256xf32>
    %611 = vector.extract_strided_slice %3 {offsets = [3, 0], sizes = [1, 256], strides = [1, 1]} : vector<9x256xf32> to vector<1x256xf32>
    %612 = vector.broadcast %611 : vector<1x256xf32> to vector<3x256xf32>
    %613 = arith.mulf %610, %612 : vector<3x256xf32>
    %c9_492 = arith.constant 9 : index
    %c0_493 = arith.constant 0 : index
    %614 = vector.load %arg15[%c9_492, %c0_493] : memref<144x256xf32, #tpu.memory_space<vmem>>, vector<3x256xf32>
    tpu.vector_store %arg15[%c9_492, %c0_493], %613 {strides = array<i32>} : memref<144x256xf32, #tpu.memory_space<vmem>>, vector<3x256xf32>,
    %c0_494 = arith.constant 0 : index
    %c17_495 = arith.constant 17 : index
    %615 = vector.load %arg14[%c0_494, %c17_495] : memref<16x290xf32, #tpu.memory_space<vmem>>, vector<3x256xf32>
    %616 = vector.extract_strided_slice %3 {offsets = [4, 0], sizes = [1, 256], strides = [1, 1]} : vector<9x256xf32> to vector<1x256xf32>
    %617 = vector.broadcast %616 : vector<1x256xf32> to vector<3x256xf32>
    %618 = arith.mulf %615, %617 : vector<3x256xf32>
    %c12_496 = arith.constant 12 : index
    %c0_497 = arith.constant 0 : index
    %619 = vector.load %arg15[%c12_496, %c0_497] : memref<144x256xf32, #tpu.memory_space<vmem>>, vector<3x256xf32>
    tpu.vector_store %arg15[%c12_496, %c0_497], %618 {strides = array<i32>} : memref<144x256xf32, #tpu.memory_space<vmem>>, vector<3x256xf32>,
    %c0_498 = arith.constant 0 : index
    %c18_499 = arith.constant 18 : index
    %620 = vector.load %arg14[%c0_498, %c18_499] : memref<16x290xf32, #tpu.memory_space<vmem>>, vector<3x256xf32>
    %621 = vector.extract_strided_slice %3 {offsets = [5, 0], sizes = [1, 256], strides = [1, 1]} : vector<9x256xf32> to vector<1x256xf32>
    %622 = vector.broadcast %621 : vector<1x256xf32> to vector<3x256xf32>
    %623 = arith.mulf %620, %622 : vector<3x256xf32>
    %c15_500 = arith.constant 15 : index
    %c0_501 = arith.constant 0 : index
    %624 = vector.load %arg15[%c15_500, %c0_501] : memref<144x256xf32, #tpu.memory_space<vmem>>, vector<3x256xf32>
    tpu.vector_store %arg15[%c15_500, %c0_501], %623 {strides = array<i32>} : memref<144x256xf32, #tpu.memory_space<vmem>>, vector<3x256xf32>,
    %c0_502 = arith.constant 0 : index
    %c32_503 = arith.constant 32 : index
    %625 = vector.load %arg14[%c0_502, %c32_503] : memref<16x290xf32, #tpu.memory_space<vmem>>, vector<3x256xf32>
    %626 = vector.extract_strided_slice %3 {offsets = [6, 0], sizes = [1, 256], strides = [1, 1]} : vector<9x256xf32> to vector<1x256xf32>
    %627 = vector.broadcast %626 : vector<1x256xf32> to vector<3x256xf32>
    %628 = arith.mulf %625, %627 : vector<3x256xf32>
    %c18_504 = arith.constant 18 : index
    %c0_505 = arith.constant 0 : index
    %629 = vector.load %arg15[%c18_504, %c0_505] : memref<144x256xf32, #tpu.memory_space<vmem>>, vector<3x256xf32>
    tpu.vector_store %arg15[%c18_504, %c0_505], %628 {strides = array<i32>} : memref<144x256xf32, #tpu.memory_space<vmem>>, vector<3x256xf32>,
    %c0_506 = arith.constant 0 : index
    %c33_507 = arith.constant 33 : index
    %630 = vector.load %arg14[%c0_506, %c33_507] : memref<16x290xf32, #tpu.memory_space<vmem>>, vector<3x256xf32>
    %631 = vector.extract_strided_slice %3 {offsets = [7, 0], sizes = [1, 256], strides = [1, 1]} : vector<9x256xf32> to vector<1x256xf32>
    %632 = vector.broadcast %631 : vector<1x256xf32> to vector<3x256xf32>
    %633 = arith.mulf %630, %632 : vector<3x256xf32>
    %c21_508 = arith.constant 21 : index
    %c0_509 = arith.constant 0 : index
    %634 = vector.load %arg15[%c21_508, %c0_509] : memref<144x256xf32, #tpu.memory_space<vmem>>, vector<3x256xf32>
    tpu.vector_store %arg15[%c21_508, %c0_509], %633 {strides = array<i32>} : memref<144x256xf32, #tpu.memory_space<vmem>>, vector<3x256xf32>,
    %c0_510 = arith.constant 0 : index
    %c34_511 = arith.constant 34 : index
    %635 = vector.load %arg14[%c0_510, %c34_511] : memref<16x290xf32, #tpu.memory_space<vmem>>, vector<3x256xf32>
    %636 = vector.extract_strided_slice %3 {offsets = [8, 0], sizes = [1, 256], strides = [1, 1]} : vector<9x256xf32> to vector<1x256xf32>
    %637 = vector.broadcast %636 : vector<1x256xf32> to vector<3x256xf32>
    %638 = arith.mulf %635, %637 : vector<3x256xf32>
    %c24_512 = arith.constant 24 : index
    %c0_513 = arith.constant 0 : index
    %639 = vector.load %arg15[%c24_512, %c0_513] : memref<144x256xf32, #tpu.memory_space<vmem>>, vector<3x256xf32>
    tpu.vector_store %arg15[%c24_512, %c0_513], %638 {strides = array<i32>} : memref<144x256xf32, #tpu.memory_space<vmem>>, vector<3x256xf32>,
    %c0_514 = arith.constant 0 : index
    %c0_515 = arith.constant 0 : index
    %640 = vector.load %arg7[%c0_514, %c0_515] : memref<16x27xf32, #tpu.memory_space<vmem>>, vector<16x27xf32>
    %c0_516 = arith.constant 0 : index
    %c0_517 = arith.constant 0 : index
    %641 = vector.load %arg15[%c0_516, %c0_517] : memref<144x256xf32, #tpu.memory_space<vmem>>, vector<27x256xf32>
    %cst_518 = arith.constant dense<0.000000e+00> : vector<16x256xf32>
    %642 = tpu.matmul %640, %641, %cst_518 {dimension_numbers = #tpu.dot_dimension_numbers<[1], [0], [0], [1], [0, 0, 1, 1], [], []>} : vector<16x27xf32>, vector<27x256xf32>, vector<16x256xf32> -> vector<16x256xf32>
    %c0_519 = arith.constant 0 : index
    %c0_520 = arith.constant 0 : index
    %643 = vector.load %arg8[%c0_519, %c0_520] : memref<16x1xf32, #tpu.memory_space<vmem>>, vector<16x1xf32>
    %644 = vector.broadcast %643 : vector<16x1xf32> to vector<16x256xf32>
    %645 = arith.addf %642, %644 : vector<16x256xf32>
    %cst_521 = arith.constant 0.000000e+00 : f32
    %646 = vector.broadcast %cst_521 : f32 to vector<16x256xf32>
    %647 = arith.maximumf %645, %646 : vector<16x256xf32>
    %c0_522 = arith.constant 0 : index
    %c17_523 = arith.constant 17 : index
    %648 = vector.load %arg14[%c0_522, %c17_523] : memref<16x290xf32, #tpu.memory_space<vmem>>, vector<16x256xf32>
    tpu.vector_store %arg14[%c0_522, %c17_523], %647 {strides = array<i32>} : memref<16x290xf32, #tpu.memory_space<vmem>>, vector<16x256xf32>,
    %c0_524 = arith.constant 0 : index
    %c0_525 = arith.constant 0 : index
    %649 = vector.load %arg14[%c0_524, %c0_525] : memref<16x290xf32, #tpu.memory_space<vmem>>, vector<16x256xf32>
    %650 = vector.extract_strided_slice %3 {offsets = [0, 0], sizes = [1, 256], strides = [1, 1]} : vector<9x256xf32> to vector<1x256xf32>
    %651 = vector.broadcast %650 : vector<1x256xf32> to vector<16x256xf32>
    %652 = arith.mulf %649, %651 : vector<16x256xf32>
    %c0_526 = arith.constant 0 : index
    %c0_527 = arith.constant 0 : index
    %653 = vector.load %arg15[%c0_526, %c0_527] : memref<144x256xf32, #tpu.memory_space<vmem>>, vector<16x256xf32>
    tpu.vector_store %arg15[%c0_526, %c0_527], %652 {strides = array<i32>} : memref<144x256xf32, #tpu.memory_space<vmem>>, vector<16x256xf32>,
    %c0_528 = arith.constant 0 : index
    %c1_529 = arith.constant 1 : index
    %654 = vector.load %arg14[%c0_528, %c1_529] : memref<16x290xf32, #tpu.memory_space<vmem>>, vector<16x256xf32>
    %655 = vector.extract_strided_slice %3 {offsets = [1, 0], sizes = [1, 256], strides = [1, 1]} : vector<9x256xf32> to vector<1x256xf32>
    %656 = vector.broadcast %655 : vector<1x256xf32> to vector<16x256xf32>
    %657 = arith.mulf %654, %656 : vector<16x256xf32>
    %c16_530 = arith.constant 16 : index
    %c0_531 = arith.constant 0 : index
    %658 = vector.load %arg15[%c16_530, %c0_531] : memref<144x256xf32, #tpu.memory_space<vmem>>, vector<16x256xf32>
    tpu.vector_store %arg15[%c16_530, %c0_531], %657 {strides = array<i32>} : memref<144x256xf32, #tpu.memory_space<vmem>>, vector<16x256xf32>,
    %c0_532 = arith.constant 0 : index
    %c2_533 = arith.constant 2 : index
    %659 = vector.load %arg14[%c0_532, %c2_533] : memref<16x290xf32, #tpu.memory_space<vmem>>, vector<16x256xf32>
    %660 = vector.extract_strided_slice %3 {offsets = [2, 0], sizes = [1, 256], strides = [1, 1]} : vector<9x256xf32> to vector<1x256xf32>
    %661 = vector.broadcast %660 : vector<1x256xf32> to vector<16x256xf32>
    %662 = arith.mulf %659, %661 : vector<16x256xf32>
    %c32_534 = arith.constant 32 : index
    %c0_535 = arith.constant 0 : index
    %663 = vector.load %arg15[%c32_534, %c0_535] : memref<144x256xf32, #tpu.memory_space<vmem>>, vector<16x256xf32>
    tpu.vector_store %arg15[%c32_534, %c0_535], %662 {strides = array<i32>} : memref<144x256xf32, #tpu.memory_space<vmem>>, vector<16x256xf32>,
    %c0_536 = arith.constant 0 : index
    %c16_537 = arith.constant 16 : index
    %664 = vector.load %arg14[%c0_536, %c16_537] : memref<16x290xf32, #tpu.memory_space<vmem>>, vector<16x256xf32>
    %665 = vector.extract_strided_slice %3 {offsets = [3, 0], sizes = [1, 256], strides = [1, 1]} : vector<9x256xf32> to vector<1x256xf32>
    %666 = vector.broadcast %665 : vector<1x256xf32> to vector<16x256xf32>
    %667 = arith.mulf %664, %666 : vector<16x256xf32>
    %c48_538 = arith.constant 48 : index
    %c0_539 = arith.constant 0 : index
    %668 = vector.load %arg15[%c48_538, %c0_539] : memref<144x256xf32, #tpu.memory_space<vmem>>, vector<16x256xf32>
    tpu.vector_store %arg15[%c48_538, %c0_539], %667 {strides = array<i32>} : memref<144x256xf32, #tpu.memory_space<vmem>>, vector<16x256xf32>,
    %c0_540 = arith.constant 0 : index
    %c17_541 = arith.constant 17 : index
    %669 = vector.load %arg14[%c0_540, %c17_541] : memref<16x290xf32, #tpu.memory_space<vmem>>, vector<16x256xf32>
    %670 = vector.extract_strided_slice %3 {offsets = [4, 0], sizes = [1, 256], strides = [1, 1]} : vector<9x256xf32> to vector<1x256xf32>
    %671 = vector.broadcast %670 : vector<1x256xf32> to vector<16x256xf32>
    %672 = arith.mulf %669, %671 : vector<16x256xf32>
    %c64_542 = arith.constant 64 : index
    %c0_543 = arith.constant 0 : index
    %673 = vector.load %arg15[%c64_542, %c0_543] : memref<144x256xf32, #tpu.memory_space<vmem>>, vector<16x256xf32>
    tpu.vector_store %arg15[%c64_542, %c0_543], %672 {strides = array<i32>} : memref<144x256xf32, #tpu.memory_space<vmem>>, vector<16x256xf32>,
    %c0_544 = arith.constant 0 : index
    %c18_545 = arith.constant 18 : index
    %674 = vector.load %arg14[%c0_544, %c18_545] : memref<16x290xf32, #tpu.memory_space<vmem>>, vector<16x256xf32>
    %675 = vector.extract_strided_slice %3 {offsets = [5, 0], sizes = [1, 256], strides = [1, 1]} : vector<9x256xf32> to vector<1x256xf32>
    %676 = vector.broadcast %675 : vector<1x256xf32> to vector<16x256xf32>
    %677 = arith.mulf %674, %676 : vector<16x256xf32>
    %c80_546 = arith.constant 80 : index
    %c0_547 = arith.constant 0 : index
    %678 = vector.load %arg15[%c80_546, %c0_547] : memref<144x256xf32, #tpu.memory_space<vmem>>, vector<16x256xf32>
    tpu.vector_store %arg15[%c80_546, %c0_547], %677 {strides = array<i32>} : memref<144x256xf32, #tpu.memory_space<vmem>>, vector<16x256xf32>,
    %c0_548 = arith.constant 0 : index
    %c32_549 = arith.constant 32 : index
    %679 = vector.load %arg14[%c0_548, %c32_549] : memref<16x290xf32, #tpu.memory_space<vmem>>, vector<16x256xf32>
    %680 = vector.extract_strided_slice %3 {offsets = [6, 0], sizes = [1, 256], strides = [1, 1]} : vector<9x256xf32> to vector<1x256xf32>
    %681 = vector.broadcast %680 : vector<1x256xf32> to vector<16x256xf32>
    %682 = arith.mulf %679, %681 : vector<16x256xf32>
    %c96_550 = arith.constant 96 : index
    %c0_551 = arith.constant 0 : index
    %683 = vector.load %arg15[%c96_550, %c0_551] : memref<144x256xf32, #tpu.memory_space<vmem>>, vector<16x256xf32>
    tpu.vector_store %arg15[%c96_550, %c0_551], %682 {strides = array<i32>} : memref<144x256xf32, #tpu.memory_space<vmem>>, vector<16x256xf32>,
    %c0_552 = arith.constant 0 : index
    %c33_553 = arith.constant 33 : index
    %684 = vector.load %arg14[%c0_552, %c33_553] : memref<16x290xf32, #tpu.memory_space<vmem>>, vector<16x256xf32>
    %685 = vector.extract_strided_slice %3 {offsets = [7, 0], sizes = [1, 256], strides = [1, 1]} : vector<9x256xf32> to vector<1x256xf32>
    %686 = vector.broadcast %685 : vector<1x256xf32> to vector<16x256xf32>
    %687 = arith.mulf %684, %686 : vector<16x256xf32>
    %c112_554 = arith.constant 112 : index
    %c0_555 = arith.constant 0 : index
    %688 = vector.load %arg15[%c112_554, %c0_555] : memref<144x256xf32, #tpu.memory_space<vmem>>, vector<16x256xf32>
    tpu.vector_store %arg15[%c112_554, %c0_555], %687 {strides = array<i32>} : memref<144x256xf32, #tpu.memory_space<vmem>>, vector<16x256xf32>,
    %c0_556 = arith.constant 0 : index
    %c34_557 = arith.constant 34 : index
    %689 = vector.load %arg14[%c0_556, %c34_557] : memref<16x290xf32, #tpu.memory_space<vmem>>, vector<16x256xf32>
    %690 = vector.extract_strided_slice %3 {offsets = [8, 0], sizes = [1, 256], strides = [1, 1]} : vector<9x256xf32> to vector<1x256xf32>
    %691 = vector.broadcast %690 : vector<1x256xf32> to vector<16x256xf32>
    %692 = arith.mulf %689, %691 : vector<16x256xf32>
    %c128_558 = arith.constant 128 : index
    %c0_559 = arith.constant 0 : index
    %693 = vector.load %arg15[%c128_558, %c0_559] : memref<144x256xf32, #tpu.memory_space<vmem>>, vector<16x256xf32>
    tpu.vector_store %arg15[%c128_558, %c0_559], %692 {strides = array<i32>} : memref<144x256xf32, #tpu.memory_space<vmem>>, vector<16x256xf32>,
    %c0_560 = arith.constant 0 : index
    %c0_561 = arith.constant 0 : index
    %694 = vector.load %arg9[%c0_560, %c0_561] : memref<3x144xf32, #tpu.memory_space<vmem>>, vector<3x144xf32>
    %c0_562 = arith.constant 0 : index
    %c0_563 = arith.constant 0 : index
    %695 = vector.load %arg15[%c0_562, %c0_563] : memref<144x256xf32, #tpu.memory_space<vmem>>, vector<144x256xf32>
    %cst_564 = arith.constant dense<0.000000e+00> : vector<3x256xf32>
    %696 = tpu.matmul %694, %695, %cst_564 {dimension_numbers = #tpu.dot_dimension_numbers<[1], [0], [0], [1], [0, 0, 1, 1], [], []>} : vector<3x144xf32>, vector<144x256xf32>, vector<3x256xf32> -> vector<3x256xf32>
    %c0_565 = arith.constant 0 : index
    %c0_566 = arith.constant 0 : index
    %697 = vector.load %arg10[%c0_565, %c0_566] : memref<3x1xf32, #tpu.memory_space<vmem>>, vector<3x1xf32>
    %698 = vector.broadcast %697 : vector<3x1xf32> to vector<3x256xf32>
    %699 = arith.addf %696, %698 : vector<3x256xf32>
    %700 = arith.negf %699 : vector<3x256xf32>
    %701 = math.exp %700 : vector<3x256xf32>
    %cst_567 = arith.constant 1.000000e+00 : f32
    %702 = vector.broadcast %cst_567 : f32 to vector<3x256xf32>
    %703 = arith.addf %702, %701 : vector<3x256xf32>
    %704 = arith.divf %702, %703 : vector<3x256xf32>
    %c0_568 = arith.constant 0 : index
    %c2_569 = arith.constant 2 : index
    %c0_570 = arith.constant 0 : index
    %c0_571 = arith.constant 0 : index
    %705 = vector.load %arg12[%c0_568, %c2_569, %c0_570, %c0_571] : memref<1x3x3x256xf32, #tpu.memory_space<vmem>>, vector<1x1x3x256xf32>
    %706 = vector.shape_cast %705 : vector<1x1x3x256xf32> to vector<3x256xf32>
    %707 = vector.shape_cast %588 : vector<3x256xf32> to vector<1x1x3x256xf32>
    tpu.vector_store %arg12[%c0_568, %c2_569, %c0_570, %c0_571], %707 {strides = array<i32>} : memref<1x3x3x256xf32, #tpu.memory_space<vmem>>, vector<1x1x3x256xf32>,
    %c0_572 = arith.constant 0 : index
    %c2_573 = arith.constant 2 : index
    %c0_574 = arith.constant 0 : index
    %c0_575 = arith.constant 0 : index
    %708 = vector.load %arg13[%c0_572, %c2_573, %c0_574, %c0_575] : memref<1x3x3x256xf32, #tpu.memory_space<vmem>>, vector<1x1x3x256xf32>
    %709 = vector.shape_cast %708 : vector<1x1x3x256xf32> to vector<3x256xf32>
    %710 = vector.shape_cast %593 : vector<3x256xf32> to vector<1x1x3x256xf32>
    tpu.vector_store %arg13[%c0_572, %c2_573, %c0_574, %c0_575], %710 {strides = array<i32>} : memref<1x3x3x256xf32, #tpu.memory_space<vmem>>, vector<1x1x3x256xf32>,
    %c0_576 = arith.constant 0 : index
    %c2_577 = arith.constant 2 : index
    %c0_578 = arith.constant 0 : index
    %c0_579 = arith.constant 0 : index
    %711 = vector.load %arg11[%c0_576, %c2_577, %c0_578, %c0_579] : memref<1x3x3x256xf32, #tpu.memory_space<vmem>>, vector<1x1x3x256xf32>
    %712 = vector.shape_cast %711 : vector<1x1x3x256xf32> to vector<3x256xf32>
    %713 = vector.shape_cast %704 : vector<3x256xf32> to vector<1x1x3x256xf32>
    tpu.vector_store %arg11[%c0_576, %c2_577, %c0_578, %c0_579], %713 {strides = array<i32>} : memref<1x3x3x256xf32, #tpu.memory_space<vmem>>, vector<1x1x3x256xf32>,
    return
  }
  func.func @transform_0(%arg0: i32) -> (i32, i32, i32) {
    %c0_i32 = arith.constant 0 : i32
    %c0_i32_0 = arith.constant 0 : i32
    %c0_i32_1 = arith.constant 0 : i32
    return %arg0, %c0_i32, %c0_i32_0 : i32, i32, i32
  }
  func.func @transform_1(%arg0: i32) -> (i32, i32) {
    %c0_i32 = arith.constant 0 : i32
    %c0_i32_0 = arith.constant 0 : i32
    %c0_i32_1 = arith.constant 0 : i32
    return %c0_i32, %c0_i32_0 : i32, i32
  }
  func.func @transform_2(%arg0: i32) -> (i32, i32) {
    %c0_i32 = arith.constant 0 : i32
    %c0_i32_0 = arith.constant 0 : i32
    %c0_i32_1 = arith.constant 0 : i32
    return %c0_i32, %c0_i32_0 : i32, i32
  }
  func.func @transform_3(%arg0: i32) -> (i32, i32) {
    %c0_i32 = arith.constant 0 : i32
    %c0_i32_0 = arith.constant 0 : i32
    %c0_i32_1 = arith.constant 0 : i32
    return %c0_i32, %c0_i32_0 : i32, i32
  }
  func.func @transform_4(%arg0: i32) -> (i32, i32) {
    %c0_i32 = arith.constant 0 : i32
    %c0_i32_0 = arith.constant 0 : i32
    %c0_i32_1 = arith.constant 0 : i32
    return %c0_i32, %c0_i32_0 : i32, i32
  }
  func.func @transform_5(%arg0: i32) -> (i32, i32) {
    %c0_i32 = arith.constant 0 : i32
    %c0_i32_0 = arith.constant 0 : i32
    %c0_i32_1 = arith.constant 0 : i32
    return %c0_i32, %c0_i32_0 : i32, i32
  }
  func.func @transform_6(%arg0: i32) -> (i32, i32) {
    %c0_i32 = arith.constant 0 : i32
    %c0_i32_0 = arith.constant 0 : i32
    %c0_i32_1 = arith.constant 0 : i32
    return %c0_i32, %c0_i32_0 : i32, i32
  }
  func.func @transform_7(%arg0: i32) -> (i32, i32) {
    %c0_i32 = arith.constant 0 : i32
    %c0_i32_0 = arith.constant 0 : i32
    %c0_i32_1 = arith.constant 0 : i32
    return %c0_i32, %c0_i32_0 : i32, i32
  }
  func.func @transform_8(%arg0: i32) -> (i32, i32) {
    %c0_i32 = arith.constant 0 : i32
    %c0_i32_0 = arith.constant 0 : i32
    %c0_i32_1 = arith.constant 0 : i32
    return %c0_i32, %c0_i32_0 : i32, i32
  }
  func.func @transform_9(%arg0: i32) -> (i32, i32) {
    %c0_i32 = arith.constant 0 : i32
    %c0_i32_0 = arith.constant 0 : i32
    %c0_i32_1 = arith.constant 0 : i32
    return %c0_i32, %c0_i32_0 : i32, i32
  }
  func.func @transform_10(%arg0: i32) -> (i32, i32, i32, i32) {
    %c0_i32 = arith.constant 0 : i32
    %c0_i32_0 = arith.constant 0 : i32
    %c0_i32_1 = arith.constant 0 : i32
    %c0_i32_2 = arith.constant 0 : i32
    return %arg0, %c0_i32, %c0_i32_0, %c0_i32_1 : i32, i32, i32, i32
  }
  func.func @transform_11(%arg0: i32) -> (i32, i32, i32, i32) {
    %c0_i32 = arith.constant 0 : i32
    %c0_i32_0 = arith.constant 0 : i32
    %c0_i32_1 = arith.constant 0 : i32
    %c0_i32_2 = arith.constant 0 : i32
    return %arg0, %c0_i32, %c0_i32_0, %c0_i32_1 : i32, i32, i32, i32
  }
  func.func @transform_12(%arg0: i32) -> (i32, i32, i32, i32) {
    %c0_i32 = arith.constant 0 : i32
    %c0_i32_0 = arith.constant 0 : i32
    %c0_i32_1 = arith.constant 0 : i32
    %c0_i32_2 = arith.constant 0 : i32
    return %arg0, %c0_i32, %c0_i32_0, %c0_i32_1 : i32, i32, i32, i32
  }
}

</mosaic_0001>

<llo_original>
// kernel: forward.1
$region0: #{forward.1}
  #allocation0 [shape = 'u32[]', space=smem, size = 0x4, offset = 0x4, fixed_abs, tag = 'smem constant byte address 0x4 - core index']
  #allocation1 [shape = 'u32[144,128]{1,0:T(1,128)}', space=vmem, size = 0x12000, scoped, tag = 'internal scratch']
  #allocation2 [shape = 'f32[16,290]{1,0:T(8,128)}', space=vmem, size = 0x6000, scoped, tag = 'scratch operand']
  #allocation3 [shape = 'f32[144,256]{1,0:T(8,128)}', space=vmem, size = 0x24000, scoped, tag = 'scratch operand']
  %s0 = inlined_call_operand.vmem [shape: f32[2,3,256], index: 0, kind: input, shape index: {}]
  %s1 = inlined_call_operand.vmem [shape: f32[9,256], index: 1, kind: input, shape index: {}]
  %s2 = inlined_call_operand.vmem [shape: f32[16,27], index: 2, kind: input, shape index: {}]
  %s3 = inlined_call_operand.vmem [shape: f32[16,1], index: 3, kind: input, shape index: {}]
  %s4 = inlined_call_operand.vmem [shape: f32[3,144], index: 4, kind: input, shape index: {}]
  %s5 = inlined_call_operand.vmem [shape: f32[3,1], index: 5, kind: input, shape index: {}]
  %s6 = inlined_call_operand.vmem [shape: f32[16,27], index: 6, kind: input, shape index: {}]
  %s7 = inlined_call_operand.vmem [shape: f32[16,1], index: 7, kind: input, shape index: {}]
  %s8 = inlined_call_operand.vmem [shape: f32[3,144], index: 8, kind: input, shape index: {}]
  %s9 = inlined_call_operand.vmem [shape: f32[3,1], index: 9, kind: input, shape index: {}]
  %s10 = inlined_call_operand.vmem [shape: f32[2,3,3,256], index: 10, kind: output, shape index: {0}]
  %s11 = inlined_call_operand.vmem [shape: f32[2,3,3,256], index: 11, kind: output, shape index: {1}]
  %s12 = inlined_call_operand.vmem [shape: f32[2,3,3,256], index: 12, kind: output, shape index: {2}]
  %13 = xla_tuple %s10, %s11, %s12
  %s14 = sld [smem:[#allocation0]]
  $region89: #{forward.1} parent=0
    _
  %s16 = ssub.s32 1, %s14
  %s17 = scalar_select 0, %s16, %s14
  loop: start=0, step=1, limit=4
  $region2: #{forward.1} parent=0 // loop_pre_header
    _
  $region3: #{forward.1} parent=0 // loop_header
    %s19 = sphi 0, %s23
    %p20 = scmp.ge.s32.totalorder %s19, 4
    %s29 = sphi 0, %s31
    %s32 = sphi 0, %s29
    %s33 = sphi 0, %s32
    %s49 = sphi 0, %s33
    %s53 = sphi 0, %s53
    %s55 = sphi 0, %s53
    %s56 = sphi 0, %s55
    %s70 = sphi 0, %s56
    %s74 = sphi 0, %s74
    %s76 = sphi 0, %s74
    %s77 = sphi 0, %s76
    %s91 = sphi 0, %s77
    %s95 = sphi 0, %s95
    %s97 = sphi 0, %s95
    %s98 = sphi 0, %s97
    %s112 = sphi 0, %s98
    %s116 = sphi 0, %s116
    %s118 = sphi 0, %s116
    %s119 = sphi 0, %s118
    %s133 = sphi 0, %s119
    %s137 = sphi 0, %s137
    %s139 = sphi 0, %s137
    %s140 = sphi 0, %s139
    %s154 = sphi 0, %s140
    %s158 = sphi 0, %s158
    %s160 = sphi 0, %s158
    %s161 = sphi 0, %s160
    %s175 = sphi 0, %s161
    %s179 = sphi 0, %s179
    %s181 = sphi 0, %s179
    %s182 = sphi 0, %s181
    %s196 = sphi 0, %s182
    %s200 = sphi 0, %s200
    %s202 = sphi 0, %s200
    %s203 = sphi 0, %s202
    %s217 = sphi 0, %s203
    %s221 = sphi 0, %s221
    %s223 = sphi 0, %s221
    %s224 = sphi 0, %s223
    %s238 = sphi 0, %s224
    %s244 = sphi 0, %s246
    %s247 = sphi 0, %s244
    %s248 = sphi 0, %s247
    %s264 = sphi 0, %s248
    %s270 = sphi 0, %s272
    %s273 = sphi 0, %s270
    %s274 = sphi 0, %s273
    %s290 = sphi 0, %s274
    %s296 = sphi 0, %s298
    %s299 = sphi 0, %s296
    %s300 = sphi 0, %s299
    %s316 = sphi 0, %s300
  $region4: #{forward.1} parent=0 // loop_header_branch
    %22 = sbr.rel (%p20) target = $region8
  $region5: #{forward.1} parent=0 // loop_body
    %s24 = ssub.s32 %s19, 1
    %s25 = ssub.s32 %s19, 2
    %s26 = sadd.s32 %s19, 1
    %s27 = ssub.s32 %s19, %s26
    %p28 = scmp.eq.s32.totalorder %s27, 0
    %s30 = sadd.s32 %s29, 1
    %s31 = scalar_select %p28, %s29, %s30
    %p34 = pneg %p28
    %p35 = scmp.eq.s32.totalorder %s19, 1
    %p36 = por %p34, %p35
    %p37 = scmp.ne.s32.totalorder %s29, %s32
    %p38 = scmp.eq.s32.totalorder %s19, 0
    %p39 = por %p37, %p38
    %p40 = scmp.ne.s32.totalorder %s29, %s32
    %p41 = scmp.eq.s32.totalorder %s24, 1
    %p42 = por %p40, %p41
    %p43 = scmp.ne.s32.totalorder %s32, %s33
    %p44 = scmp.eq.s32.totalorder %s24, 0
    %p45 = por %p43, %p44
    %p46 = scmp.ne.s32.totalorder %s32, %s33
    %p47 = scmp.eq.s32.totalorder %s25, 1
    %p48 = por %p46, %p47
    %p50 = scmp.ne.s32.totalorder %s33, %s49
    %p51 = scmp.eq.s32.totalorder %s25, 0
    %p52 = por %p50, %p51
    %s54 = sadd.s32 %s53, 1
    %p57 = scmp.eq.s32.totalorder %s19, 1
    %p58 = scmp.ne.s32.totalorder %s53, %s55
    %p59 = scmp.eq.s32.totalorder %s19, 0
    %p60 = por %p58, %p59
    %p61 = scmp.ne.s32.totalorder %s53, %s55
    %p62 = scmp.eq.s32.totalorder %s24, 1
    %p63 = por %p61, %p62
    %p64 = scmp.ne.s32.totalorder %s55, %s56
    %p65 = scmp.eq.s32.totalorder %s24, 0
    %p66 = por %p64, %p65
    %p67 = scmp.ne.s32.totalorder %s55, %s56
    %p68 = scmp.eq.s32.totalorder %s25, 1
    %p69 = por %p67, %p68
    %p71 = scmp.ne.s32.totalorder %s56, %s70
    %p72 = scmp.eq.s32.totalorder %s25, 0
    %p73 = por %p71, %p72
    %s75 = sadd.s32 %s74, 1
    %p78 = scmp.eq.s32.totalorder %s19, 1
    %p79 = scmp.ne.s32.totalorder %s74, %s76
    %p80 = scmp.eq.s32.totalorder %s19, 0
    %p81 = por %p79, %p80
    %p82 = scmp.ne.s32.totalorder %s74, %s76
    %p83 = scmp.eq.s32.totalorder %s24, 1
    %p84 = por %p82, %p83
    %p85 = scmp.ne.s32.totalorder %s76, %s77
    %p86 = scmp.eq.s32.totalorder %s24, 0
    %p87 = por %p85, %p86
    %p88 = scmp.ne.s32.totalorder %s76, %s77
    %p89 = scmp.eq.s32.totalorder %s25, 1
    %p90 = por %p88, %p89
    %p92 = scmp.ne.s32.totalorder %s77, %s91
    %p93 = scmp.eq.s32.totalorder %s25, 0
    %p94 = por %p92, %p93
    %s96 = sadd.s32 %s95, 1
    %p99 = scmp.eq.s32.totalorder %s19, 1
    %p100 = scmp.ne.s32.totalorder %s95, %s97
    %p101 = scmp.eq.s32.totalorder %s19, 0
    %p102 = por %p100, %p101
    %p103 = scmp.ne.s32.totalorder %s95, %s97
    %p104 = scmp.eq.s32.totalorder %s24, 1
    %p105 = por %p103, %p104
    %p106 = scmp.ne.s32.totalorder %s97, %s98
    %p107 = scmp.eq.s32.totalorder %s24, 0
    %p108 = por %p106, %p107
    %p109 = scmp.ne.s32.totalorder %s97, %s98
    %p110 = scmp.eq.s32.totalorder %s25, 1
    %p111 = por %p109, %p110
    %p113 = scmp.ne.s32.totalorder %s98, %s112
    %p114 = scmp.eq.s32.totalorder %s25, 0
    %p115 = por %p113, %p114
    %s117 = sadd.s32 %s116, 1
    %p120 = scmp.eq.s32.totalorder %s19, 1
    %p121 = scmp.ne.s32.totalorder %s116, %s118
    %p122 = scmp.eq.s32.totalorder %s19, 0
    %p123 = por %p121, %p122
    %p124 = scmp.ne.s32.totalorder %s116, %s118
    %p125 = scmp.eq.s32.totalorder %s24, 1
    %p126 = por %p124, %p125
    %p127 = scmp.ne.s32.totalorder %s118, %s119
    %p128 = scmp.eq.s32.totalorder %s24, 0
    %p129 = por %p127, %p128
    %p130 = scmp.ne.s32.totalorder %s118, %s119
    %p131 = scmp.eq.s32.totalorder %s25, 1
    %p132 = por %p130, %p131
    %p134 = scmp.ne.s32.totalorder %s119, %s133
    %p135 = scmp.eq.s32.totalorder %s25, 0
    %p136 = por %p134, %p135
    %s138 = sadd.s32 %s137, 1
    %p141 = scmp.eq.s32.totalorder %s19, 1
    %p142 = scmp.ne.s32.totalorder %s137, %s139
    %p143 = scmp.eq.s32.totalorder %s19, 0
    %p144 = por %p142, %p143
    %p145 = scmp.ne.s32.totalorder %s137, %s139
    %p146 = scmp.eq.s32.totalorder %s24, 1
    %p147 = por %p145, %p146
    %p148 = scmp.ne.s32.totalorder %s139, %s140
    %p149 = scmp.eq.s32.totalorder %s24, 0
    %p150 = por %p148, %p149
    %p151 = scmp.ne.s32.totalorder %s139, %s140
    %p152 = scmp.eq.s32.totalorder %s25, 1
    %p153 = por %p151, %p152
    %p155 = scmp.ne.s32.totalorder %s140, %s154
    %p156 = scmp.eq.s32.totalorder %s25, 0
    %p157 = por %p155, %p156
    %s159 = sadd.s32 %s158, 1
    %p162 = scmp.eq.s32.totalorder %s19, 1
    %p163 = scmp.ne.s32.totalorder %s158, %s160
    %p164 = scmp.eq.s32.totalorder %s19, 0
    %p165 = por %p163, %p164
    %p166 = scmp.ne.s32.totalorder %s158, %s160
    %p167 = scmp.eq.s32.totalorder %s24, 1
    %p168 = por %p166, %p167
    %p169 = scmp.ne.s32.totalorder %s160, %s161
    %p170 = scmp.eq.s32.totalorder %s24, 0
    %p171 = por %p169, %p170
    %p172 = scmp.ne.s32.totalorder %s160, %s161
    %p173 = scmp.eq.s32.totalorder %s25, 1
    %p174 = por %p172, %p173
    %p176 = scmp.ne.s32.totalorder %s161, %s175
    %p177 = scmp.eq.s32.totalorder %s25, 0
    %p178 = por %p176, %p177
    %s180 = sadd.s32 %s179, 1
    %p183 = scmp.eq.s32.totalorder %s19, 1
    %p184 = scmp.ne.s32.totalorder %s179, %s181
    %p185 = scmp.eq.s32.totalorder %s19, 0
    %p186 = por %p184, %p185
    %p187 = scmp.ne.s32.totalorder %s179, %s181
    %p188 = scmp.eq.s32.totalorder %s24, 1
    %p189 = por %p187, %p188
    %p190 = scmp.ne.s32.totalorder %s181, %s182
    %p191 = scmp.eq.s32.totalorder %s24, 0
    %p192 = por %p190, %p191
    %p193 = scmp.ne.s32.totalorder %s181, %s182
    %p194 = scmp.eq.s32.totalorder %s25, 1
    %p195 = por %p193, %p194
    %p197 = scmp.ne.s32.totalorder %s182, %s196
    %p198 = scmp.eq.s32.totalorder %s25, 0
    %p199 = por %p197, %p198
    %s201 = sadd.s32 %s200, 1
    %p204 = scmp.eq.s32.totalorder %s19, 1
    %p205 = scmp.ne.s32.totalorder %s200, %s202
    %p206 = scmp.eq.s32.totalorder %s19, 0
    %p207 = por %p205, %p206
    %p208 = scmp.ne.s32.totalorder %s200, %s202
    %p209 = scmp.eq.s32.totalorder %s24, 1
    %p210 = por %p208, %p209
    %p211 = scmp.ne.s32.totalorder %s202, %s203
    %p212 = scmp.eq.s32.totalorder %s24, 0
    %p213 = por %p211, %p212
    %p214 = scmp.ne.s32.totalorder %s202, %s203
    %p215 = scmp.eq.s32.totalorder %s25, 1
    %p216 = por %p214, %p215
    %p218 = scmp.ne.s32.totalorder %s203, %s217
    %p219 = scmp.eq.s32.totalorder %s25, 0
    %p220 = por %p218, %p219
    %s222 = sadd.s32 %s221, 1
    %p225 = scmp.eq.s32.totalorder %s19, 1
    %p226 = scmp.ne.s32.totalorder %s221, %s223
    %p227 = scmp.eq.s32.totalorder %s19, 0
    %p228 = por %p226, %p227
    %p229 = scmp.ne.s32.totalorder %s221, %s223
    %p230 = scmp.eq.s32.totalorder %s24, 1
    %p231 = por %p229, %p230
    %p232 = scmp.ne.s32.totalorder %s223, %s224
    %p233 = scmp.eq.s32.totalorder %s24, 0
    %p234 = por %p232, %p233
    %p235 = scmp.ne.s32.totalorder %s223, %s224
    %p236 = scmp.eq.s32.totalorder %s25, 1
    %p237 = por %p235, %p236
    %p239 = scmp.ne.s32.totalorder %s224, %s238
    %p240 = scmp.eq.s32.totalorder %s25, 0
    %p241 = por %p239, %p240
    %s242 = ssub.s32 %s19, %s26
    %p243 = scmp.eq.s32.totalorder %s242, 0
    %s245 = sadd.s32 %s244, 1
    %s246 = scalar_select %p243, %s244, %s245
    %p249 = pneg %p243
    %p250 = scmp.eq.s32.totalorder %s19, 1
    %p251 = por %p249, %p250
    %p252 = scmp.ne.s32.totalorder %s244, %s247
    %p253 = scmp.eq.s32.totalorder %s19, 0
    %p254 = por %p252, %p253
    %p255 = scmp.ne.s32.totalorder %s244, %s247
    %p256 = scmp.eq.s32.totalorder %s24, 1
    %p257 = por %p255, %p256
    %p258 = scmp.ne.s32.totalorder %s247, %s248
    %p259 = scmp.eq.s32.totalorder %s24, 0
    %p260 = por %p258, %p259
    %p261 = scmp.ne.s32.totalorder %s247, %s248
    %p262 = scmp.eq.s32.totalorder %s25, 1
    %p263 = por %p261, %p262
    %p265 = scmp.ne.s32.totalorder %s248, %s264
    %p266 = scmp.eq.s32.totalorder %s25, 0
    %p267 = por %p265, %p266
    %s268 = ssub.s32 %s19, %s26
    %p269 = scmp.eq.s32.totalorder %s268, 0
    %s271 = sadd.s32 %s270, 1
    %s272 = scalar_select %p269, %s270, %s271
    %p275 = pneg %p269
    %p276 = scmp.eq.s32.totalorder %s19, 1
    %p277 = por %p275, %p276
    %p278 = scmp.ne.s32.totalorder %s270, %s273
    %p279 = scmp.eq.s32.totalorder %s19, 0
    %p280 = por %p278, %p279
    %p281 = scmp.ne.s32.totalorder %s270, %s273
    %p282 = scmp.eq.s32.totalorder %s24, 1
    %p283 = por %p281, %p282
    %p284 = scmp.ne.s32.totalorder %s273, %s274
    %p285 = scmp.eq.s32.totalorder %s24, 0
    %p286 = por %p284, %p285
    %p287 = scmp.ne.s32.totalorder %s273, %s274
    %p288 = scmp.eq.s32.totalorder %s25, 1
    %p289 = por %p287, %p288
    %p291 = scmp.ne.s32.totalorder %s274, %s290
    %p292 = scmp.eq.s32.totalorder %s25, 0
    %p293 = por %p291, %p292
    %s294 = ssub.s32 %s19, %s26
    %p295 = scmp.eq.s32.totalorder %s294, 0
    %s297 = sadd.s32 %s296, 1
    %s298 = scalar_select %p295, %s296, %s297
    %p301 = pneg %p295
    %p302 = scmp.eq.s32.totalorder %s19, 1
    %p303 = por %p301, %p302
    %p304 = scmp.ne.s32.totalorder %s296, %s299
    %p305 = scmp.eq.s32.totalorder %s19, 0
    %p306 = por %p304, %p305
    %p307 = scmp.ne.s32.totalorder %s296, %s299
    %p308 = scmp.eq.s32.totalorder %s24, 1
    %p309 = por %p307, %p308
    %p310 = scmp.ne.s32.totalorder %s299, %s300
    %p311 = scmp.eq.s32.totalorder %s24, 0
    %p312 = por %p310, %p311
    %p313 = scmp.ne.s32.totalorder %s299, %s300
    %p314 = scmp.eq.s32.totalorder %s25, 1
    %p315 = por %p313, %p314
    %p317 = scmp.ne.s32.totalorder %s300, %s316
    %p318 = scmp.eq.s32.totalorder %s25, 0
    %p319 = por %p317, %p318
    %p320 = scmp.le.s32.totalorder 1, %s19
    %p321 = scmp.lt.s32.totalorder %s19, 3
    %p322 = pnand %p320, %p321
    %p323 = pneg %p322
    // Predicated region
    $region9: #{forward.1} parent=5 // pred_check
      _
    $region10: #{forward.1} parent=5 // pred_check_branch
      %325 = sbr.rel (%p322) target = $region12
    $region11: #{forward.1} parent=5 // pred_region
      %s326 = ssub.s32 %s19, 1
      // Predicated region
      $region13: #{forward.1} parent=11 // pred_check
        %p327 = pneg %p66
      $region14: #{forward.1} parent=11 // pred_check_branch
        %329 = sbr.rel (%p327) target = $region16
      $region15: #{forward.1} parent=11 // pred_region
        _
      $region16: #{forward.1} parent=11 // pred_fallthru
        _
      // Predicated region
      $region17: #{forward.1} parent=11 // pred_check
        %p330 = pneg %p87
      $region18: #{forward.1} parent=11 // pred_check_branch
        %332 = sbr.rel (%p330) target = $region20
      $region19: #{forward.1} parent=11 // pred_region
        _
      $region20: #{forward.1} parent=11 // pred_fallthru
        _
      // Predicated region
      $region21: #{forward.1} parent=11 // pred_check
        %p333 = pneg %p108
      $region22: #{forward.1} parent=11 // pred_check_branch
        %335 = sbr.rel (%p333) target = $region24
      $region23: #{forward.1} parent=11 // pred_region
        _
      $region24: #{forward.1} parent=11 // pred_fallthru
        _
      // Predicated region
      $region25: #{forward.1} parent=11 // pred_check
        %p336 = pneg %p129
      $region26: #{forward.1} parent=11 // pred_check_branch
        %338 = sbr.rel (%p336) target = $region28
      $region27: #{forward.1} parent=11 // pred_region
        _
      $region28: #{forward.1} parent=11 // pred_fallthru
        _
      // Predicated region
      $region29: #{forward.1} parent=11 // pred_check
        %p339 = pneg %p150
      $region30: #{forward.1} parent=11 // pred_check_branch
        %341 = sbr.rel (%p339) target = $region32
      $region31: #{forward.1} parent=11 // pred_region
        _
      $region32: #{forward.1} parent=11 // pred_fallthru
        _
      // Predicated region
      $region33: #{forward.1} parent=11 // pred_check
        %p342 = pneg %p171
      $region34: #{forward.1} parent=11 // pred_check_branch
        %344 = sbr.rel (%p342) target = $region36
      $region35: #{forward.1} parent=11 // pred_region
        _
      $region36: #{forward.1} parent=11 // pred_fallthru
        _
      // Predicated region
      $region37: #{forward.1} parent=11 // pred_check
        %p345 = pneg %p192
      $region38: #{forward.1} parent=11 // pred_check_branch
        %347 = sbr.rel (%p345) target = $region40
      $region39: #{forward.1} parent=11 // pred_region
        _
      $region40: #{forward.1} parent=11 // pred_fallthru
        _
      // Predicated region
      $region41: #{forward.1} parent=11 // pred_check
        %p348 = pneg %p213
      $region42: #{forward.1} parent=11 // pred_check_branch
        %350 = sbr.rel (%p348) target = $region44
      $region43: #{forward.1} parent=11 // pred_region
        _
      $region44: #{forward.1} parent=11 // pred_fallthru
        _
      // Predicated region
      $region45: #{forward.1} parent=11 // pred_check
        %p351 = pneg %p234
      $region46: #{forward.1} parent=11 // pred_check_branch
        %353 = sbr.rel (%p351) target = $region48
      $region47: #{forward.1} parent=11 // pred_region
        _
      $region48: #{forward.1} parent=11 // pred_fallthru
        _
    $region12: #{forward.1} parent=5 // pred_fallthru
      _
    %p354 = scmp.lt.s32.totalorder %s19, 2
    // Predicated region
    $region49: #{forward.1} parent=5 // pred_check
      %p355 = pneg %p354
    $region50: #{forward.1} parent=5 // pred_check_branch
      %357 = sbr.rel (%p355) target = $region52
    $region51: #{forward.1} parent=5 // pred_region
      // Predicated region
      $region53: #{forward.1} parent=51 // pred_check
        %p358 = pneg %p39
      $region54: #{forward.1} parent=51 // pred_check_branch
        %360 = sbr.rel (%p358) target = $region56
      $region55: #{forward.1} parent=51 // pred_region
        %p361 = scmp.lt.s32.totalorder %s19, 1
        %s362 = scalar_select %p361, %s19, 1
        %s363 = smul.addr %s362, 2
        %s364 = smul.addr %s363, 4
        %s365 = scalar_lea.vmem %s0, %s364
      $region56: #{forward.1} parent=51 // pred_fallthru
        _
    $region52: #{forward.1} parent=5 // pred_fallthru
      _
    %p366 = scmp.le.s32.totalorder 1, %s19
    %p367 = scmp.lt.s32.totalorder %s19, 3
    %p368 = pnand %p366, %p367
    %p369 = pneg %p368
    // Predicated region
    $region57: #{forward.1} parent=5 // pred_check
      _
    $region58: #{forward.1} parent=5 // pred_check_branch
      %371 = sbr.rel (%p368) target = $region60
    $region59: #{forward.1} parent=5 // pred_region
      %s372 = ssub.s32 %s19, 1
      %p373 = scmp.lt.s32.totalorder %s24, 1
      %s374 = scalar_select %p373, %s24, 1
      %s375 = smul.addr %s374, 2
      %s376 = smul.addr %s375, 4
      %s377 = scalar_lea.vmem %s0, %s376
      %p378 = pneg %p45
      %p379 = pneg %p42
      %p380 = pneg %p66
      %p381 = pneg %p63
      %p382 = pneg %p87
      %p383 = pneg %p84
      %p384 = pneg %p108
      %p385 = pneg %p105
      %p386 = pneg %p129
      %p387 = pneg %p126
      %p388 = pneg %p150
      %p389 = pneg %p147
      %p390 = pneg %p171
      %p391 = pneg %p168
      %p392 = pneg %p192
      %p393 = pneg %p189
      %p394 = pneg %p213
      %p395 = pneg %p210
      %p396 = pneg %p234
      %p397 = pneg %p231
      %p398 = pneg %p260
      %p399 = pneg %p257
      %p400 = scmp.lt.s32.totalorder %s24, 1
      %s401 = scalar_select %p400, %s24, 1
      %s402 = smul.addr %s401, 6
      %s403 = smul.addr %s402, 4
      %s404 = scalar_lea.vmem %s10, %s403
      %p405 = pneg %p286
      %p406 = pneg %p283
      %p407 = scmp.lt.s32.totalorder %s24, 1
      %s408 = scalar_select %p407, %s24, 1
      %s409 = smul.addr %s408, 6
      %s410 = smul.addr %s409, 4
      %s411 = scalar_lea.vmem %s11, %s410
      %p412 = pneg %p312
      %p413 = pneg %p309
      %p414 = scmp.lt.s32.totalorder %s24, 1
      %s415 = scalar_select %p414, %s24, 1
      %s416 = smul.addr %s415, 6
      %s417 = smul.addr %s416, 4
      %s418 = scalar_lea.vmem %s12, %s417
      %p419 = scmp.lt.s32.totalorder %s24, 1
      %s420 = scalar_select %p419, %s24, 1
      %s421 = smul.addr %s420, 2
      %s422 = smul.addr %s421, 4
      %s423 = scalar_lea.vmem %s0, %s422
      %p424 = scmp.lt.s32.totalorder %s24, 1
      %s425 = scalar_select %p424, %s24, 1
      %s426 = smul.addr %s425, 6
      %s427 = smul.addr %s426, 4
      %s428 = scalar_lea.vmem %s10, %s427
      %p429 = scmp.lt.s32.totalorder %s24, 1
      %s430 = scalar_select %p429, %s24, 1
      %s431 = smul.addr %s430, 6
      %s432 = smul.addr %s431, 4
      %s433 = scalar_lea.vmem %s11, %s432
      %p434 = scmp.lt.s32.totalorder %s24, 1
      %s435 = scalar_select %p434, %s24, 1
      %s436 = smul.addr %s435, 6
      %s437 = smul.addr %s436, 4
      %s438 = scalar_lea.vmem %s12, %s437
      %vm439 = vcmask 138240
      %440 = vst.msk [vmem:[#allocation2] sm:$0xff] %vm439, 0.0
      %441 = vst.msk [vmem:[#allocation2 + $0x18] sm:$0xff] %vm439, 0.0
      %vm442 = vcmask 277640
      %443 = vst.msk [vmem:[#allocation2 + $0x10] sm:$0xff] %vm442, 0.0
      %444 = vst.msk [vmem:[#allocation2 + $0x28] sm:$0xff] %vm442, 0.0
      %v445 = vld [vmem:[%s1] sm:$0xff]
      %v446 = vld [vmem:[%s1 + $0x8] sm:$0xff]
      %v447 = vld [vmem:[%s1 + $0x10] sm:$0x1]
      %v448 = vld [vmem:[%s1 + $0x18] sm:$0x1]
      %v449 = vld [vmem:[%s423] sm:$0x77]
      %v451 = vcombine.high %v449, %v449
      %452 = vrot.lane.b32.xlu0 %v449, 17
      %v453 = vpop.permute.xlu0 %452
      %454 = vrot.lane.b32.xlu0 %v451, 17
      %v455 = vpop.permute.xlu0 %454
      %v456 = vsel %vm439, %v453, %v455
      %vm460 = vcmask 1042568
      %461 = vst.msk [vmem:[#allocation2] sm:$0x7] %vm460, %v453
      %462 = vst [vmem:[#allocation2 + $0x8] sm:$0x7] %v456
      %vm463 = vcmask 133120
      %464 = vst.msk [vmem:[#allocation2 + $0x10] sm:$0x7] %vm463, %v455
      %v465 = vld [vmem:[#allocation2] sm:$0x7]
      %v466 = vld [vmem:[#allocation2 + $0x8] sm:$0x7]
      %v467 = vlaneseq
      %v468 = vshrl.u32 %v467, 7
      %v469 = vsub.s32 0, %v468
      %v470 = vrot.slane %v445, %v469
      %v471 = vlaneseq
      %v472 = vshrl.u32 %v471, 7
      %v473 = vsub.s32 0, %v472
      %v474 = vrot.slane %v446, %v473
      %v475 = vmul.f32 %v465, %v470
      %v476 = vmul.f32 %v466, %v474
      %477 = vst [vmem:[#allocation3] sm:$0x7] %v475
      %478 = vst [vmem:[#allocation3 + $0x8] sm:$0x7] %v476
      %v479 = vld [vmem:[#allocation2] sm:$0x7]
      %v480 = vld [vmem:[#allocation2 + $0x8] sm:$0x7]
      %v481 = vld [vmem:[#allocation2 + $0x10] sm:$0x7]
      %v482 = vlaneseq
      %v483 = vshrl.u32 %v482, 7
      %v484 = vsub.s32 1, %v483
      %v485 = vrot.slane %v445, %v484
      %v486 = vlaneseq
      %v487 = vshrl.u32 %v486, 7
      %v488 = vsub.s32 1, %v487
      %v489 = vrot.slane %v446, %v488
      %492 = vrot.lane.b32.xlu0 %v485, 1
      %v493 = vpop.permute.xlu0 %492
      %494 = vrot.lane.b32.xlu0 %v489, 1
      %v495 = vpop.permute.xlu0 %494
      %vm496 = vcmask 7168
      %v497 = vsel %vm496, %v493, %v495
      %v501 = vmul.f32 %v479, %v493
      %v502 = vmul.f32 %v480, %v497
      %v503 = vmul.f32 %v481, %v495
      %v507 = vrot.slane %v501, 5
      %v508 = vrot.slane %v502, 5
      %v509 = vrot.slane %v503, 5
      %510 = vrot.lane.b32.xlu0 %v507, 127
      %v511 = vpop.permute.xlu0 %510
      %512 = vrot.lane.b32.xlu0 %v508, 127
      %v513 = vpop.permute.xlu0 %512
      %514 = vrot.lane.b32.xlu0 %v509, 127
      %v515 = vpop.permute.xlu0 %514
      %vm516 = vcmask 1039360
      %v517 = vsel %vm516, %v511, %v513
      %v518 = vsel %vm516, %v513, %v515
      %521 = vst [vmem:[#allocation3] sm:$0x38] %v517
      %522 = vst [vmem:[#allocation3 + $0x8] sm:$0x38] %v518
      %v523 = vld [vmem:[#allocation2] sm:$0x7]
      %v524 = vld [vmem:[#allocation2 + $0x8] sm:$0x7]
      %v525 = vld [vmem:[#allocation2 + $0x10] sm:$0x7]
      %v526 = vlaneseq
      %v527 = vshrl.u32 %v526, 7
      %v528 = vsub.s32 2, %v527
      %v529 = vrot.slane %v445, %v528
      %v530 = vlaneseq
      %v531 = vshrl.u32 %v530, 7
      %v532 = vsub.s32 2, %v531
      %v533 = vrot.slane %v446, %v532
      %536 = vrot.lane.b32.xlu0 %v529, 2
      %v537 = vpop.permute.xlu0 %536
      %538 = vrot.lane.b32.xlu0 %v533, 2
      %v539 = vpop.permute.xlu0 %538
      %vm540 = vcmask 15360
      %v541 = vsel %vm540, %v537, %v539
      %v545 = vmul.f32 %v523, %v537
      %v546 = vmul.f32 %v524, %v541
      %v547 = vmul.f32 %v525, %v539
      %v551 = vrot.slane %v545, 2
      %v552 = vrot.slane %v546, 2
      %v553 = vrot.slane %v547, 2
      %554 = vrot.lane.b32.xlu0 %v551, 126
      %v555 = vpop.permute.xlu0 %554
      %556 = vrot.lane.b32.xlu0 %v552, 126
      %v557 = vpop.permute.xlu0 %556
      %558 = vrot.lane.b32.xlu0 %v553, 126
      %v559 = vpop.permute.xlu0 %558
      %vm560 = vcmask 1031168
      %v561 = vsel %vm560, %v555, %v557
      %v562 = vsel %vm560, %v557, %v559
      %565 = vst [vmem:[#allocation3] sm:$0xc0] %v561
      %566 = vst [vmem:[#allocation3 + $0x8] sm:$0xc0] %v562
      %567 = vst [vmem:[#allocation3 + $0x10] sm:$0x1] %v561
      %568 = vst [vmem:[#allocation3 + $0x18] sm:$0x1] %v562
      %v569 = vld [vmem:[#allocation2] sm:$0x7]
      %v570 = vld [vmem:[#allocation2 + $0x8] sm:$0x7]
      %v571 = vld [vmem:[#allocation2 + $0x10] sm:$0x7]
      %v572 = vlaneseq
      %v573 = vshrl.u32 %v572, 7
      %v574 = vsub.s32 3, %v573
      %v575 = vrot.slane %v445, %v574
      %v576 = vlaneseq
      %v577 = vshrl.u32 %v576, 7
      %v578 = vsub.s32 3, %v577
      %v579 = vrot.slane %v446, %v578
      %582 = vrot.lane.b32.xlu0 %v575, 16
      %v583 = vpop.permute.xlu0 %582
      %584 = vrot.lane.b32.xlu0 %v579, 16
      %v585 = vpop.permute.xlu0 %584
      %vm586 = vcmask 130048
      %v587 = vsel %vm586, %v583, %v585
      %v591 = vmul.f32 %v569, %v583
      %v592 = vmul.f32 %v570, %v587
      %v593 = vmul.f32 %v571, %v585
      %v597 = vrot.slane %v591, 7
      %v598 = vrot.slane %v592, 7
      %v599 = vrot.slane %v593, 7
      %600 = vrot.lane.b32.xlu0 %v597, 112
      %v601 = vpop.permute.xlu0 %600
      %602 = vrot.lane.b32.xlu0 %v598, 112
      %v603 = vpop.permute.xlu0 %602
      %604 = vrot.lane.b32.xlu0 %v599, 112
      %v605 = vpop.permute.xlu0 %604
      %vm606 = vcmask 916480
      %v607 = vsel %vm606, %v601, %v603
      %v608 = vsel %vm606, %v603, %v605
      %611 = vst [vmem:[#allocation3 + $0x10] sm:$0xe] %v607
      %612 = vst [vmem:[#allocation3 + $0x18] sm:$0xe] %v608
      %v613 = vld [vmem:[#allocation2] sm:$0x7]
      %v614 = vld [vmem:[#allocation2 + $0x8] sm:$0x7]
      %v615 = vld [vmem:[#allocation2 + $0x10] sm:$0x7]
      %v616 = vlaneseq
      %v617 = vshrl.u32 %v616, 7
      %v618 = vsub.s32 4, %v617
      %v619 = vrot.slane %v445, %v618
      %v620 = vlaneseq
      %v621 = vshrl.u32 %v620, 7
      %v622 = vsub.s32 4, %v621
      %v623 = vrot.slane %v446, %v622
      %626 = vrot.lane.b32.xlu0 %v619, 17
      %v627 = vpop.permute.xlu0 %626
      %628 = vrot.lane.b32.xlu0 %v623, 17
      %v629 = vpop.permute.xlu0 %628
      %v630 = vsel %vm439, %v627, %v629
      %v634 = vmul.f32 %v613, %v627
      %v635 = vmul.f32 %v614, %v630
      %v636 = vmul.f32 %v615, %v629
      %v640 = vrot.slane %v634, 4
      %v641 = vrot.slane %v635, 4
      %v642 = vrot.slane %v636, 4
      %643 = vrot.lane.b32.xlu0 %v640, 111
      %v644 = vpop.permute.xlu0 %643
      %645 = vrot.lane.b32.xlu0 %v641, 111
      %v646 = vpop.permute.xlu0 %645
      %647 = vrot.lane.b32.xlu0 %v642, 111
      %v648 = vpop.permute.xlu0 %647
      %vm649 = vcmask 908288
      %v650 = vsel %vm649, %v644, %v646
      %v651 = vsel %vm649, %v646, %v648
      %654 = vst [vmem:[#allocation3 + $0x10] sm:$0x70] %v650
      %655 = vst [vmem:[#allocation3 + $0x18] sm:$0x70] %v651
      %v656 = vld [vmem:[#allocation2] sm:$0x7]
      %v657 = vld [vmem:[#allocation2 + $0x8] sm:$0x7]
      %v658 = vld [vmem:[#allocation2 + $0x10] sm:$0x7]
      %v659 = vlaneseq
      %v660 = vshrl.u32 %v659, 7
      %v661 = vsub.s32 5, %v660
      %v662 = vrot.slane %v445, %v661
      %v663 = vlaneseq
      %v664 = vshrl.u32 %v663, 7
      %v665 = vsub.s32 5, %v664
      %v666 = vrot.slane %v446, %v665
      %669 = vrot.lane.b32.xlu0 %v662, 18
      %v670 = vpop.permute.xlu0 %669
      %671 = vrot.lane.b32.xlu0 %v666, 18
      %v672 = vpop.permute.xlu0 %671
      %vm673 = vcmask 146432
      %v674 = vsel %vm673, %v670, %v672
      %v678 = vmul.f32 %v656, %v670
      %v679 = vmul.f32 %v657, %v674
      %v680 = vmul.f32 %v658, %v672
      %v684 = vrot.slane %v678, 1
      %v685 = vrot.slane %v679, 1
      %v686 = vrot.slane %v680, 1
      %687 = vrot.lane.b32.xlu0 %v684, 110
      %v688 = vpop.permute.xlu0 %687
      %689 = vrot.lane.b32.xlu0 %v685, 110
      %v690 = vpop.permute.xlu0 %689
      %691 = vrot.lane.b32.xlu0 %v686, 110
      %v692 = vpop.permute.xlu0 %691
      %vm693 = vcmask 900096
      %v694 = vsel %vm693, %v688, %v690
      %v695 = vsel %vm693, %v690, %v692
      %698 = vst [vmem:[#allocation3 + $0x10] sm:$0x80] %v694
      %699 = vst [vmem:[#allocation3 + $0x18] sm:$0x80] %v695
      %700 = vst [vmem:[#allocation3 + $0x20] sm:$0x3] %v694
      %701 = vst [vmem:[#allocation3 + $0x28] sm:$0x3] %v695
      %v702 = vld [vmem:[#allocation2] sm:$0x7]
      %v703 = vld [vmem:[#allocation2 + $0x8] sm:$0x7]
      %v704 = vld [vmem:[#allocation2 + $0x10] sm:$0x7]
      %v705 = vlaneseq
      %v706 = vshrl.u32 %v705, 7
      %v707 = vsub.s32 6, %v706
      %v708 = vrot.slane %v445, %v707
      %v709 = vlaneseq
      %v710 = vshrl.u32 %v709, 7
      %v711 = vsub.s32 6, %v710
      %v712 = vrot.slane %v446, %v711
      %715 = vrot.lane.b32.xlu0 %v708, 32
      %v716 = vpop.permute.xlu0 %715
      %717 = vrot.lane.b32.xlu0 %v712, 32
      %v718 = vpop.permute.xlu0 %717
      %vm719 = vcmask 261120
      %v720 = vsel %vm719, %v716, %v718
      %v724 = vmul.f32 %v702, %v716
      %v725 = vmul.f32 %v703, %v720
      %v726 = vmul.f32 %v704, %v718
      %v730 = vrot.slane %v724, 6
      %v731 = vrot.slane %v725, 6
      %v732 = vrot.slane %v726, 6
      %733 = vrot.lane.b32.xlu0 %v730, 96
      %v734 = vpop.permute.xlu0 %733
      %735 = vrot.lane.b32.xlu0 %v731, 96
      %v736 = vpop.permute.xlu0 %735
      %737 = vrot.lane.b32.xlu0 %v732, 96
      %v738 = vpop.permute.xlu0 %737
      %vm739 = vcmask 785408
      %v740 = vsel %vm739, %v734, %v736
      %v741 = vsel %vm739, %v736, %v738
      %744 = vst [vmem:[#allocation3 + $0x20] sm:$0x1c] %v740
      %745 = vst [vmem:[#allocation3 + $0x28] sm:$0x1c] %v741
      %v746 = vld [vmem:[#allocation2] sm:$0x7]
      %v747 = vld [vmem:[#allocation2 + $0x8] sm:$0x7]
      %v748 = vld [vmem:[#allocation2 + $0x10] sm:$0x7]
      %v749 = vlaneseq
      %v750 = vshrl.u32 %v749, 7
      %v751 = vsub.s32 7, %v750
      %v752 = vrot.slane %v445, %v751
      %v753 = vlaneseq
      %v754 = vshrl.u32 %v753, 7
      %v755 = vsub.s32 7, %v754
      %v756 = vrot.slane %v446, %v755
      %759 = vrot.lane.b32.xlu0 %v752, 33
      %v760 = vpop.permute.xlu0 %759
      %761 = vrot.lane.b32.xlu0 %v756, 33
      %v762 = vpop.permute.xlu0 %761
      %vm763 = vcmask 269312
      %v764 = vsel %vm763, %v760, %v762
      %v768 = vmul.f32 %v746, %v760
      %v769 = vmul.f32 %v747, %v764
      %v770 = vmul.f32 %v748, %v762
      %v774 = vrot.slane %v768, 3
      %v775 = vrot.slane %v769, 3
      %v776 = vrot.slane %v770, 3
      %777 = vrot.lane.b32.xlu0 %v774, 95
      %v778 = vpop.permute.xlu0 %777
      %779 = vrot.lane.b32.xlu0 %v775, 95
      %v780 = vpop.permute.xlu0 %779
      %781 = vrot.lane.b32.xlu0 %v776, 95
      %v782 = vpop.permute.xlu0 %781
      %vm783 = vcmask 777216
      %v784 = vsel %vm783, %v778, %v780
      %v785 = vsel %vm783, %v780, %v782
      %788 = vst [vmem:[#allocation3 + $0x20] sm:$0xe0] %v784
      %789 = vst [vmem:[#allocation3 + $0x28] sm:$0xe0] %v785
      %v790 = vld [vmem:[#allocation2] sm:$0x7]
      %v791 = vld [vmem:[#allocation2 + $0x8] sm:$0x7]
      %v792 = vld [vmem:[#allocation2 + $0x10] sm:$0x7]
      %v793 = vlaneseq
      %v794 = vshrl.u32 %v793, 7
      %v795 = vsub.s32 0, %v794
      %v796 = vrot.slane %v447, %v795
      %v797 = vlaneseq
      %v798 = vshrl.u32 %v797, 7
      %v799 = vsub.s32 0, %v798
      %v800 = vrot.slane %v448, %v799
      %803 = vrot.lane.b32.xlu0 %v796, 34
      %v804 = vpop.permute.xlu0 %803
      %805 = vrot.lane.b32.xlu0 %v800, 34
      %v806 = vpop.permute.xlu0 %805
      %vm807 = vcmask 277504
      %v808 = vsel %vm807, %v804, %v806
      %v812 = vmul.f32 %v790, %v804
      %v813 = vmul.f32 %v791, %v808
      %v814 = vmul.f32 %v792, %v806
      %818 = vrot.lane.b32.xlu0 %v812, 94
      %v819 = vpop.permute.xlu0 %818
      %820 = vrot.lane.b32.xlu0 %v813, 94
      %v821 = vpop.permute.xlu0 %820
      %822 = vrot.lane.b32.xlu0 %v814, 94
      %v823 = vpop.permute.xlu0 %822
      %vm824 = vcmask 769024
      %v825 = vsel %vm824, %v819, %v821
      %v826 = vsel %vm824, %v821, %v823
      %829 = vst [vmem:[#allocation3 + $0x30] sm:$0x7] %v825
      %830 = vst [vmem:[#allocation3 + $0x38] sm:$0x7] %v826
      %v831 = vld [vmem:[%s2] sm:$0xff]
      %v832 = vld [vmem:[%s2 + $0x8] sm:$0xff]
      %v833 = vld [vmem:[#allocation3] sm:$0xff]
      %v834 = vld [vmem:[#allocation3 + $0x8] sm:$0xff]
      %v835 = vld [vmem:[#allocation3 + $0x10] sm:$0xff]
      %v836 = vld [vmem:[#allocation3 + $0x18] sm:$0xff]
      %v837 = vld [vmem:[#allocation3 + $0x20] sm:$0xff]
      %v838 = vld [vmem:[#allocation3 + $0x28] sm:$0xff]
      %v839 = vld [vmem:[#allocation3 + $0x30] sm:$0x7]
      %v840 = vld [vmem:[#allocation3 + $0x38] sm:$0x7]
      %v841 = vld [vmem:[%s3] sm:$0xff]
      %v842 = vld [vmem:[%s3 + $0x8] sm:$0xff]
      %844 = vset.pattern.permute.xlu0 0
      %845 = vperm.xlu0 %844, %v841
      %v846 = vpop.permute.xlu0 %845
      %849 = vset.pattern.permute.xlu0 0
      %850 = vperm.xlu0 %849, %v842
      %v851 = vpop.permute.xlu0 %850
      %vm853 = vcmask 220160
      %v855 = vsel %vm853, %v831, 0
      %v858 = vsel %vm853, %v832, 0
      %vm860 = vcmask 1042432
      %v862 = vsel %vm860, %v839, 0
      %v865 = vsel %vm860, %v840, 0
      %867 = vmatprep.subr.mxu0 0.0
      %868 = vmatpush1.msra.mxu0 0.0
      %869 = vmatprep.subr.mxu0 0.0
      %870 = vmatpush1.msra.mxu0 0.0
      %871 = vmatprep.subr.mxu0 0.0
      %872 = vmatpush1.msra.mxu0 0.0
      %873 = vmatprep.subr.mxu0 0.0
      %874 = vmatpush1.msra.mxu0 0.0
      %875 = vmatprep.subr.mxu0 0.0
      %876 = vmatpush1.msra.mxu0 0.0
      %877 = vmatprep.subr.mxu0 0.0
      %878 = vmatpush1.msra.mxu0 0.0
      %879 = vmatprep.subr.mxu0 0.0
      %880 = vmatpush1.msra.mxu0 0.0
      %881 = vmatprep.subr.mxu0 0.0
      %882 = vmatpush1.msra.mxu0 0.0
      %883 = vmatprep.subr.mxu0 0.0
      %884 = vmatpush1.msra.mxu0 0.0
      %885 = vmatprep.subr.mxu0 0.0
      %886 = vmatpush1.msra.mxu0 0.0
      %887 = vmatprep.subr.mxu0 0.0
      %888 = vmatpush1.msra.mxu0 0.0
      %889 = vmatprep.subr.mxu0 0.0
      %890 = vmatpush1.msra.mxu0 0.0
      %891 = vmatprep.subr.mxu0 %v865
      %892 = vmatpush1.msra.mxu0 %v862
      %893 = vmatprep.subr.mxu0 %v838
      %894 = vmatpush1.msra.mxu0 %v837
      %895 = vmatprep.subr.mxu0 %v836
      %896 = vmatpush1.msra.mxu0 %v835
      %897 = vmatprep.subr.mxu0 %v834
      %898 = vmatpush1.msra.mxu0 %v833
      %899 = vmatprep.subr.mxu0 0.0
      %900 = vmatpush2.msra.mxu0 0.0
      %901 = vmatprep.subr.mxu0 0.0
      %902 = vmatpush2.msra.mxu0 0.0
      %903 = vmatprep.subr.mxu0 0.0
      %904 = vmatpush2.msra.mxu0 0.0
      %905 = vmatprep.subr.mxu0 0.0
      %906 = vmatpush2.msra.mxu0 0.0
      %907 = vmatprep.subr.mxu0 0.0
      %908 = vmatpush2.msra.mxu0 0.0
      %909 = vmatprep.subr.mxu0 0.0
      %910 = vmatpush2.msra.mxu0 0.0
      %911 = vmatprep.subr.mxu0 0.0
      %912 = vmatpush2.msra.mxu0 0.0
      %913 = vmatprep.subr.mxu0 0.0
      %914 = vmatpush2.msra.mxu0 0.0
      %915 = vmatprep.subr.mxu0 0.0
      %916 = vmatpush2.msra.mxu0 0.0
      %917 = vmatprep.subr.mxu0 0.0
      %918 = vmatpush2.msra.mxu0 0.0
      %919 = vmatprep.subr.mxu0 0.0
      %920 = vmatpush2.msra.mxu0 0.0
      %921 = vmatprep.subr.mxu0 0.0
      %922 = vmatpush2.msra.mxu0 0.0
      %923 = vmatprep.subr.mxu0 0.0
      %924 = vmatpush2.msra.mxu0 0.0
      %925 = vmatprep.subr.mxu0 0.0
      %926 = vmatpush2.msra.mxu0 0.0
      %927 = vmatprep.subr.mxu0 0.0
      %928 = vmatpush2.msra.mxu0 0.0
      %929 = vmatprep.subr.mxu0 0.0
      %930 = vmatpush2.msra.mxu0 0.0
      %931 = vmatprep.mubr.f32.mxu0 0.0
      %932 = vmatmul.mubr.f32.gmra.mxu0 %v855
      %v933 = vpop.f32.mrf.mxu0
      %v934 = vadd.f32 %v846, %v933
      %v935 = vpop.f32.mrf.mxu0
      %v936 = vadd.f32 %v846, %v935
      %937 = vmatprep.mubr.f32.mxu0 0.0
      %938 = vmatmul.mubr.f32.gmra.mxu0 %v858
      %v939 = vpop.f32.mrf.mxu0
      %v940 = vadd.f32 %v851, %v939
      %v941 = vpop.f32.mrf.mxu0
      %v942 = vadd.f32 %v851, %v941
      %943 = vdwg.mxu0
      %v944 = vmax.f32 %v934, 0.0
      %v945 = vmax.f32 %v936, 0.0
      %v946 = vmax.f32 %v940, 0.0
      %v947 = vmax.f32 %v942, 0.0
      %952 = vrot.lane.b32.xlu0 %v944, 17
      %v953 = vpop.permute.xlu0 %952
      %954 = vrot.lane.b32.xlu0 %v945, 17
      %v955 = vpop.permute.xlu0 %954
      %956 = vrot.lane.b32.xlu0 %v946, 17
      %v957 = vpop.permute.xlu0 %956
      %958 = vrot.lane.b32.xlu0 %v947, 17
      %v959 = vpop.permute.xlu0 %958
      %v960 = vsel %vm439, %v953, %v955
      %v961 = vsel %vm439, %v957, %v959
      %vm968 = vcmask 1047688
      %969 = vst.msk [vmem:[#allocation2] sm:$0xff] %vm968, %v953
      %970 = vst [vmem:[#allocation2 + $0x8] sm:$0xff] %v960
      %971 = vst.msk [vmem:[#allocation2 + $0x10] sm:$0xff] %vm439, %v955
      %972 = vst.msk [vmem:[#allocation2 + $0x18] sm:$0xff] %vm968, %v957
      %973 = vst [vmem:[#allocation2 + $0x20] sm:$0xff] %v961
      %974 = vst.msk [vmem:[#allocation2 + $0x28] sm:$0xff] %vm439, %v959
      %v975 = vld [vmem:[#allocation2] sm:$0xff]
      %v976 = vld [vmem:[#allocation2 + $0x8] sm:$0xff]
      %v977 = vld [vmem:[#allocation2 + $0x18] sm:$0xff]
      %v978 = vld [vmem:[#allocation2 + $0x20] sm:$0xff]
      %v979 = vmul.f32 %v975, %v470
      %v980 = vmul.f32 %v976, %v474
      %v981 = vmul.f32 %v977, %v470
      %v982 = vmul.f32 %v978, %v474
      %983 = vst [vmem:[#allocation3] sm:$0xff] %v979
      %984 = vst [vmem:[#allocation3 + $0x8] sm:$0xff] %v980
      %985 = vst [vmem:[#allocation3 + $0x10] sm:$0xff] %v981
      %986 = vst [vmem:[#allocation3 + $0x18] sm:$0xff] %v982
      %v987 = vld [vmem:[#allocation2] sm:$0xff]
      %v988 = vld [vmem:[#allocation2 + $0x8] sm:$0xff]
      %v989 = vld [vmem:[#allocation2 + $0x10] sm:$0xff]
      %v990 = vld [vmem:[#allocation2 + $0x18] sm:$0xff]
      %v991 = vld [vmem:[#allocation2 + $0x20] sm:$0xff]
      %v992 = vld [vmem:[#allocation2 + $0x28] sm:$0xff]
      %v993 = vmul.f32 %v987, %v493
      %v994 = vmul.f32 %v988, %v497
      %v995 = vmul.f32 %v989, %v495
      %v996 = vmul.f32 %v990, %v493
      %v997 = vmul.f32 %v991, %v497
      %v998 = vmul.f32 %v992, %v495
      %1005 = vrot.lane.b32.xlu0 %v993, 127
      %v1006 = vpop.permute.xlu0 %1005
      %1007 = vrot.lane.b32.xlu0 %v994, 127
      %v1008 = vpop.permute.xlu0 %1007
      %1009 = vrot.lane.b32.xlu0 %v995, 127
      %v1010 = vpop.permute.xlu0 %1009
      %1011 = vrot.lane.b32.xlu0 %v996, 127
      %v1012 = vpop.permute.xlu0 %1011
      %1013 = vrot.lane.b32.xlu0 %v997, 127
      %v1014 = vpop.permute.xlu0 %1013
      %1015 = vrot.lane.b32.xlu0 %v998, 127
      %v1016 = vpop.permute.xlu0 %1015
      %v1017 = vsel %vm516, %v1006, %v1008
      %v1018 = vsel %vm516, %v1008, %v1010
      %v1019 = vsel %vm516, %v1012, %v1014
      %v1020 = vsel %vm516, %v1014, %v1016
      %1025 = vst [vmem:[#allocation3 + $0x20] sm:$0xff] %v1017
      %1026 = vst [vmem:[#allocation3 + $0x28] sm:$0xff] %v1018
      %1027 = vst [vmem:[#allocation3 + $0x30] sm:$0xff] %v1019
      %1028 = vst [vmem:[#allocation3 + $0x38] sm:$0xff] %v1020
      %v1029 = vld [vmem:[#allocation2] sm:$0xff]
      %v1030 = vld [vmem:[#allocation2 + $0x8] sm:$0xff]
      %v1031 = vld [vmem:[#allocation2 + $0x10] sm:$0xff]
      %v1032 = vld [vmem:[#allocation2 + $0x18] sm:$0xff]
      %v1033 = vld [vmem:[#allocation2 + $0x20] sm:$0xff]
      %v1034 = vld [vmem:[#allocation2 + $0x28] sm:$0xff]
      %v1035 = vmul.f32 %v1029, %v537
      %v1036 = vmul.f32 %v1030, %v541
      %v1037 = vmul.f32 %v1031, %v539
      %v1038 = vmul.f32 %v1032, %v537
      %v1039 = vmul.f32 %v1033, %v541
      %v1040 = vmul.f32 %v1034, %v539
      %1047 = vrot.lane.b32.xlu0 %v1035, 126
      %v1048 = vpop.permute.xlu0 %1047
      %1049 = vrot.lane.b32.xlu0 %v1036, 126
      %v1050 = vpop.permute.xlu0 %1049
      %1051 = vrot.lane.b32.xlu0 %v1037, 126
      %v1052 = vpop.permute.xlu0 %1051
      %1053 = vrot.lane.b32.xlu0 %v1038, 126
      %v1054 = vpop.permute.xlu0 %1053
      %1055 = vrot.lane.b32.xlu0 %v1039, 126
      %v1056 = vpop.permute.xlu0 %1055
      %1057 = vrot.lane.b32.xlu0 %v1040, 126
      %v1058 = vpop.permute.xlu0 %1057
      %v1059 = vsel %vm560, %v1048, %v1050
      %v1060 = vsel %vm560, %v1050, %v1052
      %v1061 = vsel %vm560, %v1054, %v1056
      %v1062 = vsel %vm560, %v1056, %v1058
      %1067 = vst [vmem:[#allocation3 + $0x40] sm:$0xff] %v1059
      %1068 = vst [vmem:[#allocation3 + $0x48] sm:$0xff] %v1060
      %1069 = vst [vmem:[#allocation3 + $0x50] sm:$0xff] %v1061
      %1070 = vst [vmem:[#allocation3 + $0x58] sm:$0xff] %v1062
      %v1071 = vld [vmem:[#allocation2] sm:$0xff]
      %v1072 = vld [vmem:[#allocation2 + $0x8] sm:$0xff]
      %v1073 = vld [vmem:[#allocation2 + $0x10] sm:$0xff]
      %v1074 = vld [vmem:[#allocation2 + $0x18] sm:$0xff]
      %v1075 = vld [vmem:[#allocation2 + $0x20] sm:$0xff]
      %v1076 = vld [vmem:[#allocation2 + $0x28] sm:$0xff]
      %v1077 = vmul.f32 %v1071, %v583
      %v1078 = vmul.f32 %v1072, %v587
      %v1079 = vmul.f32 %v1073, %v585
      %v1080 = vmul.f32 %v1074, %v583
      %v1081 = vmul.f32 %v1075, %v587
      %v1082 = vmul.f32 %v1076, %v585
      %1089 = vrot.lane.b32.xlu0 %v1077, 112
      %v1090 = vpop.permute.xlu0 %1089
      %1091 = vrot.lane.b32.xlu0 %v1078, 112
      %v1092 = vpop.permute.xlu0 %1091
      %1093 = vrot.lane.b32.xlu0 %v1079, 112
      %v1094 = vpop.permute.xlu0 %1093
      %1095 = vrot.lane.b32.xlu0 %v1080, 112
      %v1096 = vpop.permute.xlu0 %1095
      %1097 = vrot.lane.b32.xlu0 %v1081, 112
      %v1098 = vpop.permute.xlu0 %1097
      %1099 = vrot.lane.b32.xlu0 %v1082, 112
      %v1100 = vpop.permute.xlu0 %1099
      %v1101 = vsel %vm606, %v1090, %v1092
      %v1102 = vsel %vm606, %v1092, %v1094
      %v1103 = vsel %vm606, %v1096, %v1098
      %v1104 = vsel %vm606, %v1098, %v1100
      %1109 = vst [vmem:[#allocation3 + $0x60] sm:$0xff] %v1101
      %1110 = vst [vmem:[#allocation3 + $0x68] sm:$0xff] %v1102
      %1111 = vst [vmem:[#allocation3 + $0x70] sm:$0xff] %v1103
      %1112 = vst [vmem:[#allocation3 + $0x78] sm:$0xff] %v1104
      %v1113 = vld [vmem:[#allocation2] sm:$0xff]
      %v1114 = vld [vmem:[#allocation2 + $0x8] sm:$0xff]
      %v1115 = vld [vmem:[#allocation2 + $0x10] sm:$0xff]
      %v1116 = vld [vmem:[#allocation2 + $0x18] sm:$0xff]
      %v1117 = vld [vmem:[#allocation2 + $0x20] sm:$0xff]
      %v1118 = vld [vmem:[#allocation2 + $0x28] sm:$0xff]
      %v1119 = vmul.f32 %v1113, %v627
      %v1120 = vmul.f32 %v1114, %v630
      %v1121 = vmul.f32 %v1115, %v629
      %v1122 = vmul.f32 %v1116, %v627
      %v1123 = vmul.f32 %v1117, %v630
      %v1124 = vmul.f32 %v1118, %v629
      %1131 = vrot.lane.b32.xlu0 %v1119, 111
      %v1132 = vpop.permute.xlu0 %1131
      %1133 = vrot.lane.b32.xlu0 %v1120, 111
      %v1134 = vpop.permute.xlu0 %1133
      %1135 = vrot.lane.b32.xlu0 %v1121, 111
      %v1136 = vpop.permute.xlu0 %1135
      %1137 = vrot.lane.b32.xlu0 %v1122, 111
      %v1138 = vpop.permute.xlu0 %1137
      %1139 = vrot.lane.b32.xlu0 %v1123, 111
      %v1140 = vpop.permute.xlu0 %1139
      %1141 = vrot.lane.b32.xlu0 %v1124, 111
      %v1142 = vpop.permute.xlu0 %1141
      %v1143 = vsel %vm649, %v1132, %v1134
      %v1144 = vsel %vm649, %v1134, %v1136
      %v1145 = vsel %vm649, %v1138, %v1140
      %v1146 = vsel %vm649, %v1140, %v1142
      %1151 = vst [vmem:[#allocation3 + $0x80] sm:$0xff] %v1143
      %1152 = vst [vmem:[#allocation3 + $0x88] sm:$0xff] %v1144
      %1153 = vst [vmem:[#allocation3 + $0x90] sm:$0xff] %v1145
      %1154 = vst [vmem:[#allocation3 + $0x98] sm:$0xff] %v1146
      %v1155 = vld [vmem:[#allocation2] sm:$0xff]
      %v1156 = vld [vmem:[#allocation2 + $0x8] sm:$0xff]
      %v1157 = vld [vmem:[#allocation2 + $0x10] sm:$0xff]
      %v1158 = vld [vmem:[#allocation2 + $0x18] sm:$0xff]
      %v1159 = vld [vmem:[#allocation2 + $0x20] sm:$0xff]
      %v1160 = vld [vmem:[#allocation2 + $0x28] sm:$0xff]
      %v1161 = vmul.f32 %v1155, %v670
      %v1162 = vmul.f32 %v1156, %v674
      %v1163 = vmul.f32 %v1157, %v672
      %v1164 = vmul.f32 %v1158, %v670
      %v1165 = vmul.f32 %v1159, %v674
      %v1166 = vmul.f32 %v1160, %v672
      %1173 = vrot.lane.b32.xlu0 %v1161, 110
      %v1174 = vpop.permute.xlu0 %1173
      %1175 = vrot.lane.b32.xlu0 %v1162, 110
      %v1176 = vpop.permute.xlu0 %1175
      %1177 = vrot.lane.b32.xlu0 %v1163, 110
      %v1178 = vpop.permute.xlu0 %1177
      %1179 = vrot.lane.b32.xlu0 %v1164, 110
      %v1180 = vpop.permute.xlu0 %1179
      %1181 = vrot.lane.b32.xlu0 %v1165, 110
      %v1182 = vpop.permute.xlu0 %1181
      %1183 = vrot.lane.b32.xlu0 %v1166, 110
      %v1184 = vpop.permute.xlu0 %1183
      %v1185 = vsel %vm693, %v1174, %v1176
      %v1186 = vsel %vm693, %v1176, %v1178
      %v1187 = vsel %vm693, %v1180, %v1182
      %v1188 = vsel %vm693, %v1182, %v1184
      %1193 = vst [vmem:[#allocation3 + $0xa0] sm:$0xff] %v1185
      %1194 = vst [vmem:[#allocation3 + $0xa8] sm:$0xff] %v1186
      %1195 = vst [vmem:[#allocation3 + $0xb0] sm:$0xff] %v1187
      %1196 = vst [vmem:[#allocation3 + $0xb8] sm:$0xff] %v1188
      %v1197 = vld [vmem:[#allocation2] sm:$0xff]
      %v1198 = vld [vmem:[#allocation2 + $0x8] sm:$0xff]
      %v1199 = vld [vmem:[#allocation2 + $0x10] sm:$0xff]
      %v1200 = vld [vmem:[#allocation2 + $0x18] sm:$0xff]
      %v1201 = vld [vmem:[#allocation2 + $0x20] sm:$0xff]
      %v1202 = vld [vmem:[#allocation2 + $0x28] sm:$0xff]
      %v1203 = vmul.f32 %v1197, %v716
      %v1204 = vmul.f32 %v1198, %v720
      %v1205 = vmul.f32 %v1199, %v718
      %v1206 = vmul.f32 %v1200, %v716
      %v1207 = vmul.f32 %v1201, %v720
      %v1208 = vmul.f32 %v1202, %v718
      %1215 = vrot.lane.b32.xlu0 %v1203, 96
      %v1216 = vpop.permute.xlu0 %1215
      %1217 = vrot.lane.b32.xlu0 %v1204, 96
      %v1218 = vpop.permute.xlu0 %1217
      %1219 = vrot.lane.b32.xlu0 %v1205, 96
      %v1220 = vpop.permute.xlu0 %1219
      %1221 = vrot.lane.b32.xlu0 %v1206, 96
      %v1222 = vpop.permute.xlu0 %1221
      %1223 = vrot.lane.b32.xlu0 %v1207, 96
      %v1224 = vpop.permute.xlu0 %1223
      %1225 = vrot.lane.b32.xlu0 %v1208, 96
      %v1226 = vpop.permute.xlu0 %1225
      %v1227 = vsel %vm739, %v1216, %v1218
      %v1228 = vsel %vm739, %v1218, %v1220
      %v1229 = vsel %vm739, %v1222, %v1224
      %v1230 = vsel %vm739, %v1224, %v1226
      %1235 = vst [vmem:[#allocation3 + $0xc0] sm:$0xff] %v1227
      %1236 = vst [vmem:[#allocation3 + $0xc8] sm:$0xff] %v1228
      %1237 = vst [vmem:[#allocation3 + $0xd0] sm:$0xff] %v1229
      %1238 = vst [vmem:[#allocation3 + $0xd8] sm:$0xff] %v1230
      %v1239 = vld [vmem:[#allocation2] sm:$0xff]
      %v1240 = vld [vmem:[#allocation2 + $0x8] sm:$0xff]
      %v1241 = vld [vmem:[#allocation2 + $0x10] sm:$0xff]
      %v1242 = vld [vmem:[#allocation2 + $0x18] sm:$0xff]
      %v1243 = vld [vmem:[#allocation2 + $0x20] sm:$0xff]
      %v1244 = vld [vmem:[#allocation2 + $0x28] sm:$0xff]
      %v1245 = vmul.f32 %v1239, %v760
      %v1246 = vmul.f32 %v1240, %v764
      %v1247 = vmul.f32 %v1241, %v762
      %v1248 = vmul.f32 %v1242, %v760
      %v1249 = vmul.f32 %v1243, %v764
      %v1250 = vmul.f32 %v1244, %v762
      %1257 = vrot.lane.b32.xlu0 %v1245, 95
      %v1258 = vpop.permute.xlu0 %1257
      %1259 = vrot.lane.b32.xlu0 %v1246, 95
      %v1260 = vpop.permute.xlu0 %1259
      %1261 = vrot.lane.b32.xlu0 %v1247, 95
      %v1262 = vpop.permute.xlu0 %1261
      %1263 = vrot.lane.b32.xlu0 %v1248, 95
      %v1264 = vpop.permute.xlu0 %1263
      %1265 = vrot.lane.b32.xlu0 %v1249, 95
      %v1266 = vpop.permute.xlu0 %1265
      %1267 = vrot.lane.b32.xlu0 %v1250, 95
      %v1268 = vpop.permute.xlu0 %1267
      %v1269 = vsel %vm783, %v1258, %v1260
      %v1270 = vsel %vm783, %v1260, %v1262
      %v1271 = vsel %vm783, %v1264, %v1266
      %v1272 = vsel %vm783, %v1266, %v1268
      %1277 = vst [vmem:[#allocation3 + $0xe0] sm:$0xff] %v1269
      %1278 = vst [vmem:[#allocation3 + $0xe8] sm:$0xff] %v1270
      %1279 = vst [vmem:[#allocation3 + $0xf0] sm:$0xff] %v1271
      %1280 = vst [vmem:[#allocation3 + $0xf8] sm:$0xff] %v1272
      %v1281 = vld [vmem:[#allocation2] sm:$0xff]
      %v1282 = vld [vmem:[#allocation2 + $0x8] sm:$0xff]
      %v1283 = vld [vmem:[#allocation2 + $0x10] sm:$0xff]
      %v1284 = vld [vmem:[#allocation2 + $0x18] sm:$0xff]
      %v1285 = vld [vmem:[#allocation2 + $0x20] sm:$0xff]
      %v1286 = vld [vmem:[#allocation2 + $0x28] sm:$0xff]
      %v1287 = vmul.f32 %v1281, %v804
      %v1288 = vmul.f32 %v1282, %v808
      %v1289 = vmul.f32 %v1283, %v806
      %v1290 = vmul.f32 %v1284, %v804
      %v1291 = vmul.f32 %v1285, %v808
      %v1292 = vmul.f32 %v1286, %v806
      %1299 = vrot.lane.b32.xlu0 %v1287, 94
      %v1300 = vpop.permute.xlu0 %1299
      %1301 = vrot.lane.b32.xlu0 %v1288, 94
      %v1302 = vpop.permute.xlu0 %1301
      %1303 = vrot.lane.b32.xlu0 %v1289, 94
      %v1304 = vpop.permute.xlu0 %1303
      %1305 = vrot.lane.b32.xlu0 %v1290, 94
      %v1306 = vpop.permute.xlu0 %1305
      %1307 = vrot.lane.b32.xlu0 %v1291, 94
      %v1308 = vpop.permute.xlu0 %1307
      %1309 = vrot.lane.b32.xlu0 %v1292, 94
      %v1310 = vpop.permute.xlu0 %1309
      %v1311 = vsel %vm824, %v1300, %v1302
      %v1312 = vsel %vm824, %v1302, %v1304
      %v1313 = vsel %vm824, %v1306, %v1308
      %v1314 = vsel %vm824, %v1308, %v1310
      %1319 = vst [vmem:[#allocation3 + $0x100] sm:$0xff] %v1311
      %1320 = vst [vmem:[#allocation3 + $0x108] sm:$0xff] %v1312
      %1321 = vst [vmem:[#allocation3 + $0x110] sm:$0xff] %v1313
      %1322 = vst [vmem:[#allocation3 + $0x118] sm:$0xff] %v1314
      %v1323 = vld [vmem:[%s4] sm:$0x77]
      %v1324 = vld [vmem:[#allocation3] sm:$0xff]
      %v1325 = vld [vmem:[#allocation3 + $0x8] sm:$0xff]
      %v1326 = vld [vmem:[#allocation3 + $0x10] sm:$0xff]
      %v1327 = vld [vmem:[#allocation3 + $0x18] sm:$0xff]
      %v1328 = vld [vmem:[#allocation3 + $0x20] sm:$0xff]
      %v1329 = vld [vmem:[#allocation3 + $0x28] sm:$0xff]
      %v1330 = vld [vmem:[#allocation3 + $0x30] sm:$0xff]
      %v1331 = vld [vmem:[#allocation3 + $0x38] sm:$0xff]
      %v1332 = vld [vmem:[#allocation3 + $0x40] sm:$0xff]
      %v1333 = vld [vmem:[#allocation3 + $0x48] sm:$0xff]
      %v1334 = vld [vmem:[#allocation3 + $0x50] sm:$0xff]
      %v1335 = vld [vmem:[#allocation3 + $0x58] sm:$0xff]
      %v1336 = vld [vmem:[#allocation3 + $0x60] sm:$0xff]
      %v1337 = vld [vmem:[#allocation3 + $0x68] sm:$0xff]
      %v1338 = vld [vmem:[#allocation3 + $0x70] sm:$0xff]
      %v1339 = vld [vmem:[#allocation3 + $0x78] sm:$0xff]
      %v1340 = vld [vmem:[#allocation3 + $0x80] sm:$0xff]
      %v1341 = vld [vmem:[#allocation3 + $0x88] sm:$0xff]
      %v1342 = vld [vmem:[#allocation3 + $0x90] sm:$0xff]
      %v1343 = vld [vmem:[#allocation3 + $0x98] sm:$0xff]
      %v1344 = vld [vmem:[#allocation3 + $0xa0] sm:$0xff]
      %v1345 = vld [vmem:[#allocation3 + $0xa8] sm:$0xff]
      %v1346 = vld [vmem:[#allocation3 + $0xb0] sm:$0xff]
      %v1347 = vld [vmem:[#allocation3 + $0xb8] sm:$0xff]
      %v1348 = vld [vmem:[#allocation3 + $0xc0] sm:$0xff]
      %v1349 = vld [vmem:[#allocation3 + $0xc8] sm:$0xff]
      %v1350 = vld [vmem:[#allocation3 + $0xd0] sm:$0xff]
      %v1351 = vld [vmem:[#allocation3 + $0xd8] sm:$0xff]
      %v1352 = vld [vmem:[#allocation3 + $0xe0] sm:$0xff]
      %v1353 = vld [vmem:[#allocation3 + $0xe8] sm:$0xff]
      %v1354 = vld [vmem:[#allocation3 + $0xf0] sm:$0xff]
      %v1355 = vld [vmem:[#allocation3 + $0xf8] sm:$0xff]
      %v1356 = vld [vmem:[#allocation3 + $0x100] sm:$0xff]
      %v1357 = vld [vmem:[#allocation3 + $0x108] sm:$0xff]
      %v1358 = vld [vmem:[#allocation3 + $0x110] sm:$0xff]
      %v1359 = vld [vmem:[#allocation3 + $0x118] sm:$0xff]
      %v1360 = vld [vmem:[%s5] sm:$0x7]
      %1362 = vset.pattern.permute.xlu0 0
      %1363 = vperm.xlu0 %1362, %v1360
      %v1364 = vpop.permute.xlu0 %1363
      %v1367 = vcombine.high %v1323, %v1323
      %v1368 = vsel %vm586, %v1367, 0
      %1370 = vmatprep.subr.mxu0 %v1355
      %1371 = vmatpush1.msra.mxu0 %v1354
      %1372 = vmatprep.subr.mxu0 %v1353
      %1373 = vmatpush1.msra.mxu0 %v1352
      %1374 = vmatprep.subr.mxu0 %v1351
      %1375 = vmatpush1.msra.mxu0 %v1350
      %1376 = vmatprep.subr.mxu0 %v1349
      %1377 = vmatpush1.msra.mxu0 %v1348
      %1378 = vmatprep.subr.mxu0 %v1347
      %1379 = vmatpush1.msra.mxu0 %v1346
      %1380 = vmatprep.subr.mxu0 %v1345
      %1381 = vmatpush1.msra.mxu0 %v1344
      %1382 = vmatprep.subr.mxu0 %v1343
      %1383 = vmatpush1.msra.mxu0 %v1342
      %1384 = vmatprep.subr.mxu0 %v1341
      %1385 = vmatpush1.msra.mxu0 %v1340
      %1386 = vmatprep.subr.mxu0 %v1339
      %1387 = vmatpush1.msra.mxu0 %v1338
      %1388 = vmatprep.subr.mxu0 %v1337
      %1389 = vmatpush1.msra.mxu0 %v1336
      %1390 = vmatprep.subr.mxu0 %v1335
      %1391 = vmatpush1.msra.mxu0 %v1334
      %1392 = vmatprep.subr.mxu0 %v1333
      %1393 = vmatpush1.msra.mxu0 %v1332
      %1394 = vmatprep.subr.mxu0 %v1331
      %1395 = vmatpush1.msra.mxu0 %v1330
      %1396 = vmatprep.subr.mxu0 %v1329
      %1397 = vmatpush1.msra.mxu0 %v1328
      %1398 = vmatprep.subr.mxu0 %v1327
      %1399 = vmatpush1.msra.mxu0 %v1326
      %1400 = vmatprep.subr.mxu0 %v1325
      %1401 = vmatpush1.msra.mxu0 %v1324
      %1402 = vmatprep.subr.mxu0 0.0
      %1403 = vmatpush2.msra.mxu0 0.0
      %1404 = vmatprep.subr.mxu0 0.0
      %1405 = vmatpush2.msra.mxu0 0.0
      %1406 = vmatprep.subr.mxu0 0.0
      %1407 = vmatpush2.msra.mxu0 0.0
      %1408 = vmatprep.subr.mxu0 0.0
      %1409 = vmatpush2.msra.mxu0 0.0
      %1410 = vmatprep.subr.mxu0 0.0
      %1411 = vmatpush2.msra.mxu0 0.0
      %1412 = vmatprep.subr.mxu0 0.0
      %1413 = vmatpush2.msra.mxu0 0.0
      %1414 = vmatprep.subr.mxu0 0.0
      %1415 = vmatpush2.msra.mxu0 0.0
      %1416 = vmatprep.subr.mxu0 0.0
      %1417 = vmatpush2.msra.mxu0 0.0
      %1418 = vmatprep.subr.mxu0 0.0
      %1419 = vmatpush2.msra.mxu0 0.0
      %1420 = vmatprep.subr.mxu0 0.0
      %1421 = vmatpush2.msra.mxu0 0.0
      %1422 = vmatprep.subr.mxu0 0.0
      %1423 = vmatpush2.msra.mxu0 0.0
      %1424 = vmatprep.subr.mxu0 0.0
      %1425 = vmatpush2.msra.mxu0 0.0
      %1426 = vmatprep.subr.mxu0 0.0
      %1427 = vmatpush2.msra.mxu0 0.0
      %1428 = vmatprep.subr.mxu0 0.0
      %1429 = vmatpush2.msra.mxu0 0.0
      %1430 = vmatprep.subr.mxu0 %v1359
      %1431 = vmatpush2.msra.mxu0 %v1358
      %1432 = vmatprep.subr.mxu0 %v1357
      %1433 = vmatpush2.msra.mxu0 %v1356
      %1434 = vmatprep.mubr.f32.mxu0 %v1368
      %1435 = vmatmul.mubr.f32.gmra.mxu0 %v1323
      %v1436 = vpop.f32.mrf.mxu0
      %v1437 = vadd.f32 %v1364, %v1436
      %v1438 = vpop.f32.mrf.mxu0
      %v1439 = vadd.f32 %v1364, %v1438
      %1440 = vdwg.mxu0
      %v1441 = vxor.u32 %v1437, 2147483648
      %v1442 = vxor.u32 %v1439, 2147483648
      %v1443 = vmul.f32 %v1441, 1.442695
      %v1444 = vpow.pop %v1443
      %v1445 = vmul.f32 %v1442, 1.442695
      %v1446 = vpow.pop %v1445
      %v1447 = vadd.f32 %v1444, 1.0
      %v1448 = vadd.f32 %v1446, 1.0
      %v1449 = vrcp.pop %v1447
      %v1450 = vmul.f32 1.0, %v1449
      %v1451 = vrcp.pop %v1448
      %v1452 = vmul.f32 1.0, %v1451
      %v1455 = vcombine.low %v1450, %v1452
      %v1457 = vrcp.pop %v1455
      %v1458 = vmul.f32 %v449, %v1457
      %v1459 = vmax.f32 %v1458, 0.0
      %v1460 = vmin.f32 %v1459, 1.0
      %v1462 = vcombine.high %v1460, %v1460
      %1463 = vrot.lane.b32.xlu0 %v1460, 17
      %v1464 = vpop.permute.xlu0 %1463
      %1465 = vrot.lane.b32.xlu0 %v1462, 17
      %v1466 = vpop.permute.xlu0 %1465
      %v1467 = vsel %vm439, %v1464, %v1466
      %1471 = vst.msk [vmem:[#allocation2] sm:$0x7] %vm460, %v1464
      %1472 = vst [vmem:[#allocation2 + $0x8] sm:$0x7] %v1467
      %1473 = vst.msk [vmem:[#allocation2 + $0x10] sm:$0x7] %vm463, %v1466
      %v1474 = vld [vmem:[#allocation2] sm:$0x7]
      %v1475 = vld [vmem:[#allocation2 + $0x8] sm:$0x7]
      %v1476 = vmul.f32 %v1474, %v470
      %v1477 = vmul.f32 %v1475, %v474
      %1478 = vst [vmem:[#allocation3] sm:$0x7] %v1476
      %1479 = vst [vmem:[#allocation3 + $0x8] sm:$0x7] %v1477
      %v1480 = vld [vmem:[#allocation2] sm:$0x7]
      %v1481 = vld [vmem:[#allocation2 + $0x8] sm:$0x7]
      %v1482 = vld [vmem:[#allocation2 + $0x10] sm:$0x7]
      %v1483 = vmul.f32 %v1480, %v493
      %v1484 = vmul.f32 %v1481, %v497
      %v1485 = vmul.f32 %v1482, %v495
      %v1489 = vrot.slane %v1483, 5
      %v1490 = vrot.slane %v1484, 5
      %v1491 = vrot.slane %v1485, 5
      %1492 = vrot.lane.b32.xlu0 %v1489, 127
      %v1493 = vpop.permute.xlu0 %1492
      %1494 = vrot.lane.b32.xlu0 %v1490, 127
      %v1495 = vpop.permute.xlu0 %1494
      %1496 = vrot.lane.b32.xlu0 %v1491, 127
      %v1497 = vpop.permute.xlu0 %1496
      %v1498 = vsel %vm516, %v1493, %v1495
      %v1499 = vsel %vm516, %v1495, %v1497
      %1502 = vst [vmem:[#allocation3] sm:$0x38] %v1498
      %1503 = vst [vmem:[#allocation3 + $0x8] sm:$0x38] %v1499
      %v1504 = vld [vmem:[#allocation2] sm:$0x7]
      %v1505 = vld [vmem:[#allocation2 + $0x8] sm:$0x7]
      %v1506 = vld [vmem:[#allocation2 + $0x10] sm:$0x7]
      %v1507 = vmul.f32 %v1504, %v537
      %v1508 = vmul.f32 %v1505, %v541
      %v1509 = vmul.f32 %v1506, %v539
      %v1513 = vrot.slane %v1507, 2
      %v1514 = vrot.slane %v1508, 2
      %v1515 = vrot.slane %v1509, 2
      %1516 = vrot.lane.b32.xlu0 %v1513, 126
      %v1517 = vpop.permute.xlu0 %1516
      %1518 = vrot.lane.b32.xlu0 %v1514, 126
      %v1519 = vpop.permute.xlu0 %1518
      %1520 = vrot.lane.b32.xlu0 %v1515, 126
      %v1521 = vpop.permute.xlu0 %1520
      %v1522 = vsel %vm560, %v1517, %v1519
      %v1523 = vsel %vm560, %v1519, %v1521
      %1526 = vst [vmem:[#allocation3] sm:$0xc0] %v1522
      %1527 = vst [vmem:[#allocation3 + $0x8] sm:$0xc0] %v1523
      %1528 = vst [vmem:[#allocation3 + $0x10] sm:$0x1] %v1522
      %1529 = vst [vmem:[#allocation3 + $0x18] sm:$0x1] %v1523
      %v1530 = vld [vmem:[#allocation2] sm:$0x7]
      %v1531 = vld [vmem:[#allocation2 + $0x8] sm:$0x7]
      %v1532 = vld [vmem:[#allocation2 + $0x10] sm:$0x7]
      %v1533 = vmul.f32 %v1530, %v583
      %v1534 = vmul.f32 %v1531, %v587
      %v1535 = vmul.f32 %v1532, %v585
      %v1539 = vrot.slane %v1533, 7
      %v1540 = vrot.slane %v1534, 7
      %v1541 = vrot.slane %v1535, 7
      %1542 = vrot.lane.b32.xlu0 %v1539, 112
      %v1543 = vpop.permute.xlu0 %1542
      %1544 = vrot.lane.b32.xlu0 %v1540, 112
      %v1545 = vpop.permute.xlu0 %1544
      %1546 = vrot.lane.b32.xlu0 %v1541, 112
      %v1547 = vpop.permute.xlu0 %1546
      %v1548 = vsel %vm606, %v1543, %v1545
      %v1549 = vsel %vm606, %v1545, %v1547
      %1552 = vst [vmem:[#allocation3 + $0x10] sm:$0xe] %v1548
      %1553 = vst [vmem:[#allocation3 + $0x18] sm:$0xe] %v1549
      %v1554 = vld [vmem:[#allocation2] sm:$0x7]
      %v1555 = vld [vmem:[#allocation2 + $0x8] sm:$0x7]
      %v1556 = vld [vmem:[#allocation2 + $0x10] sm:$0x7]
      %v1557 = vmul.f32 %v1554, %v627
      %v1558 = vmul.f32 %v1555, %v630
      %v1559 = vmul.f32 %v1556, %v629
      %v1563 = vrot.slane %v1557, 4
      %v1564 = vrot.slane %v1558, 4
      %v1565 = vrot.slane %v1559, 4
      %1566 = vrot.lane.b32.xlu0 %v1563, 111
      %v1567 = vpop.permute.xlu0 %1566
      %1568 = vrot.lane.b32.xlu0 %v1564, 111
      %v1569 = vpop.permute.xlu0 %1568
      %1570 = vrot.lane.b32.xlu0 %v1565, 111
      %v1571 = vpop.permute.xlu0 %1570
      %v1572 = vsel %vm649, %v1567, %v1569
      %v1573 = vsel %vm649, %v1569, %v1571
      %1576 = vst [vmem:[#allocation3 + $0x10] sm:$0x70] %v1572
      %1577 = vst [vmem:[#allocation3 + $0x18] sm:$0x70] %v1573
      %v1578 = vld [vmem:[#allocation2] sm:$0x7]
      %v1579 = vld [vmem:[#allocation2 + $0x8] sm:$0x7]
      %v1580 = vld [vmem:[#allocation2 + $0x10] sm:$0x7]
      %v1581 = vmul.f32 %v1578, %v670
      %v1582 = vmul.f32 %v1579, %v674
      %v1583 = vmul.f32 %v1580, %v672
      %v1587 = vrot.slane %v1581, 1
      %v1588 = vrot.slane %v1582, 1
      %v1589 = vrot.slane %v1583, 1
      %1590 = vrot.lane.b32.xlu0 %v1587, 110
      %v1591 = vpop.permute.xlu0 %1590
      %1592 = vrot.lane.b32.xlu0 %v1588, 110
      %v1593 = vpop.permute.xlu0 %1592
      %1594 = vrot.lane.b32.xlu0 %v1589, 110
      %v1595 = vpop.permute.xlu0 %1594
      %v1596 = vsel %vm693, %v1591, %v1593
      %v1597 = vsel %vm693, %v1593, %v1595
      %1600 = vst [vmem:[#allocation3 + $0x10] sm:$0x80] %v1596
      %1601 = vst [vmem:[#allocation3 + $0x18] sm:$0x80] %v1597
      %1602 = vst [vmem:[#allocation3 + $0x20] sm:$0x3] %v1596
      %1603 = vst [vmem:[#allocation3 + $0x28] sm:$0x3] %v1597
      %v1604 = vld [vmem:[#allocation2] sm:$0x7]
      %v1605 = vld [vmem:[#allocation2 + $0x8] sm:$0x7]
      %v1606 = vld [vmem:[#allocation2 + $0x10] sm:$0x7]
      %v1607 = vmul.f32 %v1604, %v716
      %v1608 = vmul.f32 %v1605, %v720
      %v1609 = vmul.f32 %v1606, %v718
      %v1613 = vrot.slane %v1607, 6
      %v1614 = vrot.slane %v1608, 6
      %v1615 = vrot.slane %v1609, 6
      %1616 = vrot.lane.b32.xlu0 %v1613, 96
      %v1617 = vpop.permute.xlu0 %1616
      %1618 = vrot.lane.b32.xlu0 %v1614, 96
      %v1619 = vpop.permute.xlu0 %1618
      %1620 = vrot.lane.b32.xlu0 %v1615, 96
      %v1621 = vpop.permute.xlu0 %1620
      %v1622 = vsel %vm739, %v1617, %v1619
      %v1623 = vsel %vm739, %v1619, %v1621
      %1626 = vst [vmem:[#allocation3 + $0x20] sm:$0x1c] %v1622
      %1627 = vst [vmem:[#allocation3 + $0x28] sm:$0x1c] %v1623
      %v1628 = vld [vmem:[#allocation2] sm:$0x7]
      %v1629 = vld [vmem:[#allocation2 + $0x8] sm:$0x7]
      %v1630 = vld [vmem:[#allocation2 + $0x10] sm:$0x7]
      %v1631 = vmul.f32 %v1628, %v760
      %v1632 = vmul.f32 %v1629, %v764
      %v1633 = vmul.f32 %v1630, %v762
      %v1637 = vrot.slane %v1631, 3
      %v1638 = vrot.slane %v1632, 3
      %v1639 = vrot.slane %v1633, 3
      %1640 = vrot.lane.b32.xlu0 %v1637, 95
      %v1641 = vpop.permute.xlu0 %1640
      %1642 = vrot.lane.b32.xlu0 %v1638, 95
      %v1643 = vpop.permute.xlu0 %1642
      %1644 = vrot.lane.b32.xlu0 %v1639, 95
      %v1645 = vpop.permute.xlu0 %1644
      %v1646 = vsel %vm783, %v1641, %v1643
      %v1647 = vsel %vm783, %v1643, %v1645
      %1650 = vst [vmem:[#allocation3 + $0x20] sm:$0xe0] %v1646
      %1651 = vst [vmem:[#allocation3 + $0x28] sm:$0xe0] %v1647
      %v1652 = vld [vmem:[#allocation2] sm:$0x7]
      %v1653 = vld [vmem:[#allocation2 + $0x8] sm:$0x7]
      %v1654 = vld [vmem:[#allocation2 + $0x10] sm:$0x7]
      %v1655 = vmul.f32 %v1652, %v804
      %v1656 = vmul.f32 %v1653, %v808
      %v1657 = vmul.f32 %v1654, %v806
      %1661 = vrot.lane.b32.xlu0 %v1655, 94
      %v1662 = vpop.permute.xlu0 %1661
      %1663 = vrot.lane.b32.xlu0 %v1656, 94
      %v1664 = vpop.permute.xlu0 %1663
      %1665 = vrot.lane.b32.xlu0 %v1657, 94
      %v1666 = vpop.permute.xlu0 %1665
      %v1667 = vsel %vm824, %v1662, %v1664
      %v1668 = vsel %vm824, %v1664, %v1666
      %1671 = vst [vmem:[#allocation3 + $0x30] sm:$0x7] %v1667
      %1672 = vst [vmem:[#allocation3 + $0x38] sm:$0x7] %v1668
      %v1673 = vld [vmem:[%s6] sm:$0xff]
      %v1674 = vld [vmem:[%s6 + $0x8] sm:$0xff]
      %v1675 = vld [vmem:[#allocation3] sm:$0xff]
      %v1676 = vld [vmem:[#allocation3 + $0x8] sm:$0xff]
      %v1677 = vld [vmem:[#allocation3 + $0x10] sm:$0xff]
      %v1678 = vld [vmem:[#allocation3 + $0x18] sm:$0xff]
      %v1679 = vld [vmem:[#allocation3 + $0x20] sm:$0xff]
      %v1680 = vld [vmem:[#allocation3 + $0x28] sm:$0xff]
      %v1681 = vld [vmem:[#allocation3 + $0x30] sm:$0x7]
      %v1682 = vld [vmem:[#allocation3 + $0x38] sm:$0x7]
      %v1683 = vld [vmem:[%s7] sm:$0xff]
      %v1684 = vld [vmem:[%s7 + $0x8] sm:$0xff]
      %1686 = vset.pattern.permute.xlu0 0
      %1687 = vperm.xlu0 %1686, %v1683
      %v1688 = vpop.permute.xlu0 %1687
      %1691 = vset.pattern.permute.xlu0 0
      %1692 = vperm.xlu0 %1691, %v1684
      %v1693 = vpop.permute.xlu0 %1692
      %v1696 = vsel %vm853, %v1673, 0
      %v1699 = vsel %vm853, %v1674, 0
      %v1702 = vsel %vm860, %v1681, 0
      %v1705 = vsel %vm860, %v1682, 0
      %1707 = vmatprep.subr.mxu0 0.0
      %1708 = vmatpush1.msra.mxu0 0.0
      %1709 = vmatprep.subr.mxu0 0.0
      %1710 = vmatpush1.msra.mxu0 0.0
      %1711 = vmatprep.subr.mxu0 0.0
      %1712 = vmatpush1.msra.mxu0 0.0
      %1713 = vmatprep.subr.mxu0 0.0
      %1714 = vmatpush1.msra.mxu0 0.0
      %1715 = vmatprep.subr.mxu0 0.0
      %1716 = vmatpush1.msra.mxu0 0.0
      %1717 = vmatprep.subr.mxu0 0.0
      %1718 = vmatpush1.msra.mxu0 0.0
      %1719 = vmatprep.subr.mxu0 0.0
      %1720 = vmatpush1.msra.mxu0 0.0
      %1721 = vmatprep.subr.mxu0 0.0
      %1722 = vmatpush1.msra.mxu0 0.0
      %1723 = vmatprep.subr.mxu0 0.0
      %1724 = vmatpush1.msra.mxu0 0.0
      %1725 = vmatprep.subr.mxu0 0.0
      %1726 = vmatpush1.msra.mxu0 0.0
      %1727 = vmatprep.subr.mxu0 0.0
      %1728 = vmatpush1.msra.mxu0 0.0
      %1729 = vmatprep.subr.mxu0 0.0
      %1730 = vmatpush1.msra.mxu0 0.0
      %1731 = vmatprep.subr.mxu0 %v1705
      %1732 = vmatpush1.msra.mxu0 %v1702
      %1733 = vmatprep.subr.mxu0 %v1680
      %1734 = vmatpush1.msra.mxu0 %v1679
      %1735 = vmatprep.subr.mxu0 %v1678
      %1736 = vmatpush1.msra.mxu0 %v1677
      %1737 = vmatprep.subr.mxu0 %v1676
      %1738 = vmatpush1.msra.mxu0 %v1675
      %1739 = vmatprep.subr.mxu0 0.0
      %1740 = vmatpush2.msra.mxu0 0.0
      %1741 = vmatprep.subr.mxu0 0.0
      %1742 = vmatpush2.msra.mxu0 0.0
      %1743 = vmatprep.subr.mxu0 0.0
      %1744 = vmatpush2.msra.mxu0 0.0
      %1745 = vmatprep.subr.mxu0 0.0
      %1746 = vmatpush2.msra.mxu0 0.0
      %1747 = vmatprep.subr.mxu0 0.0
      %1748 = vmatpush2.msra.mxu0 0.0
      %1749 = vmatprep.subr.mxu0 0.0
      %1750 = vmatpush2.msra.mxu0 0.0
      %1751 = vmatprep.subr.mxu0 0.0
      %1752 = vmatpush2.msra.mxu0 0.0
      %1753 = vmatprep.subr.mxu0 0.0
      %1754 = vmatpush2.msra.mxu0 0.0
      %1755 = vmatprep.subr.mxu0 0.0
      %1756 = vmatpush2.msra.mxu0 0.0
      %1757 = vmatprep.subr.mxu0 0.0
      %1758 = vmatpush2.msra.mxu0 0.0
      %1759 = vmatprep.subr.mxu0 0.0
      %1760 = vmatpush2.msra.mxu0 0.0
      %1761 = vmatprep.subr.mxu0 0.0
      %1762 = vmatpush2.msra.mxu0 0.0
      %1763 = vmatprep.subr.mxu0 0.0
      %1764 = vmatpush2.msra.mxu0 0.0
      %1765 = vmatprep.subr.mxu0 0.0
      %1766 = vmatpush2.msra.mxu0 0.0
      %1767 = vmatprep.subr.mxu0 0.0
      %1768 = vmatpush2.msra.mxu0 0.0
      %1769 = vmatprep.subr.mxu0 0.0
      %1770 = vmatpush2.msra.mxu0 0.0
      %1771 = vmatprep.mubr.f32.mxu0 0.0
      %1772 = vmatmul.mubr.f32.gmra.mxu0 %v1696
      %v1773 = vpop.f32.mrf.mxu0
      %v1774 = vadd.f32 %v1688, %v1773
      %v1775 = vpop.f32.mrf.mxu0
      %v1776 = vadd.f32 %v1688, %v1775
      %1777 = vmatprep.mubr.f32.mxu0 0.0
      %1778 = vmatmul.mubr.f32.gmra.mxu0 %v1699
      %v1779 = vpop.f32.mrf.mxu0
      %v1780 = vadd.f32 %v1693, %v1779
      %v1781 = vpop.f32.mrf.mxu0
      %v1782 = vadd.f32 %v1693, %v1781
      %1783 = vdwg.mxu0
      %v1784 = vmax.f32 %v1774, 0.0
      %v1785 = vmax.f32 %v1776, 0.0
      %v1786 = vmax.f32 %v1780, 0.0
      %v1787 = vmax.f32 %v1782, 0.0
      %1792 = vrot.lane.b32.xlu0 %v1784, 17
      %v1793 = vpop.permute.xlu0 %1792
      %1794 = vrot.lane.b32.xlu0 %v1785, 17
      %v1795 = vpop.permute.xlu0 %1794
      %1796 = vrot.lane.b32.xlu0 %v1786, 17
      %v1797 = vpop.permute.xlu0 %1796
      %1798 = vrot.lane.b32.xlu0 %v1787, 17
      %v1799 = vpop.permute.xlu0 %1798
      %v1800 = vsel %vm439, %v1793, %v1795
      %v1801 = vsel %vm439, %v1797, %v1799
      %1808 = vst.msk [vmem:[#allocation2] sm:$0xff] %vm968, %v1793
      %1809 = vst [vmem:[#allocation2 + $0x8] sm:$0xff] %v1800
      %1810 = vst.msk [vmem:[#allocation2 + $0x10] sm:$0xff] %vm439, %v1795
      %1811 = vst.msk [vmem:[#allocation2 + $0x18] sm:$0xff] %vm968, %v1797
      %1812 = vst [vmem:[#allocation2 + $0x20] sm:$0xff] %v1801
      %1813 = vst.msk [vmem:[#allocation2 + $0x28] sm:$0xff] %vm439, %v1799
      %v1814 = vld [vmem:[#allocation2] sm:$0xff]
      %v1815 = vld [vmem:[#allocation2 + $0x8] sm:$0xff]
      %v1816 = vld [vmem:[#allocation2 + $0x18] sm:$0xff]
      %v1817 = vld [vmem:[#allocation2 + $0x20] sm:$0xff]
      %v1818 = vmul.f32 %v1814, %v470
      %v1819 = vmul.f32 %v1815, %v474
      %v1820 = vmul.f32 %v1816, %v470
      %v1821 = vmul.f32 %v1817, %v474
      %1822 = vst [vmem:[#allocation3] sm:$0xff] %v1818
      %1823 = vst [vmem:[#allocation3 + $0x8] sm:$0xff] %v1819
      %1824 = vst [vmem:[#allocation3 + $0x10] sm:$0xff] %v1820
      %1825 = vst [vmem:[#allocation3 + $0x18] sm:$0xff] %v1821
      %v1826 = vld [vmem:[#allocation2] sm:$0xff]
      %v1827 = vld [vmem:[#allocation2 + $0x8] sm:$0xff]
      %v1828 = vld [vmem:[#allocation2 + $0x10] sm:$0xff]
      %v1829 = vld [vmem:[#allocation2 + $0x18] sm:$0xff]
      %v1830 = vld [vmem:[#allocation2 + $0x20] sm:$0xff]
      %v1831 = vld [vmem:[#allocation2 + $0x28] sm:$0xff]
      %v1832 = vmul.f32 %v1826, %v493
      %v1833 = vmul.f32 %v1827, %v497
      %v1834 = vmul.f32 %v1828, %v495
      %v1835 = vmul.f32 %v1829, %v493
      %v1836 = vmul.f32 %v1830, %v497
      %v1837 = vmul.f32 %v1831, %v495
      %1844 = vrot.lane.b32.xlu0 %v1832, 127
      %v1845 = vpop.permute.xlu0 %1844
      %1846 = vrot.lane.b32.xlu0 %v1833, 127
      %v1847 = vpop.permute.xlu0 %1846
      %1848 = vrot.lane.b32.xlu0 %v1834, 127
      %v1849 = vpop.permute.xlu0 %1848
      %1850 = vrot.lane.b32.xlu0 %v1835, 127
      %v1851 = vpop.permute.xlu0 %1850
      %1852 = vrot.lane.b32.xlu0 %v1836, 127
      %v1853 = vpop.permute.xlu0 %1852
      %1854 = vrot.lane.b32.xlu0 %v1837, 127
      %v1855 = vpop.permute.xlu0 %1854
      %v1856 = vsel %vm516, %v1845, %v1847
      %v1857 = vsel %vm516, %v1847, %v1849
      %v1858 = vsel %vm516, %v1851, %v1853
      %v1859 = vsel %vm516, %v1853, %v1855
      %1864 = vst [vmem:[#allocation3 + $0x20] sm:$0xff] %v1856
      %1865 = vst [vmem:[#allocation3 + $0x28] sm:$0xff] %v1857
      %1866 = vst [vmem:[#allocation3 + $0x30] sm:$0xff] %v1858
      %1867 = vst [vmem:[#allocation3 + $0x38] sm:$0xff] %v1859
      %v1868 = vld [vmem:[#allocation2] sm:$0xff]
      %v1869 = vld [vmem:[#allocation2 + $0x8] sm:$0xff]
      %v1870 = vld [vmem:[#allocation2 + $0x10] sm:$0xff]
      %v1871 = vld [vmem:[#allocation2 + $0x18] sm:$0xff]
      %v1872 = vld [vmem:[#allocation2 + $0x20] sm:$0xff]
      %v1873 = vld [vmem:[#allocation2 + $0x28] sm:$0xff]
      %v1874 = vmul.f32 %v1868, %v537
      %v1875 = vmul.f32 %v1869, %v541
      %v1876 = vmul.f32 %v1870, %v539
      %v1877 = vmul.f32 %v1871, %v537
      %v1878 = vmul.f32 %v1872, %v541
      %v1879 = vmul.f32 %v1873, %v539
      %1886 = vrot.lane.b32.xlu0 %v1874, 126
      %v1887 = vpop.permute.xlu0 %1886
      %1888 = vrot.lane.b32.xlu0 %v1875, 126
      %v1889 = vpop.permute.xlu0 %1888
      %1890 = vrot.lane.b32.xlu0 %v1876, 126
      %v1891 = vpop.permute.xlu0 %1890
      %1892 = vrot.lane.b32.xlu0 %v1877, 126
      %v1893 = vpop.permute.xlu0 %1892
      %1894 = vrot.lane.b32.xlu0 %v1878, 126
      %v1895 = vpop.permute.xlu0 %1894
      %1896 = vrot.lane.b32.xlu0 %v1879, 126
      %v1897 = vpop.permute.xlu0 %1896
      %v1898 = vsel %vm560, %v1887, %v1889
      %v1899 = vsel %vm560, %v1889, %v1891
      %v1900 = vsel %vm560, %v1893, %v1895
      %v1901 = vsel %vm560, %v1895, %v1897
      %1906 = vst [vmem:[#allocation3 + $0x40] sm:$0xff] %v1898
      %1907 = vst [vmem:[#allocation3 + $0x48] sm:$0xff] %v1899
      %1908 = vst [vmem:[#allocation3 + $0x50] sm:$0xff] %v1900
      %1909 = vst [vmem:[#allocation3 + $0x58] sm:$0xff] %v1901
      %v1910 = vld [vmem:[#allocation2] sm:$0xff]
      %v1911 = vld [vmem:[#allocation2 + $0x8] sm:$0xff]
      %v1912 = vld [vmem:[#allocation2 + $0x10] sm:$0xff]
      %v1913 = vld [vmem:[#allocation2 + $0x18] sm:$0xff]
      %v1914 = vld [vmem:[#allocation2 + $0x20] sm:$0xff]
      %v1915 = vld [vmem:[#allocation2 + $0x28] sm:$0xff]
      %v1916 = vmul.f32 %v1910, %v583
      %v1917 = vmul.f32 %v1911, %v587
      %v1918 = vmul.f32 %v1912, %v585
      %v1919 = vmul.f32 %v1913, %v583
      %v1920 = vmul.f32 %v1914, %v587
      %v1921 = vmul.f32 %v1915, %v585
      %1928 = vrot.lane.b32.xlu0 %v1916, 112
      %v1929 = vpop.permute.xlu0 %1928
      %1930 = vrot.lane.b32.xlu0 %v1917, 112
      %v1931 = vpop.permute.xlu0 %1930
      %1932 = vrot.lane.b32.xlu0 %v1918, 112
      %v1933 = vpop.permute.xlu0 %1932
      %1934 = vrot.lane.b32.xlu0 %v1919, 112
      %v1935 = vpop.permute.xlu0 %1934
      %1936 = vrot.lane.b32.xlu0 %v1920, 112
      %v1937 = vpop.permute.xlu0 %1936
      %1938 = vrot.lane.b32.xlu0 %v1921, 112
      %v1939 = vpop.permute.xlu0 %1938
      %v1940 = vsel %vm606, %v1929, %v1931
      %v1941 = vsel %vm606, %v1931, %v1933
      %v1942 = vsel %vm606, %v1935, %v1937
      %v1943 = vsel %vm606, %v1937, %v1939
      %1948 = vst [vmem:[#allocation3 + $0x60] sm:$0xff] %v1940
      %1949 = vst [vmem:[#allocation3 + $0x68] sm:$0xff] %v1941
      %1950 = vst [vmem:[#allocation3 + $0x70] sm:$0xff] %v1942
      %1951 = vst [vmem:[#allocation3 + $0x78] sm:$0xff] %v1943
      %v1952 = vld [vmem:[#allocation2] sm:$0xff]
      %v1953 = vld [vmem:[#allocation2 + $0x8] sm:$0xff]
      %v1954 = vld [vmem:[#allocation2 + $0x10] sm:$0xff]
      %v1955 = vld [vmem:[#allocation2 + $0x18] sm:$0xff]
      %v1956 = vld [vmem:[#allocation2 + $0x20] sm:$0xff]
      %v1957 = vld [vmem:[#allocation2 + $0x28] sm:$0xff]
      %v1958 = vmul.f32 %v1952, %v627
      %v1959 = vmul.f32 %v1953, %v630
      %v1960 = vmul.f32 %v1954, %v629
      %v1961 = vmul.f32 %v1955, %v627
      %v1962 = vmul.f32 %v1956, %v630
      %v1963 = vmul.f32 %v1957, %v629
      %1970 = vrot.lane.b32.xlu0 %v1958, 111
      %v1971 = vpop.permute.xlu0 %1970
      %1972 = vrot.lane.b32.xlu0 %v1959, 111
      %v1973 = vpop.permute.xlu0 %1972
      %1974 = vrot.lane.b32.xlu0 %v1960, 111
      %v1975 = vpop.permute.xlu0 %1974
      %1976 = vrot.lane.b32.xlu0 %v1961, 111
      %v1977 = vpop.permute.xlu0 %1976
      %1978 = vrot.lane.b32.xlu0 %v1962, 111
      %v1979 = vpop.permute.xlu0 %1978
      %1980 = vrot.lane.b32.xlu0 %v1963, 111
      %v1981 = vpop.permute.xlu0 %1980
      %v1982 = vsel %vm649, %v1971, %v1973
      %v1983 = vsel %vm649, %v1973, %v1975
      %v1984 = vsel %vm649, %v1977, %v1979
      %v1985 = vsel %vm649, %v1979, %v1981
      %1990 = vst [vmem:[#allocation3 + $0x80] sm:$0xff] %v1982
      %1991 = vst [vmem:[#allocation3 + $0x88] sm:$0xff] %v1983
      %1992 = vst [vmem:[#allocation3 + $0x90] sm:$0xff] %v1984
      %1993 = vst [vmem:[#allocation3 + $0x98] sm:$0xff] %v1985
      %v1994 = vld [vmem:[#allocation2] sm:$0xff]
      %v1995 = vld [vmem:[#allocation2 + $0x8] sm:$0xff]
      %v1996 = vld [vmem:[#allocation2 + $0x10] sm:$0xff]
      %v1997 = vld [vmem:[#allocation2 + $0x18] sm:$0xff]
      %v1998 = vld [vmem:[#allocation2 + $0x20] sm:$0xff]
      %v1999 = vld [vmem:[#allocation2 + $0x28] sm:$0xff]
      %v2000 = vmul.f32 %v1994, %v670
      %v2001 = vmul.f32 %v1995, %v674
      %v2002 = vmul.f32 %v1996, %v672
      %v2003 = vmul.f32 %v1997, %v670
      %v2004 = vmul.f32 %v1998, %v674
      %v2005 = vmul.f32 %v1999, %v672
      %2012 = vrot.lane.b32.xlu0 %v2000, 110
      %v2013 = vpop.permute.xlu0 %2012
      %2014 = vrot.lane.b32.xlu0 %v2001, 110
      %v2015 = vpop.permute.xlu0 %2014
      %2016 = vrot.lane.b32.xlu0 %v2002, 110
      %v2017 = vpop.permute.xlu0 %2016
      %2018 = vrot.lane.b32.xlu0 %v2003, 110
      %v2019 = vpop.permute.xlu0 %2018
      %2020 = vrot.lane.b32.xlu0 %v2004, 110
      %v2021 = vpop.permute.xlu0 %2020
      %2022 = vrot.lane.b32.xlu0 %v2005, 110
      %v2023 = vpop.permute.xlu0 %2022
      %v2024 = vsel %vm693, %v2013, %v2015
      %v2025 = vsel %vm693, %v2015, %v2017
      %v2026 = vsel %vm693, %v2019, %v2021
      %v2027 = vsel %vm693, %v2021, %v2023
      %2032 = vst [vmem:[#allocation3 + $0xa0] sm:$0xff] %v2024
      %2033 = vst [vmem:[#allocation3 + $0xa8] sm:$0xff] %v2025
      %2034 = vst [vmem:[#allocation3 + $0xb0] sm:$0xff] %v2026
      %2035 = vst [vmem:[#allocation3 + $0xb8] sm:$0xff] %v2027
      %v2036 = vld [vmem:[#allocation2] sm:$0xff]
      %v2037 = vld [vmem:[#allocation2 + $0x8] sm:$0xff]
      %v2038 = vld [vmem:[#allocation2 + $0x10] sm:$0xff]
      %v2039 = vld [vmem:[#allocation2 + $0x18] sm:$0xff]
      %v2040 = vld [vmem:[#allocation2 + $0x20] sm:$0xff]
      %v2041 = vld [vmem:[#allocation2 + $0x28] sm:$0xff]
      %v2042 = vmul.f32 %v2036, %v716
      %v2043 = vmul.f32 %v2037, %v720
      %v2044 = vmul.f32 %v2038, %v718
      %v2045 = vmul.f32 %v2039, %v716
      %v2046 = vmul.f32 %v2040, %v720
      %v2047 = vmul.f32 %v2041, %v718
      %2054 = vrot.lane.b32.xlu0 %v2042, 96
      %v2055 = vpop.permute.xlu0 %2054
      %2056 = vrot.lane.b32.xlu0 %v2043, 96
      %v2057 = vpop.permute.xlu0 %2056
      %2058 = vrot.lane.b32.xlu0 %v2044, 96
      %v2059 = vpop.permute.xlu0 %2058
      %2060 = vrot.lane.b32.xlu0 %v2045, 96
      %v2061 = vpop.permute.xlu0 %2060
      %2062 = vrot.lane.b32.xlu0 %v2046, 96
      %v2063 = vpop.permute.xlu0 %2062
      %2064 = vrot.lane.b32.xlu0 %v2047, 96
      %v2065 = vpop.permute.xlu0 %2064
      %v2066 = vsel %vm739, %v2055, %v2057
      %v2067 = vsel %vm739, %v2057, %v2059
      %v2068 = vsel %vm739, %v2061, %v2063
      %v2069 = vsel %vm739, %v2063, %v2065
      %2074 = vst [vmem:[#allocation3 + $0xc0] sm:$0xff] %v2066
      %2075 = vst [vmem:[#allocation3 + $0xc8] sm:$0xff] %v2067
      %2076 = vst [vmem:[#allocation3 + $0xd0] sm:$0xff] %v2068
      %2077 = vst [vmem:[#allocation3 + $0xd8] sm:$0xff] %v2069
      %v2078 = vld [vmem:[#allocation2] sm:$0xff]
      %v2079 = vld [vmem:[#allocation2 + $0x8] sm:$0xff]
      %v2080 = vld [vmem:[#allocation2 + $0x10] sm:$0xff]
      %v2081 = vld [vmem:[#allocation2 + $0x18] sm:$0xff]
      %v2082 = vld [vmem:[#allocation2 + $0x20] sm:$0xff]
      %v2083 = vld [vmem:[#allocation2 + $0x28] sm:$0xff]
      %v2084 = vmul.f32 %v2078, %v760
      %v2085 = vmul.f32 %v2079, %v764
      %v2086 = vmul.f32 %v2080, %v762
      %v2087 = vmul.f32 %v2081, %v760
      %v2088 = vmul.f32 %v2082, %v764
      %v2089 = vmul.f32 %v2083, %v762
      %2096 = vrot.lane.b32.xlu0 %v2084, 95
      %v2097 = vpop.permute.xlu0 %2096
      %2098 = vrot.lane.b32.xlu0 %v2085, 95
      %v2099 = vpop.permute.xlu0 %2098
      %2100 = vrot.lane.b32.xlu0 %v2086, 95
      %v2101 = vpop.permute.xlu0 %2100
      %2102 = vrot.lane.b32.xlu0 %v2087, 95
      %v2103 = vpop.permute.xlu0 %2102
      %2104 = vrot.lane.b32.xlu0 %v2088, 95
      %v2105 = vpop.permute.xlu0 %2104
      %2106 = vrot.lane.b32.xlu0 %v2089, 95
      %v2107 = vpop.permute.xlu0 %2106
      %v2108 = vsel %vm783, %v2097, %v2099
      %v2109 = vsel %vm783, %v2099, %v2101
      %v2110 = vsel %vm783, %v2103, %v2105
      %v2111 = vsel %vm783, %v2105, %v2107
      %2116 = vst [vmem:[#allocation3 + $0xe0] sm:$0xff] %v2108
      %2117 = vst [vmem:[#allocation3 + $0xe8] sm:$0xff] %v2109
      %2118 = vst [vmem:[#allocation3 + $0xf0] sm:$0xff] %v2110
      %2119 = vst [vmem:[#allocation3 + $0xf8] sm:$0xff] %v2111
      %v2120 = vld [vmem:[#allocation2] sm:$0xff]
      %v2121 = vld [vmem:[#allocation2 + $0x8] sm:$0xff]
      %v2122 = vld [vmem:[#allocation2 + $0x10] sm:$0xff]
      %v2123 = vld [vmem:[#allocation2 + $0x18] sm:$0xff]
      %v2124 = vld [vmem:[#allocation2 + $0x20] sm:$0xff]
      %v2125 = vld [vmem:[#allocation2 + $0x28] sm:$0xff]
      %v2126 = vmul.f32 %v2120, %v804
      %v2127 = vmul.f32 %v2121, %v808
      %v2128 = vmul.f32 %v2122, %v806
      %v2129 = vmul.f32 %v2123, %v804
      %v2130 = vmul.f32 %v2124, %v808
      %v2131 = vmul.f32 %v2125, %v806
      %2138 = vrot.lane.b32.xlu0 %v2126, 94
      %v2139 = vpop.permute.xlu0 %2138
      %2140 = vrot.lane.b32.xlu0 %v2127, 94
      %v2141 = vpop.permute.xlu0 %2140
      %2142 = vrot.lane.b32.xlu0 %v2128, 94
      %v2143 = vpop.permute.xlu0 %2142
      %2144 = vrot.lane.b32.xlu0 %v2129, 94
      %v2145 = vpop.permute.xlu0 %2144
      %2146 = vrot.lane.b32.xlu0 %v2130, 94
      %v2147 = vpop.permute.xlu0 %2146
      %2148 = vrot.lane.b32.xlu0 %v2131, 94
      %v2149 = vpop.permute.xlu0 %2148
      %v2150 = vsel %vm824, %v2139, %v2141
      %v2151 = vsel %vm824, %v2141, %v2143
      %v2152 = vsel %vm824, %v2145, %v2147
      %v2153 = vsel %vm824, %v2147, %v2149
      %2158 = vst [vmem:[#allocation3 + $0x100] sm:$0xff] %v2150
      %2159 = vst [vmem:[#allocation3 + $0x108] sm:$0xff] %v2151
      %2160 = vst [vmem:[#allocation3 + $0x110] sm:$0xff] %v2152
      %2161 = vst [vmem:[#allocation3 + $0x118] sm:$0xff] %v2153
      %v2162 = vld [vmem:[%s8] sm:$0x77]
      %v2163 = vld [vmem:[#allocation3] sm:$0xff]
      %v2164 = vld [vmem:[#allocation3 + $0x8] sm:$0xff]
      %v2165 = vld [vmem:[#allocation3 + $0x10] sm:$0xff]
      %v2166 = vld [vmem:[#allocation3 + $0x18] sm:$0xff]
      %v2167 = vld [vmem:[#allocation3 + $0x20] sm:$0xff]
      %v2168 = vld [vmem:[#allocation3 + $0x28] sm:$0xff]
      %v2169 = vld [vmem:[#allocation3 + $0x30] sm:$0xff]
      %v2170 = vld [vmem:[#allocation3 + $0x38] sm:$0xff]
      %v2171 = vld [vmem:[#allocation3 + $0x40] sm:$0xff]
      %v2172 = vld [vmem:[#allocation3 + $0x48] sm:$0xff]
      %v2173 = vld [vmem:[#allocation3 + $0x50] sm:$0xff]
      %v2174 = vld [vmem:[#allocation3 + $0x58] sm:$0xff]
      %v2175 = vld [vmem:[#allocation3 + $0x60] sm:$0xff]
      %v2176 = vld [vmem:[#allocation3 + $0x68] sm:$0xff]
      %v2177 = vld [vmem:[#allocation3 + $0x70] sm:$0xff]
      %v2178 = vld [vmem:[#allocation3 + $0x78] sm:$0xff]
      %v2179 = vld [vmem:[#allocation3 + $0x80] sm:$0xff]
      %v2180 = vld [vmem:[#allocation3 + $0x88] sm:$0xff]
      %v2181 = vld [vmem:[#allocation3 + $0x90] sm:$0xff]
      %v2182 = vld [vmem:[#allocation3 + $0x98] sm:$0xff]
      %v2183 = vld [vmem:[#allocation3 + $0xa0] sm:$0xff]
      %v2184 = vld [vmem:[#allocation3 + $0xa8] sm:$0xff]
      %v2185 = vld [vmem:[#allocation3 + $0xb0] sm:$0xff]
      %v2186 = vld [vmem:[#allocation3 + $0xb8] sm:$0xff]
      %v2187 = vld [vmem:[#allocation3 + $0xc0] sm:$0xff]
      %v2188 = vld [vmem:[#allocation3 + $0xc8] sm:$0xff]
      %v2189 = vld [vmem:[#allocation3 + $0xd0] sm:$0xff]
      %v2190 = vld [vmem:[#allocation3 + $0xd8] sm:$0xff]
      %v2191 = vld [vmem:[#allocation3 + $0xe0] sm:$0xff]
      %v2192 = vld [vmem:[#allocation3 + $0xe8] sm:$0xff]
      %v2193 = vld [vmem:[#allocation3 + $0xf0] sm:$0xff]
      %v2194 = vld [vmem:[#allocation3 + $0xf8] sm:$0xff]
      %v2195 = vld [vmem:[#allocation3 + $0x100] sm:$0xff]
      %v2196 = vld [vmem:[#allocation3 + $0x108] sm:$0xff]
      %v2197 = vld [vmem:[#allocation3 + $0x110] sm:$0xff]
      %v2198 = vld [vmem:[#allocation3 + $0x118] sm:$0xff]
      %v2199 = vld [vmem:[%s9] sm:$0x7]
      %2201 = vset.pattern.permute.xlu0 0
      %2202 = vperm.xlu0 %2201, %v2199
      %v2203 = vpop.permute.xlu0 %2202
      %v2206 = vcombine.high %v2162, %v2162
      %v2207 = vsel %vm586, %v2206, 0
      %2209 = vmatprep.subr.mxu0 %v2194
      %2210 = vmatpush1.msra.mxu0 %v2193
      %2211 = vmatprep.subr.mxu0 %v2192
      %2212 = vmatpush1.msra.mxu0 %v2191
      %2213 = vmatprep.subr.mxu0 %v2190
      %2214 = vmatpush1.msra.mxu0 %v2189
      %2215 = vmatprep.subr.mxu0 %v2188
      %2216 = vmatpush1.msra.mxu0 %v2187
      %2217 = vmatprep.subr.mxu0 %v2186
      %2218 = vmatpush1.msra.mxu0 %v2185
      %2219 = vmatprep.subr.mxu0 %v2184
      %2220 = vmatpush1.msra.mxu0 %v2183
      %2221 = vmatprep.subr.mxu0 %v2182
      %2222 = vmatpush1.msra.mxu0 %v2181
      %2223 = vmatprep.subr.mxu0 %v2180
      %2224 = vmatpush1.msra.mxu0 %v2179
      %2225 = vmatprep.subr.mxu0 %v2178
      %2226 = vmatpush1.msra.mxu0 %v2177
      %2227 = vmatprep.subr.mxu0 %v2176
      %2228 = vmatpush1.msra.mxu0 %v2175
      %2229 = vmatprep.subr.mxu0 %v2174
      %2230 = vmatpush1.msra.mxu0 %v2173
      %2231 = vmatprep.subr.mxu0 %v2172
      %2232 = vmatpush1.msra.mxu0 %v2171
      %2233 = vmatprep.subr.mxu0 %v2170
      %2234 = vmatpush1.msra.mxu0 %v2169
      %2235 = vmatprep.subr.mxu0 %v2168
      %2236 = vmatpush1.msra.mxu0 %v2167
      %2237 = vmatprep.subr.mxu0 %v2166
      %2238 = vmatpush1.msra.mxu0 %v2165
      %2239 = vmatprep.subr.mxu0 %v2164
      %2240 = vmatpush1.msra.mxu0 %v2163
      %2241 = vmatprep.subr.mxu0 0.0
      %2242 = vmatpush2.msra.mxu0 0.0
      %2243 = vmatprep.subr.mxu0 0.0
      %2244 = vmatpush2.msra.mxu0 0.0
      %2245 = vmatprep.subr.mxu0 0.0
      %2246 = vmatpush2.msra.mxu0 0.0
      %2247 = vmatprep.subr.mxu0 0.0
      %2248 = vmatpush2.msra.mxu0 0.0
      %2249 = vmatprep.subr.mxu0 0.0
      %2250 = vmatpush2.msra.mxu0 0.0
      %2251 = vmatprep.subr.mxu0 0.0
      %2252 = vmatpush2.msra.mxu0 0.0
      %2253 = vmatprep.subr.mxu0 0.0
      %2254 = vmatpush2.msra.mxu0 0.0
      %2255 = vmatprep.subr.mxu0 0.0
      %2256 = vmatpush2.msra.mxu0 0.0
      %2257 = vmatprep.subr.mxu0 0.0
      %2258 = vmatpush2.msra.mxu0 0.0
      %2259 = vmatprep.subr.mxu0 0.0
      %2260 = vmatpush2.msra.mxu0 0.0
      %2261 = vmatprep.subr.mxu0 0.0
      %2262 = vmatpush2.msra.mxu0 0.0
      %2263 = vmatprep.subr.mxu0 0.0
      %2264 = vmatpush2.msra.mxu0 0.0
      %2265 = vmatprep.subr.mxu0 0.0
      %2266 = vmatpush2.msra.mxu0 0.0
      %2267 = vmatprep.subr.mxu0 0.0
      %2268 = vmatpush2.msra.mxu0 0.0
      %2269 = vmatprep.subr.mxu0 %v2198
      %2270 = vmatpush2.msra.mxu0 %v2197
      %2271 = vmatprep.subr.mxu0 %v2196
      %2272 = vmatpush2.msra.mxu0 %v2195
      %2273 = vmatprep.mubr.f32.mxu0 %v2207
      %2274 = vmatmul.mubr.f32.gmra.mxu0 %v2162
      %v2275 = vpop.f32.mrf.mxu0
      %v2276 = vadd.f32 %v2203, %v2275
      %v2277 = vpop.f32.mrf.mxu0
      %v2278 = vadd.f32 %v2203, %v2277
      %2279 = vdwg.mxu0
      %v2280 = vxor.u32 %v2276, 2147483648
      %v2281 = vxor.u32 %v2278, 2147483648
      %v2282 = vmul.f32 %v2280, 1.442695
      %v2283 = vpow.pop %v2282
      %v2284 = vmul.f32 %v2281, 1.442695
      %v2285 = vpow.pop %v2284
      %v2286 = vadd.f32 %v2283, 1.0
      %v2287 = vadd.f32 %v2285, 1.0
      %v2288 = vrcp.pop %v2286
      %v2289 = vmul.f32 1.0, %v2288
      %v2290 = vrcp.pop %v2287
      %v2291 = vmul.f32 1.0, %v2290
      %2292 = vst [vmem:[%s433] sm:$0x77] %v1455
      %2293 = vst [vmem:[%s438] sm:$0x77] %v1460
      %v2296 = vcombine.low %v2289, %v2291
      %2298 = vst [vmem:[%s428] sm:$0x77] %v2296
      %2299 = vrot.lane.b32.xlu0 %v2289, 17
      %v2300 = vpop.permute.xlu0 %2299
      %2301 = vrot.lane.b32.xlu0 %v2291, 17
      %v2302 = vpop.permute.xlu0 %2301
      %v2303 = vsel %vm439, %v2300, %v2302
      %2307 = vst.msk [vmem:[#allocation2] sm:$0x7] %vm460, %v2300
      %2308 = vst [vmem:[#allocation2 + $0x8] sm:$0x7] %v2303
      %2309 = vst.msk [vmem:[#allocation2 + $0x10] sm:$0x7] %vm463, %v2302
      %v2310 = vld [vmem:[#allocation2] sm:$0x7]
      %v2311 = vld [vmem:[#allocation2 + $0x8] sm:$0x7]
      %v2312 = vmul.f32 %v2310, %v470
      %v2313 = vmul.f32 %v2311, %v474
      %2314 = vst [vmem:[#allocation3] sm:$0x7] %v2312
      %2315 = vst [vmem:[#allocation3 + $0x8] sm:$0x7] %v2313
      %v2316 = vld [vmem:[#allocation2] sm:$0x7]
      %v2317 = vld [vmem:[#allocation2 + $0x8] sm:$0x7]
      %v2318 = vld [vmem:[#allocation2 + $0x10] sm:$0x7]
      %v2319 = vmul.f32 %v2316, %v493
      %v2320 = vmul.f32 %v2317, %v497
      %v2321 = vmul.f32 %v2318, %v495
      %v2325 = vrot.slane %v2319, 5
      %v2326 = vrot.slane %v2320, 5
      %v2327 = vrot.slane %v2321, 5
      %2328 = vrot.lane.b32.xlu0 %v2325, 127
      %v2329 = vpop.permute.xlu0 %2328
      %2330 = vrot.lane.b32.xlu0 %v2326, 127
      %v2331 = vpop.permute.xlu0 %2330
      %2332 = vrot.lane.b32.xlu0 %v2327, 127
      %v2333 = vpop.permute.xlu0 %2332
      %v2334 = vsel %vm516, %v2329, %v2331
      %v2335 = vsel %vm516, %v2331, %v2333
      %2338 = vst [vmem:[#allocation3] sm:$0x38] %v2334
      %2339 = vst [vmem:[#allocation3 + $0x8] sm:$0x38] %v2335
      %v2340 = vld [vmem:[#allocation2] sm:$0x7]
      %v2341 = vld [vmem:[#allocation2 + $0x8] sm:$0x7]
      %v2342 = vld [vmem:[#allocation2 + $0x10] sm:$0x7]
      %v2343 = vmul.f32 %v2340, %v537
      %v2344 = vmul.f32 %v2341, %v541
      %v2345 = vmul.f32 %v2342, %v539
      %v2349 = vrot.slane %v2343, 2
      %v2350 = vrot.slane %v2344, 2
      %v2351 = vrot.slane %v2345, 2
      %2352 = vrot.lane.b32.xlu0 %v2349, 126
      %v2353 = vpop.permute.xlu0 %2352
      %2354 = vrot.lane.b32.xlu0 %v2350, 126
      %v2355 = vpop.permute.xlu0 %2354
      %2356 = vrot.lane.b32.xlu0 %v2351, 126
      %v2357 = vpop.permute.xlu0 %2356
      %v2358 = vsel %vm560, %v2353, %v2355
      %v2359 = vsel %vm560, %v2355, %v2357
      %2362 = vst [vmem:[#allocation3] sm:$0xc0] %v2358
      %2363 = vst [vmem:[#allocation3 + $0x8] sm:$0xc0] %v2359
      %2364 = vst [vmem:[#allocation3 + $0x10] sm:$0x1] %v2358
      %2365 = vst [vmem:[#allocation3 + $0x18] sm:$0x1] %v2359
      %v2366 = vld [vmem:[#allocation2] sm:$0x7]
      %v2367 = vld [vmem:[#allocation2 + $0x8] sm:$0x7]
      %v2368 = vld [vmem:[#allocation2 + $0x10] sm:$0x7]
      %v2369 = vmul.f32 %v2366, %v583
      %v2370 = vmul.f32 %v2367, %v587
      %v2371 = vmul.f32 %v2368, %v585
      %v2375 = vrot.slane %v2369, 7
      %v2376 = vrot.slane %v2370, 7
      %v2377 = vrot.slane %v2371, 7
      %2378 = vrot.lane.b32.xlu0 %v2375, 112
      %v2379 = vpop.permute.xlu0 %2378
      %2380 = vrot.lane.b32.xlu0 %v2376, 112
      %v2381 = vpop.permute.xlu0 %2380
      %2382 = vrot.lane.b32.xlu0 %v2377, 112
      %v2383 = vpop.permute.xlu0 %2382
      %v2384 = vsel %vm606, %v2379, %v2381
      %v2385 = vsel %vm606, %v2381, %v2383
      %2388 = vst [vmem:[#allocation3 + $0x10] sm:$0xe] %v2384
      %2389 = vst [vmem:[#allocation3 + $0x18] sm:$0xe] %v2385
      %v2390 = vld [vmem:[#allocation2] sm:$0x7]
      %v2391 = vld [vmem:[#allocation2 + $0x8] sm:$0x7]
      %v2392 = vld [vmem:[#allocation2 + $0x10] sm:$0x7]
      %v2393 = vmul.f32 %v2390, %v627
      %v2394 = vmul.f32 %v2391, %v630
      %v2395 = vmul.f32 %v2392, %v629
      %v2399 = vrot.slane %v2393, 4
      %v2400 = vrot.slane %v2394, 4
      %v2401 = vrot.slane %v2395, 4
      %2402 = vrot.lane.b32.xlu0 %v2399, 111
      %v2403 = vpop.permute.xlu0 %2402
      %2404 = vrot.lane.b32.xlu0 %v2400, 111
      %v2405 = vpop.permute.xlu0 %2404
      %2406 = vrot.lane.b32.xlu0 %v2401, 111
      %v2407 = vpop.permute.xlu0 %2406
      %v2408 = vsel %vm649, %v2403, %v2405
      %v2409 = vsel %vm649, %v2405, %v2407
      %2412 = vst [vmem:[#allocation3 + $0x10] sm:$0x70] %v2408
      %2413 = vst [vmem:[#allocation3 + $0x18] sm:$0x70] %v2409
      %v2414 = vld [vmem:[#allocation2] sm:$0x7]
      %v2415 = vld [vmem:[#allocation2 + $0x8] sm:$0x7]
      %v2416 = vld [vmem:[#allocation2 + $0x10] sm:$0x7]
      %v2417 = vmul.f32 %v2414, %v670
      %v2418 = vmul.f32 %v2415, %v674
      %v2419 = vmul.f32 %v2416, %v672
      %v2423 = vrot.slane %v2417, 1
      %v2424 = vrot.slane %v2418, 1
      %v2425 = vrot.slane %v2419, 1
      %2426 = vrot.lane.b32.xlu0 %v2423, 110
      %v2427 = vpop.permute.xlu0 %2426
      %2428 = vrot.lane.b32.xlu0 %v2424, 110
      %v2429 = vpop.permute.xlu0 %2428
      %2430 = vrot.lane.b32.xlu0 %v2425, 110
      %v2431 = vpop.permute.xlu0 %2430
      %v2432 = vsel %vm693, %v2427, %v2429
      %v2433 = vsel %vm693, %v2429, %v2431
      %2436 = vst [vmem:[#allocation3 + $0x10] sm:$0x80] %v2432
      %2437 = vst [vmem:[#allocation3 + $0x18] sm:$0x80] %v2433
      %2438 = vst [vmem:[#allocation3 + $0x20] sm:$0x3] %v2432
      %2439 = vst [vmem:[#allocation3 + $0x28] sm:$0x3] %v2433
      %v2440 = vld [vmem:[#allocation2] sm:$0x7]
      %v2441 = vld [vmem:[#allocation2 + $0x8] sm:$0x7]
      %v2442 = vld [vmem:[#allocation2 + $0x10] sm:$0x7]
      %v2443 = vmul.f32 %v2440, %v716
      %v2444 = vmul.f32 %v2441, %v720
      %v2445 = vmul.f32 %v2442, %v718
      %v2449 = vrot.slane %v2443, 6
      %v2450 = vrot.slane %v2444, 6
      %v2451 = vrot.slane %v2445, 6
      %2452 = vrot.lane.b32.xlu0 %v2449, 96
      %v2453 = vpop.permute.xlu0 %2452
      %2454 = vrot.lane.b32.xlu0 %v2450, 96
      %v2455 = vpop.permute.xlu0 %2454
      %2456 = vrot.lane.b32.xlu0 %v2451, 96
      %v2457 = vpop.permute.xlu0 %2456
      %v2458 = vsel %vm739, %v2453, %v2455
      %v2459 = vsel %vm739, %v2455, %v2457
      %2462 = vst [vmem:[#allocation3 + $0x20] sm:$0x1c] %v2458
      %2463 = vst [vmem:[#allocation3 + $0x28] sm:$0x1c] %v2459
      %v2464 = vld [vmem:[#allocation2] sm:$0x7]
      %v2465 = vld [vmem:[#allocation2 + $0x8] sm:$0x7]
      %v2466 = vld [vmem:[#allocation2 + $0x10] sm:$0x7]
      %v2467 = vmul.f32 %v2464, %v760
      %v2468 = vmul.f32 %v2465, %v764
      %v2469 = vmul.f32 %v2466, %v762
      %v2473 = vrot.slane %v2467, 3
      %v2474 = vrot.slane %v2468, 3
      %v2475 = vrot.slane %v2469, 3
      %2476 = vrot.lane.b32.xlu0 %v2473, 95
      %v2477 = vpop.permute.xlu0 %2476
      %2478 = vrot.lane.b32.xlu0 %v2474, 95
      %v2479 = vpop.permute.xlu0 %2478
      %2480 = vrot.lane.b32.xlu0 %v2475, 95
      %v2481 = vpop.permute.xlu0 %2480
      %v2482 = vsel %vm783, %v2477, %v2479
      %v2483 = vsel %vm783, %v2479, %v2481
      %2486 = vst [vmem:[#allocation3 + $0x20] sm:$0xe0] %v2482
      %2487 = vst [vmem:[#allocation3 + $0x28] sm:$0xe0] %v2483
      %v2488 = vld [vmem:[#allocation2] sm:$0x7]
      %v2489 = vld [vmem:[#allocation2 + $0x8] sm:$0x7]
      %v2490 = vld [vmem:[#allocation2 + $0x10] sm:$0x7]
      %v2491 = vmul.f32 %v2488, %v804
      %v2492 = vmul.f32 %v2489, %v808
      %v2493 = vmul.f32 %v2490, %v806
      %2497 = vrot.lane.b32.xlu0 %v2491, 94
      %v2498 = vpop.permute.xlu0 %2497
      %2499 = vrot.lane.b32.xlu0 %v2492, 94
      %v2500 = vpop.permute.xlu0 %2499
      %2501 = vrot.lane.b32.xlu0 %v2493, 94
      %v2502 = vpop.permute.xlu0 %2501
      %v2503 = vsel %vm824, %v2498, %v2500
      %v2504 = vsel %vm824, %v2500, %v2502
      %2507 = vst [vmem:[#allocation3 + $0x30] sm:$0x7] %v2503
      %2508 = vst [vmem:[#allocation3 + $0x38] sm:$0x7] %v2504
      %v2509 = vld [vmem:[%s2] sm:$0xff]
      %v2510 = vld [vmem:[%s2 + $0x8] sm:$0xff]
      %v2511 = vld [vmem:[#allocation3] sm:$0xff]
      %v2512 = vld [vmem:[#allocation3 + $0x8] sm:$0xff]
      %v2513 = vld [vmem:[#allocation3 + $0x10] sm:$0xff]
      %v2514 = vld [vmem:[#allocation3 + $0x18] sm:$0xff]
      %v2515 = vld [vmem:[#allocation3 + $0x20] sm:$0xff]
      %v2516 = vld [vmem:[#allocation3 + $0x28] sm:$0xff]
      %v2517 = vld [vmem:[#allocation3 + $0x30] sm:$0x7]
      %v2518 = vld [vmem:[#allocation3 + $0x38] sm:$0x7]
      %v2519 = vld [vmem:[%s3] sm:$0xff]
      %v2520 = vld [vmem:[%s3 + $0x8] sm:$0xff]
      %2522 = vset.pattern.permute.xlu0 0
      %2523 = vperm.xlu0 %2522, %v2519
      %v2524 = vpop.permute.xlu0 %2523
      %2527 = vset.pattern.permute.xlu0 0
      %2528 = vperm.xlu0 %2527, %v2520
      %v2529 = vpop.permute.xlu0 %2528
      %v2532 = vsel %vm853, %v2509, 0
      %v2535 = vsel %vm853, %v2510, 0
      %v2538 = vsel %vm860, %v2517, 0
      %v2541 = vsel %vm860, %v2518, 0
      %2543 = vmatprep.subr.mxu0 0.0
      %2544 = vmatpush1.msra.mxu0 0.0
      %2545 = vmatprep.subr.mxu0 0.0
      %2546 = vmatpush1.msra.mxu0 0.0
      %2547 = vmatprep.subr.mxu0 0.0
      %2548 = vmatpush1.msra.mxu0 0.0
      %2549 = vmatprep.subr.mxu0 0.0
      %2550 = vmatpush1.msra.mxu0 0.0
      %2551 = vmatprep.subr.mxu0 0.0
      %2552 = vmatpush1.msra.mxu0 0.0
      %2553 = vmatprep.subr.mxu0 0.0
      %2554 = vmatpush1.msra.mxu0 0.0
      %2555 = vmatprep.subr.mxu0 0.0
      %2556 = vmatpush1.msra.mxu0 0.0
      %2557 = vmatprep.subr.mxu0 0.0
      %2558 = vmatpush1.msra.mxu0 0.0
      %2559 = vmatprep.subr.mxu0 0.0
      %2560 = vmatpush1.msra.mxu0 0.0
      %2561 = vmatprep.subr.mxu0 0.0
      %2562 = vmatpush1.msra.mxu0 0.0
      %2563 = vmatprep.subr.mxu0 0.0
      %2564 = vmatpush1.msra.mxu0 0.0
      %2565 = vmatprep.subr.mxu0 0.0
      %2566 = vmatpush1.msra.mxu0 0.0
      %2567 = vmatprep.subr.mxu0 %v2541
      %2568 = vmatpush1.msra.mxu0 %v2538
      %2569 = vmatprep.subr.mxu0 %v2516
      %2570 = vmatpush1.msra.mxu0 %v2515
      %2571 = vmatprep.subr.mxu0 %v2514
      %2572 = vmatpush1.msra.mxu0 %v2513
      %2573 = vmatprep.subr.mxu0 %v2512
      %2574 = vmatpush1.msra.mxu0 %v2511
      %2575 = vmatprep.subr.mxu0 0.0
      %2576 = vmatpush2.msra.mxu0 0.0
      %2577 = vmatprep.subr.mxu0 0.0
      %2578 = vmatpush2.msra.mxu0 0.0
      %2579 = vmatprep.subr.mxu0 0.0
      %2580 = vmatpush2.msra.mxu0 0.0
      %2581 = vmatprep.subr.mxu0 0.0
      %2582 = vmatpush2.msra.mxu0 0.0
      %2583 = vmatprep.subr.mxu0 0.0
      %2584 = vmatpush2.msra.mxu0 0.0
      %2585 = vmatprep.subr.mxu0 0.0
      %2586 = vmatpush2.msra.mxu0 0.0
      %2587 = vmatprep.subr.mxu0 0.0
      %2588 = vmatpush2.msra.mxu0 0.0
      %2589 = vmatprep.subr.mxu0 0.0
      %2590 = vmatpush2.msra.mxu0 0.0
      %2591 = vmatprep.subr.mxu0 0.0
      %2592 = vmatpush2.msra.mxu0 0.0
      %2593 = vmatprep.subr.mxu0 0.0
      %2594 = vmatpush2.msra.mxu0 0.0
      %2595 = vmatprep.subr.mxu0 0.0
      %2596 = vmatpush2.msra.mxu0 0.0
      %2597 = vmatprep.subr.mxu0 0.0
      %2598 = vmatpush2.msra.mxu0 0.0
      %2599 = vmatprep.subr.mxu0 0.0
      %2600 = vmatpush2.msra.mxu0 0.0
      %2601 = vmatprep.subr.mxu0 0.0
      %2602 = vmatpush2.msra.mxu0 0.0
      %2603 = vmatprep.subr.mxu0 0.0
      %2604 = vmatpush2.msra.mxu0 0.0
      %2605 = vmatprep.subr.mxu0 0.0
      %2606 = vmatpush2.msra.mxu0 0.0
      %2607 = vmatprep.mubr.f32.mxu0 0.0
      %2608 = vmatmul.mubr.f32.gmra.mxu0 %v2532
      %v2609 = vpop.f32.mrf.mxu0
      %v2610 = vadd.f32 %v2524, %v2609
      %v2611 = vpop.f32.mrf.mxu0
      %v2612 = vadd.f32 %v2524, %v2611
      %2613 = vmatprep.mubr.f32.mxu0 0.0
      %2614 = vmatmul.mubr.f32.gmra.mxu0 %v2535
      %v2615 = vpop.f32.mrf.mxu0
      %v2616 = vadd.f32 %v2529, %v2615
      %v2617 = vpop.f32.mrf.mxu0
      %v2618 = vadd.f32 %v2529, %v2617
      %2619 = vdwg.mxu0
      %v2620 = vmax.f32 %v2610, 0.0
      %v2621 = vmax.f32 %v2612, 0.0
      %v2622 = vmax.f32 %v2616, 0.0
      %v2623 = vmax.f32 %v2618, 0.0
      %2628 = vrot.lane.b32.xlu0 %v2620, 17
      %v2629 = vpop.permute.xlu0 %2628
      %2630 = vrot.lane.b32.xlu0 %v2621, 17
      %v2631 = vpop.permute.xlu0 %2630
      %2632 = vrot.lane.b32.xlu0 %v2622, 17
      %v2633 = vpop.permute.xlu0 %2632
      %2634 = vrot.lane.b32.xlu0 %v2623, 17
      %v2635 = vpop.permute.xlu0 %2634
      %v2636 = vsel %vm439, %v2629, %v2631
      %v2637 = vsel %vm439, %v2633, %v2635
      %2644 = vst.msk [vmem:[#allocation2] sm:$0xff] %vm968, %v2629
      %2645 = vst [vmem:[#allocation2 + $0x8] sm:$0xff] %v2636
      %2646 = vst.msk [vmem:[#allocation2 + $0x10] sm:$0xff] %vm439, %v2631
      %2647 = vst.msk [vmem:[#allocation2 + $0x18] sm:$0xff] %vm968, %v2633
      %2648 = vst [vmem:[#allocation2 + $0x20] sm:$0xff] %v2637
      %2649 = vst.msk [vmem:[#allocation2 + $0x28] sm:$0xff] %vm439, %v2635
      %v2650 = vld [vmem:[#allocation2] sm:$0xff]
      %v2651 = vld [vmem:[#allocation2 + $0x8] sm:$0xff]
      %v2652 = vld [vmem:[#allocation2 + $0x18] sm:$0xff]
      %v2653 = vld [vmem:[#allocation2 + $0x20] sm:$0xff]
      %v2654 = vmul.f32 %v2650, %v470
      %v2655 = vmul.f32 %v2651, %v474
      %v2656 = vmul.f32 %v2652, %v470
      %v2657 = vmul.f32 %v2653, %v474
      %2658 = vst [vmem:[#allocation3] sm:$0xff] %v2654
      %2659 = vst [vmem:[#allocation3 + $0x8] sm:$0xff] %v2655
      %2660 = vst [vmem:[#allocation3 + $0x10] sm:$0xff] %v2656
      %2661 = vst [vmem:[#allocation3 + $0x18] sm:$0xff] %v2657
      %v2662 = vld [vmem:[#allocation2] sm:$0xff]
      %v2663 = vld [vmem:[#allocation2 + $0x8] sm:$0xff]
      %v2664 = vld [vmem:[#allocation2 + $0x10] sm:$0xff]
      %v2665 = vld [vmem:[#allocation2 + $0x18] sm:$0xff]
      %v2666 = vld [vmem:[#allocation2 + $0x20] sm:$0xff]
      %v2667 = vld [vmem:[#allocation2 + $0x28] sm:$0xff]
      %v2668 = vmul.f32 %v2662, %v493
      %v2669 = vmul.f32 %v2663, %v497
      %v2670 = vmul.f32 %v2664, %v495
      %v2671 = vmul.f32 %v2665, %v493
      %v2672 = vmul.f32 %v2666, %v497
      %v2673 = vmul.f32 %v2667, %v495
      %2680 = vrot.lane.b32.xlu0 %v2668, 127
      %v2681 = vpop.permute.xlu0 %2680
      %2682 = vrot.lane.b32.xlu0 %v2669, 127
      %v2683 = vpop.permute.xlu0 %2682
      %2684 = vrot.lane.b32.xlu0 %v2670, 127
      %v2685 = vpop.permute.xlu0 %2684
      %2686 = vrot.lane.b32.xlu0 %v2671, 127
      %v2687 = vpop.permute.xlu0 %2686
      %2688 = vrot.lane.b32.xlu0 %v2672, 127
      %v2689 = vpop.permute.xlu0 %2688
      %2690 = vrot.lane.b32.xlu0 %v2673, 127
      %v2691 = vpop.permute.xlu0 %2690
      %v2692 = vsel %vm516, %v2681, %v2683
      %v2693 = vsel %vm516, %v2683, %v2685
      %v2694 = vsel %vm516, %v2687, %v2689
      %v2695 = vsel %vm516, %v2689, %v2691
      %2700 = vst [vmem:[#allocation3 + $0x20] sm:$0xff] %v2692
      %2701 = vst [vmem:[#allocation3 + $0x28] sm:$0xff] %v2693
      %2702 = vst [vmem:[#allocation3 + $0x30] sm:$0xff] %v2694
      %2703 = vst [vmem:[#allocation3 + $0x38] sm:$0xff] %v2695
      %v2704 = vld [vmem:[#allocation2] sm:$0xff]
      %v2705 = vld [vmem:[#allocation2 + $0x8] sm:$0xff]
      %v2706 = vld [vmem:[#allocation2 + $0x10] sm:$0xff]
      %v2707 = vld [vmem:[#allocation2 + $0x18] sm:$0xff]
      %v2708 = vld [vmem:[#allocation2 + $0x20] sm:$0xff]
      %v2709 = vld [vmem:[#allocation2 + $0x28] sm:$0xff]
      %v2710 = vmul.f32 %v2704, %v537
      %v2711 = vmul.f32 %v2705, %v541
      %v2712 = vmul.f32 %v2706, %v539
      %v2713 = vmul.f32 %v2707, %v537
      %v2714 = vmul.f32 %v2708, %v541
      %v2715 = vmul.f32 %v2709, %v539
      %2722 = vrot.lane.b32.xlu0 %v2710, 126
      %v2723 = vpop.permute.xlu0 %2722
      %2724 = vrot.lane.b32.xlu0 %v2711, 126
      %v2725 = vpop.permute.xlu0 %2724
      %2726 = vrot.lane.b32.xlu0 %v2712, 126
      %v2727 = vpop.permute.xlu0 %2726
      %2728 = vrot.lane.b32.xlu0 %v2713, 126
      %v2729 = vpop.permute.xlu0 %2728
      %2730 = vrot.lane.b32.xlu0 %v2714, 126
      %v2731 = vpop.permute.xlu0 %2730
      %2732 = vrot.lane.b32.xlu0 %v2715, 126
      %v2733 = vpop.permute.xlu0 %2732
      %v2734 = vsel %vm560, %v2723, %v2725
      %v2735 = vsel %vm560, %v2725, %v2727
      %v2736 = vsel %vm560, %v2729, %v2731
      %v2737 = vsel %vm560, %v2731, %v2733
      %2742 = vst [vmem:[#allocation3 + $0x40] sm:$0xff] %v2734
      %2743 = vst [vmem:[#allocation3 + $0x48] sm:$0xff] %v2735
      %2744 = vst [vmem:[#allocation3 + $0x50] sm:$0xff] %v2736
      %2745 = vst [vmem:[#allocation3 + $0x58] sm:$0xff] %v2737
      %v2746 = vld [vmem:[#allocation2] sm:$0xff]
      %v2747 = vld [vmem:[#allocation2 + $0x8] sm:$0xff]
      %v2748 = vld [vmem:[#allocation2 + $0x10] sm:$0xff]
      %v2749 = vld [vmem:[#allocation2 + $0x18] sm:$0xff]
      %v2750 = vld [vmem:[#allocation2 + $0x20] sm:$0xff]
      %v2751 = vld [vmem:[#allocation2 + $0x28] sm:$0xff]
      %v2752 = vmul.f32 %v2746, %v583
      %v2753 = vmul.f32 %v2747, %v587
      %v2754 = vmul.f32 %v2748, %v585
      %v2755 = vmul.f32 %v2749, %v583
      %v2756 = vmul.f32 %v2750, %v587
      %v2757 = vmul.f32 %v2751, %v585
      %2764 = vrot.lane.b32.xlu0 %v2752, 112
      %v2765 = vpop.permute.xlu0 %2764
      %2766 = vrot.lane.b32.xlu0 %v2753, 112
      %v2767 = vpop.permute.xlu0 %2766
      %2768 = vrot.lane.b32.xlu0 %v2754, 112
      %v2769 = vpop.permute.xlu0 %2768
      %2770 = vrot.lane.b32.xlu0 %v2755, 112
      %v2771 = vpop.permute.xlu0 %2770
      %2772 = vrot.lane.b32.xlu0 %v2756, 112
      %v2773 = vpop.permute.xlu0 %2772
      %2774 = vrot.lane.b32.xlu0 %v2757, 112
      %v2775 = vpop.permute.xlu0 %2774
      %v2776 = vsel %vm606, %v2765, %v2767
      %v2777 = vsel %vm606, %v2767, %v2769
      %v2778 = vsel %vm606, %v2771, %v2773
      %v2779 = vsel %vm606, %v2773, %v2775
      %2784 = vst [vmem:[#allocation3 + $0x60] sm:$0xff] %v2776
      %2785 = vst [vmem:[#allocation3 + $0x68] sm:$0xff] %v2777
      %2786 = vst [vmem:[#allocation3 + $0x70] sm:$0xff] %v2778
      %2787 = vst [vmem:[#allocation3 + $0x78] sm:$0xff] %v2779
      %v2788 = vld [vmem:[#allocation2] sm:$0xff]
      %v2789 = vld [vmem:[#allocation2 + $0x8] sm:$0xff]
      %v2790 = vld [vmem:[#allocation2 + $0x10] sm:$0xff]
      %v2791 = vld [vmem:[#allocation2 + $0x18] sm:$0xff]
      %v2792 = vld [vmem:[#allocation2 + $0x20] sm:$0xff]
      %v2793 = vld [vmem:[#allocation2 + $0x28] sm:$0xff]
      %v2794 = vmul.f32 %v2788, %v627
      %v2795 = vmul.f32 %v2789, %v630
      %v2796 = vmul.f32 %v2790, %v629
      %v2797 = vmul.f32 %v2791, %v627
      %v2798 = vmul.f32 %v2792, %v630
      %v2799 = vmul.f32 %v2793, %v629
      %2806 = vrot.lane.b32.xlu0 %v2794, 111
      %v2807 = vpop.permute.xlu0 %2806
      %2808 = vrot.lane.b32.xlu0 %v2795, 111
      %v2809 = vpop.permute.xlu0 %2808
      %2810 = vrot.lane.b32.xlu0 %v2796, 111
      %v2811 = vpop.permute.xlu0 %2810
      %2812 = vrot.lane.b32.xlu0 %v2797, 111
      %v2813 = vpop.permute.xlu0 %2812
      %2814 = vrot.lane.b32.xlu0 %v2798, 111
      %v2815 = vpop.permute.xlu0 %2814
      %2816 = vrot.lane.b32.xlu0 %v2799, 111
      %v2817 = vpop.permute.xlu0 %2816
      %v2818 = vsel %vm649, %v2807, %v2809
      %v2819 = vsel %vm649, %v2809, %v2811
      %v2820 = vsel %vm649, %v2813, %v2815
      %v2821 = vsel %vm649, %v2815, %v2817
      %2826 = vst [vmem:[#allocation3 + $0x80] sm:$0xff] %v2818
      %2827 = vst [vmem:[#allocation3 + $0x88] sm:$0xff] %v2819
      %2828 = vst [vmem:[#allocation3 + $0x90] sm:$0xff] %v2820
      %2829 = vst [vmem:[#allocation3 + $0x98] sm:$0xff] %v2821
      %v2830 = vld [vmem:[#allocation2] sm:$0xff]
      %v2831 = vld [vmem:[#allocation2 + $0x8] sm:$0xff]
      %v2832 = vld [vmem:[#allocation2 + $0x10] sm:$0xff]
      %v2833 = vld [vmem:[#allocation2 + $0x18] sm:$0xff]
      %v2834 = vld [vmem:[#allocation2 + $0x20] sm:$0xff]
      %v2835 = vld [vmem:[#allocation2 + $0x28] sm:$0xff]
      %v2836 = vmul.f32 %v2830, %v670
      %v2837 = vmul.f32 %v2831, %v674
      %v2838 = vmul.f32 %v2832, %v672
      %v2839 = vmul.f32 %v2833, %v670
      %v2840 = vmul.f32 %v2834, %v674
      %v2841 = vmul.f32 %v2835, %v672
      %2848 = vrot.lane.b32.xlu0 %v2836, 110
      %v2849 = vpop.permute.xlu0 %2848
      %2850 = vrot.lane.b32.xlu0 %v2837, 110
      %v2851 = vpop.permute.xlu0 %2850
      %2852 = vrot.lane.b32.xlu0 %v2838, 110
      %v2853 = vpop.permute.xlu0 %2852
      %2854 = vrot.lane.b32.xlu0 %v2839, 110
      %v2855 = vpop.permute.xlu0 %2854
      %2856 = vrot.lane.b32.xlu0 %v2840, 110
      %v2857 = vpop.permute.xlu0 %2856
      %2858 = vrot.lane.b32.xlu0 %v2841, 110
      %v2859 = vpop.permute.xlu0 %2858
      %v2860 = vsel %vm693, %v2849, %v2851
      %v2861 = vsel %vm693, %v2851, %v2853
      %v2862 = vsel %vm693, %v2855, %v2857
      %v2863 = vsel %vm693, %v2857, %v2859
      %2868 = vst [vmem:[#allocation3 + $0xa0] sm:$0xff] %v2860
      %2869 = vst [vmem:[#allocation3 + $0xa8] sm:$0xff] %v2861
      %2870 = vst [vmem:[#allocation3 + $0xb0] sm:$0xff] %v2862
      %2871 = vst [vmem:[#allocation3 + $0xb8] sm:$0xff] %v2863
      %v2872 = vld [vmem:[#allocation2] sm:$0xff]
      %v2873 = vld [vmem:[#allocation2 + $0x8] sm:$0xff]
      %v2874 = vld [vmem:[#allocation2 + $0x10] sm:$0xff]
      %v2875 = vld [vmem:[#allocation2 + $0x18] sm:$0xff]
      %v2876 = vld [vmem:[#allocation2 + $0x20] sm:$0xff]
      %v2877 = vld [vmem:[#allocation2 + $0x28] sm:$0xff]
      %v2878 = vmul.f32 %v2872, %v716
      %v2879 = vmul.f32 %v2873, %v720
      %v2880 = vmul.f32 %v2874, %v718
      %v2881 = vmul.f32 %v2875, %v716
      %v2882 = vmul.f32 %v2876, %v720
      %v2883 = vmul.f32 %v2877, %v718
      %2890 = vrot.lane.b32.xlu0 %v2878, 96
      %v2891 = vpop.permute.xlu0 %2890
      %2892 = vrot.lane.b32.xlu0 %v2879, 96
      %v2893 = vpop.permute.xlu0 %2892
      %2894 = vrot.lane.b32.xlu0 %v2880, 96
      %v2895 = vpop.permute.xlu0 %2894
      %2896 = vrot.lane.b32.xlu0 %v2881, 96
      %v2897 = vpop.permute.xlu0 %2896
      %2898 = vrot.lane.b32.xlu0 %v2882, 96
      %v2899 = vpop.permute.xlu0 %2898
      %2900 = vrot.lane.b32.xlu0 %v2883, 96
      %v2901 = vpop.permute.xlu0 %2900
      %v2902 = vsel %vm739, %v2891, %v2893
      %v2903 = vsel %vm739, %v2893, %v2895
      %v2904 = vsel %vm739, %v2897, %v2899
      %v2905 = vsel %vm739, %v2899, %v2901
      %2910 = vst [vmem:[#allocation3 + $0xc0] sm:$0xff] %v2902
      %2911 = vst [vmem:[#allocation3 + $0xc8] sm:$0xff] %v2903
      %2912 = vst [vmem:[#allocation3 + $0xd0] sm:$0xff] %v2904
      %2913 = vst [vmem:[#allocation3 + $0xd8] sm:$0xff] %v2905
      %v2914 = vld [vmem:[#allocation2] sm:$0xff]
      %v2915 = vld [vmem:[#allocation2 + $0x8] sm:$0xff]
      %v2916 = vld [vmem:[#allocation2 + $0x10] sm:$0xff]
      %v2917 = vld [vmem:[#allocation2 + $0x18] sm:$0xff]
      %v2918 = vld [vmem:[#allocation2 + $0x20] sm:$0xff]
      %v2919 = vld [vmem:[#allocation2 + $0x28] sm:$0xff]
      %v2920 = vmul.f32 %v2914, %v760
      %v2921 = vmul.f32 %v2915, %v764
      %v2922 = vmul.f32 %v2916, %v762
      %v2923 = vmul.f32 %v2917, %v760
      %v2924 = vmul.f32 %v2918, %v764
      %v2925 = vmul.f32 %v2919, %v762
      %2932 = vrot.lane.b32.xlu0 %v2920, 95
      %v2933 = vpop.permute.xlu0 %2932
      %2934 = vrot.lane.b32.xlu0 %v2921, 95
      %v2935 = vpop.permute.xlu0 %2934
      %2936 = vrot.lane.b32.xlu0 %v2922, 95
      %v2937 = vpop.permute.xlu0 %2936
      %2938 = vrot.lane.b32.xlu0 %v2923, 95
      %v2939 = vpop.permute.xlu0 %2938
      %2940 = vrot.lane.b32.xlu0 %v2924, 95
      %v2941 = vpop.permute.xlu0 %2940
      %2942 = vrot.lane.b32.xlu0 %v2925, 95
      %v2943 = vpop.permute.xlu0 %2942
      %v2944 = vsel %vm783, %v2933, %v2935
      %v2945 = vsel %vm783, %v2935, %v2937
      %v2946 = vsel %vm783, %v2939, %v2941
      %v2947 = vsel %vm783, %v2941, %v2943
      %2952 = vst [vmem:[#allocation3 + $0xe0] sm:$0xff] %v2944
      %2953 = vst [vmem:[#allocation3 + $0xe8] sm:$0xff] %v2945
      %2954 = vst [vmem:[#allocation3 + $0xf0] sm:$0xff] %v2946
      %2955 = vst [vmem:[#allocation3 + $0xf8] sm:$0xff] %v2947
      %v2956 = vld [vmem:[#allocation2] sm:$0xff]
      %v2957 = vld [vmem:[#allocation2 + $0x8] sm:$0xff]
      %v2958 = vld [vmem:[#allocation2 + $0x10] sm:$0xff]
      %v2959 = vld [vmem:[#allocation2 + $0x18] sm:$0xff]
      %v2960 = vld [vmem:[#allocation2 + $0x20] sm:$0xff]
      %v2961 = vld [vmem:[#allocation2 + $0x28] sm:$0xff]
      %v2962 = vmul.f32 %v2956, %v804
      %v2963 = vmul.f32 %v2957, %v808
      %v2964 = vmul.f32 %v2958, %v806
      %v2965 = vmul.f32 %v2959, %v804
      %v2966 = vmul.f32 %v2960, %v808
      %v2967 = vmul.f32 %v2961, %v806
      %2974 = vrot.lane.b32.xlu0 %v2962, 94
      %v2975 = vpop.permute.xlu0 %2974
      %2976 = vrot.lane.b32.xlu0 %v2963, 94
      %v2977 = vpop.permute.xlu0 %2976
      %2978 = vrot.lane.b32.xlu0 %v2964, 94
      %v2979 = vpop.permute.xlu0 %2978
      %2980 = vrot.lane.b32.xlu0 %v2965, 94
      %v2981 = vpop.permute.xlu0 %2980
      %2982 = vrot.lane.b32.xlu0 %v2966, 94
      %v2983 = vpop.permute.xlu0 %2982
      %2984 = vrot.lane.b32.xlu0 %v2967, 94
      %v2985 = vpop.permute.xlu0 %2984
      %v2986 = vsel %vm824, %v2975, %v2977
      %v2987 = vsel %vm824, %v2977, %v2979
      %v2988 = vsel %vm824, %v2981, %v2983
      %v2989 = vsel %vm824, %v2983, %v2985
      %2994 = vst [vmem:[#allocation3 + $0x100] sm:$0xff] %v2986
      %2995 = vst [vmem:[#allocation3 + $0x108] sm:$0xff] %v2987
      %2996 = vst [vmem:[#allocation3 + $0x110] sm:$0xff] %v2988
      %2997 = vst [vmem:[#allocation3 + $0x118] sm:$0xff] %v2989
      %v2998 = vld [vmem:[%s4] sm:$0x77]
      %v2999 = vld [vmem:[#allocation3] sm:$0xff]
      %v3000 = vld [vmem:[#allocation3 + $0x8] sm:$0xff]
      %v3001 = vld [vmem:[#allocation3 + $0x10] sm:$0xff]
      %v3002 = vld [vmem:[#allocation3 + $0x18] sm:$0xff]
      %v3003 = vld [vmem:[#allocation3 + $0x20] sm:$0xff]
      %v3004 = vld [vmem:[#allocation3 + $0x28] sm:$0xff]
      %v3005 = vld [vmem:[#allocation3 + $0x30] sm:$0xff]
      %v3006 = vld [vmem:[#allocation3 + $0x38] sm:$0xff]
      %v3007 = vld [vmem:[#allocation3 + $0x40] sm:$0xff]
      %v3008 = vld [vmem:[#allocation3 + $0x48] sm:$0xff]
      %v3009 = vld [vmem:[#allocation3 + $0x50] sm:$0xff]
      %v3010 = vld [vmem:[#allocation3 + $0x58] sm:$0xff]
      %v3011 = vld [vmem:[#allocation3 + $0x60] sm:$0xff]
      %v3012 = vld [vmem:[#allocation3 + $0x68] sm:$0xff]
      %v3013 = vld [vmem:[#allocation3 + $0x70] sm:$0xff]
      %v3014 = vld [vmem:[#allocation3 + $0x78] sm:$0xff]
      %v3015 = vld [vmem:[#allocation3 + $0x80] sm:$0xff]
      %v3016 = vld [vmem:[#allocation3 + $0x88] sm:$0xff]
      %v3017 = vld [vmem:[#allocation3 + $0x90] sm:$0xff]
      %v3018 = vld [vmem:[#allocation3 + $0x98] sm:$0xff]
      %v3019 = vld [vmem:[#allocation3 + $0xa0] sm:$0xff]
      %v3020 = vld [vmem:[#allocation3 + $0xa8] sm:$0xff]
      %v3021 = vld [vmem:[#allocation3 + $0xb0] sm:$0xff]
      %v3022 = vld [vmem:[#allocation3 + $0xb8] sm:$0xff]
      %v3023 = vld [vmem:[#allocation3 + $0xc0] sm:$0xff]
      %v3024 = vld [vmem:[#allocation3 + $0xc8] sm:$0xff]
      %v3025 = vld [vmem:[#allocation3 + $0xd0] sm:$0xff]
      %v3026 = vld [vmem:[#allocation3 + $0xd8] sm:$0xff]
      %v3027 = vld [vmem:[#allocation3 + $0xe0] sm:$0xff]
      %v3028 = vld [vmem:[#allocation3 + $0xe8] sm:$0xff]
      %v3029 = vld [vmem:[#allocation3 + $0xf0] sm:$0xff]
      %v3030 = vld [vmem:[#allocation3 + $0xf8] sm:$0xff]
      %v3031 = vld [vmem:[#allocation3 + $0x100] sm:$0xff]
      %v3032 = vld [vmem:[#allocation3 + $0x108] sm:$0xff]
      %v3033 = vld [vmem:[#allocation3 + $0x110] sm:$0xff]
      %v3034 = vld [vmem:[#allocation3 + $0x118] sm:$0xff]
      %v3035 = vld [vmem:[%s5] sm:$0x7]
      %3037 = vset.pattern.permute.xlu0 0
      %3038 = vperm.xlu0 %3037, %v3035
      %v3039 = vpop.permute.xlu0 %3038
      %v3042 = vcombine.high %v2998, %v2998
      %v3043 = vsel %vm586, %v3042, 0
      %3045 = vmatprep.subr.mxu0 %v3030
      %3046 = vmatpush1.msra.mxu0 %v3029
      %3047 = vmatprep.subr.mxu0 %v3028
      %3048 = vmatpush1.msra.mxu0 %v3027
      %3049 = vmatprep.subr.mxu0 %v3026
      %3050 = vmatpush1.msra.mxu0 %v3025
      %3051 = vmatprep.subr.mxu0 %v3024
      %3052 = vmatpush1.msra.mxu0 %v3023
      %3053 = vmatprep.subr.mxu0 %v3022
      %3054 = vmatpush1.msra.mxu0 %v3021
      %3055 = vmatprep.subr.mxu0 %v3020
      %3056 = vmatpush1.msra.mxu0 %v3019
      %3057 = vmatprep.subr.mxu0 %v3018
      %3058 = vmatpush1.msra.mxu0 %v3017
      %3059 = vmatprep.subr.mxu0 %v3016
      %3060 = vmatpush1.msra.mxu0 %v3015
      %3061 = vmatprep.subr.mxu0 %v3014
      %3062 = vmatpush1.msra.mxu0 %v3013
      %3063 = vmatprep.subr.mxu0 %v3012
      %3064 = vmatpush1.msra.mxu0 %v3011
      %3065 = vmatprep.subr.mxu0 %v3010
      %3066 = vmatpush1.msra.mxu0 %v3009
      %3067 = vmatprep.subr.mxu0 %v3008
      %3068 = vmatpush1.msra.mxu0 %v3007
      %3069 = vmatprep.subr.mxu0 %v3006
      %3070 = vmatpush1.msra.mxu0 %v3005
      %3071 = vmatprep.subr.mxu0 %v3004
      %3072 = vmatpush1.msra.mxu0 %v3003
      %3073 = vmatprep.subr.mxu0 %v3002
      %3074 = vmatpush1.msra.mxu0 %v3001
      %3075 = vmatprep.subr.mxu0 %v3000
      %3076 = vmatpush1.msra.mxu0 %v2999
      %3077 = vmatprep.subr.mxu0 0.0
      %3078 = vmatpush2.msra.mxu0 0.0
      %3079 = vmatprep.subr.mxu0 0.0
      %3080 = vmatpush2.msra.mxu0 0.0
      %3081 = vmatprep.subr.mxu0 0.0
      %3082 = vmatpush2.msra.mxu0 0.0
      %3083 = vmatprep.subr.mxu0 0.0
      %3084 = vmatpush2.msra.mxu0 0.0
      %3085 = vmatprep.subr.mxu0 0.0
      %3086 = vmatpush2.msra.mxu0 0.0
      %3087 = vmatprep.subr.mxu0 0.0
      %3088 = vmatpush2.msra.mxu0 0.0
      %3089 = vmatprep.subr.mxu0 0.0
      %3090 = vmatpush2.msra.mxu0 0.0
      %3091 = vmatprep.subr.mxu0 0.0
      %3092 = vmatpush2.msra.mxu0 0.0
      %3093 = vmatprep.subr.mxu0 0.0
      %3094 = vmatpush2.msra.mxu0 0.0
      %3095 = vmatprep.subr.mxu0 0.0
      %3096 = vmatpush2.msra.mxu0 0.0
      %3097 = vmatprep.subr.mxu0 0.0
      %3098 = vmatpush2.msra.mxu0 0.0
      %3099 = vmatprep.subr.mxu0 0.0
      %3100 = vmatpush2.msra.mxu0 0.0
      %3101 = vmatprep.subr.mxu0 0.0
      %3102 = vmatpush2.msra.mxu0 0.0
      %3103 = vmatprep.subr.mxu0 0.0
      %3104 = vmatpush2.msra.mxu0 0.0
      %3105 = vmatprep.subr.mxu0 %v3034
      %3106 = vmatpush2.msra.mxu0 %v3033
      %3107 = vmatprep.subr.mxu0 %v3032
      %3108 = vmatpush2.msra.mxu0 %v3031
      %3109 = vmatprep.mubr.f32.mxu0 %v3043
      %3110 = vmatmul.mubr.f32.gmra.mxu0 %v2998
      %v3111 = vpop.f32.mrf.mxu0
      %v3112 = vadd.f32 %v3039, %v3111
      %v3113 = vpop.f32.mrf.mxu0
      %v3114 = vadd.f32 %v3039, %v3113
      %3115 = vdwg.mxu0
      %v3116 = vxor.u32 %v3112, 2147483648
      %v3117 = vxor.u32 %v3114, 2147483648
      %v3118 = vmul.f32 %v3116, 1.442695
      %v3119 = vpow.pop %v3118
      %v3120 = vmul.f32 %v3117, 1.442695
      %v3121 = vpow.pop %v3120
      %v3122 = vadd.f32 %v3119, 1.0
      %v3123 = vadd.f32 %v3121, 1.0
      %v3124 = vrcp.pop %v3122
      %v3125 = vmul.f32 1.0, %v3124
      %v3126 = vrcp.pop %v3123
      %v3127 = vmul.f32 1.0, %v3126
      %v3128 = vrcp.pop %v3125
      %v3129 = vmul.f32 %v2289, %v3128
      %v3130 = vrcp.pop %v3127
      %v3131 = vmul.f32 %v2291, %v3130
      %v3132 = vmax.f32 %v3129, 0.0
      %v3133 = vmax.f32 %v3131, 0.0
      %v3134 = vmin.f32 %v3132, 1.0
      %v3135 = vmin.f32 %v3133, 1.0
      %3138 = vrot.lane.b32.xlu0 %v3134, 17
      %v3139 = vpop.permute.xlu0 %3138
      %3140 = vrot.lane.b32.xlu0 %v3135, 17
      %v3141 = vpop.permute.xlu0 %3140
      %v3142 = vsel %vm439, %v3139, %v3141
      %3146 = vst.msk [vmem:[#allocation2] sm:$0x7] %vm460, %v3139
      %3147 = vst [vmem:[#allocation2 + $0x8] sm:$0x7] %v3142
      %3148 = vst.msk [vmem:[#allocation2 + $0x10] sm:$0x7] %vm463, %v3141
      %v3149 = vld [vmem:[#allocation2] sm:$0x7]
      %v3150 = vld [vmem:[#allocation2 + $0x8] sm:$0x7]
      %v3151 = vmul.f32 %v3149, %v470
      %v3152 = vmul.f32 %v3150, %v474
      %3153 = vst [vmem:[#allocation3] sm:$0x7] %v3151
      %3154 = vst [vmem:[#allocation3 + $0x8] sm:$0x7] %v3152
      %v3155 = vld [vmem:[#allocation2] sm:$0x7]
      %v3156 = vld [vmem:[#allocation2 + $0x8] sm:$0x7]
      %v3157 = vld [vmem:[#allocation2 + $0x10] sm:$0x7]
      %v3158 = vmul.f32 %v3155, %v493
      %v3159 = vmul.f32 %v3156, %v497
      %v3160 = vmul.f32 %v3157, %v495
      %v3164 = vrot.slane %v3158, 5
      %v3165 = vrot.slane %v3159, 5
      %v3166 = vrot.slane %v3160, 5
      %3167 = vrot.lane.b32.xlu0 %v3164, 127
      %v3168 = vpop.permute.xlu0 %3167
      %3169 = vrot.lane.b32.xlu0 %v3165, 127
      %v3170 = vpop.permute.xlu0 %3169
      %3171 = vrot.lane.b32.xlu0 %v3166, 127
      %v3172 = vpop.permute.xlu0 %3171
      %v3173 = vsel %vm516, %v3168, %v3170
      %v3174 = vsel %vm516, %v3170, %v3172
      %3177 = vst [vmem:[#allocation3] sm:$0x38] %v3173
      %3178 = vst [vmem:[#allocation3 + $0x8] sm:$0x38] %v3174
      %v3179 = vld [vmem:[#allocation2] sm:$0x7]
      %v3180 = vld [vmem:[#allocation2 + $0x8] sm:$0x7]
      %v3181 = vld [vmem:[#allocation2 + $0x10] sm:$0x7]
      %v3182 = vmul.f32 %v3179, %v537
      %v3183 = vmul.f32 %v3180, %v541
      %v3184 = vmul.f32 %v3181, %v539
      %v3188 = vrot.slane %v3182, 2
      %v3189 = vrot.slane %v3183, 2
      %v3190 = vrot.slane %v3184, 2
      %3191 = vrot.lane.b32.xlu0 %v3188, 126
      %v3192 = vpop.permute.xlu0 %3191
      %3193 = vrot.lane.b32.xlu0 %v3189, 126
      %v3194 = vpop.permute.xlu0 %3193
      %3195 = vrot.lane.b32.xlu0 %v3190, 126
      %v3196 = vpop.permute.xlu0 %3195
      %v3197 = vsel %vm560, %v3192, %v3194
      %v3198 = vsel %vm560, %v3194, %v3196
      %3201 = vst [vmem:[#allocation3] sm:$0xc0] %v3197
      %3202 = vst [vmem:[#allocation3 + $0x8] sm:$0xc0] %v3198
      %3203 = vst [vmem:[#allocation3 + $0x10] sm:$0x1] %v3197
      %3204 = vst [vmem:[#allocation3 + $0x18] sm:$0x1] %v3198
      %v3205 = vld [vmem:[#allocation2] sm:$0x7]
      %v3206 = vld [vmem:[#allocation2 + $0x8] sm:$0x7]
      %v3207 = vld [vmem:[#allocation2 + $0x10] sm:$0x7]
      %v3208 = vmul.f32 %v3205, %v583
      %v3209 = vmul.f32 %v3206, %v587
      %v3210 = vmul.f32 %v3207, %v585
      %v3214 = vrot.slane %v3208, 7
      %v3215 = vrot.slane %v3209, 7
      %v3216 = vrot.slane %v3210, 7
      %3217 = vrot.lane.b32.xlu0 %v3214, 112
      %v3218 = vpop.permute.xlu0 %3217
      %3219 = vrot.lane.b32.xlu0 %v3215, 112
      %v3220 = vpop.permute.xlu0 %3219
      %3221 = vrot.lane.b32.xlu0 %v3216, 112
      %v3222 = vpop.permute.xlu0 %3221
      %v3223 = vsel %vm606, %v3218, %v3220
      %v3224 = vsel %vm606, %v3220, %v3222
      %3227 = vst [vmem:[#allocation3 + $0x10] sm:$0xe] %v3223
      %3228 = vst [vmem:[#allocation3 + $0x18] sm:$0xe] %v3224
      %v3229 = vld [vmem:[#allocation2] sm:$0x7]
      %v3230 = vld [vmem:[#allocation2 + $0x8] sm:$0x7]
      %v3231 = vld [vmem:[#allocation2 + $0x10] sm:$0x7]
      %v3232 = vmul.f32 %v3229, %v627
      %v3233 = vmul.f32 %v3230, %v630
      %v3234 = vmul.f32 %v3231, %v629
      %v3238 = vrot.slane %v3232, 4
      %v3239 = vrot.slane %v3233, 4
      %v3240 = vrot.slane %v3234, 4
      %3241 = vrot.lane.b32.xlu0 %v3238, 111
      %v3242 = vpop.permute.xlu0 %3241
      %3243 = vrot.lane.b32.xlu0 %v3239, 111
      %v3244 = vpop.permute.xlu0 %3243
      %3245 = vrot.lane.b32.xlu0 %v3240, 111
      %v3246 = vpop.permute.xlu0 %3245
      %v3247 = vsel %vm649, %v3242, %v3244
      %v3248 = vsel %vm649, %v3244, %v3246
      %3251 = vst [vmem:[#allocation3 + $0x10] sm:$0x70] %v3247
      %3252 = vst [vmem:[#allocation3 + $0x18] sm:$0x70] %v3248
      %v3253 = vld [vmem:[#allocation2] sm:$0x7]
      %v3254 = vld [vmem:[#allocation2 + $0x8] sm:$0x7]
      %v3255 = vld [vmem:[#allocation2 + $0x10] sm:$0x7]
      %v3256 = vmul.f32 %v3253, %v670
      %v3257 = vmul.f32 %v3254, %v674
      %v3258 = vmul.f32 %v3255, %v672
      %v3262 = vrot.slane %v3256, 1
      %v3263 = vrot.slane %v3257, 1
      %v3264 = vrot.slane %v3258, 1
      %3265 = vrot.lane.b32.xlu0 %v3262, 110
      %v3266 = vpop.permute.xlu0 %3265
      %3267 = vrot.lane.b32.xlu0 %v3263, 110
      %v3268 = vpop.permute.xlu0 %3267
      %3269 = vrot.lane.b32.xlu0 %v3264, 110
      %v3270 = vpop.permute.xlu0 %3269
      %v3271 = vsel %vm693, %v3266, %v3268
      %v3272 = vsel %vm693, %v3268, %v3270
      %3275 = vst [vmem:[#allocation3 + $0x10] sm:$0x80] %v3271
      %3276 = vst [vmem:[#allocation3 + $0x18] sm:$0x80] %v3272
      %3277 = vst [vmem:[#allocation3 + $0x20] sm:$0x3] %v3271
      %3278 = vst [vmem:[#allocation3 + $0x28] sm:$0x3] %v3272
      %v3279 = vld [vmem:[#allocation2] sm:$0x7]
      %v3280 = vld [vmem:[#allocation2 + $0x8] sm:$0x7]
      %v3281 = vld [vmem:[#allocation2 + $0x10] sm:$0x7]
      %v3282 = vmul.f32 %v3279, %v716
      %v3283 = vmul.f32 %v3280, %v720
      %v3284 = vmul.f32 %v3281, %v718
      %v3288 = vrot.slane %v3282, 6
      %v3289 = vrot.slane %v3283, 6
      %v3290 = vrot.slane %v3284, 6
      %3291 = vrot.lane.b32.xlu0 %v3288, 96
      %v3292 = vpop.permute.xlu0 %3291
      %3293 = vrot.lane.b32.xlu0 %v3289, 96
      %v3294 = vpop.permute.xlu0 %3293
      %3295 = vrot.lane.b32.xlu0 %v3290, 96
      %v3296 = vpop.permute.xlu0 %3295
      %v3297 = vsel %vm739, %v3292, %v3294
      %v3298 = vsel %vm739, %v3294, %v3296
      %3301 = vst [vmem:[#allocation3 + $0x20] sm:$0x1c] %v3297
      %3302 = vst [vmem:[#allocation3 + $0x28] sm:$0x1c] %v3298
      %v3303 = vld [vmem:[#allocation2] sm:$0x7]
      %v3304 = vld [vmem:[#allocation2 + $0x8] sm:$0x7]
      %v3305 = vld [vmem:[#allocation2 + $0x10] sm:$0x7]
      %v3306 = vmul.f32 %v3303, %v760
      %v3307 = vmul.f32 %v3304, %v764
      %v3308 = vmul.f32 %v3305, %v762
      %v3312 = vrot.slane %v3306, 3
      %v3313 = vrot.slane %v3307, 3
      %v3314 = vrot.slane %v3308, 3
      %3315 = vrot.lane.b32.xlu0 %v3312, 95
      %v3316 = vpop.permute.xlu0 %3315
      %3317 = vrot.lane.b32.xlu0 %v3313, 95
      %v3318 = vpop.permute.xlu0 %3317
      %3319 = vrot.lane.b32.xlu0 %v3314, 95
      %v3320 = vpop.permute.xlu0 %3319
      %v3321 = vsel %vm783, %v3316, %v3318
      %v3322 = vsel %vm783, %v3318, %v3320
      %3325 = vst [vmem:[#allocation3 + $0x20] sm:$0xe0] %v3321
      %3326 = vst [vmem:[#allocation3 + $0x28] sm:$0xe0] %v3322
      %v3327 = vld [vmem:[#allocation2] sm:$0x7]
      %v3328 = vld [vmem:[#allocation2 + $0x8] sm:$0x7]
      %v3329 = vld [vmem:[#allocation2 + $0x10] sm:$0x7]
      %v3330 = vmul.f32 %v3327, %v804
      %v3331 = vmul.f32 %v3328, %v808
      %v3332 = vmul.f32 %v3329, %v806
      %3336 = vrot.lane.b32.xlu0 %v3330, 94
      %v3337 = vpop.permute.xlu0 %3336
      %3338 = vrot.lane.b32.xlu0 %v3331, 94
      %v3339 = vpop.permute.xlu0 %3338
      %3340 = vrot.lane.b32.xlu0 %v3332, 94
      %v3341 = vpop.permute.xlu0 %3340
      %v3342 = vsel %vm824, %v3337, %v3339
      %v3343 = vsel %vm824, %v3339, %v3341
      %3346 = vst [vmem:[#allocation3 + $0x30] sm:$0x7] %v3342
      %3347 = vst [vmem:[#allocation3 + $0x38] sm:$0x7] %v3343
      %v3348 = vld [vmem:[%s6] sm:$0xff]
      %v3349 = vld [vmem:[%s6 + $0x8] sm:$0xff]
      %v3350 = vld [vmem:[#allocation3] sm:$0xff]
      %v3351 = vld [vmem:[#allocation3 + $0x8] sm:$0xff]
      %v3352 = vld [vmem:[#allocation3 + $0x10] sm:$0xff]
      %v3353 = vld [vmem:[#allocation3 + $0x18] sm:$0xff]
      %v3354 = vld [vmem:[#allocation3 + $0x20] sm:$0xff]
      %v3355 = vld [vmem:[#allocation3 + $0x28] sm:$0xff]
      %v3356 = vld [vmem:[#allocation3 + $0x30] sm:$0x7]
      %v3357 = vld [vmem:[#allocation3 + $0x38] sm:$0x7]
      %v3358 = vld [vmem:[%s7] sm:$0xff]
      %v3359 = vld [vmem:[%s7 + $0x8] sm:$0xff]
      %3361 = vset.pattern.permute.xlu0 0
      %3362 = vperm.xlu0 %3361, %v3358
      %v3363 = vpop.permute.xlu0 %3362
      %3366 = vset.pattern.permute.xlu0 0
      %3367 = vperm.xlu0 %3366, %v3359
      %v3368 = vpop.permute.xlu0 %3367
      %v3371 = vsel %vm853, %v3348, 0
      %v3374 = vsel %vm853, %v3349, 0
      %v3377 = vsel %vm860, %v3356, 0
      %v3380 = vsel %vm860, %v3357, 0
      %3382 = vmatprep.subr.mxu0 0.0
      %3383 = vmatpush1.msra.mxu0 0.0
      %3384 = vmatprep.subr.mxu0 0.0
      %3385 = vmatpush1.msra.mxu0 0.0
      %3386 = vmatprep.subr.mxu0 0.0
      %3387 = vmatpush1.msra.mxu0 0.0
      %3388 = vmatprep.subr.mxu0 0.0
      %3389 = vmatpush1.msra.mxu0 0.0
      %3390 = vmatprep.subr.mxu0 0.0
      %3391 = vmatpush1.msra.mxu0 0.0
      %3392 = vmatprep.subr.mxu0 0.0
      %3393 = vmatpush1.msra.mxu0 0.0
      %3394 = vmatprep.subr.mxu0 0.0
      %3395 = vmatpush1.msra.mxu0 0.0
      %3396 = vmatprep.subr.mxu0 0.0
      %3397 = vmatpush1.msra.mxu0 0.0
      %3398 = vmatprep.subr.mxu0 0.0
      %3399 = vmatpush1.msra.mxu0 0.0
      %3400 = vmatprep.subr.mxu0 0.0
      %3401 = vmatpush1.msra.mxu0 0.0
      %3402 = vmatprep.subr.mxu0 0.0
      %3403 = vmatpush1.msra.mxu0 0.0
      %3404 = vmatprep.subr.mxu0 0.0
      %3405 = vmatpush1.msra.mxu0 0.0
      %3406 = vmatprep.subr.mxu0 %v3380
      %3407 = vmatpush1.msra.mxu0 %v3377
      %3408 = vmatprep.subr.mxu0 %v3355
      %3409 = vmatpush1.msra.mxu0 %v3354
      %3410 = vmatprep.subr.mxu0 %v3353
      %3411 = vmatpush1.msra.mxu0 %v3352
      %3412 = vmatprep.subr.mxu0 %v3351
      %3413 = vmatpush1.msra.mxu0 %v3350
      %3414 = vmatprep.subr.mxu0 0.0
      %3415 = vmatpush2.msra.mxu0 0.0
      %3416 = vmatprep.subr.mxu0 0.0
      %3417 = vmatpush2.msra.mxu0 0.0
      %3418 = vmatprep.subr.mxu0 0.0
      %3419 = vmatpush2.msra.mxu0 0.0
      %3420 = vmatprep.subr.mxu0 0.0
      %3421 = vmatpush2.msra.mxu0 0.0
      %3422 = vmatprep.subr.mxu0 0.0
      %3423 = vmatpush2.msra.mxu0 0.0
      %3424 = vmatprep.subr.mxu0 0.0
      %3425 = vmatpush2.msra.mxu0 0.0
      %3426 = vmatprep.subr.mxu0 0.0
      %3427 = vmatpush2.msra.mxu0 0.0
      %3428 = vmatprep.subr.mxu0 0.0
      %3429 = vmatpush2.msra.mxu0 0.0
      %3430 = vmatprep.subr.mxu0 0.0
      %3431 = vmatpush2.msra.mxu0 0.0
      %3432 = vmatprep.subr.mxu0 0.0
      %3433 = vmatpush2.msra.mxu0 0.0
      %3434 = vmatprep.subr.mxu0 0.0
      %3435 = vmatpush2.msra.mxu0 0.0
      %3436 = vmatprep.subr.mxu0 0.0
      %3437 = vmatpush2.msra.mxu0 0.0
      %3438 = vmatprep.subr.mxu0 0.0
      %3439 = vmatpush2.msra.mxu0 0.0
      %3440 = vmatprep.subr.mxu0 0.0
      %3441 = vmatpush2.msra.mxu0 0.0
      %3442 = vmatprep.subr.mxu0 0.0
      %3443 = vmatpush2.msra.mxu0 0.0
      %3444 = vmatprep.subr.mxu0 0.0
      %3445 = vmatpush2.msra.mxu0 0.0
      %3446 = vmatprep.mubr.f32.mxu0 0.0
      %3447 = vmatmul.mubr.f32.gmra.mxu0 %v3371
      %v3448 = vpop.f32.mrf.mxu0
      %v3449 = vadd.f32 %v3363, %v3448
      %v3450 = vpop.f32.mrf.mxu0
      %v3451 = vadd.f32 %v3363, %v3450
      %3452 = vmatprep.mubr.f32.mxu0 0.0
      %3453 = vmatmul.mubr.f32.gmra.mxu0 %v3374
      %v3454 = vpop.f32.mrf.mxu0
      %v3455 = vadd.f32 %v3368, %v3454
      %v3456 = vpop.f32.mrf.mxu0
      %v3457 = vadd.f32 %v3368, %v3456
      %3458 = vdwg.mxu0
      %v3459 = vmax.f32 %v3449, 0.0
      %v3460 = vmax.f32 %v3451, 0.0
      %v3461 = vmax.f32 %v3455, 0.0
      %v3462 = vmax.f32 %v3457, 0.0
      %3467 = vrot.lane.b32.xlu0 %v3459, 17
      %v3468 = vpop.permute.xlu0 %3467
      %3469 = vrot.lane.b32.xlu0 %v3460, 17
      %v3470 = vpop.permute.xlu0 %3469
      %3471 = vrot.lane.b32.xlu0 %v3461, 17
      %v3472 = vpop.permute.xlu0 %3471
      %3473 = vrot.lane.b32.xlu0 %v3462, 17
      %v3474 = vpop.permute.xlu0 %3473
      %v3475 = vsel %vm439, %v3468, %v3470
      %v3476 = vsel %vm439, %v3472, %v3474
      %3483 = vst.msk [vmem:[#allocation2] sm:$0xff] %vm968, %v3468
      %3484 = vst [vmem:[#allocation2 + $0x8] sm:$0xff] %v3475
      %3485 = vst.msk [vmem:[#allocation2 + $0x10] sm:$0xff] %vm439, %v3470
      %3486 = vst.msk [vmem:[#allocation2 + $0x18] sm:$0xff] %vm968, %v3472
      %3487 = vst [vmem:[#allocation2 + $0x20] sm:$0xff] %v3476
      %3488 = vst.msk [vmem:[#allocation2 + $0x28] sm:$0xff] %vm439, %v3474
      %v3489 = vld [vmem:[#allocation2] sm:$0xff]
      %v3490 = vld [vmem:[#allocation2 + $0x8] sm:$0xff]
      %v3491 = vld [vmem:[#allocation2 + $0x18] sm:$0xff]
      %v3492 = vld [vmem:[#allocation2 + $0x20] sm:$0xff]
      %v3493 = vmul.f32 %v3489, %v470
      %v3494 = vmul.f32 %v3490, %v474
      %v3495 = vmul.f32 %v3491, %v470
      %v3496 = vmul.f32 %v3492, %v474
      %3497 = vst [vmem:[#allocation3] sm:$0xff] %v3493
      %3498 = vst [vmem:[#allocation3 + $0x8] sm:$0xff] %v3494
      %3499 = vst [vmem:[#allocation3 + $0x10] sm:$0xff] %v3495
      %3500 = vst [vmem:[#allocation3 + $0x18] sm:$0xff] %v3496
      %v3501 = vld [vmem:[#allocation2] sm:$0xff]
      %v3502 = vld [vmem:[#allocation2 + $0x8] sm:$0xff]
      %v3503 = vld [vmem:[#allocation2 + $0x10] sm:$0xff]
      %v3504 = vld [vmem:[#allocation2 + $0x18] sm:$0xff]
      %v3505 = vld [vmem:[#allocation2 + $0x20] sm:$0xff]
      %v3506 = vld [vmem:[#allocation2 + $0x28] sm:$0xff]
      %v3507 = vmul.f32 %v3501, %v493
      %v3508 = vmul.f32 %v3502, %v497
      %v3509 = vmul.f32 %v3503, %v495
      %v3510 = vmul.f32 %v3504, %v493
      %v3511 = vmul.f32 %v3505, %v497
      %v3512 = vmul.f32 %v3506, %v495
      %3519 = vrot.lane.b32.xlu0 %v3507, 127
      %v3520 = vpop.permute.xlu0 %3519
      %3521 = vrot.lane.b32.xlu0 %v3508, 127
      %v3522 = vpop.permute.xlu0 %3521
      %3523 = vrot.lane.b32.xlu0 %v3509, 127
      %v3524 = vpop.permute.xlu0 %3523
      %3525 = vrot.lane.b32.xlu0 %v3510, 127
      %v3526 = vpop.permute.xlu0 %3525
      %3527 = vrot.lane.b32.xlu0 %v3511, 127
      %v3528 = vpop.permute.xlu0 %3527
      %3529 = vrot.lane.b32.xlu0 %v3512, 127
      %v3530 = vpop.permute.xlu0 %3529
      %v3531 = vsel %vm516, %v3520, %v3522
      %v3532 = vsel %vm516, %v3522, %v3524
      %v3533 = vsel %vm516, %v3526, %v3528
      %v3534 = vsel %vm516, %v3528, %v3530
      %3539 = vst [vmem:[#allocation3 + $0x20] sm:$0xff] %v3531
      %3540 = vst [vmem:[#allocation3 + $0x28] sm:$0xff] %v3532
      %3541 = vst [vmem:[#allocation3 + $0x30] sm:$0xff] %v3533
      %3542 = vst [vmem:[#allocation3 + $0x38] sm:$0xff] %v3534
      %v3543 = vld [vmem:[#allocation2] sm:$0xff]
      %v3544 = vld [vmem:[#allocation2 + $0x8] sm:$0xff]
      %v3545 = vld [vmem:[#allocation2 + $0x10] sm:$0xff]
      %v3546 = vld [vmem:[#allocation2 + $0x18] sm:$0xff]
      %v3547 = vld [vmem:[#allocation2 + $0x20] sm:$0xff]
      %v3548 = vld [vmem:[#allocation2 + $0x28] sm:$0xff]
      %v3549 = vmul.f32 %v3543, %v537
      %v3550 = vmul.f32 %v3544, %v541
      %v3551 = vmul.f32 %v3545, %v539
      %v3552 = vmul.f32 %v3546, %v537
      %v3553 = vmul.f32 %v3547, %v541
      %v3554 = vmul.f32 %v3548, %v539
      %3561 = vrot.lane.b32.xlu0 %v3549, 126
      %v3562 = vpop.permute.xlu0 %3561
      %3563 = vrot.lane.b32.xlu0 %v3550, 126
      %v3564 = vpop.permute.xlu0 %3563
      %3565 = vrot.lane.b32.xlu0 %v3551, 126
      %v3566 = vpop.permute.xlu0 %3565
      %3567 = vrot.lane.b32.xlu0 %v3552, 126
      %v3568 = vpop.permute.xlu0 %3567
      %3569 = vrot.lane.b32.xlu0 %v3553, 126
      %v3570 = vpop.permute.xlu0 %3569
      %3571 = vrot.lane.b32.xlu0 %v3554, 126
      %v3572 = vpop.permute.xlu0 %3571
      %v3573 = vsel %vm560, %v3562, %v3564
      %v3574 = vsel %vm560, %v3564, %v3566
      %v3575 = vsel %vm560, %v3568, %v3570
      %v3576 = vsel %vm560, %v3570, %v3572
      %3581 = vst [vmem:[#allocation3 + $0x40] sm:$0xff] %v3573
      %3582 = vst [vmem:[#allocation3 + $0x48] sm:$0xff] %v3574
      %3583 = vst [vmem:[#allocation3 + $0x50] sm:$0xff] %v3575
      %3584 = vst [vmem:[#allocation3 + $0x58] sm:$0xff] %v3576
      %v3585 = vld [vmem:[#allocation2] sm:$0xff]
      %v3586 = vld [vmem:[#allocation2 + $0x8] sm:$0xff]
      %v3587 = vld [vmem:[#allocation2 + $0x10] sm:$0xff]
      %v3588 = vld [vmem:[#allocation2 + $0x18] sm:$0xff]
      %v3589 = vld [vmem:[#allocation2 + $0x20] sm:$0xff]
      %v3590 = vld [vmem:[#allocation2 + $0x28] sm:$0xff]
      %v3591 = vmul.f32 %v3585, %v583
      %v3592 = vmul.f32 %v3586, %v587
      %v3593 = vmul.f32 %v3587, %v585
      %v3594 = vmul.f32 %v3588, %v583
      %v3595 = vmul.f32 %v3589, %v587
      %v3596 = vmul.f32 %v3590, %v585
      %3603 = vrot.lane.b32.xlu0 %v3591, 112
      %v3604 = vpop.permute.xlu0 %3603
      %3605 = vrot.lane.b32.xlu0 %v3592, 112
      %v3606 = vpop.permute.xlu0 %3605
      %3607 = vrot.lane.b32.xlu0 %v3593, 112
      %v3608 = vpop.permute.xlu0 %3607
      %3609 = vrot.lane.b32.xlu0 %v3594, 112
      %v3610 = vpop.permute.xlu0 %3609
      %3611 = vrot.lane.b32.xlu0 %v3595, 112
      %v3612 = vpop.permute.xlu0 %3611
      %3613 = vrot.lane.b32.xlu0 %v3596, 112
      %v3614 = vpop.permute.xlu0 %3613
      %v3615 = vsel %vm606, %v3604, %v3606
      %v3616 = vsel %vm606, %v3606, %v3608
      %v3617 = vsel %vm606, %v3610, %v3612
      %v3618 = vsel %vm606, %v3612, %v3614
      %3623 = vst [vmem:[#allocation3 + $0x60] sm:$0xff] %v3615
      %3624 = vst [vmem:[#allocation3 + $0x68] sm:$0xff] %v3616
      %3625 = vst [vmem:[#allocation3 + $0x70] sm:$0xff] %v3617
      %3626 = vst [vmem:[#allocation3 + $0x78] sm:$0xff] %v3618
      %v3627 = vld [vmem:[#allocation2] sm:$0xff]
      %v3628 = vld [vmem:[#allocation2 + $0x8] sm:$0xff]
      %v3629 = vld [vmem:[#allocation2 + $0x10] sm:$0xff]
      %v3630 = vld [vmem:[#allocation2 + $0x18] sm:$0xff]
      %v3631 = vld [vmem:[#allocation2 + $0x20] sm:$0xff]
      %v3632 = vld [vmem:[#allocation2 + $0x28] sm:$0xff]
      %v3633 = vmul.f32 %v3627, %v627
      %v3634 = vmul.f32 %v3628, %v630
      %v3635 = vmul.f32 %v3629, %v629
      %v3636 = vmul.f32 %v3630, %v627
      %v3637 = vmul.f32 %v3631, %v630
      %v3638 = vmul.f32 %v3632, %v629
      %3645 = vrot.lane.b32.xlu0 %v3633, 111
      %v3646 = vpop.permute.xlu0 %3645
      %3647 = vrot.lane.b32.xlu0 %v3634, 111
      %v3648 = vpop.permute.xlu0 %3647
      %3649 = vrot.lane.b32.xlu0 %v3635, 111
      %v3650 = vpop.permute.xlu0 %3649
      %3651 = vrot.lane.b32.xlu0 %v3636, 111
      %v3652 = vpop.permute.xlu0 %3651
      %3653 = vrot.lane.b32.xlu0 %v3637, 111
      %v3654 = vpop.permute.xlu0 %3653
      %3655 = vrot.lane.b32.xlu0 %v3638, 111
      %v3656 = vpop.permute.xlu0 %3655
      %v3657 = vsel %vm649, %v3646, %v3648
      %v3658 = vsel %vm649, %v3648, %v3650
      %v3659 = vsel %vm649, %v3652, %v3654
      %v3660 = vsel %vm649, %v3654, %v3656
      %3665 = vst [vmem:[#allocation3 + $0x80] sm:$0xff] %v3657
      %3666 = vst [vmem:[#allocation3 + $0x88] sm:$0xff] %v3658
      %3667 = vst [vmem:[#allocation3 + $0x90] sm:$0xff] %v3659
      %3668 = vst [vmem:[#allocation3 + $0x98] sm:$0xff] %v3660
      %v3669 = vld [vmem:[#allocation2] sm:$0xff]
      %v3670 = vld [vmem:[#allocation2 + $0x8] sm:$0xff]
      %v3671 = vld [vmem:[#allocation2 + $0x10] sm:$0xff]
      %v3672 = vld [vmem:[#allocation2 + $0x18] sm:$0xff]
      %v3673 = vld [vmem:[#allocation2 + $0x20] sm:$0xff]
      %v3674 = vld [vmem:[#allocation2 + $0x28] sm:$0xff]
      %v3675 = vmul.f32 %v3669, %v670
      %v3676 = vmul.f32 %v3670, %v674
      %v3677 = vmul.f32 %v3671, %v672
      %v3678 = vmul.f32 %v3672, %v670
      %v3679 = vmul.f32 %v3673, %v674
      %v3680 = vmul.f32 %v3674, %v672
      %3687 = vrot.lane.b32.xlu0 %v3675, 110
      %v3688 = vpop.permute.xlu0 %3687
      %3689 = vrot.lane.b32.xlu0 %v3676, 110
      %v3690 = vpop.permute.xlu0 %3689
      %3691 = vrot.lane.b32.xlu0 %v3677, 110
      %v3692 = vpop.permute.xlu0 %3691
      %3693 = vrot.lane.b32.xlu0 %v3678, 110
      %v3694 = vpop.permute.xlu0 %3693
      %3695 = vrot.lane.b32.xlu0 %v3679, 110
      %v3696 = vpop.permute.xlu0 %3695
      %3697 = vrot.lane.b32.xlu0 %v3680, 110
      %v3698 = vpop.permute.xlu0 %3697
      %v3699 = vsel %vm693, %v3688, %v3690
      %v3700 = vsel %vm693, %v3690, %v3692
      %v3701 = vsel %vm693, %v3694, %v3696
      %v3702 = vsel %vm693, %v3696, %v3698
      %3707 = vst [vmem:[#allocation3 + $0xa0] sm:$0xff] %v3699
      %3708 = vst [vmem:[#allocation3 + $0xa8] sm:$0xff] %v3700
      %3709 = vst [vmem:[#allocation3 + $0xb0] sm:$0xff] %v3701
      %3710 = vst [vmem:[#allocation3 + $0xb8] sm:$0xff] %v3702
      %v3711 = vld [vmem:[#allocation2] sm:$0xff]
      %v3712 = vld [vmem:[#allocation2 + $0x8] sm:$0xff]
      %v3713 = vld [vmem:[#allocation2 + $0x10] sm:$0xff]
      %v3714 = vld [vmem:[#allocation2 + $0x18] sm:$0xff]
      %v3715 = vld [vmem:[#allocation2 + $0x20] sm:$0xff]
      %v3716 = vld [vmem:[#allocation2 + $0x28] sm:$0xff]
      %v3717 = vmul.f32 %v3711, %v716
      %v3718 = vmul.f32 %v3712, %v720
      %v3719 = vmul.f32 %v3713, %v718
      %v3720 = vmul.f32 %v3714, %v716
      %v3721 = vmul.f32 %v3715, %v720
      %v3722 = vmul.f32 %v3716, %v718
      %3729 = vrot.lane.b32.xlu0 %v3717, 96
      %v3730 = vpop.permute.xlu0 %3729
      %3731 = vrot.lane.b32.xlu0 %v3718, 96
      %v3732 = vpop.permute.xlu0 %3731
      %3733 = vrot.lane.b32.xlu0 %v3719, 96
      %v3734 = vpop.permute.xlu0 %3733
      %3735 = vrot.lane.b32.xlu0 %v3720, 96
      %v3736 = vpop.permute.xlu0 %3735
      %3737 = vrot.lane.b32.xlu0 %v3721, 96
      %v3738 = vpop.permute.xlu0 %3737
      %3739 = vrot.lane.b32.xlu0 %v3722, 96
      %v3740 = vpop.permute.xlu0 %3739
      %v3741 = vsel %vm739, %v3730, %v3732
      %v3742 = vsel %vm739, %v3732, %v3734
      %v3743 = vsel %vm739, %v3736, %v3738
      %v3744 = vsel %vm739, %v3738, %v3740
      %3749 = vst [vmem:[#allocation3 + $0xc0] sm:$0xff] %v3741
      %3750 = vst [vmem:[#allocation3 + $0xc8] sm:$0xff] %v3742
      %3751 = vst [vmem:[#allocation3 + $0xd0] sm:$0xff] %v3743
      %3752 = vst [vmem:[#allocation3 + $0xd8] sm:$0xff] %v3744
      %v3753 = vld [vmem:[#allocation2] sm:$0xff]
      %v3754 = vld [vmem:[#allocation2 + $0x8] sm:$0xff]
      %v3755 = vld [vmem:[#allocation2 + $0x10] sm:$0xff]
      %v3756 = vld [vmem:[#allocation2 + $0x18] sm:$0xff]
      %v3757 = vld [vmem:[#allocation2 + $0x20] sm:$0xff]
      %v3758 = vld [vmem:[#allocation2 + $0x28] sm:$0xff]
      %v3759 = vmul.f32 %v3753, %v760
      %v3760 = vmul.f32 %v3754, %v764
      %v3761 = vmul.f32 %v3755, %v762
      %v3762 = vmul.f32 %v3756, %v760
      %v3763 = vmul.f32 %v3757, %v764
      %v3764 = vmul.f32 %v3758, %v762
      %3771 = vrot.lane.b32.xlu0 %v3759, 95
      %v3772 = vpop.permute.xlu0 %3771
      %3773 = vrot.lane.b32.xlu0 %v3760, 95
      %v3774 = vpop.permute.xlu0 %3773
      %3775 = vrot.lane.b32.xlu0 %v3761, 95
      %v3776 = vpop.permute.xlu0 %3775
      %3777 = vrot.lane.b32.xlu0 %v3762, 95
      %v3778 = vpop.permute.xlu0 %3777
      %3779 = vrot.lane.b32.xlu0 %v3763, 95
      %v3780 = vpop.permute.xlu0 %3779
      %3781 = vrot.lane.b32.xlu0 %v3764, 95
      %v3782 = vpop.permute.xlu0 %3781
      %v3783 = vsel %vm783, %v3772, %v3774
      %v3784 = vsel %vm783, %v3774, %v3776
      %v3785 = vsel %vm783, %v3778, %v3780
      %v3786 = vsel %vm783, %v3780, %v3782
      %3791 = vst [vmem:[#allocation3 + $0xe0] sm:$0xff] %v3783
      %3792 = vst [vmem:[#allocation3 + $0xe8] sm:$0xff] %v3784
      %3793 = vst [vmem:[#allocation3 + $0xf0] sm:$0xff] %v3785
      %3794 = vst [vmem:[#allocation3 + $0xf8] sm:$0xff] %v3786
      %v3795 = vld [vmem:[#allocation2] sm:$0xff]
      %v3796 = vld [vmem:[#allocation2 + $0x8] sm:$0xff]
      %v3797 = vld [vmem:[#allocation2 + $0x10] sm:$0xff]
      %v3798 = vld [vmem:[#allocation2 + $0x18] sm:$0xff]
      %v3799 = vld [vmem:[#allocation2 + $0x20] sm:$0xff]
      %v3800 = vld [vmem:[#allocation2 + $0x28] sm:$0xff]
      %v3801 = vmul.f32 %v3795, %v804
      %v3802 = vmul.f32 %v3796, %v808
      %v3803 = vmul.f32 %v3797, %v806
      %v3804 = vmul.f32 %v3798, %v804
      %v3805 = vmul.f32 %v3799, %v808
      %v3806 = vmul.f32 %v3800, %v806
      %3813 = vrot.lane.b32.xlu0 %v3801, 94
      %v3814 = vpop.permute.xlu0 %3813
      %3815 = vrot.lane.b32.xlu0 %v3802, 94
      %v3816 = vpop.permute.xlu0 %3815
      %3817 = vrot.lane.b32.xlu0 %v3803, 94
      %v3818 = vpop.permute.xlu0 %3817
      %3819 = vrot.lane.b32.xlu0 %v3804, 94
      %v3820 = vpop.permute.xlu0 %3819
      %3821 = vrot.lane.b32.xlu0 %v3805, 94
      %v3822 = vpop.permute.xlu0 %3821
      %3823 = vrot.lane.b32.xlu0 %v3806, 94
      %v3824 = vpop.permute.xlu0 %3823
      %v3825 = vsel %vm824, %v3814, %v3816
      %v3826 = vsel %vm824, %v3816, %v3818
      %v3827 = vsel %vm824, %v3820, %v3822
      %v3828 = vsel %vm824, %v3822, %v3824
      %3833 = vst [vmem:[#allocation3 + $0x100] sm:$0xff] %v3825
      %3834 = vst [vmem:[#allocation3 + $0x108] sm:$0xff] %v3826
      %3835 = vst [vmem:[#allocation3 + $0x110] sm:$0xff] %v3827
      %3836 = vst [vmem:[#allocation3 + $0x118] sm:$0xff] %v3828
      %v3837 = vld [vmem:[%s8] sm:$0x77]
      %v3838 = vld [vmem:[#allocation3] sm:$0xff]
      %v3839 = vld [vmem:[#allocation3 + $0x8] sm:$0xff]
      %v3840 = vld [vmem:[#allocation3 + $0x10] sm:$0xff]
      %v3841 = vld [vmem:[#allocation3 + $0x18] sm:$0xff]
      %v3842 = vld [vmem:[#allocation3 + $0x20] sm:$0xff]
      %v3843 = vld [vmem:[#allocation3 + $0x28] sm:$0xff]
      %v3844 = vld [vmem:[#allocation3 + $0x30] sm:$0xff]
      %v3845 = vld [vmem:[#allocation3 + $0x38] sm:$0xff]
      %v3846 = vld [vmem:[#allocation3 + $0x40] sm:$0xff]
      %v3847 = vld [vmem:[#allocation3 + $0x48] sm:$0xff]
      %v3848 = vld [vmem:[#allocation3 + $0x50] sm:$0xff]
      %v3849 = vld [vmem:[#allocation3 + $0x58] sm:$0xff]
      %v3850 = vld [vmem:[#allocation3 + $0x60] sm:$0xff]
      %v3851 = vld [vmem:[#allocation3 + $0x68] sm:$0xff]
      %v3852 = vld [vmem:[#allocation3 + $0x70] sm:$0xff]
      %v3853 = vld [vmem:[#allocation3 + $0x78] sm:$0xff]
      %v3854 = vld [vmem:[#allocation3 + $0x80] sm:$0xff]
      %v3855 = vld [vmem:[#allocation3 + $0x88] sm:$0xff]
      %v3856 = vld [vmem:[#allocation3 + $0x90] sm:$0xff]
      %v3857 = vld [vmem:[#allocation3 + $0x98] sm:$0xff]
      %v3858 = vld [vmem:[#allocation3 + $0xa0] sm:$0xff]
      %v3859 = vld [vmem:[#allocation3 + $0xa8] sm:$0xff]
      %v3860 = vld [vmem:[#allocation3 + $0xb0] sm:$0xff]
      %v3861 = vld [vmem:[#allocation3 + $0xb8] sm:$0xff]
      %v3862 = vld [vmem:[#allocation3 + $0xc0] sm:$0xff]
      %v3863 = vld [vmem:[#allocation3 + $0xc8] sm:$0xff]
      %v3864 = vld [vmem:[#allocation3 + $0xd0] sm:$0xff]
      %v3865 = vld [vmem:[#allocation3 + $0xd8] sm:$0xff]
      %v3866 = vld [vmem:[#allocation3 + $0xe0] sm:$0xff]
      %v3867 = vld [vmem:[#allocation3 + $0xe8] sm:$0xff]
      %v3868 = vld [vmem:[#allocation3 + $0xf0] sm:$0xff]
      %v3869 = vld [vmem:[#allocation3 + $0xf8] sm:$0xff]
      %v3870 = vld [vmem:[#allocation3 + $0x100] sm:$0xff]
      %v3871 = vld [vmem:[#allocation3 + $0x108] sm:$0xff]
      %v3872 = vld [vmem:[#allocation3 + $0x110] sm:$0xff]
      %v3873 = vld [vmem:[#allocation3 + $0x118] sm:$0xff]
      %v3874 = vld [vmem:[%s9] sm:$0x7]
      %3876 = vset.pattern.permute.xlu0 0
      %3877 = vperm.xlu0 %3876, %v3874
      %v3878 = vpop.permute.xlu0 %3877
      %v3881 = vcombine.high %v3837, %v3837
      %v3882 = vsel %vm586, %v3881, 0
      %3884 = vmatprep.subr.mxu0 %v3869
      %3885 = vmatpush1.msra.mxu0 %v3868
      %3886 = vmatprep.subr.mxu0 %v3867
      %3887 = vmatpush1.msra.mxu0 %v3866
      %3888 = vmatprep.subr.mxu0 %v3865
      %3889 = vmatpush1.msra.mxu0 %v3864
      %3890 = vmatprep.subr.mxu0 %v3863
      %3891 = vmatpush1.msra.mxu0 %v3862
      %3892 = vmatprep.subr.mxu0 %v3861
      %3893 = vmatpush1.msra.mxu0 %v3860
      %3894 = vmatprep.subr.mxu0 %v3859
      %3895 = vmatpush1.msra.mxu0 %v3858
      %3896 = vmatprep.subr.mxu0 %v3857
      %3897 = vmatpush1.msra.mxu0 %v3856
      %3898 = vmatprep.subr.mxu0 %v3855
      %3899 = vmatpush1.msra.mxu0 %v3854
      %3900 = vmatprep.subr.mxu0 %v3853
      %3901 = vmatpush1.msra.mxu0 %v3852
      %3902 = vmatprep.subr.mxu0 %v3851
      %3903 = vmatpush1.msra.mxu0 %v3850
      %3904 = vmatprep.subr.mxu0 %v3849
      %3905 = vmatpush1.msra.mxu0 %v3848
      %3906 = vmatprep.subr.mxu0 %v3847
      %3907 = vmatpush1.msra.mxu0 %v3846
      %3908 = vmatprep.subr.mxu0 %v3845
      %3909 = vmatpush1.msra.mxu0 %v3844
      %3910 = vmatprep.subr.mxu0 %v3843
      %3911 = vmatpush1.msra.mxu0 %v3842
      %3912 = vmatprep.subr.mxu0 %v3841
      %3913 = vmatpush1.msra.mxu0 %v3840
      %3914 = vmatprep.subr.mxu0 %v3839
      %3915 = vmatpush1.msra.mxu0 %v3838
      %3916 = vmatprep.subr.mxu0 0.0
      %3917 = vmatpush2.msra.mxu0 0.0
      %3918 = vmatprep.subr.mxu0 0.0
      %3919 = vmatpush2.msra.mxu0 0.0
      %3920 = vmatprep.subr.mxu0 0.0
      %3921 = vmatpush2.msra.mxu0 0.0
      %3922 = vmatprep.subr.mxu0 0.0
      %3923 = vmatpush2.msra.mxu0 0.0
      %3924 = vmatprep.subr.mxu0 0.0
      %3925 = vmatpush2.msra.mxu0 0.0
      %3926 = vmatprep.subr.mxu0 0.0
      %3927 = vmatpush2.msra.mxu0 0.0
      %3928 = vmatprep.subr.mxu0 0.0
      %3929 = vmatpush2.msra.mxu0 0.0
      %3930 = vmatprep.subr.mxu0 0.0
      %3931 = vmatpush2.msra.mxu0 0.0
      %3932 = vmatprep.subr.mxu0 0.0
      %3933 = vmatpush2.msra.mxu0 0.0
      %3934 = vmatprep.subr.mxu0 0.0
      %3935 = vmatpush2.msra.mxu0 0.0
      %3936 = vmatprep.subr.mxu0 0.0
      %3937 = vmatpush2.msra.mxu0 0.0
      %3938 = vmatprep.subr.mxu0 0.0
      %3939 = vmatpush2.msra.mxu0 0.0
      %3940 = vmatprep.subr.mxu0 0.0
      %3941 = vmatpush2.msra.mxu0 0.0
      %3942 = vmatprep.subr.mxu0 0.0
      %3943 = vmatpush2.msra.mxu0 0.0
      %3944 = vmatprep.subr.mxu0 %v3873
      %3945 = vmatpush2.msra.mxu0 %v3872
      %3946 = vmatprep.subr.mxu0 %v3871
      %3947 = vmatpush2.msra.mxu0 %v3870
      %3948 = vmatprep.mubr.f32.mxu0 %v3882
      %3949 = vmatmul.mubr.f32.gmra.mxu0 %v3837
      %v3950 = vpop.f32.mrf.mxu0
      %v3951 = vadd.f32 %v3878, %v3950
      %v3952 = vpop.f32.mrf.mxu0
      %v3953 = vadd.f32 %v3878, %v3952
      %3954 = vdwg.mxu0
      %v3955 = vxor.u32 %v3951, 2147483648
      %v3956 = vxor.u32 %v3953, 2147483648
      %v3957 = vmul.f32 %v3955, 1.442695
      %v3958 = vpow.pop %v3957
      %v3959 = vmul.f32 %v3956, 1.442695
      %v3960 = vpow.pop %v3959
      %v3961 = vadd.f32 %v3958, 1.0
      %v3962 = vadd.f32 %v3960, 1.0
      %v3963 = vrcp.pop %v3961
      %v3964 = vmul.f32 1.0, %v3963
      %v3965 = vrcp.pop %v3962
      %v3966 = vmul.f32 1.0, %v3965
      %v3969 = vcombine.low %v3125, %v3127
      %s3971 = scalar_lea.vmem %s433, 8
      %3972 = vst [vmem:[%s3971] sm:$0x77] %v3969
      %v3973 = vcombine.low %v3134, %v3135
      %s3975 = scalar_lea.vmem %s438, 8
      %3976 = vst [vmem:[%s3975] sm:$0x77] %v3973
      %v3979 = vcombine.low %v3964, %v3966
      %s3981 = scalar_lea.vmem %s428, 8
      %3982 = vst [vmem:[%s3981] sm:$0x77] %v3979
      %3983 = vrot.lane.b32.xlu0 %v3964, 17
      %v3984 = vpop.permute.xlu0 %3983
      %3985 = vrot.lane.b32.xlu0 %v3966, 17
      %v3986 = vpop.permute.xlu0 %3985
      %v3987 = vsel %vm439, %v3984, %v3986
      %3991 = vst.msk [vmem:[#allocation2] sm:$0x7] %vm460, %v3984
      %3992 = vst [vmem:[#allocation2 + $0x8] sm:$0x7] %v3987
      %3993 = vst.msk [vmem:[#allocation2 + $0x10] sm:$0x7] %vm463, %v3986
      %v3994 = vld [vmem:[#allocation2] sm:$0x7]
      %v3995 = vld [vmem:[#allocation2 + $0x8] sm:$0x7]
      %v3996 = vmul.f32 %v3994, %v470
      %v3997 = vmul.f32 %v3995, %v474
      %3998 = vst [vmem:[#allocation3] sm:$0x7] %v3996
      %3999 = vst [vmem:[#allocation3 + $0x8] sm:$0x7] %v3997
      %v4000 = vld [vmem:[#allocation2] sm:$0x7]
      %v4001 = vld [vmem:[#allocation2 + $0x8] sm:$0x7]
      %v4002 = vld [vmem:[#allocation2 + $0x10] sm:$0x7]
      %v4003 = vmul.f32 %v4000, %v493
      %v4004 = vmul.f32 %v4001, %v497
      %v4005 = vmul.f32 %v4002, %v495
      %v4009 = vrot.slane %v4003, 5
      %v4010 = vrot.slane %v4004, 5
      %v4011 = vrot.slane %v4005, 5
      %4012 = vrot.lane.b32.xlu0 %v4009, 127
      %v4013 = vpop.permute.xlu0 %4012
      %4014 = vrot.lane.b32.xlu0 %v4010, 127
      %v4015 = vpop.permute.xlu0 %4014
      %4016 = vrot.lane.b32.xlu0 %v4011, 127
      %v4017 = vpop.permute.xlu0 %4016
      %v4018 = vsel %vm516, %v4013, %v4015
      %v4019 = vsel %vm516, %v4015, %v4017
      %4022 = vst [vmem:[#allocation3] sm:$0x38] %v4018
      %4023 = vst [vmem:[#allocation3 + $0x8] sm:$0x38] %v4019
      %v4024 = vld [vmem:[#allocation2] sm:$0x7]
      %v4025 = vld [vmem:[#allocation2 + $0x8] sm:$0x7]
      %v4026 = vld [vmem:[#allocation2 + $0x10] sm:$0x7]
      %v4027 = vmul.f32 %v4024, %v537
      %v4028 = vmul.f32 %v4025, %v541
      %v4029 = vmul.f32 %v4026, %v539
      %v4033 = vrot.slane %v4027, 2
      %v4034 = vrot.slane %v4028, 2
      %v4035 = vrot.slane %v4029, 2
      %4036 = vrot.lane.b32.xlu0 %v4033, 126
      %v4037 = vpop.permute.xlu0 %4036
      %4038 = vrot.lane.b32.xlu0 %v4034, 126
      %v4039 = vpop.permute.xlu0 %4038
      %4040 = vrot.lane.b32.xlu0 %v4035, 126
      %v4041 = vpop.permute.xlu0 %4040
      %v4042 = vsel %vm560, %v4037, %v4039
      %v4043 = vsel %vm560, %v4039, %v4041
      %4046 = vst [vmem:[#allocation3] sm:$0xc0] %v4042
      %4047 = vst [vmem:[#allocation3 + $0x8] sm:$0xc0] %v4043
      %4048 = vst [vmem:[#allocation3 + $0x10] sm:$0x1] %v4042
      %4049 = vst [vmem:[#allocation3 + $0x18] sm:$0x1] %v4043
      %v4050 = vld [vmem:[#allocation2] sm:$0x7]
      %v4051 = vld [vmem:[#allocation2 + $0x8] sm:$0x7]
      %v4052 = vld [vmem:[#allocation2 + $0x10] sm:$0x7]
      %v4053 = vmul.f32 %v4050, %v583
      %v4054 = vmul.f32 %v4051, %v587
      %v4055 = vmul.f32 %v4052, %v585
      %v4059 = vrot.slane %v4053, 7
      %v4060 = vrot.slane %v4054, 7
      %v4061 = vrot.slane %v4055, 7
      %4062 = vrot.lane.b32.xlu0 %v4059, 112
      %v4063 = vpop.permute.xlu0 %4062
      %4064 = vrot.lane.b32.xlu0 %v4060, 112
      %v4065 = vpop.permute.xlu0 %4064
      %4066 = vrot.lane.b32.xlu0 %v4061, 112
      %v4067 = vpop.permute.xlu0 %4066
      %v4068 = vsel %vm606, %v4063, %v4065
      %v4069 = vsel %vm606, %v4065, %v4067
      %4072 = vst [vmem:[#allocation3 + $0x10] sm:$0xe] %v4068
      %4073 = vst [vmem:[#allocation3 + $0x18] sm:$0xe] %v4069
      %v4074 = vld [vmem:[#allocation2] sm:$0x7]
      %v4075 = vld [vmem:[#allocation2 + $0x8] sm:$0x7]
      %v4076 = vld [vmem:[#allocation2 + $0x10] sm:$0x7]
      %v4077 = vmul.f32 %v4074, %v627
      %v4078 = vmul.f32 %v4075, %v630
      %v4079 = vmul.f32 %v4076, %v629
      %v4083 = vrot.slane %v4077, 4
      %v4084 = vrot.slane %v4078, 4
      %v4085 = vrot.slane %v4079, 4
      %4086 = vrot.lane.b32.xlu0 %v4083, 111
      %v4087 = vpop.permute.xlu0 %4086
      %4088 = vrot.lane.b32.xlu0 %v4084, 111
      %v4089 = vpop.permute.xlu0 %4088
      %4090 = vrot.lane.b32.xlu0 %v4085, 111
      %v4091 = vpop.permute.xlu0 %4090
      %v4092 = vsel %vm649, %v4087, %v4089
      %v4093 = vsel %vm649, %v4089, %v4091
      %4096 = vst [vmem:[#allocation3 + $0x10] sm:$0x70] %v4092
      %4097 = vst [vmem:[#allocation3 + $0x18] sm:$0x70] %v4093
      %v4098 = vld [vmem:[#allocation2] sm:$0x7]
      %v4099 = vld [vmem:[#allocation2 + $0x8] sm:$0x7]
      %v4100 = vld [vmem:[#allocation2 + $0x10] sm:$0x7]
      %v4101 = vmul.f32 %v4098, %v670
      %v4102 = vmul.f32 %v4099, %v674
      %v4103 = vmul.f32 %v4100, %v672
      %v4107 = vrot.slane %v4101, 1
      %v4108 = vrot.slane %v4102, 1
      %v4109 = vrot.slane %v4103, 1
      %4110 = vrot.lane.b32.xlu0 %v4107, 110
      %v4111 = vpop.permute.xlu0 %4110
      %4112 = vrot.lane.b32.xlu0 %v4108, 110
      %v4113 = vpop.permute.xlu0 %4112
      %4114 = vrot.lane.b32.xlu0 %v4109, 110
      %v4115 = vpop.permute.xlu0 %4114
      %v4116 = vsel %vm693, %v4111, %v4113
      %v4117 = vsel %vm693, %v4113, %v4115
      %4120 = vst [vmem:[#allocation3 + $0x10] sm:$0x80] %v4116
      %4121 = vst [vmem:[#allocation3 + $0x18] sm:$0x80] %v4117
      %4122 = vst [vmem:[#allocation3 + $0x20] sm:$0x3] %v4116
      %4123 = vst [vmem:[#allocation3 + $0x28] sm:$0x3] %v4117
      %v4124 = vld [vmem:[#allocation2] sm:$0x7]
      %v4125 = vld [vmem:[#allocation2 + $0x8] sm:$0x7]
      %v4126 = vld [vmem:[#allocation2 + $0x10] sm:$0x7]
      %v4127 = vmul.f32 %v4124, %v716
      %v4128 = vmul.f32 %v4125, %v720
      %v4129 = vmul.f32 %v4126, %v718
      %v4133 = vrot.slane %v4127, 6
      %v4134 = vrot.slane %v4128, 6
      %v4135 = vrot.slane %v4129, 6
      %4136 = vrot.lane.b32.xlu0 %v4133, 96
      %v4137 = vpop.permute.xlu0 %4136
      %4138 = vrot.lane.b32.xlu0 %v4134, 96
      %v4139 = vpop.permute.xlu0 %4138
      %4140 = vrot.lane.b32.xlu0 %v4135, 96
      %v4141 = vpop.permute.xlu0 %4140
      %v4142 = vsel %vm739, %v4137, %v4139
      %v4143 = vsel %vm739, %v4139, %v4141
      %4146 = vst [vmem:[#allocation3 + $0x20] sm:$0x1c] %v4142
      %4147 = vst [vmem:[#allocation3 + $0x28] sm:$0x1c] %v4143
      %v4148 = vld [vmem:[#allocation2] sm:$0x7]
      %v4149 = vld [vmem:[#allocation2 + $0x8] sm:$0x7]
      %v4150 = vld [vmem:[#allocation2 + $0x10] sm:$0x7]
      %v4151 = vmul.f32 %v4148, %v760
      %v4152 = vmul.f32 %v4149, %v764
      %v4153 = vmul.f32 %v4150, %v762
      %v4157 = vrot.slane %v4151, 3
      %v4158 = vrot.slane %v4152, 3
      %v4159 = vrot.slane %v4153, 3
      %4160 = vrot.lane.b32.xlu0 %v4157, 95
      %v4161 = vpop.permute.xlu0 %4160
      %4162 = vrot.lane.b32.xlu0 %v4158, 95
      %v4163 = vpop.permute.xlu0 %4162
      %4164 = vrot.lane.b32.xlu0 %v4159, 95
      %v4165 = vpop.permute.xlu0 %4164
      %v4166 = vsel %vm783, %v4161, %v4163
      %v4167 = vsel %vm783, %v4163, %v4165
      %4170 = vst [vmem:[#allocation3 + $0x20] sm:$0xe0] %v4166
      %4171 = vst [vmem:[#allocation3 + $0x28] sm:$0xe0] %v4167
      %v4172 = vld [vmem:[#allocation2] sm:$0x7]
      %v4173 = vld [vmem:[#allocation2 + $0x8] sm:$0x7]
      %v4174 = vld [vmem:[#allocation2 + $0x10] sm:$0x7]
      %v4175 = vmul.f32 %v4172, %v804
      %v4176 = vmul.f32 %v4173, %v808
      %v4177 = vmul.f32 %v4174, %v806
      %4181 = vrot.lane.b32.xlu0 %v4175, 94
      %v4182 = vpop.permute.xlu0 %4181
      %4183 = vrot.lane.b32.xlu0 %v4176, 94
      %v4184 = vpop.permute.xlu0 %4183
      %4185 = vrot.lane.b32.xlu0 %v4177, 94
      %v4186 = vpop.permute.xlu0 %4185
      %v4187 = vsel %vm824, %v4182, %v4184
      %v4188 = vsel %vm824, %v4184, %v4186
      %4191 = vst [vmem:[#allocation3 + $0x30] sm:$0x7] %v4187
      %4192 = vst [vmem:[#allocation3 + $0x38] sm:$0x7] %v4188
      %v4193 = vld [vmem:[%s2] sm:$0xff]
      %v4194 = vld [vmem:[%s2 + $0x8] sm:$0xff]
      %v4195 = vld [vmem:[#allocation3] sm:$0xff]
      %v4196 = vld [vmem:[#allocation3 + $0x8] sm:$0xff]
      %v4197 = vld [vmem:[#allocation3 + $0x10] sm:$0xff]
      %v4198 = vld [vmem:[#allocation3 + $0x18] sm:$0xff]
      %v4199 = vld [vmem:[#allocation3 + $0x20] sm:$0xff]
      %v4200 = vld [vmem:[#allocation3 + $0x28] sm:$0xff]
      %v4201 = vld [vmem:[#allocation3 + $0x30] sm:$0x7]
      %v4202 = vld [vmem:[#allocation3 + $0x38] sm:$0x7]
      %v4203 = vld [vmem:[%s3] sm:$0xff]
      %v4204 = vld [vmem:[%s3 + $0x8] sm:$0xff]
      %4206 = vset.pattern.permute.xlu0 0
      %4207 = vperm.xlu0 %4206, %v4203
      %v4208 = vpop.permute.xlu0 %4207
      %4211 = vset.pattern.permute.xlu0 0
      %4212 = vperm.xlu0 %4211, %v4204
      %v4213 = vpop.permute.xlu0 %4212
      %v4216 = vsel %vm853, %v4193, 0
      %v4219 = vsel %vm853, %v4194, 0
      %v4222 = vsel %vm860, %v4201, 0
      %v4225 = vsel %vm860, %v4202, 0
      %4227 = vmatprep.subr.mxu0 0.0
      %4228 = vmatpush1.msra.mxu0 0.0
      %4229 = vmatprep.subr.mxu0 0.0
      %4230 = vmatpush1.msra.mxu0 0.0
      %4231 = vmatprep.subr.mxu0 0.0
      %4232 = vmatpush1.msra.mxu0 0.0
      %4233 = vmatprep.subr.mxu0 0.0
      %4234 = vmatpush1.msra.mxu0 0.0
      %4235 = vmatprep.subr.mxu0 0.0
      %4236 = vmatpush1.msra.mxu0 0.0
      %4237 = vmatprep.subr.mxu0 0.0
      %4238 = vmatpush1.msra.mxu0 0.0
      %4239 = vmatprep.subr.mxu0 0.0
      %4240 = vmatpush1.msra.mxu0 0.0
      %4241 = vmatprep.subr.mxu0 0.0
      %4242 = vmatpush1.msra.mxu0 0.0
      %4243 = vmatprep.subr.mxu0 0.0
      %4244 = vmatpush1.msra.mxu0 0.0
      %4245 = vmatprep.subr.mxu0 0.0
      %4246 = vmatpush1.msra.mxu0 0.0
      %4247 = vmatprep.subr.mxu0 0.0
      %4248 = vmatpush1.msra.mxu0 0.0
      %4249 = vmatprep.subr.mxu0 0.0
      %4250 = vmatpush1.msra.mxu0 0.0
      %4251 = vmatprep.subr.mxu0 %v4225
      %4252 = vmatpush1.msra.mxu0 %v4222
      %4253 = vmatprep.subr.mxu0 %v4200
      %4254 = vmatpush1.msra.mxu0 %v4199
      %4255 = vmatprep.subr.mxu0 %v4198
      %4256 = vmatpush1.msra.mxu0 %v4197
      %4257 = vmatprep.subr.mxu0 %v4196
      %4258 = vmatpush1.msra.mxu0 %v4195
      %4259 = vmatprep.subr.mxu0 0.0
      %4260 = vmatpush2.msra.mxu0 0.0
      %4261 = vmatprep.subr.mxu0 0.0
      %4262 = vmatpush2.msra.mxu0 0.0
      %4263 = vmatprep.subr.mxu0 0.0
      %4264 = vmatpush2.msra.mxu0 0.0
      %4265 = vmatprep.subr.mxu0 0.0
      %4266 = vmatpush2.msra.mxu0 0.0
      %4267 = vmatprep.subr.mxu0 0.0
      %4268 = vmatpush2.msra.mxu0 0.0
      %4269 = vmatprep.subr.mxu0 0.0
      %4270 = vmatpush2.msra.mxu0 0.0
      %4271 = vmatprep.subr.mxu0 0.0
      %4272 = vmatpush2.msra.mxu0 0.0
      %4273 = vmatprep.subr.mxu0 0.0
      %4274 = vmatpush2.msra.mxu0 0.0
      %4275 = vmatprep.subr.mxu0 0.0
      %4276 = vmatpush2.msra.mxu0 0.0
      %4277 = vmatprep.subr.mxu0 0.0
      %4278 = vmatpush2.msra.mxu0 0.0
      %4279 = vmatprep.subr.mxu0 0.0
      %4280 = vmatpush2.msra.mxu0 0.0
      %4281 = vmatprep.subr.mxu0 0.0
      %4282 = vmatpush2.msra.mxu0 0.0
      %4283 = vmatprep.subr.mxu0 0.0
      %4284 = vmatpush2.msra.mxu0 0.0
      %4285 = vmatprep.subr.mxu0 0.0
      %4286 = vmatpush2.msra.mxu0 0.0
      %4287 = vmatprep.subr.mxu0 0.0
      %4288 = vmatpush2.msra.mxu0 0.0
      %4289 = vmatprep.subr.mxu0 0.0
      %4290 = vmatpush2.msra.mxu0 0.0
      %4291 = vmatprep.mubr.f32.mxu0 0.0
      %4292 = vmatmul.mubr.f32.gmra.mxu0 %v4216
      %v4293 = vpop.f32.mrf.mxu0
      %v4294 = vadd.f32 %v4208, %v4293
      %v4295 = vpop.f32.mrf.mxu0
      %v4296 = vadd.f32 %v4208, %v4295
      %4297 = vmatprep.mubr.f32.mxu0 0.0
      %4298 = vmatmul.mubr.f32.gmra.mxu0 %v4219
      %v4299 = vpop.f32.mrf.mxu0
      %v4300 = vadd.f32 %v4213, %v4299
      %v4301 = vpop.f32.mrf.mxu0
      %v4302 = vadd.f32 %v4213, %v4301
      %4303 = vdwg.mxu0
      %v4304 = vmax.f32 %v4294, 0.0
      %v4305 = vmax.f32 %v4296, 0.0
      %v4306 = vmax.f32 %v4300, 0.0
      %v4307 = vmax.f32 %v4302, 0.0
      %4312 = vrot.lane.b32.xlu0 %v4304, 17
      %v4313 = vpop.permute.xlu0 %4312
      %4314 = vrot.lane.b32.xlu0 %v4305, 17
      %v4315 = vpop.permute.xlu0 %4314
      %4316 = vrot.lane.b32.xlu0 %v4306, 17
      %v4317 = vpop.permute.xlu0 %4316
      %4318 = vrot.lane.b32.xlu0 %v4307, 17
      %v4319 = vpop.permute.xlu0 %4318
      %v4320 = vsel %vm439, %v4313, %v4315
      %v4321 = vsel %vm439, %v4317, %v4319
      %4328 = vst.msk [vmem:[#allocation2] sm:$0xff] %vm968, %v4313
      %4329 = vst [vmem:[#allocation2 + $0x8] sm:$0xff] %v4320
      %4330 = vst.msk [vmem:[#allocation2 + $0x10] sm:$0xff] %vm439, %v4315
      %4331 = vst.msk [vmem:[#allocation2 + $0x18] sm:$0xff] %vm968, %v4317
      %4332 = vst [vmem:[#allocation2 + $0x20] sm:$0xff] %v4321
      %4333 = vst.msk [vmem:[#allocation2 + $0x28] sm:$0xff] %vm439, %v4319
      %v4334 = vld [vmem:[#allocation2] sm:$0xff]
      %v4335 = vld [vmem:[#allocation2 + $0x8] sm:$0xff]
      %v4336 = vld [vmem:[#allocation2 + $0x18] sm:$0xff]
      %v4337 = vld [vmem:[#allocation2 + $0x20] sm:$0xff]
      %v4338 = vmul.f32 %v4334, %v470
      %v4339 = vmul.f32 %v4335, %v474
      %v4340 = vmul.f32 %v4336, %v470
      %v4341 = vmul.f32 %v4337, %v474
      %4342 = vst [vmem:[#allocation3] sm:$0xff] %v4338
      %4343 = vst [vmem:[#allocation3 + $0x8] sm:$0xff] %v4339
      %4344 = vst [vmem:[#allocation3 + $0x10] sm:$0xff] %v4340
      %4345 = vst [vmem:[#allocation3 + $0x18] sm:$0xff] %v4341
      %v4346 = vld [vmem:[#allocation2] sm:$0xff]
      %v4347 = vld [vmem:[#allocation2 + $0x8] sm:$0xff]
      %v4348 = vld [vmem:[#allocation2 + $0x10] sm:$0xff]
      %v4349 = vld [vmem:[#allocation2 + $0x18] sm:$0xff]
      %v4350 = vld [vmem:[#allocation2 + $0x20] sm:$0xff]
      %v4351 = vld [vmem:[#allocation2 + $0x28] sm:$0xff]
      %v4352 = vmul.f32 %v4346, %v493
      %v4353 = vmul.f32 %v4347, %v497
      %v4354 = vmul.f32 %v4348, %v495
      %v4355 = vmul.f32 %v4349, %v493
      %v4356 = vmul.f32 %v4350, %v497
      %v4357 = vmul.f32 %v4351, %v495
      %4364 = vrot.lane.b32.xlu0 %v4352, 127
      %v4365 = vpop.permute.xlu0 %4364
      %4366 = vrot.lane.b32.xlu0 %v4353, 127
      %v4367 = vpop.permute.xlu0 %4366
      %4368 = vrot.lane.b32.xlu0 %v4354, 127
      %v4369 = vpop.permute.xlu0 %4368
      %4370 = vrot.lane.b32.xlu0 %v4355, 127
      %v4371 = vpop.permute.xlu0 %4370
      %4372 = vrot.lane.b32.xlu0 %v4356, 127
      %v4373 = vpop.permute.xlu0 %4372
      %4374 = vrot.lane.b32.xlu0 %v4357, 127
      %v4375 = vpop.permute.xlu0 %4374
      %v4376 = vsel %vm516, %v4365, %v4367
      %v4377 = vsel %vm516, %v4367, %v4369
      %v4378 = vsel %vm516, %v4371, %v4373
      %v4379 = vsel %vm516, %v4373, %v4375
      %4384 = vst [vmem:[#allocation3 + $0x20] sm:$0xff] %v4376
      %4385 = vst [vmem:[#allocation3 + $0x28] sm:$0xff] %v4377
      %4386 = vst [vmem:[#allocation3 + $0x30] sm:$0xff] %v4378
      %4387 = vst [vmem:[#allocation3 + $0x38] sm:$0xff] %v4379
      %v4388 = vld [vmem:[#allocation2] sm:$0xff]
      %v4389 = vld [vmem:[#allocation2 + $0x8] sm:$0xff]
      %v4390 = vld [vmem:[#allocation2 + $0x10] sm:$0xff]
      %v4391 = vld [vmem:[#allocation2 + $0x18] sm:$0xff]
      %v4392 = vld [vmem:[#allocation2 + $0x20] sm:$0xff]
      %v4393 = vld [vmem:[#allocation2 + $0x28] sm:$0xff]
      %v4394 = vmul.f32 %v4388, %v537
      %v4395 = vmul.f32 %v4389, %v541
      %v4396 = vmul.f32 %v4390, %v539
      %v4397 = vmul.f32 %v4391, %v537
      %v4398 = vmul.f32 %v4392, %v541
      %v4399 = vmul.f32 %v4393, %v539
      %4406 = vrot.lane.b32.xlu0 %v4394, 126
      %v4407 = vpop.permute.xlu0 %4406
      %4408 = vrot.lane.b32.xlu0 %v4395, 126
      %v4409 = vpop.permute.xlu0 %4408
      %4410 = vrot.lane.b32.xlu0 %v4396, 126
      %v4411 = vpop.permute.xlu0 %4410
      %4412 = vrot.lane.b32.xlu0 %v4397, 126
      %v4413 = vpop.permute.xlu0 %4412
      %4414 = vrot.lane.b32.xlu0 %v4398, 126
      %v4415 = vpop.permute.xlu0 %4414
      %4416 = vrot.lane.b32.xlu0 %v4399, 126
      %v4417 = vpop.permute.xlu0 %4416
      %v4418 = vsel %vm560, %v4407, %v4409
      %v4419 = vsel %vm560, %v4409, %v4411
      %v4420 = vsel %vm560, %v4413, %v4415
      %v4421 = vsel %vm560, %v4415, %v4417
      %4426 = vst [vmem:[#allocation3 + $0x40] sm:$0xff] %v4418
      %4427 = vst [vmem:[#allocation3 + $0x48] sm:$0xff] %v4419
      %4428 = vst [vmem:[#allocation3 + $0x50] sm:$0xff] %v4420
      %4429 = vst [vmem:[#allocation3 + $0x58] sm:$0xff] %v4421
      %v4430 = vld [vmem:[#allocation2] sm:$0xff]
      %v4431 = vld [vmem:[#allocation2 + $0x8] sm:$0xff]
      %v4432 = vld [vmem:[#allocation2 + $0x10] sm:$0xff]
      %v4433 = vld [vmem:[#allocation2 + $0x18] sm:$0xff]
      %v4434 = vld [vmem:[#allocation2 + $0x20] sm:$0xff]
      %v4435 = vld [vmem:[#allocation2 + $0x28] sm:$0xff]
      %v4436 = vmul.f32 %v4430, %v583
      %v4437 = vmul.f32 %v4431, %v587
      %v4438 = vmul.f32 %v4432, %v585
      %v4439 = vmul.f32 %v4433, %v583
      %v4440 = vmul.f32 %v4434, %v587
      %v4441 = vmul.f32 %v4435, %v585
      %4448 = vrot.lane.b32.xlu0 %v4436, 112
      %v4449 = vpop.permute.xlu0 %4448
      %4450 = vrot.lane.b32.xlu0 %v4437, 112
      %v4451 = vpop.permute.xlu0 %4450
      %4452 = vrot.lane.b32.xlu0 %v4438, 112
      %v4453 = vpop.permute.xlu0 %4452
      %4454 = vrot.lane.b32.xlu0 %v4439, 112
      %v4455 = vpop.permute.xlu0 %4454
      %4456 = vrot.lane.b32.xlu0 %v4440, 112
      %v4457 = vpop.permute.xlu0 %4456
      %4458 = vrot.lane.b32.xlu0 %v4441, 112
      %v4459 = vpop.permute.xlu0 %4458
      %v4460 = vsel %vm606, %v4449, %v4451
      %v4461 = vsel %vm606, %v4451, %v4453
      %v4462 = vsel %vm606, %v4455, %v4457
      %v4463 = vsel %vm606, %v4457, %v4459
      %4468 = vst [vmem:[#allocation3 + $0x60] sm:$0xff] %v4460
      %4469 = vst [vmem:[#allocation3 + $0x68] sm:$0xff] %v4461
      %4470 = vst [vmem:[#allocation3 + $0x70] sm:$0xff] %v4462
      %4471 = vst [vmem:[#allocation3 + $0x78] sm:$0xff] %v4463
      %v4472 = vld [vmem:[#allocation2] sm:$0xff]
      %v4473 = vld [vmem:[#allocation2 + $0x8] sm:$0xff]
      %v4474 = vld [vmem:[#allocation2 + $0x10] sm:$0xff]
      %v4475 = vld [vmem:[#allocation2 + $0x18] sm:$0xff]
      %v4476 = vld [vmem:[#allocation2 + $0x20] sm:$0xff]
      %v4477 = vld [vmem:[#allocation2 + $0x28] sm:$0xff]
      %v4478 = vmul.f32 %v4472, %v627
      %v4479 = vmul.f32 %v4473, %v630
      %v4480 = vmul.f32 %v4474, %v629
      %v4481 = vmul.f32 %v4475, %v627
      %v4482 = vmul.f32 %v4476, %v630
      %v4483 = vmul.f32 %v4477, %v629
      %4490 = vrot.lane.b32.xlu0 %v4478, 111
      %v4491 = vpop.permute.xlu0 %4490
      %4492 = vrot.lane.b32.xlu0 %v4479, 111
      %v4493 = vpop.permute.xlu0 %4492
      %4494 = vrot.lane.b32.xlu0 %v4480, 111
      %v4495 = vpop.permute.xlu0 %4494
      %4496 = vrot.lane.b32.xlu0 %v4481, 111
      %v4497 = vpop.permute.xlu0 %4496
      %4498 = vrot.lane.b32.xlu0 %v4482, 111
      %v4499 = vpop.permute.xlu0 %4498
      %4500 = vrot.lane.b32.xlu0 %v4483, 111
      %v4501 = vpop.permute.xlu0 %4500
      %v4502 = vsel %vm649, %v4491, %v4493
      %v4503 = vsel %vm649, %v4493, %v4495
      %v4504 = vsel %vm649, %v4497, %v4499
      %v4505 = vsel %vm649, %v4499, %v4501
      %4510 = vst [vmem:[#allocation3 + $0x80] sm:$0xff] %v4502
      %4511 = vst [vmem:[#allocation3 + $0x88] sm:$0xff] %v4503
      %4512 = vst [vmem:[#allocation3 + $0x90] sm:$0xff] %v4504
      %4513 = vst [vmem:[#allocation3 + $0x98] sm:$0xff] %v4505
      %v4514 = vld [vmem:[#allocation2] sm:$0xff]
      %v4515 = vld [vmem:[#allocation2 + $0x8] sm:$0xff]
      %v4516 = vld [vmem:[#allocation2 + $0x10] sm:$0xff]
      %v4517 = vld [vmem:[#allocation2 + $0x18] sm:$0xff]
      %v4518 = vld [vmem:[#allocation2 + $0x20] sm:$0xff]
      %v4519 = vld [vmem:[#allocation2 + $0x28] sm:$0xff]
      %v4520 = vmul.f32 %v4514, %v670
      %v4521 = vmul.f32 %v4515, %v674
      %v4522 = vmul.f32 %v4516, %v672
      %v4523 = vmul.f32 %v4517, %v670
      %v4524 = vmul.f32 %v4518, %v674
      %v4525 = vmul.f32 %v4519, %v672
      %4532 = vrot.lane.b32.xlu0 %v4520, 110
      %v4533 = vpop.permute.xlu0 %4532
      %4534 = vrot.lane.b32.xlu0 %v4521, 110
      %v4535 = vpop.permute.xlu0 %4534
      %4536 = vrot.lane.b32.xlu0 %v4522, 110
      %v4537 = vpop.permute.xlu0 %4536
      %4538 = vrot.lane.b32.xlu0 %v4523, 110
      %v4539 = vpop.permute.xlu0 %4538
      %4540 = vrot.lane.b32.xlu0 %v4524, 110
      %v4541 = vpop.permute.xlu0 %4540
      %4542 = vrot.lane.b32.xlu0 %v4525, 110
      %v4543 = vpop.permute.xlu0 %4542
      %v4544 = vsel %vm693, %v4533, %v4535
      %v4545 = vsel %vm693, %v4535, %v4537
      %v4546 = vsel %vm693, %v4539, %v4541
      %v4547 = vsel %vm693, %v4541, %v4543
      %4552 = vst [vmem:[#allocation3 + $0xa0] sm:$0xff] %v4544
      %4553 = vst [vmem:[#allocation3 + $0xa8] sm:$0xff] %v4545
      %4554 = vst [vmem:[#allocation3 + $0xb0] sm:$0xff] %v4546
      %4555 = vst [vmem:[#allocation3 + $0xb8] sm:$0xff] %v4547
      %v4556 = vld [vmem:[#allocation2] sm:$0xff]
      %v4557 = vld [vmem:[#allocation2 + $0x8] sm:$0xff]
      %v4558 = vld [vmem:[#allocation2 + $0x10] sm:$0xff]
      %v4559 = vld [vmem:[#allocation2 + $0x18] sm:$0xff]
      %v4560 = vld [vmem:[#allocation2 + $0x20] sm:$0xff]
      %v4561 = vld [vmem:[#allocation2 + $0x28] sm:$0xff]
      %v4562 = vmul.f32 %v4556, %v716
      %v4563 = vmul.f32 %v4557, %v720
      %v4564 = vmul.f32 %v4558, %v718
      %v4565 = vmul.f32 %v4559, %v716
      %v4566 = vmul.f32 %v4560, %v720
      %v4567 = vmul.f32 %v4561, %v718
      %4574 = vrot.lane.b32.xlu0 %v4562, 96
      %v4575 = vpop.permute.xlu0 %4574
      %4576 = vrot.lane.b32.xlu0 %v4563, 96
      %v4577 = vpop.permute.xlu0 %4576
      %4578 = vrot.lane.b32.xlu0 %v4564, 96
      %v4579 = vpop.permute.xlu0 %4578
      %4580 = vrot.lane.b32.xlu0 %v4565, 96
      %v4581 = vpop.permute.xlu0 %4580
      %4582 = vrot.lane.b32.xlu0 %v4566, 96
      %v4583 = vpop.permute.xlu0 %4582
      %4584 = vrot.lane.b32.xlu0 %v4567, 96
      %v4585 = vpop.permute.xlu0 %4584
      %v4586 = vsel %vm739, %v4575, %v4577
      %v4587 = vsel %vm739, %v4577, %v4579
      %v4588 = vsel %vm739, %v4581, %v4583
      %v4589 = vsel %vm739, %v4583, %v4585
      %4594 = vst [vmem:[#allocation3 + $0xc0] sm:$0xff] %v4586
      %4595 = vst [vmem:[#allocation3 + $0xc8] sm:$0xff] %v4587
      %4596 = vst [vmem:[#allocation3 + $0xd0] sm:$0xff] %v4588
      %4597 = vst [vmem:[#allocation3 + $0xd8] sm:$0xff] %v4589
      %v4598 = vld [vmem:[#allocation2] sm:$0xff]
      %v4599 = vld [vmem:[#allocation2 + $0x8] sm:$0xff]
      %v4600 = vld [vmem:[#allocation2 + $0x10] sm:$0xff]
      %v4601 = vld [vmem:[#allocation2 + $0x18] sm:$0xff]
      %v4602 = vld [vmem:[#allocation2 + $0x20] sm:$0xff]
      %v4603 = vld [vmem:[#allocation2 + $0x28] sm:$0xff]
      %v4604 = vmul.f32 %v4598, %v760
      %v4605 = vmul.f32 %v4599, %v764
      %v4606 = vmul.f32 %v4600, %v762
      %v4607 = vmul.f32 %v4601, %v760
      %v4608 = vmul.f32 %v4602, %v764
      %v4609 = vmul.f32 %v4603, %v762
      %4616 = vrot.lane.b32.xlu0 %v4604, 95
      %v4617 = vpop.permute.xlu0 %4616
      %4618 = vrot.lane.b32.xlu0 %v4605, 95
      %v4619 = vpop.permute.xlu0 %4618
      %4620 = vrot.lane.b32.xlu0 %v4606, 95
      %v4621 = vpop.permute.xlu0 %4620
      %4622 = vrot.lane.b32.xlu0 %v4607, 95
      %v4623 = vpop.permute.xlu0 %4622
      %4624 = vrot.lane.b32.xlu0 %v4608, 95
      %v4625 = vpop.permute.xlu0 %4624
      %4626 = vrot.lane.b32.xlu0 %v4609, 95
      %v4627 = vpop.permute.xlu0 %4626
      %v4628 = vsel %vm783, %v4617, %v4619
      %v4629 = vsel %vm783, %v4619, %v4621
      %v4630 = vsel %vm783, %v4623, %v4625
      %v4631 = vsel %vm783, %v4625, %v4627
      %4636 = vst [vmem:[#allocation3 + $0xe0] sm:$0xff] %v4628
      %4637 = vst [vmem:[#allocation3 + $0xe8] sm:$0xff] %v4629
      %4638 = vst [vmem:[#allocation3 + $0xf0] sm:$0xff] %v4630
      %4639 = vst [vmem:[#allocation3 + $0xf8] sm:$0xff] %v4631
      %v4640 = vld [vmem:[#allocation2] sm:$0xff]
      %v4641 = vld [vmem:[#allocation2 + $0x8] sm:$0xff]
      %v4642 = vld [vmem:[#allocation2 + $0x10] sm:$0xff]
      %v4643 = vld [vmem:[#allocation2 + $0x18] sm:$0xff]
      %v4644 = vld [vmem:[#allocation2 + $0x20] sm:$0xff]
      %v4645 = vld [vmem:[#allocation2 + $0x28] sm:$0xff]
      %v4646 = vmul.f32 %v4640, %v804
      %v4647 = vmul.f32 %v4641, %v808
      %v4648 = vmul.f32 %v4642, %v806
      %v4649 = vmul.f32 %v4643, %v804
      %v4650 = vmul.f32 %v4644, %v808
      %v4651 = vmul.f32 %v4645, %v806
      %4658 = vrot.lane.b32.xlu0 %v4646, 94
      %v4659 = vpop.permute.xlu0 %4658
      %4660 = vrot.lane.b32.xlu0 %v4647, 94
      %v4661 = vpop.permute.xlu0 %4660
      %4662 = vrot.lane.b32.xlu0 %v4648, 94
      %v4663 = vpop.permute.xlu0 %4662
      %4664 = vrot.lane.b32.xlu0 %v4649, 94
      %v4665 = vpop.permute.xlu0 %4664
      %4666 = vrot.lane.b32.xlu0 %v4650, 94
      %v4667 = vpop.permute.xlu0 %4666
      %4668 = vrot.lane.b32.xlu0 %v4651, 94
      %v4669 = vpop.permute.xlu0 %4668
      %v4670 = vsel %vm824, %v4659, %v4661
      %v4671 = vsel %vm824, %v4661, %v4663
      %v4672 = vsel %vm824, %v4665, %v4667
      %v4673 = vsel %vm824, %v4667, %v4669
      %4678 = vst [vmem:[#allocation3 + $0x100] sm:$0xff] %v4670
      %4679 = vst [vmem:[#allocation3 + $0x108] sm:$0xff] %v4671
      %4680 = vst [vmem:[#allocation3 + $0x110] sm:$0xff] %v4672
      %4681 = vst [vmem:[#allocation3 + $0x118] sm:$0xff] %v4673
      %v4682 = vld [vmem:[%s4] sm:$0x77]
      %v4683 = vld [vmem:[#allocation3] sm:$0xff]
      %v4684 = vld [vmem:[#allocation3 + $0x8] sm:$0xff]
      %v4685 = vld [vmem:[#allocation3 + $0x10] sm:$0xff]
      %v4686 = vld [vmem:[#allocation3 + $0x18] sm:$0xff]
      %v4687 = vld [vmem:[#allocation3 + $0x20] sm:$0xff]
      %v4688 = vld [vmem:[#allocation3 + $0x28] sm:$0xff]
      %v4689 = vld [vmem:[#allocation3 + $0x30] sm:$0xff]
      %v4690 = vld [vmem:[#allocation3 + $0x38] sm:$0xff]
      %v4691 = vld [vmem:[#allocation3 + $0x40] sm:$0xff]
      %v4692 = vld [vmem:[#allocation3 + $0x48] sm:$0xff]
      %v4693 = vld [vmem:[#allocation3 + $0x50] sm:$0xff]
      %v4694 = vld [vmem:[#allocation3 + $0x58] sm:$0xff]
      %v4695 = vld [vmem:[#allocation3 + $0x60] sm:$0xff]
      %v4696 = vld [vmem:[#allocation3 + $0x68] sm:$0xff]
      %v4697 = vld [vmem:[#allocation3 + $0x70] sm:$0xff]
      %v4698 = vld [vmem:[#allocation3 + $0x78] sm:$0xff]
      %v4699 = vld [vmem:[#allocation3 + $0x80] sm:$0xff]
      %v4700 = vld [vmem:[#allocation3 + $0x88] sm:$0xff]
      %v4701 = vld [vmem:[#allocation3 + $0x90] sm:$0xff]
      %v4702 = vld [vmem:[#allocation3 + $0x98] sm:$0xff]
      %v4703 = vld [vmem:[#allocation3 + $0xa0] sm:$0xff]
      %v4704 = vld [vmem:[#allocation3 + $0xa8] sm:$0xff]
      %v4705 = vld [vmem:[#allocation3 + $0xb0] sm:$0xff]
      %v4706 = vld [vmem:[#allocation3 + $0xb8] sm:$0xff]
      %v4707 = vld [vmem:[#allocation3 + $0xc0] sm:$0xff]
      %v4708 = vld [vmem:[#allocation3 + $0xc8] sm:$0xff]
      %v4709 = vld [vmem:[#allocation3 + $0xd0] sm:$0xff]
      %v4710 = vld [vmem:[#allocation3 + $0xd8] sm:$0xff]
      %v4711 = vld [vmem:[#allocation3 + $0xe0] sm:$0xff]
      %v4712 = vld [vmem:[#allocation3 + $0xe8] sm:$0xff]
      %v4713 = vld [vmem:[#allocation3 + $0xf0] sm:$0xff]
      %v4714 = vld [vmem:[#allocation3 + $0xf8] sm:$0xff]
      %v4715 = vld [vmem:[#allocation3 + $0x100] sm:$0xff]
      %v4716 = vld [vmem:[#allocation3 + $0x108] sm:$0xff]
      %v4717 = vld [vmem:[#allocation3 + $0x110] sm:$0xff]
      %v4718 = vld [vmem:[#allocation3 + $0x118] sm:$0xff]
      %v4719 = vld [vmem:[%s5] sm:$0x7]
      %4721 = vset.pattern.permute.xlu0 0
      %4722 = vperm.xlu0 %4721, %v4719
      %v4723 = vpop.permute.xlu0 %4722
      %v4726 = vcombine.high %v4682, %v4682
      %v4727 = vsel %vm586, %v4726, 0
      %4729 = vmatprep.subr.mxu0 %v4714
      %4730 = vmatpush1.msra.mxu0 %v4713
      %4731 = vmatprep.subr.mxu0 %v4712
      %4732 = vmatpush1.msra.mxu0 %v4711
      %4733 = vmatprep.subr.mxu0 %v4710
      %4734 = vmatpush1.msra.mxu0 %v4709
      %4735 = vmatprep.subr.mxu0 %v4708
      %4736 = vmatpush1.msra.mxu0 %v4707
      %4737 = vmatprep.subr.mxu0 %v4706
      %4738 = vmatpush1.msra.mxu0 %v4705
      %4739 = vmatprep.subr.mxu0 %v4704
      %4740 = vmatpush1.msra.mxu0 %v4703
      %4741 = vmatprep.subr.mxu0 %v4702
      %4742 = vmatpush1.msra.mxu0 %v4701
      %4743 = vmatprep.subr.mxu0 %v4700
      %4744 = vmatpush1.msra.mxu0 %v4699
      %4745 = vmatprep.subr.mxu0 %v4698
      %4746 = vmatpush1.msra.mxu0 %v4697
      %4747 = vmatprep.subr.mxu0 %v4696
      %4748 = vmatpush1.msra.mxu0 %v4695
      %4749 = vmatprep.subr.mxu0 %v4694
      %4750 = vmatpush1.msra.mxu0 %v4693
      %4751 = vmatprep.subr.mxu0 %v4692
      %4752 = vmatpush1.msra.mxu0 %v4691
      %4753 = vmatprep.subr.mxu0 %v4690
      %4754 = vmatpush1.msra.mxu0 %v4689
      %4755 = vmatprep.subr.mxu0 %v4688
      %4756 = vmatpush1.msra.mxu0 %v4687
      %4757 = vmatprep.subr.mxu0 %v4686
      %4758 = vmatpush1.msra.mxu0 %v4685
      %4759 = vmatprep.subr.mxu0 %v4684
      %4760 = vmatpush1.msra.mxu0 %v4683
      %4761 = vmatprep.subr.mxu0 0.0
      %4762 = vmatpush2.msra.mxu0 0.0
      %4763 = vmatprep.subr.mxu0 0.0
      %4764 = vmatpush2.msra.mxu0 0.0
      %4765 = vmatprep.subr.mxu0 0.0
      %4766 = vmatpush2.msra.mxu0 0.0
      %4767 = vmatprep.subr.mxu0 0.0
      %4768 = vmatpush2.msra.mxu0 0.0
      %4769 = vmatprep.subr.mxu0 0.0
      %4770 = vmatpush2.msra.mxu0 0.0
      %4771 = vmatprep.subr.mxu0 0.0
      %4772 = vmatpush2.msra.mxu0 0.0
      %4773 = vmatprep.subr.mxu0 0.0
      %4774 = vmatpush2.msra.mxu0 0.0
      %4775 = vmatprep.subr.mxu0 0.0
      %4776 = vmatpush2.msra.mxu0 0.0
      %4777 = vmatprep.subr.mxu0 0.0
      %4778 = vmatpush2.msra.mxu0 0.0
      %4779 = vmatprep.subr.mxu0 0.0
      %4780 = vmatpush2.msra.mxu0 0.0
      %4781 = vmatprep.subr.mxu0 0.0
      %4782 = vmatpush2.msra.mxu0 0.0
      %4783 = vmatprep.subr.mxu0 0.0
      %4784 = vmatpush2.msra.mxu0 0.0
      %4785 = vmatprep.subr.mxu0 0.0
      %4786 = vmatpush2.msra.mxu0 0.0
      %4787 = vmatprep.subr.mxu0 0.0
      %4788 = vmatpush2.msra.mxu0 0.0
      %4789 = vmatprep.subr.mxu0 %v4718
      %4790 = vmatpush2.msra.mxu0 %v4717
      %4791 = vmatprep.subr.mxu0 %v4716
      %4792 = vmatpush2.msra.mxu0 %v4715
      %4793 = vmatprep.mubr.f32.mxu0 %v4727
      %4794 = vmatmul.mubr.f32.gmra.mxu0 %v4682
      %v4795 = vpop.f32.mrf.mxu0
      %v4796 = vadd.f32 %v4723, %v4795
      %v4797 = vpop.f32.mrf.mxu0
      %v4798 = vadd.f32 %v4723, %v4797
      %4799 = vdwg.mxu0
      %v4800 = vxor.u32 %v4796, 2147483648
      %v4801 = vxor.u32 %v4798, 2147483648
      %v4802 = vmul.f32 %v4800, 1.442695
      %v4803 = vpow.pop %v4802
      %v4804 = vmul.f32 %v4801, 1.442695
      %v4805 = vpow.pop %v4804
      %v4806 = vadd.f32 %v4803, 1.0
      %v4807 = vadd.f32 %v4805, 1.0
      %v4808 = vrcp.pop %v4806
      %v4809 = vmul.f32 1.0, %v4808
      %v4810 = vrcp.pop %v4807
      %v4811 = vmul.f32 1.0, %v4810
      %v4812 = vrcp.pop %v4809
      %v4813 = vmul.f32 %v3964, %v4812
      %v4814 = vrcp.pop %v4811
      %v4815 = vmul.f32 %v3966, %v4814
      %v4816 = vmax.f32 %v4813, 0.0
      %v4817 = vmax.f32 %v4815, 0.0
      %v4818 = vmin.f32 %v4816, 1.0
      %v4819 = vmin.f32 %v4817, 1.0
      %4822 = vrot.lane.b32.xlu0 %v4818, 17
      %v4823 = vpop.permute.xlu0 %4822
      %4824 = vrot.lane.b32.xlu0 %v4819, 17
      %v4825 = vpop.permute.xlu0 %4824
      %v4826 = vsel %vm439, %v4823, %v4825
      %4830 = vst.msk [vmem:[#allocation2] sm:$0x7] %vm460, %v4823
      %4831 = vst [vmem:[#allocation2 + $0x8] sm:$0x7] %v4826
      %4832 = vst.msk [vmem:[#allocation2 + $0x10] sm:$0x7] %vm463, %v4825
      %v4833 = vld [vmem:[#allocation2] sm:$0x7]
      %v4834 = vld [vmem:[#allocation2 + $0x8] sm:$0x7]
      %v4835 = vmul.f32 %v4833, %v470
      %v4836 = vmul.f32 %v4834, %v474
      %4837 = vst [vmem:[#allocation3] sm:$0x7] %v4835
      %4838 = vst [vmem:[#allocation3 + $0x8] sm:$0x7] %v4836
      %v4839 = vld [vmem:[#allocation2] sm:$0x7]
      %v4840 = vld [vmem:[#allocation2 + $0x8] sm:$0x7]
      %v4841 = vld [vmem:[#allocation2 + $0x10] sm:$0x7]
      %v4842 = vmul.f32 %v4839, %v493
      %v4843 = vmul.f32 %v4840, %v497
      %v4844 = vmul.f32 %v4841, %v495
      %v4848 = vrot.slane %v4842, 5
      %v4849 = vrot.slane %v4843, 5
      %v4850 = vrot.slane %v4844, 5
      %4851 = vrot.lane.b32.xlu0 %v4848, 127
      %v4852 = vpop.permute.xlu0 %4851
      %4853 = vrot.lane.b32.xlu0 %v4849, 127
      %v4854 = vpop.permute.xlu0 %4853
      %4855 = vrot.lane.b32.xlu0 %v4850, 127
      %v4856 = vpop.permute.xlu0 %4855
      %v4857 = vsel %vm516, %v4852, %v4854
      %v4858 = vsel %vm516, %v4854, %v4856
      %4861 = vst [vmem:[#allocation3] sm:$0x38] %v4857
      %4862 = vst [vmem:[#allocation3 + $0x8] sm:$0x38] %v4858
      %v4863 = vld [vmem:[#allocation2] sm:$0x7]
      %v4864 = vld [vmem:[#allocation2 + $0x8] sm:$0x7]
      %v4865 = vld [vmem:[#allocation2 + $0x10] sm:$0x7]
      %v4866 = vmul.f32 %v4863, %v537
      %v4867 = vmul.f32 %v4864, %v541
      %v4868 = vmul.f32 %v4865, %v539
      %v4872 = vrot.slane %v4866, 2
      %v4873 = vrot.slane %v4867, 2
      %v4874 = vrot.slane %v4868, 2
      %4875 = vrot.lane.b32.xlu0 %v4872, 126
      %v4876 = vpop.permute.xlu0 %4875
      %4877 = vrot.lane.b32.xlu0 %v4873, 126
      %v4878 = vpop.permute.xlu0 %4877
      %4879 = vrot.lane.b32.xlu0 %v4874, 126
      %v4880 = vpop.permute.xlu0 %4879
      %v4881 = vsel %vm560, %v4876, %v4878
      %v4882 = vsel %vm560, %v4878, %v4880
      %4885 = vst [vmem:[#allocation3] sm:$0xc0] %v4881
      %4886 = vst [vmem:[#allocation3 + $0x8] sm:$0xc0] %v4882
      %4887 = vst [vmem:[#allocation3 + $0x10] sm:$0x1] %v4881
      %4888 = vst [vmem:[#allocation3 + $0x18] sm:$0x1] %v4882
      %v4889 = vld [vmem:[#allocation2] sm:$0x7]
      %v4890 = vld [vmem:[#allocation2 + $0x8] sm:$0x7]
      %v4891 = vld [vmem:[#allocation2 + $0x10] sm:$0x7]
      %v4892 = vmul.f32 %v4889, %v583
      %v4893 = vmul.f32 %v4890, %v587
      %v4894 = vmul.f32 %v4891, %v585
      %v4898 = vrot.slane %v4892, 7
      %v4899 = vrot.slane %v4893, 7
      %v4900 = vrot.slane %v4894, 7
      %4901 = vrot.lane.b32.xlu0 %v4898, 112
      %v4902 = vpop.permute.xlu0 %4901
      %4903 = vrot.lane.b32.xlu0 %v4899, 112
      %v4904 = vpop.permute.xlu0 %4903
      %4905 = vrot.lane.b32.xlu0 %v4900, 112
      %v4906 = vpop.permute.xlu0 %4905
      %v4907 = vsel %vm606, %v4902, %v4904
      %v4908 = vsel %vm606, %v4904, %v4906
      %4911 = vst [vmem:[#allocation3 + $0x10] sm:$0xe] %v4907
      %4912 = vst [vmem:[#allocation3 + $0x18] sm:$0xe] %v4908
      %v4913 = vld [vmem:[#allocation2] sm:$0x7]
      %v4914 = vld [vmem:[#allocation2 + $0x8] sm:$0x7]
      %v4915 = vld [vmem:[#allocation2 + $0x10] sm:$0x7]
      %v4916 = vmul.f32 %v4913, %v627
      %v4917 = vmul.f32 %v4914, %v630
      %v4918 = vmul.f32 %v4915, %v629
      %v4922 = vrot.slane %v4916, 4
      %v4923 = vrot.slane %v4917, 4
      %v4924 = vrot.slane %v4918, 4
      %4925 = vrot.lane.b32.xlu0 %v4922, 111
      %v4926 = vpop.permute.xlu0 %4925
      %4927 = vrot.lane.b32.xlu0 %v4923, 111
      %v4928 = vpop.permute.xlu0 %4927
      %4929 = vrot.lane.b32.xlu0 %v4924, 111
      %v4930 = vpop.permute.xlu0 %4929
      %v4931 = vsel %vm649, %v4926, %v4928
      %v4932 = vsel %vm649, %v4928, %v4930
      %4935 = vst [vmem:[#allocation3 + $0x10] sm:$0x70] %v4931
      %4936 = vst [vmem:[#allocation3 + $0x18] sm:$0x70] %v4932
      %v4937 = vld [vmem:[#allocation2] sm:$0x7]
      %v4938 = vld [vmem:[#allocation2 + $0x8] sm:$0x7]
      %v4939 = vld [vmem:[#allocation2 + $0x10] sm:$0x7]
      %v4940 = vmul.f32 %v4937, %v670
      %v4941 = vmul.f32 %v4938, %v674
      %v4942 = vmul.f32 %v4939, %v672
      %v4946 = vrot.slane %v4940, 1
      %v4947 = vrot.slane %v4941, 1
      %v4948 = vrot.slane %v4942, 1
      %4949 = vrot.lane.b32.xlu0 %v4946, 110
      %v4950 = vpop.permute.xlu0 %4949
      %4951 = vrot.lane.b32.xlu0 %v4947, 110
      %v4952 = vpop.permute.xlu0 %4951
      %4953 = vrot.lane.b32.xlu0 %v4948, 110
      %v4954 = vpop.permute.xlu0 %4953
      %v4955 = vsel %vm693, %v4950, %v4952
      %v4956 = vsel %vm693, %v4952, %v4954
      %4959 = vst [vmem:[#allocation3 + $0x10] sm:$0x80] %v4955
      %4960 = vst [vmem:[#allocation3 + $0x18] sm:$0x80] %v4956
      %4961 = vst [vmem:[#allocation3 + $0x20] sm:$0x3] %v4955
      %4962 = vst [vmem:[#allocation3 + $0x28] sm:$0x3] %v4956
      %v4963 = vld [vmem:[#allocation2] sm:$0x7]
      %v4964 = vld [vmem:[#allocation2 + $0x8] sm:$0x7]
      %v4965 = vld [vmem:[#allocation2 + $0x10] sm:$0x7]
      %v4966 = vmul.f32 %v4963, %v716
      %v4967 = vmul.f32 %v4964, %v720
      %v4968 = vmul.f32 %v4965, %v718
      %v4972 = vrot.slane %v4966, 6
      %v4973 = vrot.slane %v4967, 6
      %v4974 = vrot.slane %v4968, 6
      %4975 = vrot.lane.b32.xlu0 %v4972, 96
      %v4976 = vpop.permute.xlu0 %4975
      %4977 = vrot.lane.b32.xlu0 %v4973, 96
      %v4978 = vpop.permute.xlu0 %4977
      %4979 = vrot.lane.b32.xlu0 %v4974, 96
      %v4980 = vpop.permute.xlu0 %4979
      %v4981 = vsel %vm739, %v4976, %v4978
      %v4982 = vsel %vm739, %v4978, %v4980
      %4985 = vst [vmem:[#allocation3 + $0x20] sm:$0x1c] %v4981
      %4986 = vst [vmem:[#allocation3 + $0x28] sm:$0x1c] %v4982
      %v4987 = vld [vmem:[#allocation2] sm:$0x7]
      %v4988 = vld [vmem:[#allocation2 + $0x8] sm:$0x7]
      %v4989 = vld [vmem:[#allocation2 + $0x10] sm:$0x7]
      %v4990 = vmul.f32 %v4987, %v760
      %v4991 = vmul.f32 %v4988, %v764
      %v4992 = vmul.f32 %v4989, %v762
      %v4996 = vrot.slane %v4990, 3
      %v4997 = vrot.slane %v4991, 3
      %v4998 = vrot.slane %v4992, 3
      %4999 = vrot.lane.b32.xlu0 %v4996, 95
      %v5000 = vpop.permute.xlu0 %4999
      %5001 = vrot.lane.b32.xlu0 %v4997, 95
      %v5002 = vpop.permute.xlu0 %5001
      %5003 = vrot.lane.b32.xlu0 %v4998, 95
      %v5004 = vpop.permute.xlu0 %5003
      %v5005 = vsel %vm783, %v5000, %v5002
      %v5006 = vsel %vm783, %v5002, %v5004
      %5009 = vst [vmem:[#allocation3 + $0x20] sm:$0xe0] %v5005
      %5010 = vst [vmem:[#allocation3 + $0x28] sm:$0xe0] %v5006
      %v5011 = vld [vmem:[#allocation2] sm:$0x7]
      %v5012 = vld [vmem:[#allocation2 + $0x8] sm:$0x7]
      %v5013 = vld [vmem:[#allocation2 + $0x10] sm:$0x7]
      %v5014 = vmul.f32 %v5011, %v804
      %v5015 = vmul.f32 %v5012, %v808
      %v5016 = vmul.f32 %v5013, %v806
      %5020 = vrot.lane.b32.xlu0 %v5014, 94
      %v5021 = vpop.permute.xlu0 %5020
      %5022 = vrot.lane.b32.xlu0 %v5015, 94
      %v5023 = vpop.permute.xlu0 %5022
      %5024 = vrot.lane.b32.xlu0 %v5016, 94
      %v5025 = vpop.permute.xlu0 %5024
      %v5026 = vsel %vm824, %v5021, %v5023
      %v5027 = vsel %vm824, %v5023, %v5025
      %5030 = vst [vmem:[#allocation3 + $0x30] sm:$0x7] %v5026
      %5031 = vst [vmem:[#allocation3 + $0x38] sm:$0x7] %v5027
      %v5032 = vld [vmem:[%s6] sm:$0xff]
      %v5033 = vld [vmem:[%s6 + $0x8] sm:$0xff]
      %v5034 = vld [vmem:[#allocation3] sm:$0xff]
      %v5035 = vld [vmem:[#allocation3 + $0x8] sm:$0xff]
      %v5036 = vld [vmem:[#allocation3 + $0x10] sm:$0xff]
      %v5037 = vld [vmem:[#allocation3 + $0x18] sm:$0xff]
      %v5038 = vld [vmem:[#allocation3 + $0x20] sm:$0xff]
      %v5039 = vld [vmem:[#allocation3 + $0x28] sm:$0xff]
      %v5040 = vld [vmem:[#allocation3 + $0x30] sm:$0x7]
      %v5041 = vld [vmem:[#allocation3 + $0x38] sm:$0x7]
      %v5042 = vld [vmem:[%s7] sm:$0xff]
      %v5043 = vld [vmem:[%s7 + $0x8] sm:$0xff]
      %5045 = vset.pattern.permute.xlu0 0
      %5046 = vperm.xlu0 %5045, %v5042
      %v5047 = vpop.permute.xlu0 %5046
      %5050 = vset.pattern.permute.xlu0 0
      %5051 = vperm.xlu0 %5050, %v5043
      %v5052 = vpop.permute.xlu0 %5051
      %v5055 = vsel %vm853, %v5032, 0
      %v5058 = vsel %vm853, %v5033, 0
      %v5061 = vsel %vm860, %v5040, 0
      %v5064 = vsel %vm860, %v5041, 0
      %5066 = vmatprep.subr.mxu0 0.0
      %5067 = vmatpush1.msra.mxu0 0.0
      %5068 = vmatprep.subr.mxu0 0.0
      %5069 = vmatpush1.msra.mxu0 0.0
      %5070 = vmatprep.subr.mxu0 0.0
      %5071 = vmatpush1.msra.mxu0 0.0
      %5072 = vmatprep.subr.mxu0 0.0
      %5073 = vmatpush1.msra.mxu0 0.0
      %5074 = vmatprep.subr.mxu0 0.0
      %5075 = vmatpush1.msra.mxu0 0.0
      %5076 = vmatprep.subr.mxu0 0.0
      %5077 = vmatpush1.msra.mxu0 0.0
      %5078 = vmatprep.subr.mxu0 0.0
      %5079 = vmatpush1.msra.mxu0 0.0
      %5080 = vmatprep.subr.mxu0 0.0
      %5081 = vmatpush1.msra.mxu0 0.0
      %5082 = vmatprep.subr.mxu0 0.0
      %5083 = vmatpush1.msra.mxu0 0.0
      %5084 = vmatprep.subr.mxu0 0.0
      %5085 = vmatpush1.msra.mxu0 0.0
      %5086 = vmatprep.subr.mxu0 0.0
      %5087 = vmatpush1.msra.mxu0 0.0
      %5088 = vmatprep.subr.mxu0 0.0
      %5089 = vmatpush1.msra.mxu0 0.0
      %5090 = vmatprep.subr.mxu0 %v5064
      %5091 = vmatpush1.msra.mxu0 %v5061
      %5092 = vmatprep.subr.mxu0 %v5039
      %5093 = vmatpush1.msra.mxu0 %v5038
      %5094 = vmatprep.subr.mxu0 %v5037
      %5095 = vmatpush1.msra.mxu0 %v5036
      %5096 = vmatprep.subr.mxu0 %v5035
      %5097 = vmatpush1.msra.mxu0 %v5034
      %5098 = vmatprep.subr.mxu0 0.0
      %5099 = vmatpush2.msra.mxu0 0.0
      %5100 = vmatprep.subr.mxu0 0.0
      %5101 = vmatpush2.msra.mxu0 0.0
      %5102 = vmatprep.subr.mxu0 0.0
      %5103 = vmatpush2.msra.mxu0 0.0
      %5104 = vmatprep.subr.mxu0 0.0
      %5105 = vmatpush2.msra.mxu0 0.0
      %5106 = vmatprep.subr.mxu0 0.0
      %5107 = vmatpush2.msra.mxu0 0.0
      %5108 = vmatprep.subr.mxu0 0.0
      %5109 = vmatpush2.msra.mxu0 0.0
      %5110 = vmatprep.subr.mxu0 0.0
      %5111 = vmatpush2.msra.mxu0 0.0
      %5112 = vmatprep.subr.mxu0 0.0
      %5113 = vmatpush2.msra.mxu0 0.0
      %5114 = vmatprep.subr.mxu0 0.0
      %5115 = vmatpush2.msra.mxu0 0.0
      %5116 = vmatprep.subr.mxu0 0.0
      %5117 = vmatpush2.msra.mxu0 0.0
      %5118 = vmatprep.subr.mxu0 0.0
      %5119 = vmatpush2.msra.mxu0 0.0
      %5120 = vmatprep.subr.mxu0 0.0
      %5121 = vmatpush2.msra.mxu0 0.0
      %5122 = vmatprep.subr.mxu0 0.0
      %5123 = vmatpush2.msra.mxu0 0.0
      %5124 = vmatprep.subr.mxu0 0.0
      %5125 = vmatpush2.msra.mxu0 0.0
      %5126 = vmatprep.subr.mxu0 0.0
      %5127 = vmatpush2.msra.mxu0 0.0
      %5128 = vmatprep.subr.mxu0 0.0
      %5129 = vmatpush2.msra.mxu0 0.0
      %5130 = vmatprep.mubr.f32.mxu0 0.0
      %5131 = vmatmul.mubr.f32.gmra.mxu0 %v5055
      %v5132 = vpop.f32.mrf.mxu0
      %v5133 = vadd.f32 %v5047, %v5132
      %v5134 = vpop.f32.mrf.mxu0
      %v5135 = vadd.f32 %v5047, %v5134
      %5136 = vmatprep.mubr.f32.mxu0 0.0
      %5137 = vmatmul.mubr.f32.gmra.mxu0 %v5058
      %v5138 = vpop.f32.mrf.mxu0
      %v5139 = vadd.f32 %v5052, %v5138
      %v5140 = vpop.f32.mrf.mxu0
      %v5141 = vadd.f32 %v5052, %v5140
      %5142 = vdwg.mxu0
      %v5143 = vmax.f32 %v5133, 0.0
      %v5144 = vmax.f32 %v5135, 0.0
      %v5145 = vmax.f32 %v5139, 0.0
      %v5146 = vmax.f32 %v5141, 0.0
      %5151 = vrot.lane.b32.xlu0 %v5143, 17
      %v5152 = vpop.permute.xlu0 %5151
      %5153 = vrot.lane.b32.xlu0 %v5144, 17
      %v5154 = vpop.permute.xlu0 %5153
      %5155 = vrot.lane.b32.xlu0 %v5145, 17
      %v5156 = vpop.permute.xlu0 %5155
      %5157 = vrot.lane.b32.xlu0 %v5146, 17
      %v5158 = vpop.permute.xlu0 %5157
      %v5159 = vsel %vm439, %v5152, %v5154
      %v5160 = vsel %vm439, %v5156, %v5158
      %5167 = vst.msk [vmem:[#allocation2] sm:$0xff] %vm968, %v5152
      %5168 = vst [vmem:[#allocation2 + $0x8] sm:$0xff] %v5159
      %5169 = vst.msk [vmem:[#allocation2 + $0x10] sm:$0xff] %vm439, %v5154
      %5170 = vst.msk [vmem:[#allocation2 + $0x18] sm:$0xff] %vm968, %v5156
      %5171 = vst [vmem:[#allocation2 + $0x20] sm:$0xff] %v5160
      %5172 = vst.msk [vmem:[#allocation2 + $0x28] sm:$0xff] %vm439, %v5158
      %v5173 = vld [vmem:[#allocation2] sm:$0xff]
      %v5174 = vld [vmem:[#allocation2 + $0x8] sm:$0xff]
      %v5175 = vld [vmem:[#allocation2 + $0x18] sm:$0xff]
      %v5176 = vld [vmem:[#allocation2 + $0x20] sm:$0xff]
      %v5177 = vmul.f32 %v5173, %v470
      %v5178 = vmul.f32 %v5174, %v474
      %v5179 = vmul.f32 %v5175, %v470
      %v5180 = vmul.f32 %v5176, %v474
      %5181 = vst [vmem:[#allocation3] sm:$0xff] %v5177
      %5182 = vst [vmem:[#allocation3 + $0x8] sm:$0xff] %v5178
      %5183 = vst [vmem:[#allocation3 + $0x10] sm:$0xff] %v5179
      %5184 = vst [vmem:[#allocation3 + $0x18] sm:$0xff] %v5180
      %v5185 = vld [vmem:[#allocation2] sm:$0xff]
      %v5186 = vld [vmem:[#allocation2 + $0x8] sm:$0xff]
      %v5187 = vld [vmem:[#allocation2 + $0x10] sm:$0xff]
      %v5188 = vld [vmem:[#allocation2 + $0x18] sm:$0xff]
      %v5189 = vld [vmem:[#allocation2 + $0x20] sm:$0xff]
      %v5190 = vld [vmem:[#allocation2 + $0x28] sm:$0xff]
      %v5191 = vmul.f32 %v5185, %v493
      %v5192 = vmul.f32 %v5186, %v497
      %v5193 = vmul.f32 %v5187, %v495
      %v5194 = vmul.f32 %v5188, %v493
      %v5195 = vmul.f32 %v5189, %v497
      %v5196 = vmul.f32 %v5190, %v495
      %5203 = vrot.lane.b32.xlu0 %v5191, 127
      %v5204 = vpop.permute.xlu0 %5203
      %5205 = vrot.lane.b32.xlu0 %v5192, 127
      %v5206 = vpop.permute.xlu0 %5205
      %5207 = vrot.lane.b32.xlu0 %v5193, 127
      %v5208 = vpop.permute.xlu0 %5207
      %5209 = vrot.lane.b32.xlu0 %v5194, 127
      %v5210 = vpop.permute.xlu0 %5209
      %5211 = vrot.lane.b32.xlu0 %v5195, 127
      %v5212 = vpop.permute.xlu0 %5211
      %5213 = vrot.lane.b32.xlu0 %v5196, 127
      %v5214 = vpop.permute.xlu0 %5213
      %v5215 = vsel %vm516, %v5204, %v5206
      %v5216 = vsel %vm516, %v5206, %v5208
      %v5217 = vsel %vm516, %v5210, %v5212
      %v5218 = vsel %vm516, %v5212, %v5214
      %5223 = vst [vmem:[#allocation3 + $0x20] sm:$0xff] %v5215
      %5224 = vst [vmem:[#allocation3 + $0x28] sm:$0xff] %v5216
      %5225 = vst [vmem:[#allocation3 + $0x30] sm:$0xff] %v5217
      %5226 = vst [vmem:[#allocation3 + $0x38] sm:$0xff] %v5218
      %v5227 = vld [vmem:[#allocation2] sm:$0xff]
      %v5228 = vld [vmem:[#allocation2 + $0x8] sm:$0xff]
      %v5229 = vld [vmem:[#allocation2 + $0x10] sm:$0xff]
      %v5230 = vld [vmem:[#allocation2 + $0x18] sm:$0xff]
      %v5231 = vld [vmem:[#allocation2 + $0x20] sm:$0xff]
      %v5232 = vld [vmem:[#allocation2 + $0x28] sm:$0xff]
      %v5233 = vmul.f32 %v5227, %v537
      %v5234 = vmul.f32 %v5228, %v541
      %v5235 = vmul.f32 %v5229, %v539
      %v5236 = vmul.f32 %v5230, %v537
      %v5237 = vmul.f32 %v5231, %v541
      %v5238 = vmul.f32 %v5232, %v539
      %5245 = vrot.lane.b32.xlu0 %v5233, 126
      %v5246 = vpop.permute.xlu0 %5245
      %5247 = vrot.lane.b32.xlu0 %v5234, 126
      %v5248 = vpop.permute.xlu0 %5247
      %5249 = vrot.lane.b32.xlu0 %v5235, 126
      %v5250 = vpop.permute.xlu0 %5249
      %5251 = vrot.lane.b32.xlu0 %v5236, 126
      %v5252 = vpop.permute.xlu0 %5251
      %5253 = vrot.lane.b32.xlu0 %v5237, 126
      %v5254 = vpop.permute.xlu0 %5253
      %5255 = vrot.lane.b32.xlu0 %v5238, 126
      %v5256 = vpop.permute.xlu0 %5255
      %v5257 = vsel %vm560, %v5246, %v5248
      %v5258 = vsel %vm560, %v5248, %v5250
      %v5259 = vsel %vm560, %v5252, %v5254
      %v5260 = vsel %vm560, %v5254, %v5256
      %5265 = vst [vmem:[#allocation3 + $0x40] sm:$0xff] %v5257
      %5266 = vst [vmem:[#allocation3 + $0x48] sm:$0xff] %v5258
      %5267 = vst [vmem:[#allocation3 + $0x50] sm:$0xff] %v5259
      %5268 = vst [vmem:[#allocation3 + $0x58] sm:$0xff] %v5260
      %v5269 = vld [vmem:[#allocation2] sm:$0xff]
      %v5270 = vld [vmem:[#allocation2 + $0x8] sm:$0xff]
      %v5271 = vld [vmem:[#allocation2 + $0x10] sm:$0xff]
      %v5272 = vld [vmem:[#allocation2 + $0x18] sm:$0xff]
      %v5273 = vld [vmem:[#allocation2 + $0x20] sm:$0xff]
      %v5274 = vld [vmem:[#allocation2 + $0x28] sm:$0xff]
      %v5275 = vmul.f32 %v5269, %v583
      %v5276 = vmul.f32 %v5270, %v587
      %v5277 = vmul.f32 %v5271, %v585
      %v5278 = vmul.f32 %v5272, %v583
      %v5279 = vmul.f32 %v5273, %v587
      %v5280 = vmul.f32 %v5274, %v585
      %5287 = vrot.lane.b32.xlu0 %v5275, 112
      %v5288 = vpop.permute.xlu0 %5287
      %5289 = vrot.lane.b32.xlu0 %v5276, 112
      %v5290 = vpop.permute.xlu0 %5289
      %5291 = vrot.lane.b32.xlu0 %v5277, 112
      %v5292 = vpop.permute.xlu0 %5291
      %5293 = vrot.lane.b32.xlu0 %v5278, 112
      %v5294 = vpop.permute.xlu0 %5293
      %5295 = vrot.lane.b32.xlu0 %v5279, 112
      %v5296 = vpop.permute.xlu0 %5295
      %5297 = vrot.lane.b32.xlu0 %v5280, 112
      %v5298 = vpop.permute.xlu0 %5297
      %v5299 = vsel %vm606, %v5288, %v5290
      %v5300 = vsel %vm606, %v5290, %v5292
      %v5301 = vsel %vm606, %v5294, %v5296
      %v5302 = vsel %vm606, %v5296, %v5298
      %5307 = vst [vmem:[#allocation3 + $0x60] sm:$0xff] %v5299
      %5308 = vst [vmem:[#allocation3 + $0x68] sm:$0xff] %v5300
      %5309 = vst [vmem:[#allocation3 + $0x70] sm:$0xff] %v5301
      %5310 = vst [vmem:[#allocation3 + $0x78] sm:$0xff] %v5302
      %v5311 = vld [vmem:[#allocation2] sm:$0xff]
      %v5312 = vld [vmem:[#allocation2 + $0x8] sm:$0xff]
      %v5313 = vld [vmem:[#allocation2 + $0x10] sm:$0xff]
      %v5314 = vld [vmem:[#allocation2 + $0x18] sm:$0xff]
      %v5315 = vld [vmem:[#allocation2 + $0x20] sm:$0xff]
      %v5316 = vld [vmem:[#allocation2 + $0x28] sm:$0xff]
      %v5317 = vmul.f32 %v5311, %v627
      %v5318 = vmul.f32 %v5312, %v630
      %v5319 = vmul.f32 %v5313, %v629
      %v5320 = vmul.f32 %v5314, %v627
      %v5321 = vmul.f32 %v5315, %v630
      %v5322 = vmul.f32 %v5316, %v629
      %5329 = vrot.lane.b32.xlu0 %v5317, 111
      %v5330 = vpop.permute.xlu0 %5329
      %5331 = vrot.lane.b32.xlu0 %v5318, 111
      %v5332 = vpop.permute.xlu0 %5331
      %5333 = vrot.lane.b32.xlu0 %v5319, 111
      %v5334 = vpop.permute.xlu0 %5333
      %5335 = vrot.lane.b32.xlu0 %v5320, 111
      %v5336 = vpop.permute.xlu0 %5335
      %5337 = vrot.lane.b32.xlu0 %v5321, 111
      %v5338 = vpop.permute.xlu0 %5337
      %5339 = vrot.lane.b32.xlu0 %v5322, 111
      %v5340 = vpop.permute.xlu0 %5339
      %v5341 = vsel %vm649, %v5330, %v5332
      %v5342 = vsel %vm649, %v5332, %v5334
      %v5343 = vsel %vm649, %v5336, %v5338
      %v5344 = vsel %vm649, %v5338, %v5340
      %5349 = vst [vmem:[#allocation3 + $0x80] sm:$0xff] %v5341
      %5350 = vst [vmem:[#allocation3 + $0x88] sm:$0xff] %v5342
      %5351 = vst [vmem:[#allocation3 + $0x90] sm:$0xff] %v5343
      %5352 = vst [vmem:[#allocation3 + $0x98] sm:$0xff] %v5344
      %v5353 = vld [vmem:[#allocation2] sm:$0xff]
      %v5354 = vld [vmem:[#allocation2 + $0x8] sm:$0xff]
      %v5355 = vld [vmem:[#allocation2 + $0x10] sm:$0xff]
      %v5356 = vld [vmem:[#allocation2 + $0x18] sm:$0xff]
      %v5357 = vld [vmem:[#allocation2 + $0x20] sm:$0xff]
      %v5358 = vld [vmem:[#allocation2 + $0x28] sm:$0xff]
      %v5359 = vmul.f32 %v5353, %v670
      %v5360 = vmul.f32 %v5354, %v674
      %v5361 = vmul.f32 %v5355, %v672
      %v5362 = vmul.f32 %v5356, %v670
      %v5363 = vmul.f32 %v5357, %v674
      %v5364 = vmul.f32 %v5358, %v672
      %5371 = vrot.lane.b32.xlu0 %v5359, 110
      %v5372 = vpop.permute.xlu0 %5371
      %5373 = vrot.lane.b32.xlu0 %v5360, 110
      %v5374 = vpop.permute.xlu0 %5373
      %5375 = vrot.lane.b32.xlu0 %v5361, 110
      %v5376 = vpop.permute.xlu0 %5375
      %5377 = vrot.lane.b32.xlu0 %v5362, 110
      %v5378 = vpop.permute.xlu0 %5377
      %5379 = vrot.lane.b32.xlu0 %v5363, 110
      %v5380 = vpop.permute.xlu0 %5379
      %5381 = vrot.lane.b32.xlu0 %v5364, 110
      %v5382 = vpop.permute.xlu0 %5381
      %v5383 = vsel %vm693, %v5372, %v5374
      %v5384 = vsel %vm693, %v5374, %v5376
      %v5385 = vsel %vm693, %v5378, %v5380
      %v5386 = vsel %vm693, %v5380, %v5382
      %5391 = vst [vmem:[#allocation3 + $0xa0] sm:$0xff] %v5383
      %5392 = vst [vmem:[#allocation3 + $0xa8] sm:$0xff] %v5384
      %5393 = vst [vmem:[#allocation3 + $0xb0] sm:$0xff] %v5385
      %5394 = vst [vmem:[#allocation3 + $0xb8] sm:$0xff] %v5386
      %v5395 = vld [vmem:[#allocation2] sm:$0xff]
      %v5396 = vld [vmem:[#allocation2 + $0x8] sm:$0xff]
      %v5397 = vld [vmem:[#allocation2 + $0x10] sm:$0xff]
      %v5398 = vld [vmem:[#allocation2 + $0x18] sm:$0xff]
      %v5399 = vld [vmem:[#allocation2 + $0x20] sm:$0xff]
      %v5400 = vld [vmem:[#allocation2 + $0x28] sm:$0xff]
      %v5401 = vmul.f32 %v5395, %v716
      %v5402 = vmul.f32 %v5396, %v720
      %v5403 = vmul.f32 %v5397, %v718
      %v5404 = vmul.f32 %v5398, %v716
      %v5405 = vmul.f32 %v5399, %v720
      %v5406 = vmul.f32 %v5400, %v718
      %5413 = vrot.lane.b32.xlu0 %v5401, 96
      %v5414 = vpop.permute.xlu0 %5413
      %5415 = vrot.lane.b32.xlu0 %v5402, 96
      %v5416 = vpop.permute.xlu0 %5415
      %5417 = vrot.lane.b32.xlu0 %v5403, 96
      %v5418 = vpop.permute.xlu0 %5417
      %5419 = vrot.lane.b32.xlu0 %v5404, 96
      %v5420 = vpop.permute.xlu0 %5419
      %5421 = vrot.lane.b32.xlu0 %v5405, 96
      %v5422 = vpop.permute.xlu0 %5421
      %5423 = vrot.lane.b32.xlu0 %v5406, 96
      %v5424 = vpop.permute.xlu0 %5423
      %v5425 = vsel %vm739, %v5414, %v5416
      %v5426 = vsel %vm739, %v5416, %v5418
      %v5427 = vsel %vm739, %v5420, %v5422
      %v5428 = vsel %vm739, %v5422, %v5424
      %5433 = vst [vmem:[#allocation3 + $0xc0] sm:$0xff] %v5425
      %5434 = vst [vmem:[#allocation3 + $0xc8] sm:$0xff] %v5426
      %5435 = vst [vmem:[#allocation3 + $0xd0] sm:$0xff] %v5427
      %5436 = vst [vmem:[#allocation3 + $0xd8] sm:$0xff] %v5428
      %v5437 = vld [vmem:[#allocation2] sm:$0xff]
      %v5438 = vld [vmem:[#allocation2 + $0x8] sm:$0xff]
      %v5439 = vld [vmem:[#allocation2 + $0x10] sm:$0xff]
      %v5440 = vld [vmem:[#allocation2 + $0x18] sm:$0xff]
      %v5441 = vld [vmem:[#allocation2 + $0x20] sm:$0xff]
      %v5442 = vld [vmem:[#allocation2 + $0x28] sm:$0xff]
      %v5443 = vmul.f32 %v5437, %v760
      %v5444 = vmul.f32 %v5438, %v764
      %v5445 = vmul.f32 %v5439, %v762
      %v5446 = vmul.f32 %v5440, %v760
      %v5447 = vmul.f32 %v5441, %v764
      %v5448 = vmul.f32 %v5442, %v762
      %5455 = vrot.lane.b32.xlu0 %v5443, 95
      %v5456 = vpop.permute.xlu0 %5455
      %5457 = vrot.lane.b32.xlu0 %v5444, 95
      %v5458 = vpop.permute.xlu0 %5457
      %5459 = vrot.lane.b32.xlu0 %v5445, 95
      %v5460 = vpop.permute.xlu0 %5459
      %5461 = vrot.lane.b32.xlu0 %v5446, 95
      %v5462 = vpop.permute.xlu0 %5461
      %5463 = vrot.lane.b32.xlu0 %v5447, 95
      %v5464 = vpop.permute.xlu0 %5463
      %5465 = vrot.lane.b32.xlu0 %v5448, 95
      %v5466 = vpop.permute.xlu0 %5465
      %v5467 = vsel %vm783, %v5456, %v5458
      %v5468 = vsel %vm783, %v5458, %v5460
      %v5469 = vsel %vm783, %v5462, %v5464
      %v5470 = vsel %vm783, %v5464, %v5466
      %5475 = vst [vmem:[#allocation3 + $0xe0] sm:$0xff] %v5467
      %5476 = vst [vmem:[#allocation3 + $0xe8] sm:$0xff] %v5468
      %5477 = vst [vmem:[#allocation3 + $0xf0] sm:$0xff] %v5469
      %5478 = vst [vmem:[#allocation3 + $0xf8] sm:$0xff] %v5470
      %v5479 = vld [vmem:[#allocation2] sm:$0xff]
      %v5480 = vld [vmem:[#allocation2 + $0x8] sm:$0xff]
      %v5481 = vld [vmem:[#allocation2 + $0x10] sm:$0xff]
      %v5482 = vld [vmem:[#allocation2 + $0x18] sm:$0xff]
      %v5483 = vld [vmem:[#allocation2 + $0x20] sm:$0xff]
      %v5484 = vld [vmem:[#allocation2 + $0x28] sm:$0xff]
      %v5485 = vmul.f32 %v5479, %v804
      %v5486 = vmul.f32 %v5480, %v808
      %v5487 = vmul.f32 %v5481, %v806
      %v5488 = vmul.f32 %v5482, %v804
      %v5489 = vmul.f32 %v5483, %v808
      %v5490 = vmul.f32 %v5484, %v806
      %5497 = vrot.lane.b32.xlu0 %v5485, 94
      %v5498 = vpop.permute.xlu0 %5497
      %5499 = vrot.lane.b32.xlu0 %v5486, 94
      %v5500 = vpop.permute.xlu0 %5499
      %5501 = vrot.lane.b32.xlu0 %v5487, 94
      %v5502 = vpop.permute.xlu0 %5501
      %5503 = vrot.lane.b32.xlu0 %v5488, 94
      %v5504 = vpop.permute.xlu0 %5503
      %5505 = vrot.lane.b32.xlu0 %v5489, 94
      %v5506 = vpop.permute.xlu0 %5505
      %5507 = vrot.lane.b32.xlu0 %v5490, 94
      %v5508 = vpop.permute.xlu0 %5507
      %v5509 = vsel %vm824, %v5498, %v5500
      %v5510 = vsel %vm824, %v5500, %v5502
      %v5511 = vsel %vm824, %v5504, %v5506
      %v5512 = vsel %vm824, %v5506, %v5508
      %5517 = vst [vmem:[#allocation3 + $0x100] sm:$0xff] %v5509
      %5518 = vst [vmem:[#allocation3 + $0x108] sm:$0xff] %v5510
      %5519 = vst [vmem:[#allocation3 + $0x110] sm:$0xff] %v5511
      %5520 = vst [vmem:[#allocation3 + $0x118] sm:$0xff] %v5512
      %v5521 = vld [vmem:[%s8] sm:$0x77]
      %v5522 = vld [vmem:[#allocation3] sm:$0xff]
      %v5523 = vld [vmem:[#allocation3 + $0x8] sm:$0xff]
      %v5524 = vld [vmem:[#allocation3 + $0x10] sm:$0xff]
      %v5525 = vld [vmem:[#allocation3 + $0x18] sm:$0xff]
      %v5526 = vld [vmem:[#allocation3 + $0x20] sm:$0xff]
      %v5527 = vld [vmem:[#allocation3 + $0x28] sm:$0xff]
      %v5528 = vld [vmem:[#allocation3 + $0x30] sm:$0xff]
      %v5529 = vld [vmem:[#allocation3 + $0x38] sm:$0xff]
      %v5530 = vld [vmem:[#allocation3 + $0x40] sm:$0xff]
      %v5531 = vld [vmem:[#allocation3 + $0x48] sm:$0xff]
      %v5532 = vld [vmem:[#allocation3 + $0x50] sm:$0xff]
      %v5533 = vld [vmem:[#allocation3 + $0x58] sm:$0xff]
      %v5534 = vld [vmem:[#allocation3 + $0x60] sm:$0xff]
      %v5535 = vld [vmem:[#allocation3 + $0x68] sm:$0xff]
      %v5536 = vld [vmem:[#allocation3 + $0x70] sm:$0xff]
      %v5537 = vld [vmem:[#allocation3 + $0x78] sm:$0xff]
      %v5538 = vld [vmem:[#allocation3 + $0x80] sm:$0xff]
      %v5539 = vld [vmem:[#allocation3 + $0x88] sm:$0xff]
      %v5540 = vld [vmem:[#allocation3 + $0x90] sm:$0xff]
      %v5541 = vld [vmem:[#allocation3 + $0x98] sm:$0xff]
      %v5542 = vld [vmem:[#allocation3 + $0xa0] sm:$0xff]
      %v5543 = vld [vmem:[#allocation3 + $0xa8] sm:$0xff]
      %v5544 = vld [vmem:[#allocation3 + $0xb0] sm:$0xff]
      %v5545 = vld [vmem:[#allocation3 + $0xb8] sm:$0xff]
      %v5546 = vld [vmem:[#allocation3 + $0xc0] sm:$0xff]
      %v5547 = vld [vmem:[#allocation3 + $0xc8] sm:$0xff]
      %v5548 = vld [vmem:[#allocation3 + $0xd0] sm:$0xff]
      %v5549 = vld [vmem:[#allocation3 + $0xd8] sm:$0xff]
      %v5550 = vld [vmem:[#allocation3 + $0xe0] sm:$0xff]
      %v5551 = vld [vmem:[#allocation3 + $0xe8] sm:$0xff]
      %v5552 = vld [vmem:[#allocation3 + $0xf0] sm:$0xff]
      %v5553 = vld [vmem:[#allocation3 + $0xf8] sm:$0xff]
      %v5554 = vld [vmem:[#allocation3 + $0x100] sm:$0xff]
      %v5555 = vld [vmem:[#allocation3 + $0x108] sm:$0xff]
      %v5556 = vld [vmem:[#allocation3 + $0x110] sm:$0xff]
      %v5557 = vld [vmem:[#allocation3 + $0x118] sm:$0xff]
      %v5558 = vld [vmem:[%s9] sm:$0x7]
      %5560 = vset.pattern.permute.xlu0 0
      %5561 = vperm.xlu0 %5560, %v5558
      %v5562 = vpop.permute.xlu0 %5561
      %v5565 = vcombine.high %v5521, %v5521
      %v5566 = vsel %vm586, %v5565, 0
      %5568 = vmatprep.subr.mxu0 %v5553
      %5569 = vmatpush1.msra.mxu0 %v5552
      %5570 = vmatprep.subr.mxu0 %v5551
      %5571 = vmatpush1.msra.mxu0 %v5550
      %5572 = vmatprep.subr.mxu0 %v5549
      %5573 = vmatpush1.msra.mxu0 %v5548
      %5574 = vmatprep.subr.mxu0 %v5547
      %5575 = vmatpush1.msra.mxu0 %v5546
      %5576 = vmatprep.subr.mxu0 %v5545
      %5577 = vmatpush1.msra.mxu0 %v5544
      %5578 = vmatprep.subr.mxu0 %v5543
      %5579 = vmatpush1.msra.mxu0 %v5542
      %5580 = vmatprep.subr.mxu0 %v5541
      %5581 = vmatpush1.msra.mxu0 %v5540
      %5582 = vmatprep.subr.mxu0 %v5539
      %5583 = vmatpush1.msra.mxu0 %v5538
      %5584 = vmatprep.subr.mxu0 %v5537
      %5585 = vmatpush1.msra.mxu0 %v5536
      %5586 = vmatprep.subr.mxu0 %v5535
      %5587 = vmatpush1.msra.mxu0 %v5534
      %5588 = vmatprep.subr.mxu0 %v5533
      %5589 = vmatpush1.msra.mxu0 %v5532
      %5590 = vmatprep.subr.mxu0 %v5531
      %5591 = vmatpush1.msra.mxu0 %v5530
      %5592 = vmatprep.subr.mxu0 %v5529
      %5593 = vmatpush1.msra.mxu0 %v5528
      %5594 = vmatprep.subr.mxu0 %v5527
      %5595 = vmatpush1.msra.mxu0 %v5526
      %5596 = vmatprep.subr.mxu0 %v5525
      %5597 = vmatpush1.msra.mxu0 %v5524
      %5598 = vmatprep.subr.mxu0 %v5523
      %5599 = vmatpush1.msra.mxu0 %v5522
      %5600 = vmatprep.subr.mxu0 0.0
      %5601 = vmatpush2.msra.mxu0 0.0
      %5602 = vmatprep.subr.mxu0 0.0
      %5603 = vmatpush2.msra.mxu0 0.0
      %5604 = vmatprep.subr.mxu0 0.0
      %5605 = vmatpush2.msra.mxu0 0.0
      %5606 = vmatprep.subr.mxu0 0.0
      %5607 = vmatpush2.msra.mxu0 0.0
      %5608 = vmatprep.subr.mxu0 0.0
      %5609 = vmatpush2.msra.mxu0 0.0
      %5610 = vmatprep.subr.mxu0 0.0
      %5611 = vmatpush2.msra.mxu0 0.0
      %5612 = vmatprep.subr.mxu0 0.0
      %5613 = vmatpush2.msra.mxu0 0.0
      %5614 = vmatprep.subr.mxu0 0.0
      %5615 = vmatpush2.msra.mxu0 0.0
      %5616 = vmatprep.subr.mxu0 0.0
      %5617 = vmatpush2.msra.mxu0 0.0
      %5618 = vmatprep.subr.mxu0 0.0
      %5619 = vmatpush2.msra.mxu0 0.0
      %5620 = vmatprep.subr.mxu0 0.0
      %5621 = vmatpush2.msra.mxu0 0.0
      %5622 = vmatprep.subr.mxu0 0.0
      %5623 = vmatpush2.msra.mxu0 0.0
      %5624 = vmatprep.subr.mxu0 0.0
      %5625 = vmatpush2.msra.mxu0 0.0
      %5626 = vmatprep.subr.mxu0 0.0
      %5627 = vmatpush2.msra.mxu0 0.0
      %5628 = vmatprep.subr.mxu0 %v5557
      %5629 = vmatpush2.msra.mxu0 %v5556
      %5630 = vmatprep.subr.mxu0 %v5555
      %5631 = vmatpush2.msra.mxu0 %v5554
      %5632 = vmatprep.mubr.f32.mxu0 %v5566
      %5633 = vmatmul.mubr.f32.gmra.mxu0 %v5521
      %v5634 = vpop.f32.mrf.mxu0
      %v5635 = vadd.f32 %v5562, %v5634
      %v5636 = vpop.f32.mrf.mxu0
      %v5637 = vadd.f32 %v5562, %v5636
      %5638 = vdwg.mxu0
      %v5639 = vxor.u32 %v5635, 2147483648
      %v5640 = vxor.u32 %v5637, 2147483648
      %v5641 = vmul.f32 %v5639, 1.442695
      %v5642 = vpow.pop %v5641
      %v5643 = vmul.f32 %v5640, 1.442695
      %v5644 = vpow.pop %v5643
      %v5645 = vadd.f32 %v5642, 1.0
      %v5646 = vadd.f32 %v5644, 1.0
      %v5647 = vrcp.pop %v5645
      %v5648 = vmul.f32 1.0, %v5647
      %v5649 = vrcp.pop %v5646
      %v5650 = vmul.f32 1.0, %v5649
      %v5653 = vcombine.low %v4809, %v4811
      %s5655 = scalar_lea.vmem %s433, 16
      %5656 = vst [vmem:[%s5655] sm:$0x77] %v5653
      %v5657 = vcombine.low %v4818, %v4819
      %s5659 = scalar_lea.vmem %s438, 16
      %5660 = vst [vmem:[%s5659] sm:$0x77] %v5657
      %v5663 = vcombine.low %v5648, %v5650
      %s5665 = scalar_lea.vmem %s428, 16
      %5666 = vst [vmem:[%s5665] sm:$0x77] %v5663
      %p5667 = scmp.lt.s32.totalorder %s24, 1
      %s5668 = scalar_select %p5667, %s24, 1
      %s5669 = smul.addr %s5668, 6
      %s5670 = smul.addr %s5669, 4
      %s5671 = scalar_lea.vmem %s10, %s5670
      %p5672 = scmp.lt.s32.totalorder %s24, 1
      %s5673 = scalar_select %p5672, %s24, 1
      %s5674 = smul.addr %s5673, 6
      %s5675 = smul.addr %s5674, 4
      %s5676 = scalar_lea.vmem %s11, %s5675
      %p5677 = scmp.lt.s32.totalorder %s24, 1
      %s5678 = scalar_select %p5677, %s24, 1
      %s5679 = smul.addr %s5678, 6
      %s5680 = smul.addr %s5679, 4
      %s5681 = scalar_lea.vmem %s12, %s5680
      // Predicated region
      $region61: #{forward.1} parent=59 // pred_check
        %p5682 = pneg %p257
      $region62: #{forward.1} parent=59 // pred_check_branch
        %5684 = sbr.rel (%p5682) target = $region64
      $region63: #{forward.1} parent=59 // pred_region
        _
      $region64: #{forward.1} parent=59 // pred_fallthru
        _
      // Predicated region
      $region65: #{forward.1} parent=59 // pred_check
        %p5685 = pneg %p283
      $region66: #{forward.1} parent=59 // pred_check_branch
        %5687 = sbr.rel (%p5685) target = $region68
      $region67: #{forward.1} parent=59 // pred_region
        _
      $region68: #{forward.1} parent=59 // pred_fallthru
        _
      // Predicated region
      $region69: #{forward.1} parent=59 // pred_check
        %p5688 = pneg %p309
      $region70: #{forward.1} parent=59 // pred_check_branch
        %5690 = sbr.rel (%p5688) target = $region72
      $region71: #{forward.1} parent=59 // pred_region
        _
      $region72: #{forward.1} parent=59 // pred_fallthru
        _
    $region60: #{forward.1} parent=5 // pred_fallthru
      _
    %p5691 = scmp.le.s32.totalorder 2, %s19
    // Predicated region
    $region73: #{forward.1} parent=5 // pred_check
      %p5692 = pneg %p5691
    $region74: #{forward.1} parent=5 // pred_check_branch
      %5694 = sbr.rel (%p5692) target = $region76
    $region75: #{forward.1} parent=5 // pred_region
      %s5695 = ssub.s32 %s19, 2
      // Predicated region
      $region77: #{forward.1} parent=75 // pred_check
        %p5696 = pneg %p263
      $region78: #{forward.1} parent=75 // pred_check_branch
        %5698 = sbr.rel (%p5696) target = $region80
      $region79: #{forward.1} parent=75 // pred_region
        %p5699 = scmp.lt.s32.totalorder %s25, 1
        %s5700 = scalar_select %p5699, %s25, 1
        %s5701 = smul.addr %s5700, 6
        %s5702 = smul.addr %s5701, 4
        %s5703 = scalar_lea.vmem %s10, %s5702
      $region80: #{forward.1} parent=75 // pred_fallthru
        _
      // Predicated region
      $region81: #{forward.1} parent=75 // pred_check
        %p5704 = pneg %p289
      $region82: #{forward.1} parent=75 // pred_check_branch
        %5706 = sbr.rel (%p5704) target = $region84
      $region83: #{forward.1} parent=75 // pred_region
        %p5707 = scmp.lt.s32.totalorder %s25, 1
        %s5708 = scalar_select %p5707, %s25, 1
        %s5709 = smul.addr %s5708, 6
        %s5710 = smul.addr %s5709, 4
        %s5711 = scalar_lea.vmem %s11, %s5710
      $region84: #{forward.1} parent=75 // pred_fallthru
        _
      // Predicated region
      $region85: #{forward.1} parent=75 // pred_check
        %p5712 = pneg %p315
      $region86: #{forward.1} parent=75 // pred_check_branch
        %5714 = sbr.rel (%p5712) target = $region88
      $region87: #{forward.1} parent=75 // pred_region
        %p5715 = scmp.lt.s32.totalorder %s25, 1
        %s5716 = scalar_select %p5715, %s25, 1
        %s5717 = smul.addr %s5716, 6
        %s5718 = smul.addr %s5717, 4
        %s5719 = scalar_lea.vmem %s12, %s5718
      $region88: #{forward.1} parent=75 // pred_fallthru
        _
    $region76: #{forward.1} parent=5 // pred_fallthru
      _
  $region6: #{forward.1} parent=0 // loop_footer
    %s23 = sadd.s32 1, %s19
  $region7: #{forward.1} parent=0 // loop_footer_branch
    %18 = sbr.rel target = $region3
  $region8: #{forward.1} parent=0 // loop_exit
    _

</llo_original>
